<compile_context>
chip_gen: v7x
topology: tpu7x:2x2x1
jax: 0.10.0
libtpu: 0.0.40
codegen_flags: <defaults>
</compile_context>

<pallas_src>
import jax
import jax.numpy as jnp
from jax import lax
from jax.experimental import pallas as pl
from jax.experimental.pallas import tpu as pltpu


# ----------------------------------------------------------------------------- kernel
def _decoder_kernel(
    gx_ref,                 # (T, 4, B, E)  precomputed x-part of the LSTM gates (+bias)
    h0_ref, c0_ref,         # (B, E)
    whh_ref,                # (4, E, E)     recurrent weight, per gate, pre-transposed
    wq_ref, bq_ref,         # (E, 2E), (1, 2E)  fused + scaled Q projection (char | tag)
    ce_ref, ceT_ref,        # (B*Sc, E), (E, B*Sc)  char encoding (flat) and its transpose
    te_ref, teT_ref,        # (B*St, E), (E, B*St)
    wkc_ref, bkc_ref,       # (E, E) original orientation, (E, 1)
    wvc_ref, bvc_ref,       # (E, E) pre-transposed,        (1, E)
    wkt_ref, bkt_ref,
    wvt_ref, bvt_ref,
    maskc_ref, maskt_ref,   # (B, B*Sc), (B, B*St)  batch-block additive masks
    wo_ref, bo_ref,         # (2E, 2E) block-diagonal attention out-proj, (1, 2E)
    ow_ref, ob_ref,         # (2E, N), (1, N)        output Linear
    out_ref,                # (T, B, N)
):
    T = gx_ref.shape[0]
    E = h0_ref.shape[1]
    f32 = jnp.float32

    # ---- once per call: K^T / V projections of the encodings (plain 2-D matmuls) ----
    kT_c = jnp.dot(wkc_ref[...], ceT_ref[...], preferred_element_type=f32) + bkc_ref[...]  # (E, B*Sc)
    v_c = jnp.dot(ce_ref[...], wvc_ref[...], preferred_element_type=f32) + bvc_ref[...]    # (B*Sc, E)
    kT_t = jnp.dot(wkt_ref[...], teT_ref[...], preferred_element_type=f32) + bkt_ref[...]  # (E, B*St)
    v_t = jnp.dot(te_ref[...], wvt_ref[...], preferred_element_type=f32) + bvt_ref[...]    # (B*St, E)
    mask_c = maskc_ref[...]
    mask_t = maskt_ref[...]

    def attend(q, kT, v, mask):
        # flattened-batch single-head attention: 2-D MXU matmuls + lane-axis softmax;
        # the additive mask keeps every query inside its own batch's key block.
        s = jnp.dot(q, kT, preferred_element_type=f32) + mask           # (B, B*S)
        s = s - jnp.max(s, axis=-1, keepdims=True)
        e = jnp.exp(s)
        p = e * pl.reciprocal(jnp.sum(e, axis=-1, keepdims=True), approx=True)
        return jnp.dot(p, v, preferred_element_type=f32)                # (B, E)

    def step(t, carry):
        h, c = carry
        gx = gx_ref[t]                                                  # (4, B, E)
        # ---- LSTMCell, PyTorch gate order (i, f, g, o); x-part precomputed ----
        i_g = jax.nn.sigmoid(gx[0] + jnp.dot(h, whh_ref[0], preferred_element_type=f32))
        f_g = jax.nn.sigmoid(gx[1] + jnp.dot(h, whh_ref[1], preferred_element_type=f32))
        g_g = jnp.tanh(gx[2] + jnp.dot(h, whh_ref[2], preferred_element_type=f32))
        o_g = jax.nn.sigmoid(gx[3] + jnp.dot(h, whh_ref[3], preferred_element_type=f32))
        c_new = f_g * c + i_g * g_g
        h_new = o_g * jnp.tanh(c_new)

        # ---- fused char|tag Q projection (1/sqrt(E) scale + bias folded in) ----
        q = jnp.dot(h_new, wq_ref[...], preferred_element_type=f32) + bq_ref[...]  # (B, 2E)
        ctx_c = attend(q[:, :E], kT_c, v_c, mask_c)
        ctx_t = attend(q[:, E:], kT_t, v_t, mask_t)

        # ---- fused (block-diag) attention out-proj -> relu -> output Linear ----
        ctx = jnp.concatenate([ctx_c, ctx_t], axis=-1)                  # (B, 2E)
        agg = jnp.maximum(
            jnp.dot(ctx, wo_ref[...], preferred_element_type=f32) + bo_ref[...], 0.0)
        out = jnp.dot(agg, ow_ref[...], preferred_element_type=f32) + ob_ref[...]  # (B, N)
        out_ref[t] = out.astype(out_ref.dtype)
        return h_new, c_new

    lax.fori_loop(0, T, step, (h0_ref[...], c0_ref[...]), unroll=True)


# ----------------------------------------------------------------------------- wrapper
def decoder_forward(params, char_encoding, char_state, tag_encoding, true_output_seq):
    """Teacher-forcing decode. Returns (B, T, n_chars) logits, T = char seq length."""
    f32 = jnp.float32
    B, Sc, E = char_encoding.shape
    _, St, _ = tag_encoding.shape
    N = params["out_w"].shape[0]
    T = Sc
    scale = 1.0 / jnp.sqrt(jnp.float32(E))

    char_hn, char_cn = char_state
    h0 = jnp.concatenate([char_hn[0], char_hn[1]], axis=-1).astype(f32)   # (B, E)
    c0 = jnp.concatenate([char_cn[0], char_cn[1]], axis=-1).astype(f32)   # (B, E)

    # teacher-forcing inputs: step t consumes the true one-hot from step t-1 (zeros at t=0)
    true_sf = jnp.transpose(true_output_seq, (1, 0, 2)).astype(f32)       # (T, B, N)
    inputs_seq = jnp.concatenate(
        [jnp.zeros((1, B, N), f32), true_sf[:T - 1]], axis=0)

    # hoisted LSTM input projection for all T steps, laid out (T, 4, B, E)
    w_ih4 = params["w_ih"].reshape(4, E, N)
    b4 = params["b_lstm"].reshape(4, 1, E)
    gx = jnp.einsum("tbn,gen->tgbe", inputs_seq, w_ih4) + b4[None]

    # recurrent weight, per gate, pre-transposed: whh_t[g] = W_hh[g*E:(g+1)*E, :].T
    whh_t = params["w_hh"].reshape(4, E, E).transpose(0, 2, 1)

    # fused Q projection for both attentions; fold 1/sqrt(E) scale + bias into weights
    wq_both = jnp.concatenate(
        [(params["c_wq"] * scale).T, (params["t_wq"] * scale).T], axis=1)  # (E, 2E)
    bq_both = jnp.concatenate(
        [params["c_bq"] * scale, params["t_bq"] * scale], axis=1)          # (1, 2E)

    # batch-flattened encodings (and transposed copies for the K^T projections)
    ce2 = char_encoding.reshape(B * Sc, E).astype(f32)
    te2 = tag_encoding.reshape(B * St, E).astype(f32)
    ceT = ce2.T
    teT = te2.T

    # batch-block masks: query b may only attend to its own batch's key rows
    mask_c = jnp.where(jnp.arange(B)[:, None] == jnp.arange(B * Sc)[None, :] // Sc,
                       0.0, -1e30).astype(f32)
    mask_t = jnp.where(jnp.arange(B)[:, None] == jnp.arange(B * St)[None, :] // St,
                       0.0, -1e30).astype(f32)

    # attention output projections fused into one block-diagonal matmul
    wo_blk = jnp.zeros((2 * E, 2 * E), f32)
    wo_blk = wo_blk.at[:E, :E].set(params["c_wo"].T).at[E:, E:].set(params["t_wo"].T)
    bo_both = jnp.concatenate([params["c_bo"], params["t_bo"]], axis=1)    # (1, 2E)

    out_w_t = params["out_w"].T                                            # (2E, N)

    inputs = [
        gx, h0, c0, whh_t, wq_both, bq_both,
        ce2, ceT, te2, teT,
        params["c_wk"], params["c_bk"].T, params["c_wv"].T, params["c_bv"],
        params["t_wk"], params["t_bk"].T, params["t_wv"].T, params["t_bv"],
        mask_c, mask_t, wo_blk, bo_both, out_w_t, params["out_b"],
    ]

    def const_spec(a):
        nd = a.ndim
        return pl.BlockSpec(a.shape, lambda i, _nd=nd: (0,) * _nd)

    out_sf = pl.pallas_call(
        _decoder_kernel,
        out_shape=jax.ShapeDtypeStruct((T, B, N), f32),
        grid=(1,),
        in_specs=[const_spec(a) for a in inputs],
        out_specs=pl.BlockSpec((T, B, N), lambda i: (0, 0, 0)),
        compiler_params=pltpu.CompilerParams(dimension_semantics=("arbitrary",)),
    )(*inputs)

    return jnp.transpose(out_sf, (1, 0, 2))                               # (B, T, N)


# ----------------------------------------------------------------------------- reference (plain JAX)
def decoder_reference(params, char_encoding, char_state, tag_encoding, true_output_seq):
    B, Sc, E = char_encoding.shape
    N = params["out_w"].shape[0]
    T = Sc
    char_hn, char_cn = char_state
    h = jnp.concatenate([char_hn[0], char_hn[1]], axis=-1)
    c = jnp.concatenate([char_cn[0], char_cn[1]], axis=-1)
    scale = 1.0 / jnp.sqrt(jnp.float32(E))

    def attn(pre, q, enc):
        k = jnp.einsum('bse,fe->bsf', enc, params[pre + "_wk"]) + params[pre + "_bk"]
        v = jnp.einsum('bse,fe->bsf', enc, params[pre + "_wv"]) + params[pre + "_bv"]
        qq = jnp.einsum('be,fe->bf', q, params[pre + "_wq"]) + params[pre + "_bq"]
        s = jnp.einsum('be,bse->bs', qq * scale, k)
        p = jax.nn.softmax(s, axis=-1)
        ctx = jnp.einsum('bs,bse->be', p, v)
        return jnp.einsum('be,fe->bf', ctx, params[pre + "_wo"]) + params[pre + "_bo"]

    x = jnp.zeros((B, N), jnp.float32)
    outs = []
    for t in range(T):
        gates = (jnp.einsum('bn,gn->bg', x, params["w_ih"])
                 + jnp.einsum('be,ge->bg', h, params["w_hh"])
                 + params["b_lstm"])
        i_g = jax.nn.sigmoid(gates[:, :E])
        f_g = jax.nn.sigmoid(gates[:, E:2 * E])
        g_g = jnp.tanh(gates[:, 2 * E:3 * E])
        o_g = jax.nn.sigmoid(gates[:, 3 * E:])
        c = f_g * c + i_g * g_g
        h = o_g * jnp.tanh(c)
        agg = jnp.maximum(jnp.concatenate(
            [attn("c", h, char_encoding), attn("t", h, tag_encoding)], axis=-1), 0.0)
        outs.append(jnp.einsum('bf,nf->bn', agg, params["out_w"]) + params["out_b"])
        x = true_output_seq[:, t, :]
    return jnp.stack(outs, axis=1)


# ----------------------------------------------------------------------------- params
def init_params(key, E, N):
    ks = iter(jax.random.split(key, 24))

    def rnd(shape, scale=0.1):
        return scale * jax.random.normal(next(ks), shape, jnp.float32)

    p = {
        "w_ih": rnd((4 * E, N)),        # LSTMCell weight_ih
        "w_hh": rnd((4 * E, E)),        # LSTMCell weight_hh
        "b_lstm": rnd((1, 4 * E)),      # bias_ih + bias_hh (pre-summed)
        "out_w": rnd((N, 2 * E)),       # output Linear
        "out_b": rnd((1, N)),
    }
    for pre in ("c", "t"):              # char / tag single-head attention
        p[pre + "_wq"] = rnd((E, E))
        p[pre + "_wk"] = rnd((E, E))
        p[pre + "_wv"] = rnd((E, E))
        p[pre + "_bq"] = rnd((1, E))
        p[pre + "_bk"] = rnd((1, E))
        p[pre + "_bv"] = rnd((1, E))
        p[pre + "_wo"] = rnd((E, E))
        p[pre + "_bo"] = rnd((1, E))
    return p


# ----------------------------------------------------------------------------- main
if __name__ == "__main__":
    B, E, N = 2, 32, 16          # batch, embed_size, n_chars
    Sc, St = 8, 4                # char / tag encoder sequence lengths

    key = jax.random.PRNGKey(0)
    k = jax.random.split(key, 8)
    char_encoding = jax.random.normal(k[0], (B, Sc, E), jnp.float32)
    tag_encoding = jax.random.normal(k[1], (B, St, E), jnp.float32)
    char_hn = jax.random.normal(k[2], (2, B, E // 2), jnp.float32)
    char_cn = jax.random.normal(k[3], (2, B, E // 2), jnp.float32)
    # (tag_hn / tag_cn are unused by the forward pass: only char states seed the LSTM)
    true_output_seq = jax.random.normal(k[4], (B, Sc, N), jnp.float32)
    params = init_params(k[5], E, N)

    out = decoder_forward(params, char_encoding, (char_hn, char_cn),
                          tag_encoding, true_output_seq)
    out = jax.block_until_ready(out)

    ref = decoder_reference(params, char_encoding, (char_hn, char_cn),
                            tag_encoding, true_output_seq)

    assert out.shape == (B, Sc, N)
    assert bool(jnp.all(jnp.isfinite(out)))
    assert jnp.allclose(out, ref, atol=1e-2, rtol=1e-2)
    print("KERNEL_OK")
</pallas_src>

<mosaic_0001>
module attributes {stable_mosaic.version = 11 : i64} {
  func.func @_decoder_kernel(%arg0: i32, %arg1: memref<8x4x2x32xf32, #tpu.memory_space<vmem>>, %arg2: memref<2x32xf32, #tpu.memory_space<vmem>>, %arg3: memref<2x32xf32, #tpu.memory_space<vmem>>, %arg4: memref<4x32x32xf32, #tpu.memory_space<vmem>>, %arg5: memref<32x64xf32, #tpu.memory_space<vmem>>, %arg6: memref<1x64xf32, #tpu.memory_space<vmem>>, %arg7: memref<16x32xf32, #tpu.memory_space<vmem>>, %arg8: memref<32x16xf32, #tpu.memory_space<vmem>>, %arg9: memref<8x32xf32, #tpu.memory_space<vmem>>, %arg10: memref<32x8xf32, #tpu.memory_space<vmem>>, %arg11: memref<32x32xf32, #tpu.memory_space<vmem>>, %arg12: memref<32x1xf32, #tpu.memory_space<vmem>>, %arg13: memref<32x32xf32, #tpu.memory_space<vmem>>, %arg14: memref<1x32xf32, #tpu.memory_space<vmem>>, %arg15: memref<32x32xf32, #tpu.memory_space<vmem>>, %arg16: memref<32x1xf32, #tpu.memory_space<vmem>>, %arg17: memref<32x32xf32, #tpu.memory_space<vmem>>, %arg18: memref<1x32xf32, #tpu.memory_space<vmem>>, %arg19: memref<2x16xf32, #tpu.memory_space<vmem>>, %arg20: memref<2x8xf32, #tpu.memory_space<vmem>>, %arg21: memref<64x64xf32, #tpu.memory_space<vmem>>, %arg22: memref<1x64xf32, #tpu.memory_space<vmem>>, %arg23: memref<64x16xf32, #tpu.memory_space<vmem>>, %arg24: memref<1x16xf32, #tpu.memory_space<vmem>>, %arg25: memref<8x2x16xf32, #tpu.memory_space<vmem>>) attributes {dimension_semantics = [#tpu.dimension_semantics<arbitrary>], iteration_bounds = array<i64: 1>, scalar_prefetch = 0 : i64, scratch_operands = 0 : i64, tpu.core_type = #tpu.core_type<tc>, window_params = [{pipeline_mode = #tpu.pipeline_mode<synchronous>, transform_indices = @transform_0, window_bounds = array<i64: 8, 4, 2, 32>}, {pipeline_mode = #tpu.pipeline_mode<synchronous>, transform_indices = @transform_1, window_bounds = array<i64: 2, 32>}, {pipeline_mode = #tpu.pipeline_mode<synchronous>, transform_indices = @transform_2, window_bounds = array<i64: 2, 32>}, {pipeline_mode = #tpu.pipeline_mode<synchronous>, transform_indices = @transform_3, window_bounds = array<i64: 4, 32, 32>}, {pipeline_mode = #tpu.pipeline_mode<synchronous>, transform_indices = @transform_4, window_bounds = array<i64: 32, 64>}, {pipeline_mode = #tpu.pipeline_mode<synchronous>, transform_indices = @transform_5, window_bounds = array<i64: 1, 64>}, {pipeline_mode = #tpu.pipeline_mode<synchronous>, transform_indices = @transform_6, window_bounds = array<i64: 16, 32>}, {pipeline_mode = #tpu.pipeline_mode<synchronous>, transform_indices = @transform_7, window_bounds = array<i64: 32, 16>}, {pipeline_mode = #tpu.pipeline_mode<synchronous>, transform_indices = @transform_8, window_bounds = array<i64: 8, 32>}, {pipeline_mode = #tpu.pipeline_mode<synchronous>, transform_indices = @transform_9, window_bounds = array<i64: 32, 8>}, {pipeline_mode = #tpu.pipeline_mode<synchronous>, transform_indices = @transform_10, window_bounds = array<i64: 32, 32>}, {pipeline_mode = #tpu.pipeline_mode<synchronous>, transform_indices = @transform_11, window_bounds = array<i64: 32, 1>}, {pipeline_mode = #tpu.pipeline_mode<synchronous>, transform_indices = @transform_12, window_bounds = array<i64: 32, 32>}, {pipeline_mode = #tpu.pipeline_mode<synchronous>, transform_indices = @transform_13, window_bounds = array<i64: 1, 32>}, {pipeline_mode = #tpu.pipeline_mode<synchronous>, transform_indices = @transform_14, window_bounds = array<i64: 32, 32>}, {pipeline_mode = #tpu.pipeline_mode<synchronous>, transform_indices = @transform_15, window_bounds = array<i64: 32, 1>}, {pipeline_mode = #tpu.pipeline_mode<synchronous>, transform_indices = @transform_16, window_bounds = array<i64: 32, 32>}, {pipeline_mode = #tpu.pipeline_mode<synchronous>, transform_indices = @transform_17, window_bounds = array<i64: 1, 32>}, {pipeline_mode = #tpu.pipeline_mode<synchronous>, transform_indices = @transform_18, window_bounds = array<i64: 2, 16>}, {pipeline_mode = #tpu.pipeline_mode<synchronous>, transform_indices = @transform_19, window_bounds = array<i64: 2, 8>}, {pipeline_mode = #tpu.pipeline_mode<synchronous>, transform_indices = @transform_20, window_bounds = array<i64: 64, 64>}, {pipeline_mode = #tpu.pipeline_mode<synchronous>, transform_indices = @transform_21, window_bounds = array<i64: 1, 64>}, {pipeline_mode = #tpu.pipeline_mode<synchronous>, transform_indices = @transform_22, window_bounds = array<i64: 64, 16>}, {pipeline_mode = #tpu.pipeline_mode<synchronous>, transform_indices = @transform_23, window_bounds = array<i64: 1, 16>}, {pipeline_mode = #tpu.pipeline_mode<synchronous>, transform_indices = @transform_24, window_bounds = array<i64: 8, 2, 16>}]} {
    %c0 = arith.constant 0 : index
    %c0_0 = arith.constant 0 : index
    %0 = vector.load %arg11[%c0, %c0_0] : memref<32x32xf32, #tpu.memory_space<vmem>>, vector<32x32xf32>
    %c0_1 = arith.constant 0 : index
    %c0_2 = arith.constant 0 : index
    %1 = vector.load %arg8[%c0_1, %c0_2] : memref<32x16xf32, #tpu.memory_space<vmem>>, vector<32x16xf32>
    %cst = arith.constant dense<0.000000e+00> : vector<32x16xf32>
    %2 = tpu.matmul %0, %1, %cst {dimension_numbers = #tpu.dot_dimension_numbers<[1], [0], [0], [1], [0, 0, 1, 1], [], []>} : vector<32x32xf32>, vector<32x16xf32>, vector<32x16xf32> -> vector<32x16xf32>
    %c0_3 = arith.constant 0 : index
    %c0_4 = arith.constant 0 : index
    %3 = vector.load %arg12[%c0_3, %c0_4] : memref<32x1xf32, #tpu.memory_space<vmem>>, vector<32x1xf32>
    %4 = vector.broadcast %3 : vector<32x1xf32> to vector<32x16xf32>
    %5 = arith.addf %2, %4 : vector<32x16xf32>
    %c0_5 = arith.constant 0 : index
    %c0_6 = arith.constant 0 : index
    %6 = vector.load %arg7[%c0_5, %c0_6] : memref<16x32xf32, #tpu.memory_space<vmem>>, vector<16x32xf32>
    %c0_7 = arith.constant 0 : index
    %c0_8 = arith.constant 0 : index
    %7 = vector.load %arg13[%c0_7, %c0_8] : memref<32x32xf32, #tpu.memory_space<vmem>>, vector<32x32xf32>
    %cst_9 = arith.constant dense<0.000000e+00> : vector<16x32xf32>
    %8 = tpu.matmul %6, %7, %cst_9 {dimension_numbers = #tpu.dot_dimension_numbers<[1], [0], [0], [1], [0, 0, 1, 1], [], []>} : vector<16x32xf32>, vector<32x32xf32>, vector<16x32xf32> -> vector<16x32xf32>
    %c0_10 = arith.constant 0 : index
    %c0_11 = arith.constant 0 : index
    %9 = vector.load %arg14[%c0_10, %c0_11] : memref<1x32xf32, #tpu.memory_space<vmem>>, vector<1x32xf32>
    %10 = vector.broadcast %9 : vector<1x32xf32> to vector<16x32xf32>
    %11 = arith.addf %8, %10 : vector<16x32xf32>
    %c0_12 = arith.constant 0 : index
    %c0_13 = arith.constant 0 : index
    %12 = vector.load %arg15[%c0_12, %c0_13] : memref<32x32xf32, #tpu.memory_space<vmem>>, vector<32x32xf32>
    %c0_14 = arith.constant 0 : index
    %c0_15 = arith.constant 0 : index
    %13 = vector.load %arg10[%c0_14, %c0_15] : memref<32x8xf32, #tpu.memory_space<vmem>>, vector<32x8xf32>
    %cst_16 = arith.constant dense<0.000000e+00> : vector<32x8xf32>
    %14 = tpu.matmul %12, %13, %cst_16 {dimension_numbers = #tpu.dot_dimension_numbers<[1], [0], [0], [1], [0, 0, 1, 1], [], []>} : vector<32x32xf32>, vector<32x8xf32>, vector<32x8xf32> -> vector<32x8xf32>
    %c0_17 = arith.constant 0 : index
    %c0_18 = arith.constant 0 : index
    %15 = vector.load %arg16[%c0_17, %c0_18] : memref<32x1xf32, #tpu.memory_space<vmem>>, vector<32x1xf32>
    %16 = vector.broadcast %15 : vector<32x1xf32> to vector<32x8xf32>
    %17 = arith.addf %14, %16 : vector<32x8xf32>
    %c0_19 = arith.constant 0 : index
    %c0_20 = arith.constant 0 : index
    %18 = vector.load %arg9[%c0_19, %c0_20] : memref<8x32xf32, #tpu.memory_space<vmem>>, vector<8x32xf32>
    %c0_21 = arith.constant 0 : index
    %c0_22 = arith.constant 0 : index
    %19 = vector.load %arg17[%c0_21, %c0_22] : memref<32x32xf32, #tpu.memory_space<vmem>>, vector<32x32xf32>
    %cst_23 = arith.constant dense<0.000000e+00> : vector<8x32xf32>
    %20 = tpu.matmul %18, %19, %cst_23 {dimension_numbers = #tpu.dot_dimension_numbers<[1], [0], [0], [1], [0, 0, 1, 1], [], []>} : vector<8x32xf32>, vector<32x32xf32>, vector<8x32xf32> -> vector<8x32xf32>
    %c0_24 = arith.constant 0 : index
    %c0_25 = arith.constant 0 : index
    %21 = vector.load %arg18[%c0_24, %c0_25] : memref<1x32xf32, #tpu.memory_space<vmem>>, vector<1x32xf32>
    %22 = vector.broadcast %21 : vector<1x32xf32> to vector<8x32xf32>
    %23 = arith.addf %20, %22 : vector<8x32xf32>
    %c0_26 = arith.constant 0 : index
    %c0_27 = arith.constant 0 : index
    %24 = vector.load %arg19[%c0_26, %c0_27] : memref<2x16xf32, #tpu.memory_space<vmem>>, vector<2x16xf32>
    %c0_28 = arith.constant 0 : index
    %c0_29 = arith.constant 0 : index
    %25 = vector.load %arg20[%c0_28, %c0_29] : memref<2x8xf32, #tpu.memory_space<vmem>>, vector<2x8xf32>
    %c0_30 = arith.constant 0 : index
    %c0_31 = arith.constant 0 : index
    %26 = vector.load %arg2[%c0_30, %c0_31] : memref<2x32xf32, #tpu.memory_space<vmem>>, vector<2x32xf32>
    %c0_32 = arith.constant 0 : index
    %c0_33 = arith.constant 0 : index
    %27 = vector.load %arg3[%c0_32, %c0_33] : memref<2x32xf32, #tpu.memory_space<vmem>>, vector<2x32xf32>
    %c0_i32 = arith.constant 0 : i32
    %28 = arith.index_cast %c0_i32 : i32 to index
    %c0_34 = arith.constant 0 : index
    %c0_35 = arith.constant 0 : index
    %c0_36 = arith.constant 0 : index
    %29 = vector.load %arg1[%28, %c0_34, %c0_35, %c0_36] : memref<8x4x2x32xf32, #tpu.memory_space<vmem>>, vector<1x4x2x32xf32>
    %30 = vector.shape_cast %29 : vector<1x4x2x32xf32> to vector<4x2x32xf32>
    %31 = vector.extract_strided_slice %30 {offsets = [0, 0, 0], sizes = [1, 2, 32], strides = [1, 1, 1]} : vector<4x2x32xf32> to vector<1x2x32xf32>
    %32 = vector.shape_cast %31 : vector<1x2x32xf32> to vector<2x32xf32>
    %c0_37 = arith.constant 0 : index
    %c0_38 = arith.constant 0 : index
    %c0_39 = arith.constant 0 : index
    %33 = vector.load %arg4[%c0_37, %c0_38, %c0_39] : memref<4x32x32xf32, #tpu.memory_space<vmem>>, vector<1x32x32xf32>
    %34 = vector.shape_cast %33 : vector<1x32x32xf32> to vector<32x32xf32>
    %cst_40 = arith.constant dense<0.000000e+00> : vector<2x32xf32>
    %35 = tpu.matmul %26, %34, %cst_40 {dimension_numbers = #tpu.dot_dimension_numbers<[1], [0], [0], [1], [0, 0, 1, 1], [], []>} : vector<2x32xf32>, vector<32x32xf32>, vector<2x32xf32> -> vector<2x32xf32>
    %36 = arith.addf %32, %35 : vector<2x32xf32>
    %37 = arith.negf %36 : vector<2x32xf32>
    %38 = math.exp %37 : vector<2x32xf32>
    %cst_41 = arith.constant 1.000000e+00 : f32
    %39 = vector.broadcast %cst_41 : f32 to vector<2x32xf32>
    %40 = arith.addf %39, %38 : vector<2x32xf32>
    %41 = arith.divf %39, %40 : vector<2x32xf32>
    %42 = vector.extract_strided_slice %30 {offsets = [1, 0, 0], sizes = [1, 2, 32], strides = [1, 1, 1]} : vector<4x2x32xf32> to vector<1x2x32xf32>
    %43 = vector.shape_cast %42 : vector<1x2x32xf32> to vector<2x32xf32>
    %c1 = arith.constant 1 : index
    %c0_42 = arith.constant 0 : index
    %c0_43 = arith.constant 0 : index
    %44 = vector.load %arg4[%c1, %c0_42, %c0_43] : memref<4x32x32xf32, #tpu.memory_space<vmem>>, vector<1x32x32xf32>
    %45 = vector.shape_cast %44 : vector<1x32x32xf32> to vector<32x32xf32>
    %cst_44 = arith.constant dense<0.000000e+00> : vector<2x32xf32>
    %46 = tpu.matmul %26, %45, %cst_44 {dimension_numbers = #tpu.dot_dimension_numbers<[1], [0], [0], [1], [0, 0, 1, 1], [], []>} : vector<2x32xf32>, vector<32x32xf32>, vector<2x32xf32> -> vector<2x32xf32>
    %47 = arith.addf %43, %46 : vector<2x32xf32>
    %48 = arith.negf %47 : vector<2x32xf32>
    %49 = math.exp %48 : vector<2x32xf32>
    %cst_45 = arith.constant 1.000000e+00 : f32
    %50 = vector.broadcast %cst_45 : f32 to vector<2x32xf32>
    %51 = arith.addf %50, %49 : vector<2x32xf32>
    %52 = arith.divf %50, %51 : vector<2x32xf32>
    %53 = vector.extract_strided_slice %30 {offsets = [2, 0, 0], sizes = [1, 2, 32], strides = [1, 1, 1]} : vector<4x2x32xf32> to vector<1x2x32xf32>
    %54 = vector.shape_cast %53 : vector<1x2x32xf32> to vector<2x32xf32>
    %c2 = arith.constant 2 : index
    %c0_46 = arith.constant 0 : index
    %c0_47 = arith.constant 0 : index
    %55 = vector.load %arg4[%c2, %c0_46, %c0_47] : memref<4x32x32xf32, #tpu.memory_space<vmem>>, vector<1x32x32xf32>
    %56 = vector.shape_cast %55 : vector<1x32x32xf32> to vector<32x32xf32>
    %cst_48 = arith.constant dense<0.000000e+00> : vector<2x32xf32>
    %57 = tpu.matmul %26, %56, %cst_48 {dimension_numbers = #tpu.dot_dimension_numbers<[1], [0], [0], [1], [0, 0, 1, 1], [], []>} : vector<2x32xf32>, vector<32x32xf32>, vector<2x32xf32> -> vector<2x32xf32>
    %58 = arith.addf %54, %57 : vector<2x32xf32>
    %59 = math.tanh %58 : vector<2x32xf32>
    %60 = vector.extract_strided_slice %30 {offsets = [3, 0, 0], sizes = [1, 2, 32], strides = [1, 1, 1]} : vector<4x2x32xf32> to vector<1x2x32xf32>
    %61 = vector.shape_cast %60 : vector<1x2x32xf32> to vector<2x32xf32>
    %c3 = arith.constant 3 : index
    %c0_49 = arith.constant 0 : index
    %c0_50 = arith.constant 0 : index
    %62 = vector.load %arg4[%c3, %c0_49, %c0_50] : memref<4x32x32xf32, #tpu.memory_space<vmem>>, vector<1x32x32xf32>
    %63 = vector.shape_cast %62 : vector<1x32x32xf32> to vector<32x32xf32>
    %cst_51 = arith.constant dense<0.000000e+00> : vector<2x32xf32>
    %64 = tpu.matmul %26, %63, %cst_51 {dimension_numbers = #tpu.dot_dimension_numbers<[1], [0], [0], [1], [0, 0, 1, 1], [], []>} : vector<2x32xf32>, vector<32x32xf32>, vector<2x32xf32> -> vector<2x32xf32>
    %65 = arith.addf %61, %64 : vector<2x32xf32>
    %66 = arith.negf %65 : vector<2x32xf32>
    %67 = math.exp %66 : vector<2x32xf32>
    %cst_52 = arith.constant 1.000000e+00 : f32
    %68 = vector.broadcast %cst_52 : f32 to vector<2x32xf32>
    %69 = arith.addf %68, %67 : vector<2x32xf32>
    %70 = arith.divf %68, %69 : vector<2x32xf32>
    %71 = arith.mulf %52, %27 : vector<2x32xf32>
    %72 = arith.mulf %41, %59 : vector<2x32xf32>
    %73 = arith.addf %71, %72 : vector<2x32xf32>
    %74 = math.tanh %73 : vector<2x32xf32>
    %75 = arith.mulf %70, %74 : vector<2x32xf32>
    %c0_53 = arith.constant 0 : index
    %c0_54 = arith.constant 0 : index
    %76 = vector.load %arg5[%c0_53, %c0_54] : memref<32x64xf32, #tpu.memory_space<vmem>>, vector<32x64xf32>
    %cst_55 = arith.constant dense<0.000000e+00> : vector<2x64xf32>
    %77 = tpu.matmul %75, %76, %cst_55 {dimension_numbers = #tpu.dot_dimension_numbers<[1], [0], [0], [1], [0, 0, 1, 1], [], []>} : vector<2x32xf32>, vector<32x64xf32>, vector<2x64xf32> -> vector<2x64xf32>
    %c0_56 = arith.constant 0 : index
    %c0_57 = arith.constant 0 : index
    %78 = vector.load %arg6[%c0_56, %c0_57] : memref<1x64xf32, #tpu.memory_space<vmem>>, vector<1x64xf32>
    %79 = vector.broadcast %78 : vector<1x64xf32> to vector<2x64xf32>
    %80 = arith.addf %77, %79 : vector<2x64xf32>
    %81 = vector.extract_strided_slice %80 {offsets = [0, 0], sizes = [2, 32], strides = [1, 1]} : vector<2x64xf32> to vector<2x32xf32>
    %cst_58 = arith.constant dense<0.000000e+00> : vector<2x16xf32>
    %82 = tpu.matmul %81, %5, %cst_58 {dimension_numbers = #tpu.dot_dimension_numbers<[1], [0], [0], [1], [0, 0, 1, 1], [], []>} : vector<2x32xf32>, vector<32x16xf32>, vector<2x16xf32> -> vector<2x16xf32>
    %83 = arith.addf %82, %24 : vector<2x16xf32>
    %cst_59 = arith.constant dense<0xFF800000> : vector<2xf32>
    %84 = vector.multi_reduction <maximumf>, %83, %cst_59 [1] : vector<2x16xf32> to vector<2xf32>
    %85 = vector.shape_cast %84 : vector<2xf32> to vector<2x1xf32>
    %86 = vector.broadcast %85 : vector<2x1xf32> to vector<2x16xf32>
    %87 = arith.subf %83, %86 : vector<2x16xf32>
    %88 = math.exp %87 : vector<2x16xf32>
    %cst_60 = arith.constant dense<0.000000e+00> : vector<2xf32>
    %89 = vector.multi_reduction <add>, %88, %cst_60 [1] : vector<2x16xf32> to vector<2xf32>
    %90 = vector.shape_cast %89 : vector<2xf32> to vector<2x1xf32>
    %91 = tpu.reciprocal %90 {approx = true} : vector<2x1xf32> -> vector<2x1xf32>
    %92 = vector.broadcast %91 : vector<2x1xf32> to vector<2x16xf32>
    %93 = arith.mulf %88, %92 : vector<2x16xf32>
    %cst_61 = arith.constant dense<0.000000e+00> : vector<2x32xf32>
    %94 = tpu.matmul %93, %11, %cst_61 {dimension_numbers = #tpu.dot_dimension_numbers<[1], [0], [0], [1], [0, 0, 1, 1], [], []>} : vector<2x16xf32>, vector<16x32xf32>, vector<2x32xf32> -> vector<2x32xf32>
    %95 = vector.extract_strided_slice %80 {offsets = [0, 32], sizes = [2, 32], strides = [1, 1]} : vector<2x64xf32> to vector<2x32xf32>
    %cst_62 = arith.constant dense<0.000000e+00> : vector<2x8xf32>
    %96 = tpu.matmul %95, %17, %cst_62 {dimension_numbers = #tpu.dot_dimension_numbers<[1], [0], [0], [1], [0, 0, 1, 1], [], []>} : vector<2x32xf32>, vector<32x8xf32>, vector<2x8xf32> -> vector<2x8xf32>
    %97 = arith.addf %96, %25 : vector<2x8xf32>
    %cst_63 = arith.constant dense<0xFF800000> : vector<2xf32>
    %98 = vector.multi_reduction <maximumf>, %97, %cst_63 [1] : vector<2x8xf32> to vector<2xf32>
    %99 = vector.shape_cast %98 : vector<2xf32> to vector<2x1xf32>
    %100 = vector.broadcast %99 : vector<2x1xf32> to vector<2x8xf32>
    %101 = arith.subf %97, %100 : vector<2x8xf32>
    %102 = math.exp %101 : vector<2x8xf32>
    %cst_64 = arith.constant dense<0.000000e+00> : vector<2xf32>
    %103 = vector.multi_reduction <add>, %102, %cst_64 [1] : vector<2x8xf32> to vector<2xf32>
    %104 = vector.shape_cast %103 : vector<2xf32> to vector<2x1xf32>
    %105 = tpu.reciprocal %104 {approx = true} : vector<2x1xf32> -> vector<2x1xf32>
    %106 = vector.broadcast %105 : vector<2x1xf32> to vector<2x8xf32>
    %107 = arith.mulf %102, %106 : vector<2x8xf32>
    %cst_65 = arith.constant dense<0.000000e+00> : vector<2x32xf32>
    %108 = tpu.matmul %107, %23, %cst_65 {dimension_numbers = #tpu.dot_dimension_numbers<[1], [0], [0], [1], [0, 0, 1, 1], [], []>} : vector<2x8xf32>, vector<8x32xf32>, vector<2x32xf32> -> vector<2x32xf32>
    %109 = tpu.concatenate %94, %108 in 1 : vector<2x32xf32>, vector<2x32xf32> -> vector<2x64xf32>
    %c0_66 = arith.constant 0 : index
    %c0_67 = arith.constant 0 : index
    %110 = vector.load %arg21[%c0_66, %c0_67] : memref<64x64xf32, #tpu.memory_space<vmem>>, vector<64x64xf32>
    %cst_68 = arith.constant dense<0.000000e+00> : vector<2x64xf32>
    %111 = tpu.matmul %109, %110, %cst_68 {dimension_numbers = #tpu.dot_dimension_numbers<[1], [0], [0], [1], [0, 0, 1, 1], [], []>} : vector<2x64xf32>, vector<64x64xf32>, vector<2x64xf32> -> vector<2x64xf32>
    %c0_69 = arith.constant 0 : index
    %c0_70 = arith.constant 0 : index
    %112 = vector.load %arg22[%c0_69, %c0_70] : memref<1x64xf32, #tpu.memory_space<vmem>>, vector<1x64xf32>
    %113 = vector.broadcast %112 : vector<1x64xf32> to vector<2x64xf32>
    %114 = arith.addf %111, %113 : vector<2x64xf32>
    %cst_71 = arith.constant 0.000000e+00 : f32
    %115 = vector.broadcast %cst_71 : f32 to vector<2x64xf32>
    %116 = arith.maximumf %114, %115 : vector<2x64xf32>
    %c0_72 = arith.constant 0 : index
    %c0_73 = arith.constant 0 : index
    %117 = vector.load %arg23[%c0_72, %c0_73] : memref<64x16xf32, #tpu.memory_space<vmem>>, vector<64x16xf32>
    %cst_74 = arith.constant dense<0.000000e+00> : vector<2x16xf32>
    %118 = tpu.matmul %116, %117, %cst_74 {dimension_numbers = #tpu.dot_dimension_numbers<[1], [0], [0], [1], [0, 0, 1, 1], [], []>} : vector<2x64xf32>, vector<64x16xf32>, vector<2x16xf32> -> vector<2x16xf32>
    %c0_75 = arith.constant 0 : index
    %c0_76 = arith.constant 0 : index
    %119 = vector.load %arg24[%c0_75, %c0_76] : memref<1x16xf32, #tpu.memory_space<vmem>>, vector<1x16xf32>
    %120 = vector.broadcast %119 : vector<1x16xf32> to vector<2x16xf32>
    %121 = arith.addf %118, %120 : vector<2x16xf32>
    %122 = arith.index_cast %c0_i32 : i32 to index
    %c0_77 = arith.constant 0 : index
    %c0_78 = arith.constant 0 : index
    %123 = vector.load %arg25[%122, %c0_77, %c0_78] : memref<8x2x16xf32, #tpu.memory_space<vmem>>, vector<1x2x16xf32>
    %124 = vector.shape_cast %123 : vector<1x2x16xf32> to vector<2x16xf32>
    %125 = vector.shape_cast %121 : vector<2x16xf32> to vector<1x2x16xf32>
    tpu.vector_store %arg25[%122, %c0_77, %c0_78], %125 {strides = array<i32>} : memref<8x2x16xf32, #tpu.memory_space<vmem>>, vector<1x2x16xf32>,
    %c1_i32 = arith.constant 1 : i32
    %126 = arith.index_cast %c1_i32 : i32 to index
    %c0_79 = arith.constant 0 : index
    %c0_80 = arith.constant 0 : index
    %c0_81 = arith.constant 0 : index
    %127 = vector.load %arg1[%126, %c0_79, %c0_80, %c0_81] : memref<8x4x2x32xf32, #tpu.memory_space<vmem>>, vector<1x4x2x32xf32>
    %128 = vector.shape_cast %127 : vector<1x4x2x32xf32> to vector<4x2x32xf32>
    %129 = vector.extract_strided_slice %128 {offsets = [0, 0, 0], sizes = [1, 2, 32], strides = [1, 1, 1]} : vector<4x2x32xf32> to vector<1x2x32xf32>
    %130 = vector.shape_cast %129 : vector<1x2x32xf32> to vector<2x32xf32>
    %c0_82 = arith.constant 0 : index
    %c0_83 = arith.constant 0 : index
    %c0_84 = arith.constant 0 : index
    %131 = vector.load %arg4[%c0_82, %c0_83, %c0_84] : memref<4x32x32xf32, #tpu.memory_space<vmem>>, vector<1x32x32xf32>
    %132 = vector.shape_cast %131 : vector<1x32x32xf32> to vector<32x32xf32>
    %cst_85 = arith.constant dense<0.000000e+00> : vector<2x32xf32>
    %133 = tpu.matmul %75, %132, %cst_85 {dimension_numbers = #tpu.dot_dimension_numbers<[1], [0], [0], [1], [0, 0, 1, 1], [], []>} : vector<2x32xf32>, vector<32x32xf32>, vector<2x32xf32> -> vector<2x32xf32>
    %134 = arith.addf %130, %133 : vector<2x32xf32>
    %135 = arith.negf %134 : vector<2x32xf32>
    %136 = math.exp %135 : vector<2x32xf32>
    %cst_86 = arith.constant 1.000000e+00 : f32
    %137 = vector.broadcast %cst_86 : f32 to vector<2x32xf32>
    %138 = arith.addf %137, %136 : vector<2x32xf32>
    %139 = arith.divf %137, %138 : vector<2x32xf32>
    %140 = vector.extract_strided_slice %128 {offsets = [1, 0, 0], sizes = [1, 2, 32], strides = [1, 1, 1]} : vector<4x2x32xf32> to vector<1x2x32xf32>
    %141 = vector.shape_cast %140 : vector<1x2x32xf32> to vector<2x32xf32>
    %c1_87 = arith.constant 1 : index
    %c0_88 = arith.constant 0 : index
    %c0_89 = arith.constant 0 : index
    %142 = vector.load %arg4[%c1_87, %c0_88, %c0_89] : memref<4x32x32xf32, #tpu.memory_space<vmem>>, vector<1x32x32xf32>
    %143 = vector.shape_cast %142 : vector<1x32x32xf32> to vector<32x32xf32>
    %cst_90 = arith.constant dense<0.000000e+00> : vector<2x32xf32>
    %144 = tpu.matmul %75, %143, %cst_90 {dimension_numbers = #tpu.dot_dimension_numbers<[1], [0], [0], [1], [0, 0, 1, 1], [], []>} : vector<2x32xf32>, vector<32x32xf32>, vector<2x32xf32> -> vector<2x32xf32>
    %145 = arith.addf %141, %144 : vector<2x32xf32>
    %146 = arith.negf %145 : vector<2x32xf32>
    %147 = math.exp %146 : vector<2x32xf32>
    %cst_91 = arith.constant 1.000000e+00 : f32
    %148 = vector.broadcast %cst_91 : f32 to vector<2x32xf32>
    %149 = arith.addf %148, %147 : vector<2x32xf32>
    %150 = arith.divf %148, %149 : vector<2x32xf32>
    %151 = vector.extract_strided_slice %128 {offsets = [2, 0, 0], sizes = [1, 2, 32], strides = [1, 1, 1]} : vector<4x2x32xf32> to vector<1x2x32xf32>
    %152 = vector.shape_cast %151 : vector<1x2x32xf32> to vector<2x32xf32>
    %c2_92 = arith.constant 2 : index
    %c0_93 = arith.constant 0 : index
    %c0_94 = arith.constant 0 : index
    %153 = vector.load %arg4[%c2_92, %c0_93, %c0_94] : memref<4x32x32xf32, #tpu.memory_space<vmem>>, vector<1x32x32xf32>
    %154 = vector.shape_cast %153 : vector<1x32x32xf32> to vector<32x32xf32>
    %cst_95 = arith.constant dense<0.000000e+00> : vector<2x32xf32>
    %155 = tpu.matmul %75, %154, %cst_95 {dimension_numbers = #tpu.dot_dimension_numbers<[1], [0], [0], [1], [0, 0, 1, 1], [], []>} : vector<2x32xf32>, vector<32x32xf32>, vector<2x32xf32> -> vector<2x32xf32>
    %156 = arith.addf %152, %155 : vector<2x32xf32>
    %157 = math.tanh %156 : vector<2x32xf32>
    %158 = vector.extract_strided_slice %128 {offsets = [3, 0, 0], sizes = [1, 2, 32], strides = [1, 1, 1]} : vector<4x2x32xf32> to vector<1x2x32xf32>
    %159 = vector.shape_cast %158 : vector<1x2x32xf32> to vector<2x32xf32>
    %c3_96 = arith.constant 3 : index
    %c0_97 = arith.constant 0 : index
    %c0_98 = arith.constant 0 : index
    %160 = vector.load %arg4[%c3_96, %c0_97, %c0_98] : memref<4x32x32xf32, #tpu.memory_space<vmem>>, vector<1x32x32xf32>
    %161 = vector.shape_cast %160 : vector<1x32x32xf32> to vector<32x32xf32>
    %cst_99 = arith.constant dense<0.000000e+00> : vector<2x32xf32>
    %162 = tpu.matmul %75, %161, %cst_99 {dimension_numbers = #tpu.dot_dimension_numbers<[1], [0], [0], [1], [0, 0, 1, 1], [], []>} : vector<2x32xf32>, vector<32x32xf32>, vector<2x32xf32> -> vector<2x32xf32>
    %163 = arith.addf %159, %162 : vector<2x32xf32>
    %164 = arith.negf %163 : vector<2x32xf32>
    %165 = math.exp %164 : vector<2x32xf32>
    %cst_100 = arith.constant 1.000000e+00 : f32
    %166 = vector.broadcast %cst_100 : f32 to vector<2x32xf32>
    %167 = arith.addf %166, %165 : vector<2x32xf32>
    %168 = arith.divf %166, %167 : vector<2x32xf32>
    %169 = arith.mulf %150, %73 : vector<2x32xf32>
    %170 = arith.mulf %139, %157 : vector<2x32xf32>
    %171 = arith.addf %169, %170 : vector<2x32xf32>
    %172 = math.tanh %171 : vector<2x32xf32>
    %173 = arith.mulf %168, %172 : vector<2x32xf32>
    %c0_101 = arith.constant 0 : index
    %c0_102 = arith.constant 0 : index
    %174 = vector.load %arg5[%c0_101, %c0_102] : memref<32x64xf32, #tpu.memory_space<vmem>>, vector<32x64xf32>
    %cst_103 = arith.constant dense<0.000000e+00> : vector<2x64xf32>
    %175 = tpu.matmul %173, %174, %cst_103 {dimension_numbers = #tpu.dot_dimension_numbers<[1], [0], [0], [1], [0, 0, 1, 1], [], []>} : vector<2x32xf32>, vector<32x64xf32>, vector<2x64xf32> -> vector<2x64xf32>
    %c0_104 = arith.constant 0 : index
    %c0_105 = arith.constant 0 : index
    %176 = vector.load %arg6[%c0_104, %c0_105] : memref<1x64xf32, #tpu.memory_space<vmem>>, vector<1x64xf32>
    %177 = vector.broadcast %176 : vector<1x64xf32> to vector<2x64xf32>
    %178 = arith.addf %175, %177 : vector<2x64xf32>
    %179 = vector.extract_strided_slice %178 {offsets = [0, 0], sizes = [2, 32], strides = [1, 1]} : vector<2x64xf32> to vector<2x32xf32>
    %cst_106 = arith.constant dense<0.000000e+00> : vector<2x16xf32>
    %180 = tpu.matmul %179, %5, %cst_106 {dimension_numbers = #tpu.dot_dimension_numbers<[1], [0], [0], [1], [0, 0, 1, 1], [], []>} : vector<2x32xf32>, vector<32x16xf32>, vector<2x16xf32> -> vector<2x16xf32>
    %181 = arith.addf %180, %24 : vector<2x16xf32>
    %cst_107 = arith.constant dense<0xFF800000> : vector<2xf32>
    %182 = vector.multi_reduction <maximumf>, %181, %cst_107 [1] : vector<2x16xf32> to vector<2xf32>
    %183 = vector.shape_cast %182 : vector<2xf32> to vector<2x1xf32>
    %184 = vector.broadcast %183 : vector<2x1xf32> to vector<2x16xf32>
    %185 = arith.subf %181, %184 : vector<2x16xf32>
    %186 = math.exp %185 : vector<2x16xf32>
    %cst_108 = arith.constant dense<0.000000e+00> : vector<2xf32>
    %187 = vector.multi_reduction <add>, %186, %cst_108 [1] : vector<2x16xf32> to vector<2xf32>
    %188 = vector.shape_cast %187 : vector<2xf32> to vector<2x1xf32>
    %189 = tpu.reciprocal %188 {approx = true} : vector<2x1xf32> -> vector<2x1xf32>
    %190 = vector.broadcast %189 : vector<2x1xf32> to vector<2x16xf32>
    %191 = arith.mulf %186, %190 : vector<2x16xf32>
    %cst_109 = arith.constant dense<0.000000e+00> : vector<2x32xf32>
    %192 = tpu.matmul %191, %11, %cst_109 {dimension_numbers = #tpu.dot_dimension_numbers<[1], [0], [0], [1], [0, 0, 1, 1], [], []>} : vector<2x16xf32>, vector<16x32xf32>, vector<2x32xf32> -> vector<2x32xf32>
    %193 = vector.extract_strided_slice %178 {offsets = [0, 32], sizes = [2, 32], strides = [1, 1]} : vector<2x64xf32> to vector<2x32xf32>
    %cst_110 = arith.constant dense<0.000000e+00> : vector<2x8xf32>
    %194 = tpu.matmul %193, %17, %cst_110 {dimension_numbers = #tpu.dot_dimension_numbers<[1], [0], [0], [1], [0, 0, 1, 1], [], []>} : vector<2x32xf32>, vector<32x8xf32>, vector<2x8xf32> -> vector<2x8xf32>
    %195 = arith.addf %194, %25 : vector<2x8xf32>
    %cst_111 = arith.constant dense<0xFF800000> : vector<2xf32>
    %196 = vector.multi_reduction <maximumf>, %195, %cst_111 [1] : vector<2x8xf32> to vector<2xf32>
    %197 = vector.shape_cast %196 : vector<2xf32> to vector<2x1xf32>
    %198 = vector.broadcast %197 : vector<2x1xf32> to vector<2x8xf32>
    %199 = arith.subf %195, %198 : vector<2x8xf32>
    %200 = math.exp %199 : vector<2x8xf32>
    %cst_112 = arith.constant dense<0.000000e+00> : vector<2xf32>
    %201 = vector.multi_reduction <add>, %200, %cst_112 [1] : vector<2x8xf32> to vector<2xf32>
    %202 = vector.shape_cast %201 : vector<2xf32> to vector<2x1xf32>
    %203 = tpu.reciprocal %202 {approx = true} : vector<2x1xf32> -> vector<2x1xf32>
    %204 = vector.broadcast %203 : vector<2x1xf32> to vector<2x8xf32>
    %205 = arith.mulf %200, %204 : vector<2x8xf32>
    %cst_113 = arith.constant dense<0.000000e+00> : vector<2x32xf32>
    %206 = tpu.matmul %205, %23, %cst_113 {dimension_numbers = #tpu.dot_dimension_numbers<[1], [0], [0], [1], [0, 0, 1, 1], [], []>} : vector<2x8xf32>, vector<8x32xf32>, vector<2x32xf32> -> vector<2x32xf32>
    %207 = tpu.concatenate %192, %206 in 1 : vector<2x32xf32>, vector<2x32xf32> -> vector<2x64xf32>
    %c0_114 = arith.constant 0 : index
    %c0_115 = arith.constant 0 : index
    %208 = vector.load %arg21[%c0_114, %c0_115] : memref<64x64xf32, #tpu.memory_space<vmem>>, vector<64x64xf32>
    %cst_116 = arith.constant dense<0.000000e+00> : vector<2x64xf32>
    %209 = tpu.matmul %207, %208, %cst_116 {dimension_numbers = #tpu.dot_dimension_numbers<[1], [0], [0], [1], [0, 0, 1, 1], [], []>} : vector<2x64xf32>, vector<64x64xf32>, vector<2x64xf32> -> vector<2x64xf32>
    %c0_117 = arith.constant 0 : index
    %c0_118 = arith.constant 0 : index
    %210 = vector.load %arg22[%c0_117, %c0_118] : memref<1x64xf32, #tpu.memory_space<vmem>>, vector<1x64xf32>
    %211 = vector.broadcast %210 : vector<1x64xf32> to vector<2x64xf32>
    %212 = arith.addf %209, %211 : vector<2x64xf32>
    %cst_119 = arith.constant 0.000000e+00 : f32
    %213 = vector.broadcast %cst_119 : f32 to vector<2x64xf32>
    %214 = arith.maximumf %212, %213 : vector<2x64xf32>
    %c0_120 = arith.constant 0 : index
    %c0_121 = arith.constant 0 : index
    %215 = vector.load %arg23[%c0_120, %c0_121] : memref<64x16xf32, #tpu.memory_space<vmem>>, vector<64x16xf32>
    %cst_122 = arith.constant dense<0.000000e+00> : vector<2x16xf32>
    %216 = tpu.matmul %214, %215, %cst_122 {dimension_numbers = #tpu.dot_dimension_numbers<[1], [0], [0], [1], [0, 0, 1, 1], [], []>} : vector<2x64xf32>, vector<64x16xf32>, vector<2x16xf32> -> vector<2x16xf32>
    %c0_123 = arith.constant 0 : index
    %c0_124 = arith.constant 0 : index
    %217 = vector.load %arg24[%c0_123, %c0_124] : memref<1x16xf32, #tpu.memory_space<vmem>>, vector<1x16xf32>
    %218 = vector.broadcast %217 : vector<1x16xf32> to vector<2x16xf32>
    %219 = arith.addf %216, %218 : vector<2x16xf32>
    %220 = arith.index_cast %c1_i32 : i32 to index
    %c0_125 = arith.constant 0 : index
    %c0_126 = arith.constant 0 : index
    %221 = vector.load %arg25[%220, %c0_125, %c0_126] : memref<8x2x16xf32, #tpu.memory_space<vmem>>, vector<1x2x16xf32>
    %222 = vector.shape_cast %221 : vector<1x2x16xf32> to vector<2x16xf32>
    %223 = vector.shape_cast %219 : vector<2x16xf32> to vector<1x2x16xf32>
    tpu.vector_store %arg25[%220, %c0_125, %c0_126], %223 {strides = array<i32>} : memref<8x2x16xf32, #tpu.memory_space<vmem>>, vector<1x2x16xf32>,
    %c2_i32 = arith.constant 2 : i32
    %224 = arith.index_cast %c2_i32 : i32 to index
    %c0_127 = arith.constant 0 : index
    %c0_128 = arith.constant 0 : index
    %c0_129 = arith.constant 0 : index
    %225 = vector.load %arg1[%224, %c0_127, %c0_128, %c0_129] : memref<8x4x2x32xf32, #tpu.memory_space<vmem>>, vector<1x4x2x32xf32>
    %226 = vector.shape_cast %225 : vector<1x4x2x32xf32> to vector<4x2x32xf32>
    %227 = vector.extract_strided_slice %226 {offsets = [0, 0, 0], sizes = [1, 2, 32], strides = [1, 1, 1]} : vector<4x2x32xf32> to vector<1x2x32xf32>
    %228 = vector.shape_cast %227 : vector<1x2x32xf32> to vector<2x32xf32>
    %c0_130 = arith.constant 0 : index
    %c0_131 = arith.constant 0 : index
    %c0_132 = arith.constant 0 : index
    %229 = vector.load %arg4[%c0_130, %c0_131, %c0_132] : memref<4x32x32xf32, #tpu.memory_space<vmem>>, vector<1x32x32xf32>
    %230 = vector.shape_cast %229 : vector<1x32x32xf32> to vector<32x32xf32>
    %cst_133 = arith.constant dense<0.000000e+00> : vector<2x32xf32>
    %231 = tpu.matmul %173, %230, %cst_133 {dimension_numbers = #tpu.dot_dimension_numbers<[1], [0], [0], [1], [0, 0, 1, 1], [], []>} : vector<2x32xf32>, vector<32x32xf32>, vector<2x32xf32> -> vector<2x32xf32>
    %232 = arith.addf %228, %231 : vector<2x32xf32>
    %233 = arith.negf %232 : vector<2x32xf32>
    %234 = math.exp %233 : vector<2x32xf32>
    %cst_134 = arith.constant 1.000000e+00 : f32
    %235 = vector.broadcast %cst_134 : f32 to vector<2x32xf32>
    %236 = arith.addf %235, %234 : vector<2x32xf32>
    %237 = arith.divf %235, %236 : vector<2x32xf32>
    %238 = vector.extract_strided_slice %226 {offsets = [1, 0, 0], sizes = [1, 2, 32], strides = [1, 1, 1]} : vector<4x2x32xf32> to vector<1x2x32xf32>
    %239 = vector.shape_cast %238 : vector<1x2x32xf32> to vector<2x32xf32>
    %c1_135 = arith.constant 1 : index
    %c0_136 = arith.constant 0 : index
    %c0_137 = arith.constant 0 : index
    %240 = vector.load %arg4[%c1_135, %c0_136, %c0_137] : memref<4x32x32xf32, #tpu.memory_space<vmem>>, vector<1x32x32xf32>
    %241 = vector.shape_cast %240 : vector<1x32x32xf32> to vector<32x32xf32>
    %cst_138 = arith.constant dense<0.000000e+00> : vector<2x32xf32>
    %242 = tpu.matmul %173, %241, %cst_138 {dimension_numbers = #tpu.dot_dimension_numbers<[1], [0], [0], [1], [0, 0, 1, 1], [], []>} : vector<2x32xf32>, vector<32x32xf32>, vector<2x32xf32> -> vector<2x32xf32>
    %243 = arith.addf %239, %242 : vector<2x32xf32>
    %244 = arith.negf %243 : vector<2x32xf32>
    %245 = math.exp %244 : vector<2x32xf32>
    %cst_139 = arith.constant 1.000000e+00 : f32
    %246 = vector.broadcast %cst_139 : f32 to vector<2x32xf32>
    %247 = arith.addf %246, %245 : vector<2x32xf32>
    %248 = arith.divf %246, %247 : vector<2x32xf32>
    %249 = vector.extract_strided_slice %226 {offsets = [2, 0, 0], sizes = [1, 2, 32], strides = [1, 1, 1]} : vector<4x2x32xf32> to vector<1x2x32xf32>
    %250 = vector.shape_cast %249 : vector<1x2x32xf32> to vector<2x32xf32>
    %c2_140 = arith.constant 2 : index
    %c0_141 = arith.constant 0 : index
    %c0_142 = arith.constant 0 : index
    %251 = vector.load %arg4[%c2_140, %c0_141, %c0_142] : memref<4x32x32xf32, #tpu.memory_space<vmem>>, vector<1x32x32xf32>
    %252 = vector.shape_cast %251 : vector<1x32x32xf32> to vector<32x32xf32>
    %cst_143 = arith.constant dense<0.000000e+00> : vector<2x32xf32>
    %253 = tpu.matmul %173, %252, %cst_143 {dimension_numbers = #tpu.dot_dimension_numbers<[1], [0], [0], [1], [0, 0, 1, 1], [], []>} : vector<2x32xf32>, vector<32x32xf32>, vector<2x32xf32> -> vector<2x32xf32>
    %254 = arith.addf %250, %253 : vector<2x32xf32>
    %255 = math.tanh %254 : vector<2x32xf32>
    %256 = vector.extract_strided_slice %226 {offsets = [3, 0, 0], sizes = [1, 2, 32], strides = [1, 1, 1]} : vector<4x2x32xf32> to vector<1x2x32xf32>
    %257 = vector.shape_cast %256 : vector<1x2x32xf32> to vector<2x32xf32>
    %c3_144 = arith.constant 3 : index
    %c0_145 = arith.constant 0 : index
    %c0_146 = arith.constant 0 : index
    %258 = vector.load %arg4[%c3_144, %c0_145, %c0_146] : memref<4x32x32xf32, #tpu.memory_space<vmem>>, vector<1x32x32xf32>
    %259 = vector.shape_cast %258 : vector<1x32x32xf32> to vector<32x32xf32>
    %cst_147 = arith.constant dense<0.000000e+00> : vector<2x32xf32>
    %260 = tpu.matmul %173, %259, %cst_147 {dimension_numbers = #tpu.dot_dimension_numbers<[1], [0], [0], [1], [0, 0, 1, 1], [], []>} : vector<2x32xf32>, vector<32x32xf32>, vector<2x32xf32> -> vector<2x32xf32>
    %261 = arith.addf %257, %260 : vector<2x32xf32>
    %262 = arith.negf %261 : vector<2x32xf32>
    %263 = math.exp %262 : vector<2x32xf32>
    %cst_148 = arith.constant 1.000000e+00 : f32
    %264 = vector.broadcast %cst_148 : f32 to vector<2x32xf32>
    %265 = arith.addf %264, %263 : vector<2x32xf32>
    %266 = arith.divf %264, %265 : vector<2x32xf32>
    %267 = arith.mulf %248, %171 : vector<2x32xf32>
    %268 = arith.mulf %237, %255 : vector<2x32xf32>
    %269 = arith.addf %267, %268 : vector<2x32xf32>
    %270 = math.tanh %269 : vector<2x32xf32>
    %271 = arith.mulf %266, %270 : vector<2x32xf32>
    %c0_149 = arith.constant 0 : index
    %c0_150 = arith.constant 0 : index
    %272 = vector.load %arg5[%c0_149, %c0_150] : memref<32x64xf32, #tpu.memory_space<vmem>>, vector<32x64xf32>
    %cst_151 = arith.constant dense<0.000000e+00> : vector<2x64xf32>
    %273 = tpu.matmul %271, %272, %cst_151 {dimension_numbers = #tpu.dot_dimension_numbers<[1], [0], [0], [1], [0, 0, 1, 1], [], []>} : vector<2x32xf32>, vector<32x64xf32>, vector<2x64xf32> -> vector<2x64xf32>
    %c0_152 = arith.constant 0 : index
    %c0_153 = arith.constant 0 : index
    %274 = vector.load %arg6[%c0_152, %c0_153] : memref<1x64xf32, #tpu.memory_space<vmem>>, vector<1x64xf32>
    %275 = vector.broadcast %274 : vector<1x64xf32> to vector<2x64xf32>
    %276 = arith.addf %273, %275 : vector<2x64xf32>
    %277 = vector.extract_strided_slice %276 {offsets = [0, 0], sizes = [2, 32], strides = [1, 1]} : vector<2x64xf32> to vector<2x32xf32>
    %cst_154 = arith.constant dense<0.000000e+00> : vector<2x16xf32>
    %278 = tpu.matmul %277, %5, %cst_154 {dimension_numbers = #tpu.dot_dimension_numbers<[1], [0], [0], [1], [0, 0, 1, 1], [], []>} : vector<2x32xf32>, vector<32x16xf32>, vector<2x16xf32> -> vector<2x16xf32>
    %279 = arith.addf %278, %24 : vector<2x16xf32>
    %cst_155 = arith.constant dense<0xFF800000> : vector<2xf32>
    %280 = vector.multi_reduction <maximumf>, %279, %cst_155 [1] : vector<2x16xf32> to vector<2xf32>
    %281 = vector.shape_cast %280 : vector<2xf32> to vector<2x1xf32>
    %282 = vector.broadcast %281 : vector<2x1xf32> to vector<2x16xf32>
    %283 = arith.subf %279, %282 : vector<2x16xf32>
    %284 = math.exp %283 : vector<2x16xf32>
    %cst_156 = arith.constant dense<0.000000e+00> : vector<2xf32>
    %285 = vector.multi_reduction <add>, %284, %cst_156 [1] : vector<2x16xf32> to vector<2xf32>
    %286 = vector.shape_cast %285 : vector<2xf32> to vector<2x1xf32>
    %287 = tpu.reciprocal %286 {approx = true} : vector<2x1xf32> -> vector<2x1xf32>
    %288 = vector.broadcast %287 : vector<2x1xf32> to vector<2x16xf32>
    %289 = arith.mulf %284, %288 : vector<2x16xf32>
    %cst_157 = arith.constant dense<0.000000e+00> : vector<2x32xf32>
    %290 = tpu.matmul %289, %11, %cst_157 {dimension_numbers = #tpu.dot_dimension_numbers<[1], [0], [0], [1], [0, 0, 1, 1], [], []>} : vector<2x16xf32>, vector<16x32xf32>, vector<2x32xf32> -> vector<2x32xf32>
    %291 = vector.extract_strided_slice %276 {offsets = [0, 32], sizes = [2, 32], strides = [1, 1]} : vector<2x64xf32> to vector<2x32xf32>
    %cst_158 = arith.constant dense<0.000000e+00> : vector<2x8xf32>
    %292 = tpu.matmul %291, %17, %cst_158 {dimension_numbers = #tpu.dot_dimension_numbers<[1], [0], [0], [1], [0, 0, 1, 1], [], []>} : vector<2x32xf32>, vector<32x8xf32>, vector<2x8xf32> -> vector<2x8xf32>
    %293 = arith.addf %292, %25 : vector<2x8xf32>
    %cst_159 = arith.constant dense<0xFF800000> : vector<2xf32>
    %294 = vector.multi_reduction <maximumf>, %293, %cst_159 [1] : vector<2x8xf32> to vector<2xf32>
    %295 = vector.shape_cast %294 : vector<2xf32> to vector<2x1xf32>
    %296 = vector.broadcast %295 : vector<2x1xf32> to vector<2x8xf32>
    %297 = arith.subf %293, %296 : vector<2x8xf32>
    %298 = math.exp %297 : vector<2x8xf32>
    %cst_160 = arith.constant dense<0.000000e+00> : vector<2xf32>
    %299 = vector.multi_reduction <add>, %298, %cst_160 [1] : vector<2x8xf32> to vector<2xf32>
    %300 = vector.shape_cast %299 : vector<2xf32> to vector<2x1xf32>
    %301 = tpu.reciprocal %300 {approx = true} : vector<2x1xf32> -> vector<2x1xf32>
    %302 = vector.broadcast %301 : vector<2x1xf32> to vector<2x8xf32>
    %303 = arith.mulf %298, %302 : vector<2x8xf32>
    %cst_161 = arith.constant dense<0.000000e+00> : vector<2x32xf32>
    %304 = tpu.matmul %303, %23, %cst_161 {dimension_numbers = #tpu.dot_dimension_numbers<[1], [0], [0], [1], [0, 0, 1, 1], [], []>} : vector<2x8xf32>, vector<8x32xf32>, vector<2x32xf32> -> vector<2x32xf32>
    %305 = tpu.concatenate %290, %304 in 1 : vector<2x32xf32>, vector<2x32xf32> -> vector<2x64xf32>
    %c0_162 = arith.constant 0 : index
    %c0_163 = arith.constant 0 : index
    %306 = vector.load %arg21[%c0_162, %c0_163] : memref<64x64xf32, #tpu.memory_space<vmem>>, vector<64x64xf32>
    %cst_164 = arith.constant dense<0.000000e+00> : vector<2x64xf32>
    %307 = tpu.matmul %305, %306, %cst_164 {dimension_numbers = #tpu.dot_dimension_numbers<[1], [0], [0], [1], [0, 0, 1, 1], [], []>} : vector<2x64xf32>, vector<64x64xf32>, vector<2x64xf32> -> vector<2x64xf32>
    %c0_165 = arith.constant 0 : index
    %c0_166 = arith.constant 0 : index
    %308 = vector.load %arg22[%c0_165, %c0_166] : memref<1x64xf32, #tpu.memory_space<vmem>>, vector<1x64xf32>
    %309 = vector.broadcast %308 : vector<1x64xf32> to vector<2x64xf32>
    %310 = arith.addf %307, %309 : vector<2x64xf32>
    %cst_167 = arith.constant 0.000000e+00 : f32
    %311 = vector.broadcast %cst_167 : f32 to vector<2x64xf32>
    %312 = arith.maximumf %310, %311 : vector<2x64xf32>
    %c0_168 = arith.constant 0 : index
    %c0_169 = arith.constant 0 : index
    %313 = vector.load %arg23[%c0_168, %c0_169] : memref<64x16xf32, #tpu.memory_space<vmem>>, vector<64x16xf32>
    %cst_170 = arith.constant dense<0.000000e+00> : vector<2x16xf32>
    %314 = tpu.matmul %312, %313, %cst_170 {dimension_numbers = #tpu.dot_dimension_numbers<[1], [0], [0], [1], [0, 0, 1, 1], [], []>} : vector<2x64xf32>, vector<64x16xf32>, vector<2x16xf32> -> vector<2x16xf32>
    %c0_171 = arith.constant 0 : index
    %c0_172 = arith.constant 0 : index
    %315 = vector.load %arg24[%c0_171, %c0_172] : memref<1x16xf32, #tpu.memory_space<vmem>>, vector<1x16xf32>
    %316 = vector.broadcast %315 : vector<1x16xf32> to vector<2x16xf32>
    %317 = arith.addf %314, %316 : vector<2x16xf32>
    %318 = arith.index_cast %c2_i32 : i32 to index
    %c0_173 = arith.constant 0 : index
    %c0_174 = arith.constant 0 : index
    %319 = vector.load %arg25[%318, %c0_173, %c0_174] : memref<8x2x16xf32, #tpu.memory_space<vmem>>, vector<1x2x16xf32>
    %320 = vector.shape_cast %319 : vector<1x2x16xf32> to vector<2x16xf32>
    %321 = vector.shape_cast %317 : vector<2x16xf32> to vector<1x2x16xf32>
    tpu.vector_store %arg25[%318, %c0_173, %c0_174], %321 {strides = array<i32>} : memref<8x2x16xf32, #tpu.memory_space<vmem>>, vector<1x2x16xf32>,
    %c3_i32 = arith.constant 3 : i32
    %322 = arith.index_cast %c3_i32 : i32 to index
    %c0_175 = arith.constant 0 : index
    %c0_176 = arith.constant 0 : index
    %c0_177 = arith.constant 0 : index
    %323 = vector.load %arg1[%322, %c0_175, %c0_176, %c0_177] : memref<8x4x2x32xf32, #tpu.memory_space<vmem>>, vector<1x4x2x32xf32>
    %324 = vector.shape_cast %323 : vector<1x4x2x32xf32> to vector<4x2x32xf32>
    %325 = vector.extract_strided_slice %324 {offsets = [0, 0, 0], sizes = [1, 2, 32], strides = [1, 1, 1]} : vector<4x2x32xf32> to vector<1x2x32xf32>
    %326 = vector.shape_cast %325 : vector<1x2x32xf32> to vector<2x32xf32>
    %c0_178 = arith.constant 0 : index
    %c0_179 = arith.constant 0 : index
    %c0_180 = arith.constant 0 : index
    %327 = vector.load %arg4[%c0_178, %c0_179, %c0_180] : memref<4x32x32xf32, #tpu.memory_space<vmem>>, vector<1x32x32xf32>
    %328 = vector.shape_cast %327 : vector<1x32x32xf32> to vector<32x32xf32>
    %cst_181 = arith.constant dense<0.000000e+00> : vector<2x32xf32>
    %329 = tpu.matmul %271, %328, %cst_181 {dimension_numbers = #tpu.dot_dimension_numbers<[1], [0], [0], [1], [0, 0, 1, 1], [], []>} : vector<2x32xf32>, vector<32x32xf32>, vector<2x32xf32> -> vector<2x32xf32>
    %330 = arith.addf %326, %329 : vector<2x32xf32>
    %331 = arith.negf %330 : vector<2x32xf32>
    %332 = math.exp %331 : vector<2x32xf32>
    %cst_182 = arith.constant 1.000000e+00 : f32
    %333 = vector.broadcast %cst_182 : f32 to vector<2x32xf32>
    %334 = arith.addf %333, %332 : vector<2x32xf32>
    %335 = arith.divf %333, %334 : vector<2x32xf32>
    %336 = vector.extract_strided_slice %324 {offsets = [1, 0, 0], sizes = [1, 2, 32], strides = [1, 1, 1]} : vector<4x2x32xf32> to vector<1x2x32xf32>
    %337 = vector.shape_cast %336 : vector<1x2x32xf32> to vector<2x32xf32>
    %c1_183 = arith.constant 1 : index
    %c0_184 = arith.constant 0 : index
    %c0_185 = arith.constant 0 : index
    %338 = vector.load %arg4[%c1_183, %c0_184, %c0_185] : memref<4x32x32xf32, #tpu.memory_space<vmem>>, vector<1x32x32xf32>
    %339 = vector.shape_cast %338 : vector<1x32x32xf32> to vector<32x32xf32>
    %cst_186 = arith.constant dense<0.000000e+00> : vector<2x32xf32>
    %340 = tpu.matmul %271, %339, %cst_186 {dimension_numbers = #tpu.dot_dimension_numbers<[1], [0], [0], [1], [0, 0, 1, 1], [], []>} : vector<2x32xf32>, vector<32x32xf32>, vector<2x32xf32> -> vector<2x32xf32>
    %341 = arith.addf %337, %340 : vector<2x32xf32>
    %342 = arith.negf %341 : vector<2x32xf32>
    %343 = math.exp %342 : vector<2x32xf32>
    %cst_187 = arith.constant 1.000000e+00 : f32
    %344 = vector.broadcast %cst_187 : f32 to vector<2x32xf32>
    %345 = arith.addf %344, %343 : vector<2x32xf32>
    %346 = arith.divf %344, %345 : vector<2x32xf32>
    %347 = vector.extract_strided_slice %324 {offsets = [2, 0, 0], sizes = [1, 2, 32], strides = [1, 1, 1]} : vector<4x2x32xf32> to vector<1x2x32xf32>
    %348 = vector.shape_cast %347 : vector<1x2x32xf32> to vector<2x32xf32>
    %c2_188 = arith.constant 2 : index
    %c0_189 = arith.constant 0 : index
    %c0_190 = arith.constant 0 : index
    %349 = vector.load %arg4[%c2_188, %c0_189, %c0_190] : memref<4x32x32xf32, #tpu.memory_space<vmem>>, vector<1x32x32xf32>
    %350 = vector.shape_cast %349 : vector<1x32x32xf32> to vector<32x32xf32>
    %cst_191 = arith.constant dense<0.000000e+00> : vector<2x32xf32>
    %351 = tpu.matmul %271, %350, %cst_191 {dimension_numbers = #tpu.dot_dimension_numbers<[1], [0], [0], [1], [0, 0, 1, 1], [], []>} : vector<2x32xf32>, vector<32x32xf32>, vector<2x32xf32> -> vector<2x32xf32>
    %352 = arith.addf %348, %351 : vector<2x32xf32>
    %353 = math.tanh %352 : vector<2x32xf32>
    %354 = vector.extract_strided_slice %324 {offsets = [3, 0, 0], sizes = [1, 2, 32], strides = [1, 1, 1]} : vector<4x2x32xf32> to vector<1x2x32xf32>
    %355 = vector.shape_cast %354 : vector<1x2x32xf32> to vector<2x32xf32>
    %c3_192 = arith.constant 3 : index
    %c0_193 = arith.constant 0 : index
    %c0_194 = arith.constant 0 : index
    %356 = vector.load %arg4[%c3_192, %c0_193, %c0_194] : memref<4x32x32xf32, #tpu.memory_space<vmem>>, vector<1x32x32xf32>
    %357 = vector.shape_cast %356 : vector<1x32x32xf32> to vector<32x32xf32>
    %cst_195 = arith.constant dense<0.000000e+00> : vector<2x32xf32>
    %358 = tpu.matmul %271, %357, %cst_195 {dimension_numbers = #tpu.dot_dimension_numbers<[1], [0], [0], [1], [0, 0, 1, 1], [], []>} : vector<2x32xf32>, vector<32x32xf32>, vector<2x32xf32> -> vector<2x32xf32>
    %359 = arith.addf %355, %358 : vector<2x32xf32>
    %360 = arith.negf %359 : vector<2x32xf32>
    %361 = math.exp %360 : vector<2x32xf32>
    %cst_196 = arith.constant 1.000000e+00 : f32
    %362 = vector.broadcast %cst_196 : f32 to vector<2x32xf32>
    %363 = arith.addf %362, %361 : vector<2x32xf32>
    %364 = arith.divf %362, %363 : vector<2x32xf32>
    %365 = arith.mulf %346, %269 : vector<2x32xf32>
    %366 = arith.mulf %335, %353 : vector<2x32xf32>
    %367 = arith.addf %365, %366 : vector<2x32xf32>
    %368 = math.tanh %367 : vector<2x32xf32>
    %369 = arith.mulf %364, %368 : vector<2x32xf32>
    %c0_197 = arith.constant 0 : index
    %c0_198 = arith.constant 0 : index
    %370 = vector.load %arg5[%c0_197, %c0_198] : memref<32x64xf32, #tpu.memory_space<vmem>>, vector<32x64xf32>
    %cst_199 = arith.constant dense<0.000000e+00> : vector<2x64xf32>
    %371 = tpu.matmul %369, %370, %cst_199 {dimension_numbers = #tpu.dot_dimension_numbers<[1], [0], [0], [1], [0, 0, 1, 1], [], []>} : vector<2x32xf32>, vector<32x64xf32>, vector<2x64xf32> -> vector<2x64xf32>
    %c0_200 = arith.constant 0 : index
    %c0_201 = arith.constant 0 : index
    %372 = vector.load %arg6[%c0_200, %c0_201] : memref<1x64xf32, #tpu.memory_space<vmem>>, vector<1x64xf32>
    %373 = vector.broadcast %372 : vector<1x64xf32> to vector<2x64xf32>
    %374 = arith.addf %371, %373 : vector<2x64xf32>
    %375 = vector.extract_strided_slice %374 {offsets = [0, 0], sizes = [2, 32], strides = [1, 1]} : vector<2x64xf32> to vector<2x32xf32>
    %cst_202 = arith.constant dense<0.000000e+00> : vector<2x16xf32>
    %376 = tpu.matmul %375, %5, %cst_202 {dimension_numbers = #tpu.dot_dimension_numbers<[1], [0], [0], [1], [0, 0, 1, 1], [], []>} : vector<2x32xf32>, vector<32x16xf32>, vector<2x16xf32> -> vector<2x16xf32>
    %377 = arith.addf %376, %24 : vector<2x16xf32>
    %cst_203 = arith.constant dense<0xFF800000> : vector<2xf32>
    %378 = vector.multi_reduction <maximumf>, %377, %cst_203 [1] : vector<2x16xf32> to vector<2xf32>
    %379 = vector.shape_cast %378 : vector<2xf32> to vector<2x1xf32>
    %380 = vector.broadcast %379 : vector<2x1xf32> to vector<2x16xf32>
    %381 = arith.subf %377, %380 : vector<2x16xf32>
    %382 = math.exp %381 : vector<2x16xf32>
    %cst_204 = arith.constant dense<0.000000e+00> : vector<2xf32>
    %383 = vector.multi_reduction <add>, %382, %cst_204 [1] : vector<2x16xf32> to vector<2xf32>
    %384 = vector.shape_cast %383 : vector<2xf32> to vector<2x1xf32>
    %385 = tpu.reciprocal %384 {approx = true} : vector<2x1xf32> -> vector<2x1xf32>
    %386 = vector.broadcast %385 : vector<2x1xf32> to vector<2x16xf32>
    %387 = arith.mulf %382, %386 : vector<2x16xf32>
    %cst_205 = arith.constant dense<0.000000e+00> : vector<2x32xf32>
    %388 = tpu.matmul %387, %11, %cst_205 {dimension_numbers = #tpu.dot_dimension_numbers<[1], [0], [0], [1], [0, 0, 1, 1], [], []>} : vector<2x16xf32>, vector<16x32xf32>, vector<2x32xf32> -> vector<2x32xf32>
    %389 = vector.extract_strided_slice %374 {offsets = [0, 32], sizes = [2, 32], strides = [1, 1]} : vector<2x64xf32> to vector<2x32xf32>
    %cst_206 = arith.constant dense<0.000000e+00> : vector<2x8xf32>
    %390 = tpu.matmul %389, %17, %cst_206 {dimension_numbers = #tpu.dot_dimension_numbers<[1], [0], [0], [1], [0, 0, 1, 1], [], []>} : vector<2x32xf32>, vector<32x8xf32>, vector<2x8xf32> -> vector<2x8xf32>
    %391 = arith.addf %390, %25 : vector<2x8xf32>
    %cst_207 = arith.constant dense<0xFF800000> : vector<2xf32>
    %392 = vector.multi_reduction <maximumf>, %391, %cst_207 [1] : vector<2x8xf32> to vector<2xf32>
    %393 = vector.shape_cast %392 : vector<2xf32> to vector<2x1xf32>
    %394 = vector.broadcast %393 : vector<2x1xf32> to vector<2x8xf32>
    %395 = arith.subf %391, %394 : vector<2x8xf32>
    %396 = math.exp %395 : vector<2x8xf32>
    %cst_208 = arith.constant dense<0.000000e+00> : vector<2xf32>
    %397 = vector.multi_reduction <add>, %396, %cst_208 [1] : vector<2x8xf32> to vector<2xf32>
    %398 = vector.shape_cast %397 : vector<2xf32> to vector<2x1xf32>
    %399 = tpu.reciprocal %398 {approx = true} : vector<2x1xf32> -> vector<2x1xf32>
    %400 = vector.broadcast %399 : vector<2x1xf32> to vector<2x8xf32>
    %401 = arith.mulf %396, %400 : vector<2x8xf32>
    %cst_209 = arith.constant dense<0.000000e+00> : vector<2x32xf32>
    %402 = tpu.matmul %401, %23, %cst_209 {dimension_numbers = #tpu.dot_dimension_numbers<[1], [0], [0], [1], [0, 0, 1, 1], [], []>} : vector<2x8xf32>, vector<8x32xf32>, vector<2x32xf32> -> vector<2x32xf32>
    %403 = tpu.concatenate %388, %402 in 1 : vector<2x32xf32>, vector<2x32xf32> -> vector<2x64xf32>
    %c0_210 = arith.constant 0 : index
    %c0_211 = arith.constant 0 : index
    %404 = vector.load %arg21[%c0_210, %c0_211] : memref<64x64xf32, #tpu.memory_space<vmem>>, vector<64x64xf32>
    %cst_212 = arith.constant dense<0.000000e+00> : vector<2x64xf32>
    %405 = tpu.matmul %403, %404, %cst_212 {dimension_numbers = #tpu.dot_dimension_numbers<[1], [0], [0], [1], [0, 0, 1, 1], [], []>} : vector<2x64xf32>, vector<64x64xf32>, vector<2x64xf32> -> vector<2x64xf32>
    %c0_213 = arith.constant 0 : index
    %c0_214 = arith.constant 0 : index
    %406 = vector.load %arg22[%c0_213, %c0_214] : memref<1x64xf32, #tpu.memory_space<vmem>>, vector<1x64xf32>
    %407 = vector.broadcast %406 : vector<1x64xf32> to vector<2x64xf32>
    %408 = arith.addf %405, %407 : vector<2x64xf32>
    %cst_215 = arith.constant 0.000000e+00 : f32
    %409 = vector.broadcast %cst_215 : f32 to vector<2x64xf32>
    %410 = arith.maximumf %408, %409 : vector<2x64xf32>
    %c0_216 = arith.constant 0 : index
    %c0_217 = arith.constant 0 : index
    %411 = vector.load %arg23[%c0_216, %c0_217] : memref<64x16xf32, #tpu.memory_space<vmem>>, vector<64x16xf32>
    %cst_218 = arith.constant dense<0.000000e+00> : vector<2x16xf32>
    %412 = tpu.matmul %410, %411, %cst_218 {dimension_numbers = #tpu.dot_dimension_numbers<[1], [0], [0], [1], [0, 0, 1, 1], [], []>} : vector<2x64xf32>, vector<64x16xf32>, vector<2x16xf32> -> vector<2x16xf32>
    %c0_219 = arith.constant 0 : index
    %c0_220 = arith.constant 0 : index
    %413 = vector.load %arg24[%c0_219, %c0_220] : memref<1x16xf32, #tpu.memory_space<vmem>>, vector<1x16xf32>
    %414 = vector.broadcast %413 : vector<1x16xf32> to vector<2x16xf32>
    %415 = arith.addf %412, %414 : vector<2x16xf32>
    %416 = arith.index_cast %c3_i32 : i32 to index
    %c0_221 = arith.constant 0 : index
    %c0_222 = arith.constant 0 : index
    %417 = vector.load %arg25[%416, %c0_221, %c0_222] : memref<8x2x16xf32, #tpu.memory_space<vmem>>, vector<1x2x16xf32>
    %418 = vector.shape_cast %417 : vector<1x2x16xf32> to vector<2x16xf32>
    %419 = vector.shape_cast %415 : vector<2x16xf32> to vector<1x2x16xf32>
    tpu.vector_store %arg25[%416, %c0_221, %c0_222], %419 {strides = array<i32>} : memref<8x2x16xf32, #tpu.memory_space<vmem>>, vector<1x2x16xf32>,
    %c4_i32 = arith.constant 4 : i32
    %420 = arith.index_cast %c4_i32 : i32 to index
    %c0_223 = arith.constant 0 : index
    %c0_224 = arith.constant 0 : index
    %c0_225 = arith.constant 0 : index
    %421 = vector.load %arg1[%420, %c0_223, %c0_224, %c0_225] : memref<8x4x2x32xf32, #tpu.memory_space<vmem>>, vector<1x4x2x32xf32>
    %422 = vector.shape_cast %421 : vector<1x4x2x32xf32> to vector<4x2x32xf32>
    %423 = vector.extract_strided_slice %422 {offsets = [0, 0, 0], sizes = [1, 2, 32], strides = [1, 1, 1]} : vector<4x2x32xf32> to vector<1x2x32xf32>
    %424 = vector.shape_cast %423 : vector<1x2x32xf32> to vector<2x32xf32>
    %c0_226 = arith.constant 0 : index
    %c0_227 = arith.constant 0 : index
    %c0_228 = arith.constant 0 : index
    %425 = vector.load %arg4[%c0_226, %c0_227, %c0_228] : memref<4x32x32xf32, #tpu.memory_space<vmem>>, vector<1x32x32xf32>
    %426 = vector.shape_cast %425 : vector<1x32x32xf32> to vector<32x32xf32>
    %cst_229 = arith.constant dense<0.000000e+00> : vector<2x32xf32>
    %427 = tpu.matmul %369, %426, %cst_229 {dimension_numbers = #tpu.dot_dimension_numbers<[1], [0], [0], [1], [0, 0, 1, 1], [], []>} : vector<2x32xf32>, vector<32x32xf32>, vector<2x32xf32> -> vector<2x32xf32>
    %428 = arith.addf %424, %427 : vector<2x32xf32>
    %429 = arith.negf %428 : vector<2x32xf32>
    %430 = math.exp %429 : vector<2x32xf32>
    %cst_230 = arith.constant 1.000000e+00 : f32
    %431 = vector.broadcast %cst_230 : f32 to vector<2x32xf32>
    %432 = arith.addf %431, %430 : vector<2x32xf32>
    %433 = arith.divf %431, %432 : vector<2x32xf32>
    %434 = vector.extract_strided_slice %422 {offsets = [1, 0, 0], sizes = [1, 2, 32], strides = [1, 1, 1]} : vector<4x2x32xf32> to vector<1x2x32xf32>
    %435 = vector.shape_cast %434 : vector<1x2x32xf32> to vector<2x32xf32>
    %c1_231 = arith.constant 1 : index
    %c0_232 = arith.constant 0 : index
    %c0_233 = arith.constant 0 : index
    %436 = vector.load %arg4[%c1_231, %c0_232, %c0_233] : memref<4x32x32xf32, #tpu.memory_space<vmem>>, vector<1x32x32xf32>
    %437 = vector.shape_cast %436 : vector<1x32x32xf32> to vector<32x32xf32>
    %cst_234 = arith.constant dense<0.000000e+00> : vector<2x32xf32>
    %438 = tpu.matmul %369, %437, %cst_234 {dimension_numbers = #tpu.dot_dimension_numbers<[1], [0], [0], [1], [0, 0, 1, 1], [], []>} : vector<2x32xf32>, vector<32x32xf32>, vector<2x32xf32> -> vector<2x32xf32>
    %439 = arith.addf %435, %438 : vector<2x32xf32>
    %440 = arith.negf %439 : vector<2x32xf32>
    %441 = math.exp %440 : vector<2x32xf32>
    %cst_235 = arith.constant 1.000000e+00 : f32
    %442 = vector.broadcast %cst_235 : f32 to vector<2x32xf32>
    %443 = arith.addf %442, %441 : vector<2x32xf32>
    %444 = arith.divf %442, %443 : vector<2x32xf32>
    %445 = vector.extract_strided_slice %422 {offsets = [2, 0, 0], sizes = [1, 2, 32], strides = [1, 1, 1]} : vector<4x2x32xf32> to vector<1x2x32xf32>
    %446 = vector.shape_cast %445 : vector<1x2x32xf32> to vector<2x32xf32>
    %c2_236 = arith.constant 2 : index
    %c0_237 = arith.constant 0 : index
    %c0_238 = arith.constant 0 : index
    %447 = vector.load %arg4[%c2_236, %c0_237, %c0_238] : memref<4x32x32xf32, #tpu.memory_space<vmem>>, vector<1x32x32xf32>
    %448 = vector.shape_cast %447 : vector<1x32x32xf32> to vector<32x32xf32>
    %cst_239 = arith.constant dense<0.000000e+00> : vector<2x32xf32>
    %449 = tpu.matmul %369, %448, %cst_239 {dimension_numbers = #tpu.dot_dimension_numbers<[1], [0], [0], [1], [0, 0, 1, 1], [], []>} : vector<2x32xf32>, vector<32x32xf32>, vector<2x32xf32> -> vector<2x32xf32>
    %450 = arith.addf %446, %449 : vector<2x32xf32>
    %451 = math.tanh %450 : vector<2x32xf32>
    %452 = vector.extract_strided_slice %422 {offsets = [3, 0, 0], sizes = [1, 2, 32], strides = [1, 1, 1]} : vector<4x2x32xf32> to vector<1x2x32xf32>
    %453 = vector.shape_cast %452 : vector<1x2x32xf32> to vector<2x32xf32>
    %c3_240 = arith.constant 3 : index
    %c0_241 = arith.constant 0 : index
    %c0_242 = arith.constant 0 : index
    %454 = vector.load %arg4[%c3_240, %c0_241, %c0_242] : memref<4x32x32xf32, #tpu.memory_space<vmem>>, vector<1x32x32xf32>
    %455 = vector.shape_cast %454 : vector<1x32x32xf32> to vector<32x32xf32>
    %cst_243 = arith.constant dense<0.000000e+00> : vector<2x32xf32>
    %456 = tpu.matmul %369, %455, %cst_243 {dimension_numbers = #tpu.dot_dimension_numbers<[1], [0], [0], [1], [0, 0, 1, 1], [], []>} : vector<2x32xf32>, vector<32x32xf32>, vector<2x32xf32> -> vector<2x32xf32>
    %457 = arith.addf %453, %456 : vector<2x32xf32>
    %458 = arith.negf %457 : vector<2x32xf32>
    %459 = math.exp %458 : vector<2x32xf32>
    %cst_244 = arith.constant 1.000000e+00 : f32
    %460 = vector.broadcast %cst_244 : f32 to vector<2x32xf32>
    %461 = arith.addf %460, %459 : vector<2x32xf32>
    %462 = arith.divf %460, %461 : vector<2x32xf32>
    %463 = arith.mulf %444, %367 : vector<2x32xf32>
    %464 = arith.mulf %433, %451 : vector<2x32xf32>
    %465 = arith.addf %463, %464 : vector<2x32xf32>
    %466 = math.tanh %465 : vector<2x32xf32>
    %467 = arith.mulf %462, %466 : vector<2x32xf32>
    %c0_245 = arith.constant 0 : index
    %c0_246 = arith.constant 0 : index
    %468 = vector.load %arg5[%c0_245, %c0_246] : memref<32x64xf32, #tpu.memory_space<vmem>>, vector<32x64xf32>
    %cst_247 = arith.constant dense<0.000000e+00> : vector<2x64xf32>
    %469 = tpu.matmul %467, %468, %cst_247 {dimension_numbers = #tpu.dot_dimension_numbers<[1], [0], [0], [1], [0, 0, 1, 1], [], []>} : vector<2x32xf32>, vector<32x64xf32>, vector<2x64xf32> -> vector<2x64xf32>
    %c0_248 = arith.constant 0 : index
    %c0_249 = arith.constant 0 : index
    %470 = vector.load %arg6[%c0_248, %c0_249] : memref<1x64xf32, #tpu.memory_space<vmem>>, vector<1x64xf32>
    %471 = vector.broadcast %470 : vector<1x64xf32> to vector<2x64xf32>
    %472 = arith.addf %469, %471 : vector<2x64xf32>
    %473 = vector.extract_strided_slice %472 {offsets = [0, 0], sizes = [2, 32], strides = [1, 1]} : vector<2x64xf32> to vector<2x32xf32>
    %cst_250 = arith.constant dense<0.000000e+00> : vector<2x16xf32>
    %474 = tpu.matmul %473, %5, %cst_250 {dimension_numbers = #tpu.dot_dimension_numbers<[1], [0], [0], [1], [0, 0, 1, 1], [], []>} : vector<2x32xf32>, vector<32x16xf32>, vector<2x16xf32> -> vector<2x16xf32>
    %475 = arith.addf %474, %24 : vector<2x16xf32>
    %cst_251 = arith.constant dense<0xFF800000> : vector<2xf32>
    %476 = vector.multi_reduction <maximumf>, %475, %cst_251 [1] : vector<2x16xf32> to vector<2xf32>
    %477 = vector.shape_cast %476 : vector<2xf32> to vector<2x1xf32>
    %478 = vector.broadcast %477 : vector<2x1xf32> to vector<2x16xf32>
    %479 = arith.subf %475, %478 : vector<2x16xf32>
    %480 = math.exp %479 : vector<2x16xf32>
    %cst_252 = arith.constant dense<0.000000e+00> : vector<2xf32>
    %481 = vector.multi_reduction <add>, %480, %cst_252 [1] : vector<2x16xf32> to vector<2xf32>
    %482 = vector.shape_cast %481 : vector<2xf32> to vector<2x1xf32>
    %483 = tpu.reciprocal %482 {approx = true} : vector<2x1xf32> -> vector<2x1xf32>
    %484 = vector.broadcast %483 : vector<2x1xf32> to vector<2x16xf32>
    %485 = arith.mulf %480, %484 : vector<2x16xf32>
    %cst_253 = arith.constant dense<0.000000e+00> : vector<2x32xf32>
    %486 = tpu.matmul %485, %11, %cst_253 {dimension_numbers = #tpu.dot_dimension_numbers<[1], [0], [0], [1], [0, 0, 1, 1], [], []>} : vector<2x16xf32>, vector<16x32xf32>, vector<2x32xf32> -> vector<2x32xf32>
    %487 = vector.extract_strided_slice %472 {offsets = [0, 32], sizes = [2, 32], strides = [1, 1]} : vector<2x64xf32> to vector<2x32xf32>
    %cst_254 = arith.constant dense<0.000000e+00> : vector<2x8xf32>
    %488 = tpu.matmul %487, %17, %cst_254 {dimension_numbers = #tpu.dot_dimension_numbers<[1], [0], [0], [1], [0, 0, 1, 1], [], []>} : vector<2x32xf32>, vector<32x8xf32>, vector<2x8xf32> -> vector<2x8xf32>
    %489 = arith.addf %488, %25 : vector<2x8xf32>
    %cst_255 = arith.constant dense<0xFF800000> : vector<2xf32>
    %490 = vector.multi_reduction <maximumf>, %489, %cst_255 [1] : vector<2x8xf32> to vector<2xf32>
    %491 = vector.shape_cast %490 : vector<2xf32> to vector<2x1xf32>
    %492 = vector.broadcast %491 : vector<2x1xf32> to vector<2x8xf32>
    %493 = arith.subf %489, %492 : vector<2x8xf32>
    %494 = math.exp %493 : vector<2x8xf32>
    %cst_256 = arith.constant dense<0.000000e+00> : vector<2xf32>
    %495 = vector.multi_reduction <add>, %494, %cst_256 [1] : vector<2x8xf32> to vector<2xf32>
    %496 = vector.shape_cast %495 : vector<2xf32> to vector<2x1xf32>
    %497 = tpu.reciprocal %496 {approx = true} : vector<2x1xf32> -> vector<2x1xf32>
    %498 = vector.broadcast %497 : vector<2x1xf32> to vector<2x8xf32>
    %499 = arith.mulf %494, %498 : vector<2x8xf32>
    %cst_257 = arith.constant dense<0.000000e+00> : vector<2x32xf32>
    %500 = tpu.matmul %499, %23, %cst_257 {dimension_numbers = #tpu.dot_dimension_numbers<[1], [0], [0], [1], [0, 0, 1, 1], [], []>} : vector<2x8xf32>, vector<8x32xf32>, vector<2x32xf32> -> vector<2x32xf32>
    %501 = tpu.concatenate %486, %500 in 1 : vector<2x32xf32>, vector<2x32xf32> -> vector<2x64xf32>
    %c0_258 = arith.constant 0 : index
    %c0_259 = arith.constant 0 : index
    %502 = vector.load %arg21[%c0_258, %c0_259] : memref<64x64xf32, #tpu.memory_space<vmem>>, vector<64x64xf32>
    %cst_260 = arith.constant dense<0.000000e+00> : vector<2x64xf32>
    %503 = tpu.matmul %501, %502, %cst_260 {dimension_numbers = #tpu.dot_dimension_numbers<[1], [0], [0], [1], [0, 0, 1, 1], [], []>} : vector<2x64xf32>, vector<64x64xf32>, vector<2x64xf32> -> vector<2x64xf32>
    %c0_261 = arith.constant 0 : index
    %c0_262 = arith.constant 0 : index
    %504 = vector.load %arg22[%c0_261, %c0_262] : memref<1x64xf32, #tpu.memory_space<vmem>>, vector<1x64xf32>
    %505 = vector.broadcast %504 : vector<1x64xf32> to vector<2x64xf32>
    %506 = arith.addf %503, %505 : vector<2x64xf32>
    %cst_263 = arith.constant 0.000000e+00 : f32
    %507 = vector.broadcast %cst_263 : f32 to vector<2x64xf32>
    %508 = arith.maximumf %506, %507 : vector<2x64xf32>
    %c0_264 = arith.constant 0 : index
    %c0_265 = arith.constant 0 : index
    %509 = vector.load %arg23[%c0_264, %c0_265] : memref<64x16xf32, #tpu.memory_space<vmem>>, vector<64x16xf32>
    %cst_266 = arith.constant dense<0.000000e+00> : vector<2x16xf32>
    %510 = tpu.matmul %508, %509, %cst_266 {dimension_numbers = #tpu.dot_dimension_numbers<[1], [0], [0], [1], [0, 0, 1, 1], [], []>} : vector<2x64xf32>, vector<64x16xf32>, vector<2x16xf32> -> vector<2x16xf32>
    %c0_267 = arith.constant 0 : index
    %c0_268 = arith.constant 0 : index
    %511 = vector.load %arg24[%c0_267, %c0_268] : memref<1x16xf32, #tpu.memory_space<vmem>>, vector<1x16xf32>
    %512 = vector.broadcast %511 : vector<1x16xf32> to vector<2x16xf32>
    %513 = arith.addf %510, %512 : vector<2x16xf32>
    %514 = arith.index_cast %c4_i32 : i32 to index
    %c0_269 = arith.constant 0 : index
    %c0_270 = arith.constant 0 : index
    %515 = vector.load %arg25[%514, %c0_269, %c0_270] : memref<8x2x16xf32, #tpu.memory_space<vmem>>, vector<1x2x16xf32>
    %516 = vector.shape_cast %515 : vector<1x2x16xf32> to vector<2x16xf32>
    %517 = vector.shape_cast %513 : vector<2x16xf32> to vector<1x2x16xf32>
    tpu.vector_store %arg25[%514, %c0_269, %c0_270], %517 {strides = array<i32>} : memref<8x2x16xf32, #tpu.memory_space<vmem>>, vector<1x2x16xf32>,
    %c5_i32 = arith.constant 5 : i32
    %518 = arith.index_cast %c5_i32 : i32 to index
    %c0_271 = arith.constant 0 : index
    %c0_272 = arith.constant 0 : index
    %c0_273 = arith.constant 0 : index
    %519 = vector.load %arg1[%518, %c0_271, %c0_272, %c0_273] : memref<8x4x2x32xf32, #tpu.memory_space<vmem>>, vector<1x4x2x32xf32>
    %520 = vector.shape_cast %519 : vector<1x4x2x32xf32> to vector<4x2x32xf32>
    %521 = vector.extract_strided_slice %520 {offsets = [0, 0, 0], sizes = [1, 2, 32], strides = [1, 1, 1]} : vector<4x2x32xf32> to vector<1x2x32xf32>
    %522 = vector.shape_cast %521 : vector<1x2x32xf32> to vector<2x32xf32>
    %c0_274 = arith.constant 0 : index
    %c0_275 = arith.constant 0 : index
    %c0_276 = arith.constant 0 : index
    %523 = vector.load %arg4[%c0_274, %c0_275, %c0_276] : memref<4x32x32xf32, #tpu.memory_space<vmem>>, vector<1x32x32xf32>
    %524 = vector.shape_cast %523 : vector<1x32x32xf32> to vector<32x32xf32>
    %cst_277 = arith.constant dense<0.000000e+00> : vector<2x32xf32>
    %525 = tpu.matmul %467, %524, %cst_277 {dimension_numbers = #tpu.dot_dimension_numbers<[1], [0], [0], [1], [0, 0, 1, 1], [], []>} : vector<2x32xf32>, vector<32x32xf32>, vector<2x32xf32> -> vector<2x32xf32>
    %526 = arith.addf %522, %525 : vector<2x32xf32>
    %527 = arith.negf %526 : vector<2x32xf32>
    %528 = math.exp %527 : vector<2x32xf32>
    %cst_278 = arith.constant 1.000000e+00 : f32
    %529 = vector.broadcast %cst_278 : f32 to vector<2x32xf32>
    %530 = arith.addf %529, %528 : vector<2x32xf32>
    %531 = arith.divf %529, %530 : vector<2x32xf32>
    %532 = vector.extract_strided_slice %520 {offsets = [1, 0, 0], sizes = [1, 2, 32], strides = [1, 1, 1]} : vector<4x2x32xf32> to vector<1x2x32xf32>
    %533 = vector.shape_cast %532 : vector<1x2x32xf32> to vector<2x32xf32>
    %c1_279 = arith.constant 1 : index
    %c0_280 = arith.constant 0 : index
    %c0_281 = arith.constant 0 : index
    %534 = vector.load %arg4[%c1_279, %c0_280, %c0_281] : memref<4x32x32xf32, #tpu.memory_space<vmem>>, vector<1x32x32xf32>
    %535 = vector.shape_cast %534 : vector<1x32x32xf32> to vector<32x32xf32>
    %cst_282 = arith.constant dense<0.000000e+00> : vector<2x32xf32>
    %536 = tpu.matmul %467, %535, %cst_282 {dimension_numbers = #tpu.dot_dimension_numbers<[1], [0], [0], [1], [0, 0, 1, 1], [], []>} : vector<2x32xf32>, vector<32x32xf32>, vector<2x32xf32> -> vector<2x32xf32>
    %537 = arith.addf %533, %536 : vector<2x32xf32>
    %538 = arith.negf %537 : vector<2x32xf32>
    %539 = math.exp %538 : vector<2x32xf32>
    %cst_283 = arith.constant 1.000000e+00 : f32
    %540 = vector.broadcast %cst_283 : f32 to vector<2x32xf32>
    %541 = arith.addf %540, %539 : vector<2x32xf32>
    %542 = arith.divf %540, %541 : vector<2x32xf32>
    %543 = vector.extract_strided_slice %520 {offsets = [2, 0, 0], sizes = [1, 2, 32], strides = [1, 1, 1]} : vector<4x2x32xf32> to vector<1x2x32xf32>
    %544 = vector.shape_cast %543 : vector<1x2x32xf32> to vector<2x32xf32>
    %c2_284 = arith.constant 2 : index
    %c0_285 = arith.constant 0 : index
    %c0_286 = arith.constant 0 : index
    %545 = vector.load %arg4[%c2_284, %c0_285, %c0_286] : memref<4x32x32xf32, #tpu.memory_space<vmem>>, vector<1x32x32xf32>
    %546 = vector.shape_cast %545 : vector<1x32x32xf32> to vector<32x32xf32>
    %cst_287 = arith.constant dense<0.000000e+00> : vector<2x32xf32>
    %547 = tpu.matmul %467, %546, %cst_287 {dimension_numbers = #tpu.dot_dimension_numbers<[1], [0], [0], [1], [0, 0, 1, 1], [], []>} : vector<2x32xf32>, vector<32x32xf32>, vector<2x32xf32> -> vector<2x32xf32>
    %548 = arith.addf %544, %547 : vector<2x32xf32>
    %549 = math.tanh %548 : vector<2x32xf32>
    %550 = vector.extract_strided_slice %520 {offsets = [3, 0, 0], sizes = [1, 2, 32], strides = [1, 1, 1]} : vector<4x2x32xf32> to vector<1x2x32xf32>
    %551 = vector.shape_cast %550 : vector<1x2x32xf32> to vector<2x32xf32>
    %c3_288 = arith.constant 3 : index
    %c0_289 = arith.constant 0 : index
    %c0_290 = arith.constant 0 : index
    %552 = vector.load %arg4[%c3_288, %c0_289, %c0_290] : memref<4x32x32xf32, #tpu.memory_space<vmem>>, vector<1x32x32xf32>
    %553 = vector.shape_cast %552 : vector<1x32x32xf32> to vector<32x32xf32>
    %cst_291 = arith.constant dense<0.000000e+00> : vector<2x32xf32>
    %554 = tpu.matmul %467, %553, %cst_291 {dimension_numbers = #tpu.dot_dimension_numbers<[1], [0], [0], [1], [0, 0, 1, 1], [], []>} : vector<2x32xf32>, vector<32x32xf32>, vector<2x32xf32> -> vector<2x32xf32>
    %555 = arith.addf %551, %554 : vector<2x32xf32>
    %556 = arith.negf %555 : vector<2x32xf32>
    %557 = math.exp %556 : vector<2x32xf32>
    %cst_292 = arith.constant 1.000000e+00 : f32
    %558 = vector.broadcast %cst_292 : f32 to vector<2x32xf32>
    %559 = arith.addf %558, %557 : vector<2x32xf32>
    %560 = arith.divf %558, %559 : vector<2x32xf32>
    %561 = arith.mulf %542, %465 : vector<2x32xf32>
    %562 = arith.mulf %531, %549 : vector<2x32xf32>
    %563 = arith.addf %561, %562 : vector<2x32xf32>
    %564 = math.tanh %563 : vector<2x32xf32>
    %565 = arith.mulf %560, %564 : vector<2x32xf32>
    %c0_293 = arith.constant 0 : index
    %c0_294 = arith.constant 0 : index
    %566 = vector.load %arg5[%c0_293, %c0_294] : memref<32x64xf32, #tpu.memory_space<vmem>>, vector<32x64xf32>
    %cst_295 = arith.constant dense<0.000000e+00> : vector<2x64xf32>
    %567 = tpu.matmul %565, %566, %cst_295 {dimension_numbers = #tpu.dot_dimension_numbers<[1], [0], [0], [1], [0, 0, 1, 1], [], []>} : vector<2x32xf32>, vector<32x64xf32>, vector<2x64xf32> -> vector<2x64xf32>
    %c0_296 = arith.constant 0 : index
    %c0_297 = arith.constant 0 : index
    %568 = vector.load %arg6[%c0_296, %c0_297] : memref<1x64xf32, #tpu.memory_space<vmem>>, vector<1x64xf32>
    %569 = vector.broadcast %568 : vector<1x64xf32> to vector<2x64xf32>
    %570 = arith.addf %567, %569 : vector<2x64xf32>
    %571 = vector.extract_strided_slice %570 {offsets = [0, 0], sizes = [2, 32], strides = [1, 1]} : vector<2x64xf32> to vector<2x32xf32>
    %cst_298 = arith.constant dense<0.000000e+00> : vector<2x16xf32>
    %572 = tpu.matmul %571, %5, %cst_298 {dimension_numbers = #tpu.dot_dimension_numbers<[1], [0], [0], [1], [0, 0, 1, 1], [], []>} : vector<2x32xf32>, vector<32x16xf32>, vector<2x16xf32> -> vector<2x16xf32>
    %573 = arith.addf %572, %24 : vector<2x16xf32>
    %cst_299 = arith.constant dense<0xFF800000> : vector<2xf32>
    %574 = vector.multi_reduction <maximumf>, %573, %cst_299 [1] : vector<2x16xf32> to vector<2xf32>
    %575 = vector.shape_cast %574 : vector<2xf32> to vector<2x1xf32>
    %576 = vector.broadcast %575 : vector<2x1xf32> to vector<2x16xf32>
    %577 = arith.subf %573, %576 : vector<2x16xf32>
    %578 = math.exp %577 : vector<2x16xf32>
    %cst_300 = arith.constant dense<0.000000e+00> : vector<2xf32>
    %579 = vector.multi_reduction <add>, %578, %cst_300 [1] : vector<2x16xf32> to vector<2xf32>
    %580 = vector.shape_cast %579 : vector<2xf32> to vector<2x1xf32>
    %581 = tpu.reciprocal %580 {approx = true} : vector<2x1xf32> -> vector<2x1xf32>
    %582 = vector.broadcast %581 : vector<2x1xf32> to vector<2x16xf32>
    %583 = arith.mulf %578, %582 : vector<2x16xf32>
    %cst_301 = arith.constant dense<0.000000e+00> : vector<2x32xf32>
    %584 = tpu.matmul %583, %11, %cst_301 {dimension_numbers = #tpu.dot_dimension_numbers<[1], [0], [0], [1], [0, 0, 1, 1], [], []>} : vector<2x16xf32>, vector<16x32xf32>, vector<2x32xf32> -> vector<2x32xf32>
    %585 = vector.extract_strided_slice %570 {offsets = [0, 32], sizes = [2, 32], strides = [1, 1]} : vector<2x64xf32> to vector<2x32xf32>
    %cst_302 = arith.constant dense<0.000000e+00> : vector<2x8xf32>
    %586 = tpu.matmul %585, %17, %cst_302 {dimension_numbers = #tpu.dot_dimension_numbers<[1], [0], [0], [1], [0, 0, 1, 1], [], []>} : vector<2x32xf32>, vector<32x8xf32>, vector<2x8xf32> -> vector<2x8xf32>
    %587 = arith.addf %586, %25 : vector<2x8xf32>
    %cst_303 = arith.constant dense<0xFF800000> : vector<2xf32>
    %588 = vector.multi_reduction <maximumf>, %587, %cst_303 [1] : vector<2x8xf32> to vector<2xf32>
    %589 = vector.shape_cast %588 : vector<2xf32> to vector<2x1xf32>
    %590 = vector.broadcast %589 : vector<2x1xf32> to vector<2x8xf32>
    %591 = arith.subf %587, %590 : vector<2x8xf32>
    %592 = math.exp %591 : vector<2x8xf32>
    %cst_304 = arith.constant dense<0.000000e+00> : vector<2xf32>
    %593 = vector.multi_reduction <add>, %592, %cst_304 [1] : vector<2x8xf32> to vector<2xf32>
    %594 = vector.shape_cast %593 : vector<2xf32> to vector<2x1xf32>
    %595 = tpu.reciprocal %594 {approx = true} : vector<2x1xf32> -> vector<2x1xf32>
    %596 = vector.broadcast %595 : vector<2x1xf32> to vector<2x8xf32>
    %597 = arith.mulf %592, %596 : vector<2x8xf32>
    %cst_305 = arith.constant dense<0.000000e+00> : vector<2x32xf32>
    %598 = tpu.matmul %597, %23, %cst_305 {dimension_numbers = #tpu.dot_dimension_numbers<[1], [0], [0], [1], [0, 0, 1, 1], [], []>} : vector<2x8xf32>, vector<8x32xf32>, vector<2x32xf32> -> vector<2x32xf32>
    %599 = tpu.concatenate %584, %598 in 1 : vector<2x32xf32>, vector<2x32xf32> -> vector<2x64xf32>
    %c0_306 = arith.constant 0 : index
    %c0_307 = arith.constant 0 : index
    %600 = vector.load %arg21[%c0_306, %c0_307] : memref<64x64xf32, #tpu.memory_space<vmem>>, vector<64x64xf32>
    %cst_308 = arith.constant dense<0.000000e+00> : vector<2x64xf32>
    %601 = tpu.matmul %599, %600, %cst_308 {dimension_numbers = #tpu.dot_dimension_numbers<[1], [0], [0], [1], [0, 0, 1, 1], [], []>} : vector<2x64xf32>, vector<64x64xf32>, vector<2x64xf32> -> vector<2x64xf32>
    %c0_309 = arith.constant 0 : index
    %c0_310 = arith.constant 0 : index
    %602 = vector.load %arg22[%c0_309, %c0_310] : memref<1x64xf32, #tpu.memory_space<vmem>>, vector<1x64xf32>
    %603 = vector.broadcast %602 : vector<1x64xf32> to vector<2x64xf32>
    %604 = arith.addf %601, %603 : vector<2x64xf32>
    %cst_311 = arith.constant 0.000000e+00 : f32
    %605 = vector.broadcast %cst_311 : f32 to vector<2x64xf32>
    %606 = arith.maximumf %604, %605 : vector<2x64xf32>
    %c0_312 = arith.constant 0 : index
    %c0_313 = arith.constant 0 : index
    %607 = vector.load %arg23[%c0_312, %c0_313] : memref<64x16xf32, #tpu.memory_space<vmem>>, vector<64x16xf32>
    %cst_314 = arith.constant dense<0.000000e+00> : vector<2x16xf32>
    %608 = tpu.matmul %606, %607, %cst_314 {dimension_numbers = #tpu.dot_dimension_numbers<[1], [0], [0], [1], [0, 0, 1, 1], [], []>} : vector<2x64xf32>, vector<64x16xf32>, vector<2x16xf32> -> vector<2x16xf32>
    %c0_315 = arith.constant 0 : index
    %c0_316 = arith.constant 0 : index
    %609 = vector.load %arg24[%c0_315, %c0_316] : memref<1x16xf32, #tpu.memory_space<vmem>>, vector<1x16xf32>
    %610 = vector.broadcast %609 : vector<1x16xf32> to vector<2x16xf32>
    %611 = arith.addf %608, %610 : vector<2x16xf32>
    %612 = arith.index_cast %c5_i32 : i32 to index
    %c0_317 = arith.constant 0 : index
    %c0_318 = arith.constant 0 : index
    %613 = vector.load %arg25[%612, %c0_317, %c0_318] : memref<8x2x16xf32, #tpu.memory_space<vmem>>, vector<1x2x16xf32>
    %614 = vector.shape_cast %613 : vector<1x2x16xf32> to vector<2x16xf32>
    %615 = vector.shape_cast %611 : vector<2x16xf32> to vector<1x2x16xf32>
    tpu.vector_store %arg25[%612, %c0_317, %c0_318], %615 {strides = array<i32>} : memref<8x2x16xf32, #tpu.memory_space<vmem>>, vector<1x2x16xf32>,
    %c6_i32 = arith.constant 6 : i32
    %616 = arith.index_cast %c6_i32 : i32 to index
    %c0_319 = arith.constant 0 : index
    %c0_320 = arith.constant 0 : index
    %c0_321 = arith.constant 0 : index
    %617 = vector.load %arg1[%616, %c0_319, %c0_320, %c0_321] : memref<8x4x2x32xf32, #tpu.memory_space<vmem>>, vector<1x4x2x32xf32>
    %618 = vector.shape_cast %617 : vector<1x4x2x32xf32> to vector<4x2x32xf32>
    %619 = vector.extract_strided_slice %618 {offsets = [0, 0, 0], sizes = [1, 2, 32], strides = [1, 1, 1]} : vector<4x2x32xf32> to vector<1x2x32xf32>
    %620 = vector.shape_cast %619 : vector<1x2x32xf32> to vector<2x32xf32>
    %c0_322 = arith.constant 0 : index
    %c0_323 = arith.constant 0 : index
    %c0_324 = arith.constant 0 : index
    %621 = vector.load %arg4[%c0_322, %c0_323, %c0_324] : memref<4x32x32xf32, #tpu.memory_space<vmem>>, vector<1x32x32xf32>
    %622 = vector.shape_cast %621 : vector<1x32x32xf32> to vector<32x32xf32>
    %cst_325 = arith.constant dense<0.000000e+00> : vector<2x32xf32>
    %623 = tpu.matmul %565, %622, %cst_325 {dimension_numbers = #tpu.dot_dimension_numbers<[1], [0], [0], [1], [0, 0, 1, 1], [], []>} : vector<2x32xf32>, vector<32x32xf32>, vector<2x32xf32> -> vector<2x32xf32>
    %624 = arith.addf %620, %623 : vector<2x32xf32>
    %625 = arith.negf %624 : vector<2x32xf32>
    %626 = math.exp %625 : vector<2x32xf32>
    %cst_326 = arith.constant 1.000000e+00 : f32
    %627 = vector.broadcast %cst_326 : f32 to vector<2x32xf32>
    %628 = arith.addf %627, %626 : vector<2x32xf32>
    %629 = arith.divf %627, %628 : vector<2x32xf32>
    %630 = vector.extract_strided_slice %618 {offsets = [1, 0, 0], sizes = [1, 2, 32], strides = [1, 1, 1]} : vector<4x2x32xf32> to vector<1x2x32xf32>
    %631 = vector.shape_cast %630 : vector<1x2x32xf32> to vector<2x32xf32>
    %c1_327 = arith.constant 1 : index
    %c0_328 = arith.constant 0 : index
    %c0_329 = arith.constant 0 : index
    %632 = vector.load %arg4[%c1_327, %c0_328, %c0_329] : memref<4x32x32xf32, #tpu.memory_space<vmem>>, vector<1x32x32xf32>
    %633 = vector.shape_cast %632 : vector<1x32x32xf32> to vector<32x32xf32>
    %cst_330 = arith.constant dense<0.000000e+00> : vector<2x32xf32>
    %634 = tpu.matmul %565, %633, %cst_330 {dimension_numbers = #tpu.dot_dimension_numbers<[1], [0], [0], [1], [0, 0, 1, 1], [], []>} : vector<2x32xf32>, vector<32x32xf32>, vector<2x32xf32> -> vector<2x32xf32>
    %635 = arith.addf %631, %634 : vector<2x32xf32>
    %636 = arith.negf %635 : vector<2x32xf32>
    %637 = math.exp %636 : vector<2x32xf32>
    %cst_331 = arith.constant 1.000000e+00 : f32
    %638 = vector.broadcast %cst_331 : f32 to vector<2x32xf32>
    %639 = arith.addf %638, %637 : vector<2x32xf32>
    %640 = arith.divf %638, %639 : vector<2x32xf32>
    %641 = vector.extract_strided_slice %618 {offsets = [2, 0, 0], sizes = [1, 2, 32], strides = [1, 1, 1]} : vector<4x2x32xf32> to vector<1x2x32xf32>
    %642 = vector.shape_cast %641 : vector<1x2x32xf32> to vector<2x32xf32>
    %c2_332 = arith.constant 2 : index
    %c0_333 = arith.constant 0 : index
    %c0_334 = arith.constant 0 : index
    %643 = vector.load %arg4[%c2_332, %c0_333, %c0_334] : memref<4x32x32xf32, #tpu.memory_space<vmem>>, vector<1x32x32xf32>
    %644 = vector.shape_cast %643 : vector<1x32x32xf32> to vector<32x32xf32>
    %cst_335 = arith.constant dense<0.000000e+00> : vector<2x32xf32>
    %645 = tpu.matmul %565, %644, %cst_335 {dimension_numbers = #tpu.dot_dimension_numbers<[1], [0], [0], [1], [0, 0, 1, 1], [], []>} : vector<2x32xf32>, vector<32x32xf32>, vector<2x32xf32> -> vector<2x32xf32>
    %646 = arith.addf %642, %645 : vector<2x32xf32>
    %647 = math.tanh %646 : vector<2x32xf32>
    %648 = vector.extract_strided_slice %618 {offsets = [3, 0, 0], sizes = [1, 2, 32], strides = [1, 1, 1]} : vector<4x2x32xf32> to vector<1x2x32xf32>
    %649 = vector.shape_cast %648 : vector<1x2x32xf32> to vector<2x32xf32>
    %c3_336 = arith.constant 3 : index
    %c0_337 = arith.constant 0 : index
    %c0_338 = arith.constant 0 : index
    %650 = vector.load %arg4[%c3_336, %c0_337, %c0_338] : memref<4x32x32xf32, #tpu.memory_space<vmem>>, vector<1x32x32xf32>
    %651 = vector.shape_cast %650 : vector<1x32x32xf32> to vector<32x32xf32>
    %cst_339 = arith.constant dense<0.000000e+00> : vector<2x32xf32>
    %652 = tpu.matmul %565, %651, %cst_339 {dimension_numbers = #tpu.dot_dimension_numbers<[1], [0], [0], [1], [0, 0, 1, 1], [], []>} : vector<2x32xf32>, vector<32x32xf32>, vector<2x32xf32> -> vector<2x32xf32>
    %653 = arith.addf %649, %652 : vector<2x32xf32>
    %654 = arith.negf %653 : vector<2x32xf32>
    %655 = math.exp %654 : vector<2x32xf32>
    %cst_340 = arith.constant 1.000000e+00 : f32
    %656 = vector.broadcast %cst_340 : f32 to vector<2x32xf32>
    %657 = arith.addf %656, %655 : vector<2x32xf32>
    %658 = arith.divf %656, %657 : vector<2x32xf32>
    %659 = arith.mulf %640, %563 : vector<2x32xf32>
    %660 = arith.mulf %629, %647 : vector<2x32xf32>
    %661 = arith.addf %659, %660 : vector<2x32xf32>
    %662 = math.tanh %661 : vector<2x32xf32>
    %663 = arith.mulf %658, %662 : vector<2x32xf32>
    %c0_341 = arith.constant 0 : index
    %c0_342 = arith.constant 0 : index
    %664 = vector.load %arg5[%c0_341, %c0_342] : memref<32x64xf32, #tpu.memory_space<vmem>>, vector<32x64xf32>
    %cst_343 = arith.constant dense<0.000000e+00> : vector<2x64xf32>
    %665 = tpu.matmul %663, %664, %cst_343 {dimension_numbers = #tpu.dot_dimension_numbers<[1], [0], [0], [1], [0, 0, 1, 1], [], []>} : vector<2x32xf32>, vector<32x64xf32>, vector<2x64xf32> -> vector<2x64xf32>
    %c0_344 = arith.constant 0 : index
    %c0_345 = arith.constant 0 : index
    %666 = vector.load %arg6[%c0_344, %c0_345] : memref<1x64xf32, #tpu.memory_space<vmem>>, vector<1x64xf32>
    %667 = vector.broadcast %666 : vector<1x64xf32> to vector<2x64xf32>
    %668 = arith.addf %665, %667 : vector<2x64xf32>
    %669 = vector.extract_strided_slice %668 {offsets = [0, 0], sizes = [2, 32], strides = [1, 1]} : vector<2x64xf32> to vector<2x32xf32>
    %cst_346 = arith.constant dense<0.000000e+00> : vector<2x16xf32>
    %670 = tpu.matmul %669, %5, %cst_346 {dimension_numbers = #tpu.dot_dimension_numbers<[1], [0], [0], [1], [0, 0, 1, 1], [], []>} : vector<2x32xf32>, vector<32x16xf32>, vector<2x16xf32> -> vector<2x16xf32>
    %671 = arith.addf %670, %24 : vector<2x16xf32>
    %cst_347 = arith.constant dense<0xFF800000> : vector<2xf32>
    %672 = vector.multi_reduction <maximumf>, %671, %cst_347 [1] : vector<2x16xf32> to vector<2xf32>
    %673 = vector.shape_cast %672 : vector<2xf32> to vector<2x1xf32>
    %674 = vector.broadcast %673 : vector<2x1xf32> to vector<2x16xf32>
    %675 = arith.subf %671, %674 : vector<2x16xf32>
    %676 = math.exp %675 : vector<2x16xf32>
    %cst_348 = arith.constant dense<0.000000e+00> : vector<2xf32>
    %677 = vector.multi_reduction <add>, %676, %cst_348 [1] : vector<2x16xf32> to vector<2xf32>
    %678 = vector.shape_cast %677 : vector<2xf32> to vector<2x1xf32>
    %679 = tpu.reciprocal %678 {approx = true} : vector<2x1xf32> -> vector<2x1xf32>
    %680 = vector.broadcast %679 : vector<2x1xf32> to vector<2x16xf32>
    %681 = arith.mulf %676, %680 : vector<2x16xf32>
    %cst_349 = arith.constant dense<0.000000e+00> : vector<2x32xf32>
    %682 = tpu.matmul %681, %11, %cst_349 {dimension_numbers = #tpu.dot_dimension_numbers<[1], [0], [0], [1], [0, 0, 1, 1], [], []>} : vector<2x16xf32>, vector<16x32xf32>, vector<2x32xf32> -> vector<2x32xf32>
    %683 = vector.extract_strided_slice %668 {offsets = [0, 32], sizes = [2, 32], strides = [1, 1]} : vector<2x64xf32> to vector<2x32xf32>
    %cst_350 = arith.constant dense<0.000000e+00> : vector<2x8xf32>
    %684 = tpu.matmul %683, %17, %cst_350 {dimension_numbers = #tpu.dot_dimension_numbers<[1], [0], [0], [1], [0, 0, 1, 1], [], []>} : vector<2x32xf32>, vector<32x8xf32>, vector<2x8xf32> -> vector<2x8xf32>
    %685 = arith.addf %684, %25 : vector<2x8xf32>
    %cst_351 = arith.constant dense<0xFF800000> : vector<2xf32>
    %686 = vector.multi_reduction <maximumf>, %685, %cst_351 [1] : vector<2x8xf32> to vector<2xf32>
    %687 = vector.shape_cast %686 : vector<2xf32> to vector<2x1xf32>
    %688 = vector.broadcast %687 : vector<2x1xf32> to vector<2x8xf32>
    %689 = arith.subf %685, %688 : vector<2x8xf32>
    %690 = math.exp %689 : vector<2x8xf32>
    %cst_352 = arith.constant dense<0.000000e+00> : vector<2xf32>
    %691 = vector.multi_reduction <add>, %690, %cst_352 [1] : vector<2x8xf32> to vector<2xf32>
    %692 = vector.shape_cast %691 : vector<2xf32> to vector<2x1xf32>
    %693 = tpu.reciprocal %692 {approx = true} : vector<2x1xf32> -> vector<2x1xf32>
    %694 = vector.broadcast %693 : vector<2x1xf32> to vector<2x8xf32>
    %695 = arith.mulf %690, %694 : vector<2x8xf32>
    %cst_353 = arith.constant dense<0.000000e+00> : vector<2x32xf32>
    %696 = tpu.matmul %695, %23, %cst_353 {dimension_numbers = #tpu.dot_dimension_numbers<[1], [0], [0], [1], [0, 0, 1, 1], [], []>} : vector<2x8xf32>, vector<8x32xf32>, vector<2x32xf32> -> vector<2x32xf32>
    %697 = tpu.concatenate %682, %696 in 1 : vector<2x32xf32>, vector<2x32xf32> -> vector<2x64xf32>
    %c0_354 = arith.constant 0 : index
    %c0_355 = arith.constant 0 : index
    %698 = vector.load %arg21[%c0_354, %c0_355] : memref<64x64xf32, #tpu.memory_space<vmem>>, vector<64x64xf32>
    %cst_356 = arith.constant dense<0.000000e+00> : vector<2x64xf32>
    %699 = tpu.matmul %697, %698, %cst_356 {dimension_numbers = #tpu.dot_dimension_numbers<[1], [0], [0], [1], [0, 0, 1, 1], [], []>} : vector<2x64xf32>, vector<64x64xf32>, vector<2x64xf32> -> vector<2x64xf32>
    %c0_357 = arith.constant 0 : index
    %c0_358 = arith.constant 0 : index
    %700 = vector.load %arg22[%c0_357, %c0_358] : memref<1x64xf32, #tpu.memory_space<vmem>>, vector<1x64xf32>
    %701 = vector.broadcast %700 : vector<1x64xf32> to vector<2x64xf32>
    %702 = arith.addf %699, %701 : vector<2x64xf32>
    %cst_359 = arith.constant 0.000000e+00 : f32
    %703 = vector.broadcast %cst_359 : f32 to vector<2x64xf32>
    %704 = arith.maximumf %702, %703 : vector<2x64xf32>
    %c0_360 = arith.constant 0 : index
    %c0_361 = arith.constant 0 : index
    %705 = vector.load %arg23[%c0_360, %c0_361] : memref<64x16xf32, #tpu.memory_space<vmem>>, vector<64x16xf32>
    %cst_362 = arith.constant dense<0.000000e+00> : vector<2x16xf32>
    %706 = tpu.matmul %704, %705, %cst_362 {dimension_numbers = #tpu.dot_dimension_numbers<[1], [0], [0], [1], [0, 0, 1, 1], [], []>} : vector<2x64xf32>, vector<64x16xf32>, vector<2x16xf32> -> vector<2x16xf32>
    %c0_363 = arith.constant 0 : index
    %c0_364 = arith.constant 0 : index
    %707 = vector.load %arg24[%c0_363, %c0_364] : memref<1x16xf32, #tpu.memory_space<vmem>>, vector<1x16xf32>
    %708 = vector.broadcast %707 : vector<1x16xf32> to vector<2x16xf32>
    %709 = arith.addf %706, %708 : vector<2x16xf32>
    %710 = arith.index_cast %c6_i32 : i32 to index
    %c0_365 = arith.constant 0 : index
    %c0_366 = arith.constant 0 : index
    %711 = vector.load %arg25[%710, %c0_365, %c0_366] : memref<8x2x16xf32, #tpu.memory_space<vmem>>, vector<1x2x16xf32>
    %712 = vector.shape_cast %711 : vector<1x2x16xf32> to vector<2x16xf32>
    %713 = vector.shape_cast %709 : vector<2x16xf32> to vector<1x2x16xf32>
    tpu.vector_store %arg25[%710, %c0_365, %c0_366], %713 {strides = array<i32>} : memref<8x2x16xf32, #tpu.memory_space<vmem>>, vector<1x2x16xf32>,
    %c7_i32 = arith.constant 7 : i32
    %714 = arith.index_cast %c7_i32 : i32 to index
    %c0_367 = arith.constant 0 : index
    %c0_368 = arith.constant 0 : index
    %c0_369 = arith.constant 0 : index
    %715 = vector.load %arg1[%714, %c0_367, %c0_368, %c0_369] : memref<8x4x2x32xf32, #tpu.memory_space<vmem>>, vector<1x4x2x32xf32>
    %716 = vector.shape_cast %715 : vector<1x4x2x32xf32> to vector<4x2x32xf32>
    %717 = vector.extract_strided_slice %716 {offsets = [0, 0, 0], sizes = [1, 2, 32], strides = [1, 1, 1]} : vector<4x2x32xf32> to vector<1x2x32xf32>
    %718 = vector.shape_cast %717 : vector<1x2x32xf32> to vector<2x32xf32>
    %c0_370 = arith.constant 0 : index
    %c0_371 = arith.constant 0 : index
    %c0_372 = arith.constant 0 : index
    %719 = vector.load %arg4[%c0_370, %c0_371, %c0_372] : memref<4x32x32xf32, #tpu.memory_space<vmem>>, vector<1x32x32xf32>
    %720 = vector.shape_cast %719 : vector<1x32x32xf32> to vector<32x32xf32>
    %cst_373 = arith.constant dense<0.000000e+00> : vector<2x32xf32>
    %721 = tpu.matmul %663, %720, %cst_373 {dimension_numbers = #tpu.dot_dimension_numbers<[1], [0], [0], [1], [0, 0, 1, 1], [], []>} : vector<2x32xf32>, vector<32x32xf32>, vector<2x32xf32> -> vector<2x32xf32>
    %722 = arith.addf %718, %721 : vector<2x32xf32>
    %723 = arith.negf %722 : vector<2x32xf32>
    %724 = math.exp %723 : vector<2x32xf32>
    %cst_374 = arith.constant 1.000000e+00 : f32
    %725 = vector.broadcast %cst_374 : f32 to vector<2x32xf32>
    %726 = arith.addf %725, %724 : vector<2x32xf32>
    %727 = arith.divf %725, %726 : vector<2x32xf32>
    %728 = vector.extract_strided_slice %716 {offsets = [1, 0, 0], sizes = [1, 2, 32], strides = [1, 1, 1]} : vector<4x2x32xf32> to vector<1x2x32xf32>
    %729 = vector.shape_cast %728 : vector<1x2x32xf32> to vector<2x32xf32>
    %c1_375 = arith.constant 1 : index
    %c0_376 = arith.constant 0 : index
    %c0_377 = arith.constant 0 : index
    %730 = vector.load %arg4[%c1_375, %c0_376, %c0_377] : memref<4x32x32xf32, #tpu.memory_space<vmem>>, vector<1x32x32xf32>
    %731 = vector.shape_cast %730 : vector<1x32x32xf32> to vector<32x32xf32>
    %cst_378 = arith.constant dense<0.000000e+00> : vector<2x32xf32>
    %732 = tpu.matmul %663, %731, %cst_378 {dimension_numbers = #tpu.dot_dimension_numbers<[1], [0], [0], [1], [0, 0, 1, 1], [], []>} : vector<2x32xf32>, vector<32x32xf32>, vector<2x32xf32> -> vector<2x32xf32>
    %733 = arith.addf %729, %732 : vector<2x32xf32>
    %734 = arith.negf %733 : vector<2x32xf32>
    %735 = math.exp %734 : vector<2x32xf32>
    %cst_379 = arith.constant 1.000000e+00 : f32
    %736 = vector.broadcast %cst_379 : f32 to vector<2x32xf32>
    %737 = arith.addf %736, %735 : vector<2x32xf32>
    %738 = arith.divf %736, %737 : vector<2x32xf32>
    %739 = vector.extract_strided_slice %716 {offsets = [2, 0, 0], sizes = [1, 2, 32], strides = [1, 1, 1]} : vector<4x2x32xf32> to vector<1x2x32xf32>
    %740 = vector.shape_cast %739 : vector<1x2x32xf32> to vector<2x32xf32>
    %c2_380 = arith.constant 2 : index
    %c0_381 = arith.constant 0 : index
    %c0_382 = arith.constant 0 : index
    %741 = vector.load %arg4[%c2_380, %c0_381, %c0_382] : memref<4x32x32xf32, #tpu.memory_space<vmem>>, vector<1x32x32xf32>
    %742 = vector.shape_cast %741 : vector<1x32x32xf32> to vector<32x32xf32>
    %cst_383 = arith.constant dense<0.000000e+00> : vector<2x32xf32>
    %743 = tpu.matmul %663, %742, %cst_383 {dimension_numbers = #tpu.dot_dimension_numbers<[1], [0], [0], [1], [0, 0, 1, 1], [], []>} : vector<2x32xf32>, vector<32x32xf32>, vector<2x32xf32> -> vector<2x32xf32>
    %744 = arith.addf %740, %743 : vector<2x32xf32>
    %745 = math.tanh %744 : vector<2x32xf32>
    %746 = vector.extract_strided_slice %716 {offsets = [3, 0, 0], sizes = [1, 2, 32], strides = [1, 1, 1]} : vector<4x2x32xf32> to vector<1x2x32xf32>
    %747 = vector.shape_cast %746 : vector<1x2x32xf32> to vector<2x32xf32>
    %c3_384 = arith.constant 3 : index
    %c0_385 = arith.constant 0 : index
    %c0_386 = arith.constant 0 : index
    %748 = vector.load %arg4[%c3_384, %c0_385, %c0_386] : memref<4x32x32xf32, #tpu.memory_space<vmem>>, vector<1x32x32xf32>
    %749 = vector.shape_cast %748 : vector<1x32x32xf32> to vector<32x32xf32>
    %cst_387 = arith.constant dense<0.000000e+00> : vector<2x32xf32>
    %750 = tpu.matmul %663, %749, %cst_387 {dimension_numbers = #tpu.dot_dimension_numbers<[1], [0], [0], [1], [0, 0, 1, 1], [], []>} : vector<2x32xf32>, vector<32x32xf32>, vector<2x32xf32> -> vector<2x32xf32>
    %751 = arith.addf %747, %750 : vector<2x32xf32>
    %752 = arith.negf %751 : vector<2x32xf32>
    %753 = math.exp %752 : vector<2x32xf32>
    %cst_388 = arith.constant 1.000000e+00 : f32
    %754 = vector.broadcast %cst_388 : f32 to vector<2x32xf32>
    %755 = arith.addf %754, %753 : vector<2x32xf32>
    %756 = arith.divf %754, %755 : vector<2x32xf32>
    %757 = arith.mulf %738, %661 : vector<2x32xf32>
    %758 = arith.mulf %727, %745 : vector<2x32xf32>
    %759 = arith.addf %757, %758 : vector<2x32xf32>
    %760 = math.tanh %759 : vector<2x32xf32>
    %761 = arith.mulf %756, %760 : vector<2x32xf32>
    %c0_389 = arith.constant 0 : index
    %c0_390 = arith.constant 0 : index
    %762 = vector.load %arg5[%c0_389, %c0_390] : memref<32x64xf32, #tpu.memory_space<vmem>>, vector<32x64xf32>
    %cst_391 = arith.constant dense<0.000000e+00> : vector<2x64xf32>
    %763 = tpu.matmul %761, %762, %cst_391 {dimension_numbers = #tpu.dot_dimension_numbers<[1], [0], [0], [1], [0, 0, 1, 1], [], []>} : vector<2x32xf32>, vector<32x64xf32>, vector<2x64xf32> -> vector<2x64xf32>
    %c0_392 = arith.constant 0 : index
    %c0_393 = arith.constant 0 : index
    %764 = vector.load %arg6[%c0_392, %c0_393] : memref<1x64xf32, #tpu.memory_space<vmem>>, vector<1x64xf32>
    %765 = vector.broadcast %764 : vector<1x64xf32> to vector<2x64xf32>
    %766 = arith.addf %763, %765 : vector<2x64xf32>
    %767 = vector.extract_strided_slice %766 {offsets = [0, 0], sizes = [2, 32], strides = [1, 1]} : vector<2x64xf32> to vector<2x32xf32>
    %cst_394 = arith.constant dense<0.000000e+00> : vector<2x16xf32>
    %768 = tpu.matmul %767, %5, %cst_394 {dimension_numbers = #tpu.dot_dimension_numbers<[1], [0], [0], [1], [0, 0, 1, 1], [], []>} : vector<2x32xf32>, vector<32x16xf32>, vector<2x16xf32> -> vector<2x16xf32>
    %769 = arith.addf %768, %24 : vector<2x16xf32>
    %cst_395 = arith.constant dense<0xFF800000> : vector<2xf32>
    %770 = vector.multi_reduction <maximumf>, %769, %cst_395 [1] : vector<2x16xf32> to vector<2xf32>
    %771 = vector.shape_cast %770 : vector<2xf32> to vector<2x1xf32>
    %772 = vector.broadcast %771 : vector<2x1xf32> to vector<2x16xf32>
    %773 = arith.subf %769, %772 : vector<2x16xf32>
    %774 = math.exp %773 : vector<2x16xf32>
    %cst_396 = arith.constant dense<0.000000e+00> : vector<2xf32>
    %775 = vector.multi_reduction <add>, %774, %cst_396 [1] : vector<2x16xf32> to vector<2xf32>
    %776 = vector.shape_cast %775 : vector<2xf32> to vector<2x1xf32>
    %777 = tpu.reciprocal %776 {approx = true} : vector<2x1xf32> -> vector<2x1xf32>
    %778 = vector.broadcast %777 : vector<2x1xf32> to vector<2x16xf32>
    %779 = arith.mulf %774, %778 : vector<2x16xf32>
    %cst_397 = arith.constant dense<0.000000e+00> : vector<2x32xf32>
    %780 = tpu.matmul %779, %11, %cst_397 {dimension_numbers = #tpu.dot_dimension_numbers<[1], [0], [0], [1], [0, 0, 1, 1], [], []>} : vector<2x16xf32>, vector<16x32xf32>, vector<2x32xf32> -> vector<2x32xf32>
    %781 = vector.extract_strided_slice %766 {offsets = [0, 32], sizes = [2, 32], strides = [1, 1]} : vector<2x64xf32> to vector<2x32xf32>
    %cst_398 = arith.constant dense<0.000000e+00> : vector<2x8xf32>
    %782 = tpu.matmul %781, %17, %cst_398 {dimension_numbers = #tpu.dot_dimension_numbers<[1], [0], [0], [1], [0, 0, 1, 1], [], []>} : vector<2x32xf32>, vector<32x8xf32>, vector<2x8xf32> -> vector<2x8xf32>
    %783 = arith.addf %782, %25 : vector<2x8xf32>
    %cst_399 = arith.constant dense<0xFF800000> : vector<2xf32>
    %784 = vector.multi_reduction <maximumf>, %783, %cst_399 [1] : vector<2x8xf32> to vector<2xf32>
    %785 = vector.shape_cast %784 : vector<2xf32> to vector<2x1xf32>
    %786 = vector.broadcast %785 : vector<2x1xf32> to vector<2x8xf32>
    %787 = arith.subf %783, %786 : vector<2x8xf32>
    %788 = math.exp %787 : vector<2x8xf32>
    %cst_400 = arith.constant dense<0.000000e+00> : vector<2xf32>
    %789 = vector.multi_reduction <add>, %788, %cst_400 [1] : vector<2x8xf32> to vector<2xf32>
    %790 = vector.shape_cast %789 : vector<2xf32> to vector<2x1xf32>
    %791 = tpu.reciprocal %790 {approx = true} : vector<2x1xf32> -> vector<2x1xf32>
    %792 = vector.broadcast %791 : vector<2x1xf32> to vector<2x8xf32>
    %793 = arith.mulf %788, %792 : vector<2x8xf32>
    %cst_401 = arith.constant dense<0.000000e+00> : vector<2x32xf32>
    %794 = tpu.matmul %793, %23, %cst_401 {dimension_numbers = #tpu.dot_dimension_numbers<[1], [0], [0], [1], [0, 0, 1, 1], [], []>} : vector<2x8xf32>, vector<8x32xf32>, vector<2x32xf32> -> vector<2x32xf32>
    %795 = tpu.concatenate %780, %794 in 1 : vector<2x32xf32>, vector<2x32xf32> -> vector<2x64xf32>
    %c0_402 = arith.constant 0 : index
    %c0_403 = arith.constant 0 : index
    %796 = vector.load %arg21[%c0_402, %c0_403] : memref<64x64xf32, #tpu.memory_space<vmem>>, vector<64x64xf32>
    %cst_404 = arith.constant dense<0.000000e+00> : vector<2x64xf32>
    %797 = tpu.matmul %795, %796, %cst_404 {dimension_numbers = #tpu.dot_dimension_numbers<[1], [0], [0], [1], [0, 0, 1, 1], [], []>} : vector<2x64xf32>, vector<64x64xf32>, vector<2x64xf32> -> vector<2x64xf32>
    %c0_405 = arith.constant 0 : index
    %c0_406 = arith.constant 0 : index
    %798 = vector.load %arg22[%c0_405, %c0_406] : memref<1x64xf32, #tpu.memory_space<vmem>>, vector<1x64xf32>
    %799 = vector.broadcast %798 : vector<1x64xf32> to vector<2x64xf32>
    %800 = arith.addf %797, %799 : vector<2x64xf32>
    %cst_407 = arith.constant 0.000000e+00 : f32
    %801 = vector.broadcast %cst_407 : f32 to vector<2x64xf32>
    %802 = arith.maximumf %800, %801 : vector<2x64xf32>
    %c0_408 = arith.constant 0 : index
    %c0_409 = arith.constant 0 : index
    %803 = vector.load %arg23[%c0_408, %c0_409] : memref<64x16xf32, #tpu.memory_space<vmem>>, vector<64x16xf32>
    %cst_410 = arith.constant dense<0.000000e+00> : vector<2x16xf32>
    %804 = tpu.matmul %802, %803, %cst_410 {dimension_numbers = #tpu.dot_dimension_numbers<[1], [0], [0], [1], [0, 0, 1, 1], [], []>} : vector<2x64xf32>, vector<64x16xf32>, vector<2x16xf32> -> vector<2x16xf32>
    %c0_411 = arith.constant 0 : index
    %c0_412 = arith.constant 0 : index
    %805 = vector.load %arg24[%c0_411, %c0_412] : memref<1x16xf32, #tpu.memory_space<vmem>>, vector<1x16xf32>
    %806 = vector.broadcast %805 : vector<1x16xf32> to vector<2x16xf32>
    %807 = arith.addf %804, %806 : vector<2x16xf32>
    %808 = arith.index_cast %c7_i32 : i32 to index
    %c0_413 = arith.constant 0 : index
    %c0_414 = arith.constant 0 : index
    %809 = vector.load %arg25[%808, %c0_413, %c0_414] : memref<8x2x16xf32, #tpu.memory_space<vmem>>, vector<1x2x16xf32>
    %810 = vector.shape_cast %809 : vector<1x2x16xf32> to vector<2x16xf32>
    %811 = vector.shape_cast %807 : vector<2x16xf32> to vector<1x2x16xf32>
    tpu.vector_store %arg25[%808, %c0_413, %c0_414], %811 {strides = array<i32>} : memref<8x2x16xf32, #tpu.memory_space<vmem>>, vector<1x2x16xf32>,
    %c8_i32 = arith.constant 8 : i32
    return
  }
  func.func @transform_0(%arg0: i32) -> (i32, i32, i32, i32) {
    %c0_i32 = arith.constant 0 : i32
    %c0_i32_0 = arith.constant 0 : i32
    %c0_i32_1 = arith.constant 0 : i32
    %c0_i32_2 = arith.constant 0 : i32
    %c0_i32_3 = arith.constant 0 : i32
    return %c0_i32, %c0_i32_0, %c0_i32_1, %c0_i32_2 : i32, i32, i32, i32
  }
  func.func @transform_1(%arg0: i32) -> (i32, i32) {
    %c0_i32 = arith.constant 0 : i32
    %c0_i32_0 = arith.constant 0 : i32
    %c0_i32_1 = arith.constant 0 : i32
    return %c0_i32, %c0_i32_0 : i32, i32
  }
  func.func @transform_2(%arg0: i32) -> (i32, i32) {
    %c0_i32 = arith.constant 0 : i32
    %c0_i32_0 = arith.constant 0 : i32
    %c0_i32_1 = arith.constant 0 : i32
    return %c0_i32, %c0_i32_0 : i32, i32
  }
  func.func @transform_3(%arg0: i32) -> (i32, i32, i32) {
    %c0_i32 = arith.constant 0 : i32
    %c0_i32_0 = arith.constant 0 : i32
    %c0_i32_1 = arith.constant 0 : i32
    %c0_i32_2 = arith.constant 0 : i32
    return %c0_i32, %c0_i32_0, %c0_i32_1 : i32, i32, i32
  }
  func.func @transform_4(%arg0: i32) -> (i32, i32) {
    %c0_i32 = arith.constant 0 : i32
    %c0_i32_0 = arith.constant 0 : i32
    %c0_i32_1 = arith.constant 0 : i32
    return %c0_i32, %c0_i32_0 : i32, i32
  }
  func.func @transform_5(%arg0: i32) -> (i32, i32) {
    %c0_i32 = arith.constant 0 : i32
    %c0_i32_0 = arith.constant 0 : i32
    %c0_i32_1 = arith.constant 0 : i32
    return %c0_i32, %c0_i32_0 : i32, i32
  }
  func.func @transform_6(%arg0: i32) -> (i32, i32) {
    %c0_i32 = arith.constant 0 : i32
    %c0_i32_0 = arith.constant 0 : i32
    %c0_i32_1 = arith.constant 0 : i32
    return %c0_i32, %c0_i32_0 : i32, i32
  }
  func.func @transform_7(%arg0: i32) -> (i32, i32) {
    %c0_i32 = arith.constant 0 : i32
    %c0_i32_0 = arith.constant 0 : i32
    %c0_i32_1 = arith.constant 0 : i32
    return %c0_i32, %c0_i32_0 : i32, i32
  }
  func.func @transform_8(%arg0: i32) -> (i32, i32) {
    %c0_i32 = arith.constant 0 : i32
    %c0_i32_0 = arith.constant 0 : i32
    %c0_i32_1 = arith.constant 0 : i32
    return %c0_i32, %c0_i32_0 : i32, i32
  }
  func.func @transform_9(%arg0: i32) -> (i32, i32) {
    %c0_i32 = arith.constant 0 : i32
    %c0_i32_0 = arith.constant 0 : i32
    %c0_i32_1 = arith.constant 0 : i32
    return %c0_i32, %c0_i32_0 : i32, i32
  }
  func.func @transform_10(%arg0: i32) -> (i32, i32) {
    %c0_i32 = arith.constant 0 : i32
    %c0_i32_0 = arith.constant 0 : i32
    %c0_i32_1 = arith.constant 0 : i32
    return %c0_i32, %c0_i32_0 : i32, i32
  }
  func.func @transform_11(%arg0: i32) -> (i32, i32) {
    %c0_i32 = arith.constant 0 : i32
    %c0_i32_0 = arith.constant 0 : i32
    %c0_i32_1 = arith.constant 0 : i32
    return %c0_i32, %c0_i32_0 : i32, i32
  }
  func.func @transform_12(%arg0: i32) -> (i32, i32) {
    %c0_i32 = arith.constant 0 : i32
    %c0_i32_0 = arith.constant 0 : i32
    %c0_i32_1 = arith.constant 0 : i32
    return %c0_i32, %c0_i32_0 : i32, i32
  }
  func.func @transform_13(%arg0: i32) -> (i32, i32) {
    %c0_i32 = arith.constant 0 : i32
    %c0_i32_0 = arith.constant 0 : i32
    %c0_i32_1 = arith.constant 0 : i32
    return %c0_i32, %c0_i32_0 : i32, i32
  }
  func.func @transform_14(%arg0: i32) -> (i32, i32) {
    %c0_i32 = arith.constant 0 : i32
    %c0_i32_0 = arith.constant 0 : i32
    %c0_i32_1 = arith.constant 0 : i32
    return %c0_i32, %c0_i32_0 : i32, i32
  }
  func.func @transform_15(%arg0: i32) -> (i32, i32) {
    %c0_i32 = arith.constant 0 : i32
    %c0_i32_0 = arith.constant 0 : i32
    %c0_i32_1 = arith.constant 0 : i32
    return %c0_i32, %c0_i32_0 : i32, i32
  }
  func.func @transform_16(%arg0: i32) -> (i32, i32) {
    %c0_i32 = arith.constant 0 : i32
    %c0_i32_0 = arith.constant 0 : i32
    %c0_i32_1 = arith.constant 0 : i32
    return %c0_i32, %c0_i32_0 : i32, i32
  }
  func.func @transform_17(%arg0: i32) -> (i32, i32) {
    %c0_i32 = arith.constant 0 : i32
    %c0_i32_0 = arith.constant 0 : i32
    %c0_i32_1 = arith.constant 0 : i32
    return %c0_i32, %c0_i32_0 : i32, i32
  }
  func.func @transform_18(%arg0: i32) -> (i32, i32) {
    %c0_i32 = arith.constant 0 : i32
    %c0_i32_0 = arith.constant 0 : i32
    %c0_i32_1 = arith.constant 0 : i32
    return %c0_i32, %c0_i32_0 : i32, i32
  }
  func.func @transform_19(%arg0: i32) -> (i32, i32) {
    %c0_i32 = arith.constant 0 : i32
    %c0_i32_0 = arith.constant 0 : i32
    %c0_i32_1 = arith.constant 0 : i32
    return %c0_i32, %c0_i32_0 : i32, i32
  }
  func.func @transform_20(%arg0: i32) -> (i32, i32) {
    %c0_i32 = arith.constant 0 : i32
    %c0_i32_0 = arith.constant 0 : i32
    %c0_i32_1 = arith.constant 0 : i32
    return %c0_i32, %c0_i32_0 : i32, i32
  }
  func.func @transform_21(%arg0: i32) -> (i32, i32) {
    %c0_i32 = arith.constant 0 : i32
    %c0_i32_0 = arith.constant 0 : i32
    %c0_i32_1 = arith.constant 0 : i32
    return %c0_i32, %c0_i32_0 : i32, i32
  }
  func.func @transform_22(%arg0: i32) -> (i32, i32) {
    %c0_i32 = arith.constant 0 : i32
    %c0_i32_0 = arith.constant 0 : i32
    %c0_i32_1 = arith.constant 0 : i32
    return %c0_i32, %c0_i32_0 : i32, i32
  }
  func.func @transform_23(%arg0: i32) -> (i32, i32) {
    %c0_i32 = arith.constant 0 : i32
    %c0_i32_0 = arith.constant 0 : i32
    %c0_i32_1 = arith.constant 0 : i32
    return %c0_i32, %c0_i32_0 : i32, i32
  }
  func.func @transform_24(%arg0: i32) -> (i32, i32, i32) {
    %c0_i32 = arith.constant 0 : i32
    %c0_i32_0 = arith.constant 0 : i32
    %c0_i32_1 = arith.constant 0 : i32
    %c0_i32_2 = arith.constant 0 : i32
    return %c0_i32, %c0_i32_0, %c0_i32_1 : i32, i32, i32
  }
}

</mosaic_0001>

<llo_original>
// kernel: tpu_custom_call.1
$region0: #{tpu_custom_call.1}
  #allocation0 [shape = 'u32[]', space=smem, size = 0x4, offset = 0x4, fixed_abs, tag = 'smem constant byte address 0x4 - core index']
  #allocation1 [shape = 'u32[144,128]{1,0:T(1,128)}', space=vmem, size = 0x12000, scoped, tag = 'internal scratch']
  %s0 = inlined_call_operand.vmem [shape: f32[8,4,2,32], index: 0, kind: input, shape index: {}]
  %s1 = inlined_call_operand.hbm [shape: f32[2,32], index: 1, kind: input, shape index: {}]
  %s2 = inlined_call_operand.hbm [shape: f32[2,32], index: 2, kind: input, shape index: {}]
  %s3 = inlined_call_operand.vmem [shape: f32[4,32,32], index: 3, kind: input, shape index: {}]
  %s4 = inlined_call_operand.hbm [shape: f32[32,64], index: 4, kind: input, shape index: {}]
  %s5 = inlined_call_operand.hbm [shape: f32[1,64], index: 5, kind: input, shape index: {}]
  %s6 = inlined_call_operand.hbm [shape: f32[16,32], index: 6, kind: input, shape index: {}]
  %s7 = inlined_call_operand.vmem [shape: f32[32,16], index: 7, kind: input, shape index: {}]
  %s8 = inlined_call_operand.hbm [shape: f32[8,32], index: 8, kind: input, shape index: {}]
  %s9 = inlined_call_operand.vmem [shape: f32[32,8], index: 9, kind: input, shape index: {}]
  %s10 = inlined_call_operand.hbm [shape: f32[32,32], index: 10, kind: input, shape index: {}]
  %s11 = inlined_call_operand.vmem [shape: f32[32,1], index: 11, kind: input, shape index: {}]
  %s12 = inlined_call_operand.hbm [shape: f32[32,32], index: 12, kind: input, shape index: {}]
  %s13 = inlined_call_operand.vmem [shape: f32[1,32], index: 13, kind: input, shape index: {}]
  %s14 = inlined_call_operand.hbm [shape: f32[32,32], index: 14, kind: input, shape index: {}]
  %s15 = inlined_call_operand.vmem [shape: f32[32,1], index: 15, kind: input, shape index: {}]
  %s16 = inlined_call_operand.vmem [shape: f32[32,32], index: 16, kind: input, shape index: {}]
  %s17 = inlined_call_operand.hbm [shape: f32[1,32], index: 17, kind: input, shape index: {}]
  %s18 = inlined_call_operand.hbm [shape: f32[2,16], index: 18, kind: input, shape index: {}]
  %s19 = inlined_call_operand.hbm [shape: f32[2,8], index: 19, kind: input, shape index: {}]
  %s20 = inlined_call_operand.vmem [shape: f32[64,64], index: 20, kind: input, shape index: {}]
  %s21 = inlined_call_operand.vmem [shape: f32[1,64], index: 21, kind: input, shape index: {}]
  %s22 = inlined_call_operand.vmem [shape: f32[64,16], index: 22, kind: input, shape index: {}]
  %s23 = inlined_call_operand.vmem [shape: f32[1,16], index: 23, kind: input, shape index: {}]
  %s24 = inlined_call_operand.hbm [shape: f32[8,2,16], index: 24, kind: output, shape index: {}]
  %s25 = sld [smem:[#allocation0]]
  $region154: #{tpu_custom_call.1} parent=0
    _
  %s27 = ssub.s32 1, %s25
  %s28 = scalar_select 0, %s27, %s25
  $region1: #{tpu_custom_call.1} parent=0
    #allocation2 [shape = 'u8[1024]{0}', space=vmem, size = 0x400, scoped, tag = 'input window, operand 1, single buffered']
    #allocation3 [shape = 's32[1]{0}', space=sflag, size = 0x4, scoped, tag = 'scoped memory for tpu_custom_call.1']
    #allocation4 [shape = 's32[1]{0}', space=sflag, size = 0x4, scoped, tag = 'scoped memory for tpu_custom_call.1']
    #allocation5 [shape = 'u8[1024]{0}', space=vmem, size = 0x400, scoped, tag = 'input window, operand 2, single buffered']
    #allocation6 [shape = 's32[1]{0}', space=sflag, size = 0x4, scoped, tag = 'scoped memory for tpu_custom_call.1']
    #allocation7 [shape = 'u8[16384]{0}', space=vmem, size = 0x4000, scoped, tag = 'input window, operand 4, single buffered']
    #allocation8 [shape = 'u8[512]{0}', space=vmem, size = 0x400, scoped, tag = 'input window, operand 5, single buffered']
    #allocation9 [shape = 's32[1]{0}', space=sflag, size = 0x4, scoped, tag = 'scoped memory for tpu_custom_call.1']
    #allocation10 [shape = 'u8[8192]{0}', space=vmem, size = 0x2000, scoped, tag = 'input window, operand 6, single buffered']
    #allocation11 [shape = 'u8[4096]{0}', space=vmem, size = 0x1000, scoped, tag = 'input window, operand 8, single buffered']
    #allocation12 [shape = 's32[1]{0}', space=sflag, size = 0x4, scoped, tag = 'scoped memory for tpu_custom_call.1']
    #allocation13 [shape = 'u8[16384]{0}', space=vmem, size = 0x4000, scoped, tag = 'input window, operand 10, single buffered']
    #allocation14 [shape = 'u8[16384]{0}', space=vmem, size = 0x4000, scoped, tag = 'input window, operand 12, single buffered']
    #allocation15 [shape = 's32[1]{0}', space=sflag, size = 0x4, scoped, tag = 'scoped memory for tpu_custom_call.1']
    #allocation16 [shape = 'u8[16384]{0}', space=vmem, size = 0x4000, scoped, tag = 'input window, operand 14, single buffered']
    #allocation17 [shape = 'u8[512]{0}', space=vmem, size = 0x400, scoped, tag = 'input window, operand 17, single buffered']
    #allocation18 [shape = 's32[1]{0}', space=sflag, size = 0x4, scoped, tag = 'scoped memory for tpu_custom_call.1']
    #allocation19 [shape = 'u8[1024]{0}', space=vmem, size = 0x400, scoped, tag = 'input window, operand 18, single buffered']
    #allocation20 [shape = 'u8[1024]{0}', space=vmem, size = 0x400, scoped, tag = 'input window, operand 19, single buffered']
    #allocation21 [shape = 's32[1]{0}', space=sflag, size = 0x4, scoped, tag = 'scoped memory for tpu_custom_call.1']
    #allocation22 [shape = 'u8[8192]{0}', space=vmem, size = 0x2000, scoped, tag = 'output window, operand 0, single buffered']
    %29 = vsyncpa [#allocation3], 0
    %30 = vsyncpa [#allocation6], 0
    %31 = vsyncpa [#allocation9], 0
    %32 = vsyncpa [#allocation12], 0
    %33 = vsyncpa [#allocation15], 0
    %34 = vsyncpa [#allocation18], 0
    %35 = vsyncpa [#allocation21], 0
    %36 = vsyncpa [#allocation4], 0
    // Predicated region
    $region2: #{tpu_custom_call.1} parent=1 // pred_check
      _
    $region3: #{tpu_custom_call.1} parent=1 // pred_check_branch
      %38 = sbr.rel (0) target = $region5
    $region4: #{tpu_custom_call.1} parent=1 // pred_region
      _
    $region5: #{tpu_custom_call.1} parent=1 // pred_fallthru
      _
    // Predicated region
    $region6: #{tpu_custom_call.1} parent=1 // pred_check
      _
    $region7: #{tpu_custom_call.1} parent=1 // pred_check_branch
      %40 = sbr.rel (0) target = $region9
    $region8: #{tpu_custom_call.1} parent=1 // pred_region
      %s42 = ssub.s32 32, 32
      %43 = vsyncadd [#allocation3], %s42
      %s45 = sshll.u32 [#allocation2], 4
      %s46 = int_to_ptr.vmem [resolvable:$true] %s45
      %48 = dma.hbm_to_vmem [thread:$0]  %s1, 32, %s46, [#allocation3]
    $region9: #{tpu_custom_call.1} parent=1 // pred_fallthru
      _
    // Predicated region
    $region10: #{tpu_custom_call.1} parent=1 // pred_check
      _
    $region11: #{tpu_custom_call.1} parent=1 // pred_check_branch
      %50 = sbr.rel (0) target = $region13
    $region12: #{tpu_custom_call.1} parent=1 // pred_region
      %s52 = ssub.s32 32, 32
      %53 = vsyncadd [#allocation6], %s52
      %s55 = sshll.u32 [#allocation5], 4
      %s56 = int_to_ptr.vmem [resolvable:$true] %s55
      %58 = dma.hbm_to_vmem [thread:$0]  %s2, 32, %s56, [#allocation6]
    $region13: #{tpu_custom_call.1} parent=1 // pred_fallthru
      _
    // Predicated region
    $region14: #{tpu_custom_call.1} parent=1 // pred_check
      _
    $region15: #{tpu_custom_call.1} parent=1 // pred_check_branch
      %60 = sbr.rel (0) target = $region17
    $region16: #{tpu_custom_call.1} parent=1 // pred_region
      _
    $region17: #{tpu_custom_call.1} parent=1 // pred_fallthru
      _
    // Predicated region
    $region18: #{tpu_custom_call.1} parent=1 // pred_check
      _
    $region19: #{tpu_custom_call.1} parent=1 // pred_check_branch
      %62 = sbr.rel (0) target = $region21
    $region20: #{tpu_custom_call.1} parent=1 // pred_region
      %s64 = ssub.s32 512, 512
      %65 = vsyncadd [#allocation6], %s64
      %s66 = sshll.u32 [#allocation7], 4
      %s67 = int_to_ptr.vmem [resolvable:$true] %s66
      %72 = dma.hbm_to_vmem [thread:$0]  %s4, 512, %s67, [#allocation6], 128, 128, 8
    $region21: #{tpu_custom_call.1} parent=1 // pred_fallthru
      _
    // Predicated region
    $region22: #{tpu_custom_call.1} parent=1 // pred_check
      _
    $region23: #{tpu_custom_call.1} parent=1 // pred_check_branch
      %74 = sbr.rel (0) target = $region25
    $region24: #{tpu_custom_call.1} parent=1 // pred_region
      %s76 = ssub.s32 16, 16
      %77 = vsyncadd [#allocation9], %s76
      %s79 = sshll.u32 [#allocation8], 4
      %s80 = int_to_ptr.vmem [resolvable:$true] %s79
      %82 = dma.hbm_to_vmem [thread:$0]  %s5, 16, %s80, [#allocation9]
    $region25: #{tpu_custom_call.1} parent=1 // pred_fallthru
      _
    // Predicated region
    $region26: #{tpu_custom_call.1} parent=1 // pred_check
      _
    $region27: #{tpu_custom_call.1} parent=1 // pred_check_branch
      %84 = sbr.rel (0) target = $region29
    $region28: #{tpu_custom_call.1} parent=1 // pred_region
      %s86 = ssub.s32 256, 256
      %87 = vsyncadd [#allocation9], %s86
      %s88 = sshll.u32 [#allocation10], 4
      %s89 = int_to_ptr.vmem [resolvable:$true] %s88
      %94 = dma.hbm_to_vmem [thread:$0]  %s6, 256, %s89, [#allocation9], 128, 128, 8
    $region29: #{tpu_custom_call.1} parent=1 // pred_fallthru
      _
    // Predicated region
    $region30: #{tpu_custom_call.1} parent=1 // pred_check
      _
    $region31: #{tpu_custom_call.1} parent=1 // pred_check_branch
      %96 = sbr.rel (0) target = $region33
    $region32: #{tpu_custom_call.1} parent=1 // pred_region
      _
    $region33: #{tpu_custom_call.1} parent=1 // pred_fallthru
      _
    // Predicated region
    $region34: #{tpu_custom_call.1} parent=1 // pred_check
      _
    $region35: #{tpu_custom_call.1} parent=1 // pred_check_branch
      %98 = sbr.rel (0) target = $region37
    $region36: #{tpu_custom_call.1} parent=1 // pred_region
      %s100 = ssub.s32 128, 128
      %101 = vsyncadd [#allocation12], %s100
      %s103 = sshll.u32 [#allocation11], 4
      %s104 = int_to_ptr.vmem [resolvable:$true] %s103
      %106 = dma.hbm_to_vmem [thread:$0]  %s8, 128, %s104, [#allocation12]
    $region37: #{tpu_custom_call.1} parent=1 // pred_fallthru
      _
    // Predicated region
    $region38: #{tpu_custom_call.1} parent=1 // pred_check
      _
    $region39: #{tpu_custom_call.1} parent=1 // pred_check_branch
      %108 = sbr.rel (0) target = $region41
    $region40: #{tpu_custom_call.1} parent=1 // pred_region
      _
    $region41: #{tpu_custom_call.1} parent=1 // pred_fallthru
      _
    // Predicated region
    $region42: #{tpu_custom_call.1} parent=1 // pred_check
      _
    $region43: #{tpu_custom_call.1} parent=1 // pred_check_branch
      %110 = sbr.rel (0) target = $region45
    $region44: #{tpu_custom_call.1} parent=1 // pred_region
      %s112 = ssub.s32 512, 512
      %113 = vsyncadd [#allocation12], %s112
      %s114 = sshll.u32 [#allocation13], 4
      %s115 = int_to_ptr.vmem [resolvable:$true] %s114
      %120 = dma.hbm_to_vmem [thread:$0]  %s10, 512, %s115, [#allocation12], 128, 128, 8
    $region45: #{tpu_custom_call.1} parent=1 // pred_fallthru
      _
    // Predicated region
    $region46: #{tpu_custom_call.1} parent=1 // pred_check
      _
    $region47: #{tpu_custom_call.1} parent=1 // pred_check_branch
      %122 = sbr.rel (0) target = $region49
    $region48: #{tpu_custom_call.1} parent=1 // pred_region
      _
    $region49: #{tpu_custom_call.1} parent=1 // pred_fallthru
      _
    // Predicated region
    $region50: #{tpu_custom_call.1} parent=1 // pred_check
      _
    $region51: #{tpu_custom_call.1} parent=1 // pred_check_branch
      %124 = sbr.rel (0) target = $region53
    $region52: #{tpu_custom_call.1} parent=1 // pred_region
      %s126 = ssub.s32 512, 512
      %127 = vsyncadd [#allocation15], %s126
      %s128 = sshll.u32 [#allocation14], 4
      %s129 = int_to_ptr.vmem [resolvable:$true] %s128
      %134 = dma.hbm_to_vmem [thread:$0]  %s12, 512, %s129, [#allocation15], 128, 128, 8
    $region53: #{tpu_custom_call.1} parent=1 // pred_fallthru
      _
    // Predicated region
    $region54: #{tpu_custom_call.1} parent=1 // pred_check
      _
    $region55: #{tpu_custom_call.1} parent=1 // pred_check_branch
      %136 = sbr.rel (0) target = $region57
    $region56: #{tpu_custom_call.1} parent=1 // pred_region
      _
    $region57: #{tpu_custom_call.1} parent=1 // pred_fallthru
      _
    // Predicated region
    $region58: #{tpu_custom_call.1} parent=1 // pred_check
      _
    $region59: #{tpu_custom_call.1} parent=1 // pred_check_branch
      %138 = sbr.rel (0) target = $region61
    $region60: #{tpu_custom_call.1} parent=1 // pred_region
      %s140 = ssub.s32 512, 512
      %141 = vsyncadd [#allocation15], %s140
      %s142 = sshll.u32 [#allocation16], 4
      %s143 = int_to_ptr.vmem [resolvable:$true] %s142
      %148 = dma.hbm_to_vmem [thread:$0]  %s14, 512, %s143, [#allocation15], 128, 128, 8
    $region61: #{tpu_custom_call.1} parent=1 // pred_fallthru
      _
    // Predicated region
    $region62: #{tpu_custom_call.1} parent=1 // pred_check
      _
    $region63: #{tpu_custom_call.1} parent=1 // pred_check_branch
      %150 = sbr.rel (0) target = $region65
    $region64: #{tpu_custom_call.1} parent=1 // pred_region
      _
    $region65: #{tpu_custom_call.1} parent=1 // pred_fallthru
      _
    // Predicated region
    $region66: #{tpu_custom_call.1} parent=1 // pred_check
      _
    $region67: #{tpu_custom_call.1} parent=1 // pred_check_branch
      %152 = sbr.rel (0) target = $region69
    $region68: #{tpu_custom_call.1} parent=1 // pred_region
      _
    $region69: #{tpu_custom_call.1} parent=1 // pred_fallthru
      _
    // Predicated region
    $region70: #{tpu_custom_call.1} parent=1 // pred_check
      _
    $region71: #{tpu_custom_call.1} parent=1 // pred_check_branch
      %154 = sbr.rel (0) target = $region73
    $region72: #{tpu_custom_call.1} parent=1 // pred_region
      %s156 = ssub.s32 16, 16
      %157 = vsyncadd [#allocation18], %s156
      %s159 = sshll.u32 [#allocation17], 4
      %s160 = int_to_ptr.vmem [resolvable:$true] %s159
      %162 = dma.hbm_to_vmem [thread:$0]  %s17, 16, %s160, [#allocation18]
    $region73: #{tpu_custom_call.1} parent=1 // pred_fallthru
      _
    // Predicated region
    $region74: #{tpu_custom_call.1} parent=1 // pred_check
      _
    $region75: #{tpu_custom_call.1} parent=1 // pred_check_branch
      %164 = sbr.rel (0) target = $region77
    $region76: #{tpu_custom_call.1} parent=1 // pred_region
      %s166 = ssub.s32 32, 32
      %167 = vsyncadd [#allocation18], %s166
      %s169 = sshll.u32 [#allocation19], 4
      %s170 = int_to_ptr.vmem [resolvable:$true] %s169
      %172 = dma.hbm_to_vmem [thread:$0]  %s18, 32, %s170, [#allocation18]
    $region77: #{tpu_custom_call.1} parent=1 // pred_fallthru
      _
    // Predicated region
    $region78: #{tpu_custom_call.1} parent=1 // pred_check
      _
    $region79: #{tpu_custom_call.1} parent=1 // pred_check_branch
      %174 = sbr.rel (0) target = $region81
    $region80: #{tpu_custom_call.1} parent=1 // pred_region
      %s176 = ssub.s32 32, 32
      %177 = vsyncadd [#allocation21], %s176
      %s179 = sshll.u32 [#allocation20], 4
      %s180 = int_to_ptr.vmem [resolvable:$true] %s179
      %182 = dma.hbm_to_vmem [thread:$0]  %s19, 32, %s180, [#allocation21]
    $region81: #{tpu_custom_call.1} parent=1 // pred_fallthru
      _
    // Predicated region
    $region82: #{tpu_custom_call.1} parent=1 // pred_check
      _
    $region83: #{tpu_custom_call.1} parent=1 // pred_check_branch
      %184 = sbr.rel (0) target = $region85
    $region84: #{tpu_custom_call.1} parent=1 // pred_region
      _
    $region85: #{tpu_custom_call.1} parent=1 // pred_fallthru
      _
    // Predicated region
    $region86: #{tpu_custom_call.1} parent=1 // pred_check
      _
    $region87: #{tpu_custom_call.1} parent=1 // pred_check_branch
      %186 = sbr.rel (0) target = $region89
    $region88: #{tpu_custom_call.1} parent=1 // pred_region
      _
    $region89: #{tpu_custom_call.1} parent=1 // pred_fallthru
      _
    // Predicated region
    $region90: #{tpu_custom_call.1} parent=1 // pred_check
      _
    $region91: #{tpu_custom_call.1} parent=1 // pred_check_branch
      %188 = sbr.rel (0) target = $region93
    $region92: #{tpu_custom_call.1} parent=1 // pred_region
      _
    $region93: #{tpu_custom_call.1} parent=1 // pred_fallthru
      _
    // Predicated region
    $region94: #{tpu_custom_call.1} parent=1 // pred_check
      _
    $region95: #{tpu_custom_call.1} parent=1 // pred_check_branch
      %190 = sbr.rel (0) target = $region97
    $region96: #{tpu_custom_call.1} parent=1 // pred_region
      _
    $region97: #{tpu_custom_call.1} parent=1 // pred_fallthru
      _
    // Predicated region
    $region98: #{tpu_custom_call.1} parent=1 // pred_check
      _
    $region99: #{tpu_custom_call.1} parent=1 // pred_check_branch
      %192 = sbr.rel (0) target = $region101
    $region100: #{tpu_custom_call.1} parent=1 // pred_region
      %193 = dma.done [#allocation3], 32
    $region101: #{tpu_custom_call.1} parent=1 // pred_fallthru
      _
    // Predicated region
    $region102: #{tpu_custom_call.1} parent=1 // pred_check
      _
    $region103: #{tpu_custom_call.1} parent=1 // pred_check_branch
      %195 = sbr.rel (0) target = $region105
    $region104: #{tpu_custom_call.1} parent=1 // pred_region
      %196 = dma.done [#allocation6], 32
    $region105: #{tpu_custom_call.1} parent=1 // pred_fallthru
      _
    // Predicated region
    $region106: #{tpu_custom_call.1} parent=1 // pred_check
      _
    $region107: #{tpu_custom_call.1} parent=1 // pred_check_branch
      %198 = sbr.rel (0) target = $region109
    $region108: #{tpu_custom_call.1} parent=1 // pred_region
      %199 = dma.done [#allocation6], 512
    $region109: #{tpu_custom_call.1} parent=1 // pred_fallthru
      _
    // Predicated region
    $region110: #{tpu_custom_call.1} parent=1 // pred_check
      _
    $region111: #{tpu_custom_call.1} parent=1 // pred_check_branch
      %201 = sbr.rel (0) target = $region113
    $region112: #{tpu_custom_call.1} parent=1 // pred_region
      %202 = dma.done [#allocation9], 16
    $region113: #{tpu_custom_call.1} parent=1 // pred_fallthru
      _
    // Predicated region
    $region114: #{tpu_custom_call.1} parent=1 // pred_check
      _
    $region115: #{tpu_custom_call.1} parent=1 // pred_check_branch
      %204 = sbr.rel (0) target = $region117
    $region116: #{tpu_custom_call.1} parent=1 // pred_region
      %205 = dma.done [#allocation9], 256
    $region117: #{tpu_custom_call.1} parent=1 // pred_fallthru
      _
    // Predicated region
    $region118: #{tpu_custom_call.1} parent=1 // pred_check
      _
    $region119: #{tpu_custom_call.1} parent=1 // pred_check_branch
      %207 = sbr.rel (0) target = $region121
    $region120: #{tpu_custom_call.1} parent=1 // pred_region
      %208 = dma.done [#allocation12], 128
    $region121: #{tpu_custom_call.1} parent=1 // pred_fallthru
      _
    // Predicated region
    $region122: #{tpu_custom_call.1} parent=1 // pred_check
      _
    $region123: #{tpu_custom_call.1} parent=1 // pred_check_branch
      %210 = sbr.rel (0) target = $region125
    $region124: #{tpu_custom_call.1} parent=1 // pred_region
      %211 = dma.done [#allocation12], 512
    $region125: #{tpu_custom_call.1} parent=1 // pred_fallthru
      _
    // Predicated region
    $region126: #{tpu_custom_call.1} parent=1 // pred_check
      _
    $region127: #{tpu_custom_call.1} parent=1 // pred_check_branch
      %213 = sbr.rel (0) target = $region129
    $region128: #{tpu_custom_call.1} parent=1 // pred_region
      %214 = dma.done [#allocation15], 512
    $region129: #{tpu_custom_call.1} parent=1 // pred_fallthru
      _
    // Predicated region
    $region130: #{tpu_custom_call.1} parent=1 // pred_check
      _
    $region131: #{tpu_custom_call.1} parent=1 // pred_check_branch
      %216 = sbr.rel (0) target = $region133
    $region132: #{tpu_custom_call.1} parent=1 // pred_region
      %217 = dma.done [#allocation15], 512
    $region133: #{tpu_custom_call.1} parent=1 // pred_fallthru
      _
    // Predicated region
    $region134: #{tpu_custom_call.1} parent=1 // pred_check
      _
    $region135: #{tpu_custom_call.1} parent=1 // pred_check_branch
      %219 = sbr.rel (0) target = $region137
    $region136: #{tpu_custom_call.1} parent=1 // pred_region
      %220 = dma.done [#allocation18], 16
    $region137: #{tpu_custom_call.1} parent=1 // pred_fallthru
      _
    // Predicated region
    $region138: #{tpu_custom_call.1} parent=1 // pred_check
      _
    $region139: #{tpu_custom_call.1} parent=1 // pred_check_branch
      %222 = sbr.rel (0) target = $region141
    $region140: #{tpu_custom_call.1} parent=1 // pred_region
      %223 = dma.done [#allocation18], 32
    $region141: #{tpu_custom_call.1} parent=1 // pred_fallthru
      _
    // Predicated region
    $region142: #{tpu_custom_call.1} parent=1 // pred_check
      _
    $region143: #{tpu_custom_call.1} parent=1 // pred_check_branch
      %225 = sbr.rel (0) target = $region145
    $region144: #{tpu_custom_call.1} parent=1 // pred_region
      %226 = dma.done [#allocation21], 32
    $region145: #{tpu_custom_call.1} parent=1 // pred_fallthru
      _
    %v227 = vld [vmem:[#allocation13] sm:$0xff]
    %v228 = vld [vmem:[#allocation13 + $0x8] sm:$0xff]
    %v229 = vld [vmem:[#allocation13 + $0x10] sm:$0xff]
    %v230 = vld [vmem:[#allocation13 + $0x18] sm:$0xff]
    %v231 = vld [vmem:[%s7] sm:$0xff]
    %v232 = vld [vmem:[%s7 + $0x8] sm:$0xff]
    %v233 = vld [vmem:[%s7 + $0x10] sm:$0xff]
    %v234 = vld [vmem:[%s7 + $0x18] sm:$0xff]
    %v235 = vld [vmem:[%s11] sm:$0xff]
    %v236 = vld [vmem:[%s11 + $0x8] sm:$0xff]
    %v237 = vld [vmem:[%s11 + $0x10] sm:$0xff]
    %v238 = vld [vmem:[%s11 + $0x18] sm:$0xff]
    %240 = vset.pattern.permute.xlu0 0
    %241 = vperm.xlu0 %240, %v235
    %v242 = vpop.permute.xlu0 %241
    %245 = vset.pattern.permute.xlu0 0
    %246 = vperm.xlu0 %245, %v236
    %v247 = vpop.permute.xlu0 %246
    %250 = vset.pattern.permute.xlu0 0
    %251 = vperm.xlu0 %250, %v237
    %v252 = vpop.permute.xlu0 %251
    %255 = vset.pattern.permute.xlu0 0
    %256 = vperm.xlu0 %255, %v238
    %v257 = vpop.permute.xlu0 %256
    %vm259 = vcmask 261120
    %v261 = vsel %vm259, %v227, 0
    %v264 = vsel %vm259, %v228, 0
    %v267 = vsel %vm259, %v229, 0
    %v270 = vsel %vm259, %v230, 0
    %272 = vmatprep.subr.mxu0 0.0
    %273 = vmatpush1.msra.mxu0 %v231
    %274 = vmatprep.subr.mxu0 0.0
    %275 = vmatpush1.msra.mxu0 %v232
    %276 = vmatprep.subr.mxu0 0.0
    %277 = vmatpush1.msra.mxu0 %v233
    %278 = vmatprep.subr.mxu0 0.0
    %279 = vmatpush1.msra.mxu0 %v234
    %280 = vmatprep.subr.mxu0 0.0
    %281 = vmatpush1.msra.mxu0 0.0
    %282 = vmatprep.subr.mxu0 0.0
    %283 = vmatpush1.msra.mxu0 0.0
    %284 = vmatprep.subr.mxu0 0.0
    %285 = vmatpush1.msra.mxu0 0.0
    %286 = vmatprep.subr.mxu0 0.0
    %287 = vmatpush1.msra.mxu0 0.0
    %288 = vmatprep.subr.mxu0 0.0
    %289 = vmatpush1.msra.mxu0 0.0
    %290 = vmatprep.subr.mxu0 0.0
    %291 = vmatpush1.msra.mxu0 0.0
    %292 = vmatprep.subr.mxu0 0.0
    %293 = vmatpush1.msra.mxu0 0.0
    %294 = vmatprep.subr.mxu0 0.0
    %295 = vmatpush1.msra.mxu0 0.0
    %296 = vmatprep.subr.mxu0 0.0
    %297 = vmatpush1.msra.mxu0 0.0
    %298 = vmatprep.subr.mxu0 0.0
    %299 = vmatpush1.msra.mxu0 0.0
    %300 = vmatprep.subr.mxu0 0.0
    %301 = vmatpush1.msra.mxu0 0.0
    %302 = vmatprep.subr.mxu0 0.0
    %303 = vmatpush1.msra.mxu0 0.0
    %304 = vmatprep.subr.mxu0 0.0
    %305 = vmatpush1.msra.mxu0 0.0
    %306 = vmatprep.subr.mxu0 0.0
    %307 = vmatpush1.msra.mxu0 0.0
    %308 = vmatprep.subr.mxu0 0.0
    %309 = vmatpush1.msra.mxu0 0.0
    %310 = vmatprep.subr.mxu0 0.0
    %311 = vmatpush1.msra.mxu0 0.0
    %312 = vmatprep.subr.mxu0 0.0
    %313 = vmatpush1.msra.mxu0 0.0
    %314 = vmatprep.subr.mxu0 0.0
    %315 = vmatpush1.msra.mxu0 0.0
    %316 = vmatprep.subr.mxu0 0.0
    %317 = vmatpush1.msra.mxu0 0.0
    %318 = vmatprep.subr.mxu0 0.0
    %319 = vmatpush1.msra.mxu0 0.0
    %320 = vmatprep.subr.mxu0 0.0
    %321 = vmatpush1.msra.mxu0 0.0
    %322 = vmatprep.subr.mxu0 0.0
    %323 = vmatpush1.msra.mxu0 0.0
    %324 = vmatprep.subr.mxu0 0.0
    %325 = vmatpush1.msra.mxu0 0.0
    %326 = vmatprep.subr.mxu0 0.0
    %327 = vmatpush1.msra.mxu0 0.0
    %328 = vmatprep.subr.mxu0 0.0
    %329 = vmatpush1.msra.mxu0 0.0
    %330 = vmatprep.subr.mxu0 0.0
    %331 = vmatpush1.msra.mxu0 0.0
    %332 = vmatprep.subr.mxu0 0.0
    %333 = vmatpush1.msra.mxu0 0.0
    %334 = vmatprep.subr.mxu0 0.0
    %335 = vmatpush1.msra.mxu0 0.0
    %336 = vmatprep.mubr.f32.mxu0 0.0
    %337 = vmatmul.mubr.f32.gmra.mrb[0].mxu0 %v261
    %v338 = vpop.f32.mrb[0].mxu0
    %v339 = vadd.f32 %v242, %v338
    %v340 = vpop.f32.mrb[0].mxu0
    %341 = vmatprep.mubr.f32.mxu0 0.0
    %342 = vmatmul.mubr.f32.gmra.mrb[0].mxu0 %v264
    %v343 = vpop.f32.mrb[0].mxu0
    %v344 = vadd.f32 %v247, %v343
    %v345 = vpop.f32.mrb[0].mxu0
    %346 = vmatprep.mubr.f32.mxu0 0.0
    %347 = vmatmul.mubr.f32.gmra.mrb[0].mxu0 %v267
    %v348 = vpop.f32.mrb[0].mxu0
    %v349 = vadd.f32 %v252, %v348
    %v350 = vpop.f32.mrb[0].mxu0
    %351 = vmatprep.mubr.f32.mxu0 0.0
    %352 = vmatmul.mubr.f32.gmra.mrb[0].mxu0 %v270
    %v353 = vpop.f32.mrb[0].mxu0
    %v354 = vadd.f32 %v257, %v353
    %v355 = vpop.f32.mrb[0].mxu0
    %356 = vdwg.mxu0
    %v357 = vld [vmem:[#allocation10] sm:$0xff]
    %v358 = vld [vmem:[#allocation10 + $0x8] sm:$0xff]
    %v359 = vld [vmem:[#allocation14] sm:$0xff]
    %v360 = vld [vmem:[#allocation14 + $0x8] sm:$0xff]
    %v361 = vld [vmem:[#allocation14 + $0x10] sm:$0xff]
    %v362 = vld [vmem:[#allocation14 + $0x18] sm:$0xff]
    %v363 = vld [vmem:[%s13] sm:$0x1]
    %v365 = vlaneseq
    %v366 = vshrl.u32 %v365, 7
    %v367 = vsub.s32 0, %v366
    %v368 = vrot.slane %v363, %v367
    %v371 = vsel %vm259, %v357, 0
    %v374 = vsel %vm259, %v358, 0
    %376 = vmatprep.subr.mxu0 0.0
    %377 = vmatpush1.msra.mxu0 %v359
    %378 = vmatprep.subr.mxu0 0.0
    %379 = vmatpush1.msra.mxu0 %v360
    %380 = vmatprep.subr.mxu0 0.0
    %381 = vmatpush1.msra.mxu0 %v361
    %382 = vmatprep.subr.mxu0 0.0
    %383 = vmatpush1.msra.mxu0 %v362
    %384 = vmatprep.subr.mxu0 0.0
    %385 = vmatpush1.msra.mxu0 0.0
    %386 = vmatprep.subr.mxu0 0.0
    %387 = vmatpush1.msra.mxu0 0.0
    %388 = vmatprep.subr.mxu0 0.0
    %389 = vmatpush1.msra.mxu0 0.0
    %390 = vmatprep.subr.mxu0 0.0
    %391 = vmatpush1.msra.mxu0 0.0
    %392 = vmatprep.subr.mxu0 0.0
    %393 = vmatpush1.msra.mxu0 0.0
    %394 = vmatprep.subr.mxu0 0.0
    %395 = vmatpush1.msra.mxu0 0.0
    %396 = vmatprep.subr.mxu0 0.0
    %397 = vmatpush1.msra.mxu0 0.0
    %398 = vmatprep.subr.mxu0 0.0
    %399 = vmatpush1.msra.mxu0 0.0
    %400 = vmatprep.subr.mxu0 0.0
    %401 = vmatpush1.msra.mxu0 0.0
    %402 = vmatprep.subr.mxu0 0.0
    %403 = vmatpush1.msra.mxu0 0.0
    %404 = vmatprep.subr.mxu0 0.0
    %405 = vmatpush1.msra.mxu0 0.0
    %406 = vmatprep.subr.mxu0 0.0
    %407 = vmatpush1.msra.mxu0 0.0
    %408 = vmatprep.subr.mxu0 0.0
    %409 = vmatpush1.msra.mxu0 0.0
    %410 = vmatprep.subr.mxu0 0.0
    %411 = vmatpush1.msra.mxu0 0.0
    %412 = vmatprep.subr.mxu0 0.0
    %413 = vmatpush1.msra.mxu0 0.0
    %414 = vmatprep.subr.mxu0 0.0
    %415 = vmatpush1.msra.mxu0 0.0
    %416 = vmatprep.subr.mxu0 0.0
    %417 = vmatpush1.msra.mxu0 0.0
    %418 = vmatprep.subr.mxu0 0.0
    %419 = vmatpush1.msra.mxu0 0.0
    %420 = vmatprep.subr.mxu0 0.0
    %421 = vmatpush1.msra.mxu0 0.0
    %422 = vmatprep.subr.mxu0 0.0
    %423 = vmatpush1.msra.mxu0 0.0
    %424 = vmatprep.subr.mxu0 0.0
    %425 = vmatpush1.msra.mxu0 0.0
    %426 = vmatprep.subr.mxu0 0.0
    %427 = vmatpush1.msra.mxu0 0.0
    %428 = vmatprep.subr.mxu0 0.0
    %429 = vmatpush1.msra.mxu0 0.0
    %430 = vmatprep.subr.mxu0 0.0
    %431 = vmatpush1.msra.mxu0 0.0
    %432 = vmatprep.subr.mxu0 0.0
    %433 = vmatpush1.msra.mxu0 0.0
    %434 = vmatprep.subr.mxu0 0.0
    %435 = vmatpush1.msra.mxu0 0.0
    %436 = vmatprep.subr.mxu0 0.0
    %437 = vmatpush1.msra.mxu0 0.0
    %438 = vmatprep.subr.mxu0 0.0
    %439 = vmatpush1.msra.mxu0 0.0
    %440 = vmatprep.mubr.f32.mxu0 0.0
    %441 = vmatmul.mubr.f32.gmra.mrb[0].mxu0 %v371
    %v442 = vpop.f32.mrb[0].mxu0
    %v443 = vadd.f32 %v368, %v442
    %v444 = vpop.f32.mrb[0].mxu0
    %445 = vmatprep.mubr.f32.mxu0 0.0
    %446 = vmatmul.mubr.f32.gmra.mrb[0].mxu0 %v374
    %v447 = vpop.f32.mrb[0].mxu0
    %v448 = vadd.f32 %v368, %v447
    %v449 = vpop.f32.mrb[0].mxu0
    %450 = vdwg.mxu0
    %v451 = vld [vmem:[#allocation16] sm:$0xff]
    %v452 = vld [vmem:[#allocation16 + $0x8] sm:$0xff]
    %v453 = vld [vmem:[#allocation16 + $0x10] sm:$0xff]
    %v454 = vld [vmem:[#allocation16 + $0x18] sm:$0xff]
    %v455 = vld [vmem:[%s9] sm:$0xff]
    %v456 = vld [vmem:[%s9 + $0x8] sm:$0xff]
    %v457 = vld [vmem:[%s9 + $0x10] sm:$0xff]
    %v458 = vld [vmem:[%s9 + $0x18] sm:$0xff]
    %v459 = vld [vmem:[%s15] sm:$0xff]
    %v460 = vld [vmem:[%s15 + $0x8] sm:$0xff]
    %v461 = vld [vmem:[%s15 + $0x10] sm:$0xff]
    %v462 = vld [vmem:[%s15 + $0x18] sm:$0xff]
    %464 = vset.pattern.permute.xlu0 0
    %465 = vperm.xlu0 %464, %v459
    %v466 = vpop.permute.xlu0 %465
    %469 = vset.pattern.permute.xlu0 0
    %470 = vperm.xlu0 %469, %v460
    %v471 = vpop.permute.xlu0 %470
    %474 = vset.pattern.permute.xlu0 0
    %475 = vperm.xlu0 %474, %v461
    %v476 = vpop.permute.xlu0 %475
    %479 = vset.pattern.permute.xlu0 0
    %480 = vperm.xlu0 %479, %v462
    %v481 = vpop.permute.xlu0 %480
    %v484 = vsel %vm259, %v451, 0
    %v487 = vsel %vm259, %v452, 0
    %v490 = vsel %vm259, %v453, 0
    %v493 = vsel %vm259, %v454, 0
    %495 = vmatprep.subr.mxu0 0.0
    %496 = vmatpush1.msra.mxu0 %v455
    %497 = vmatprep.subr.mxu0 0.0
    %498 = vmatpush1.msra.mxu0 %v456
    %499 = vmatprep.subr.mxu0 0.0
    %500 = vmatpush1.msra.mxu0 %v457
    %501 = vmatprep.subr.mxu0 0.0
    %502 = vmatpush1.msra.mxu0 %v458
    %503 = vmatprep.subr.mxu0 0.0
    %504 = vmatpush1.msra.mxu0 0.0
    %505 = vmatprep.subr.mxu0 0.0
    %506 = vmatpush1.msra.mxu0 0.0
    %507 = vmatprep.subr.mxu0 0.0
    %508 = vmatpush1.msra.mxu0 0.0
    %509 = vmatprep.subr.mxu0 0.0
    %510 = vmatpush1.msra.mxu0 0.0
    %511 = vmatprep.subr.mxu0 0.0
    %512 = vmatpush1.msra.mxu0 0.0
    %513 = vmatprep.subr.mxu0 0.0
    %514 = vmatpush1.msra.mxu0 0.0
    %515 = vmatprep.subr.mxu0 0.0
    %516 = vmatpush1.msra.mxu0 0.0
    %517 = vmatprep.subr.mxu0 0.0
    %518 = vmatpush1.msra.mxu0 0.0
    %519 = vmatprep.subr.mxu0 0.0
    %520 = vmatpush1.msra.mxu0 0.0
    %521 = vmatprep.subr.mxu0 0.0
    %522 = vmatpush1.msra.mxu0 0.0
    %523 = vmatprep.subr.mxu0 0.0
    %524 = vmatpush1.msra.mxu0 0.0
    %525 = vmatprep.subr.mxu0 0.0
    %526 = vmatpush1.msra.mxu0 0.0
    %527 = vmatprep.subr.mxu0 0.0
    %528 = vmatpush1.msra.mxu0 0.0
    %529 = vmatprep.subr.mxu0 0.0
    %530 = vmatpush1.msra.mxu0 0.0
    %531 = vmatprep.subr.mxu0 0.0
    %532 = vmatpush1.msra.mxu0 0.0
    %533 = vmatprep.subr.mxu0 0.0
    %534 = vmatpush1.msra.mxu0 0.0
    %535 = vmatprep.subr.mxu0 0.0
    %536 = vmatpush1.msra.mxu0 0.0
    %537 = vmatprep.subr.mxu0 0.0
    %538 = vmatpush1.msra.mxu0 0.0
    %539 = vmatprep.subr.mxu0 0.0
    %540 = vmatpush1.msra.mxu0 0.0
    %541 = vmatprep.subr.mxu0 0.0
    %542 = vmatpush1.msra.mxu0 0.0
    %543 = vmatprep.subr.mxu0 0.0
    %544 = vmatpush1.msra.mxu0 0.0
    %545 = vmatprep.subr.mxu0 0.0
    %546 = vmatpush1.msra.mxu0 0.0
    %547 = vmatprep.subr.mxu0 0.0
    %548 = vmatpush1.msra.mxu0 0.0
    %549 = vmatprep.subr.mxu0 0.0
    %550 = vmatpush1.msra.mxu0 0.0
    %551 = vmatprep.subr.mxu0 0.0
    %552 = vmatpush1.msra.mxu0 0.0
    %553 = vmatprep.subr.mxu0 0.0
    %554 = vmatpush1.msra.mxu0 0.0
    %555 = vmatprep.subr.mxu0 0.0
    %556 = vmatpush1.msra.mxu0 0.0
    %557 = vmatprep.subr.mxu0 0.0
    %558 = vmatpush1.msra.mxu0 0.0
    %559 = vmatprep.mubr.f32.mxu0 0.0
    %560 = vmatmul.mubr.f32.gmra.mrb[0].mxu0 %v484
    %v561 = vpop.f32.mrb[0].mxu0
    %v562 = vadd.f32 %v466, %v561
    %v563 = vpop.f32.mrb[0].mxu0
    %564 = vmatprep.mubr.f32.mxu0 0.0
    %565 = vmatmul.mubr.f32.gmra.mrb[0].mxu0 %v487
    %v566 = vpop.f32.mrb[0].mxu0
    %v567 = vadd.f32 %v471, %v566
    %v568 = vpop.f32.mrb[0].mxu0
    %569 = vmatprep.mubr.f32.mxu0 0.0
    %570 = vmatmul.mubr.f32.gmra.mrb[0].mxu0 %v490
    %v571 = vpop.f32.mrb[0].mxu0
    %v572 = vadd.f32 %v476, %v571
    %v573 = vpop.f32.mrb[0].mxu0
    %574 = vmatprep.mubr.f32.mxu0 0.0
    %575 = vmatmul.mubr.f32.gmra.mrb[0].mxu0 %v493
    %v576 = vpop.f32.mrb[0].mxu0
    %v577 = vadd.f32 %v481, %v576
    %v578 = vpop.f32.mrb[0].mxu0
    %579 = vdwg.mxu0
    %v580 = vld [vmem:[#allocation11] sm:$0xff]
    %v581 = vld [vmem:[%s16] sm:$0xff]
    %v582 = vld [vmem:[%s16 + $0x8] sm:$0xff]
    %v583 = vld [vmem:[%s16 + $0x10] sm:$0xff]
    %v584 = vld [vmem:[%s16 + $0x18] sm:$0xff]
    %v585 = vld [vmem:[#allocation17] sm:$0x1]
    %v587 = vlaneseq
    %v588 = vshrl.u32 %v587, 7
    %v589 = vsub.s32 0, %v588
    %v590 = vrot.slane %v585, %v589
    %v593 = vsel %vm259, %v580, 0
    %595 = vmatprep.subr.mxu0 0.0
    %596 = vmatpush1.msra.mxu0 %v581
    %597 = vmatprep.subr.mxu0 0.0
    %598 = vmatpush1.msra.mxu0 %v582
    %599 = vmatprep.subr.mxu0 0.0
    %600 = vmatpush1.msra.mxu0 %v583
    %601 = vmatprep.subr.mxu0 0.0
    %602 = vmatpush1.msra.mxu0 %v584
    %603 = vmatprep.subr.mxu0 0.0
    %604 = vmatpush1.msra.mxu0 0.0
    %605 = vmatprep.subr.mxu0 0.0
    %606 = vmatpush1.msra.mxu0 0.0
    %607 = vmatprep.subr.mxu0 0.0
    %608 = vmatpush1.msra.mxu0 0.0
    %609 = vmatprep.subr.mxu0 0.0
    %610 = vmatpush1.msra.mxu0 0.0
    %611 = vmatprep.subr.mxu0 0.0
    %612 = vmatpush1.msra.mxu0 0.0
    %613 = vmatprep.subr.mxu0 0.0
    %614 = vmatpush1.msra.mxu0 0.0
    %615 = vmatprep.subr.mxu0 0.0
    %616 = vmatpush1.msra.mxu0 0.0
    %617 = vmatprep.subr.mxu0 0.0
    %618 = vmatpush1.msra.mxu0 0.0
    %619 = vmatprep.subr.mxu0 0.0
    %620 = vmatpush1.msra.mxu0 0.0
    %621 = vmatprep.subr.mxu0 0.0
    %622 = vmatpush1.msra.mxu0 0.0
    %623 = vmatprep.subr.mxu0 0.0
    %624 = vmatpush1.msra.mxu0 0.0
    %625 = vmatprep.subr.mxu0 0.0
    %626 = vmatpush1.msra.mxu0 0.0
    %627 = vmatprep.subr.mxu0 0.0
    %628 = vmatpush1.msra.mxu0 0.0
    %629 = vmatprep.subr.mxu0 0.0
    %630 = vmatpush1.msra.mxu0 0.0
    %631 = vmatprep.subr.mxu0 0.0
    %632 = vmatpush1.msra.mxu0 0.0
    %633 = vmatprep.subr.mxu0 0.0
    %634 = vmatpush1.msra.mxu0 0.0
    %635 = vmatprep.subr.mxu0 0.0
    %636 = vmatpush1.msra.mxu0 0.0
    %637 = vmatprep.subr.mxu0 0.0
    %638 = vmatpush1.msra.mxu0 0.0
    %639 = vmatprep.subr.mxu0 0.0
    %640 = vmatpush1.msra.mxu0 0.0
    %641 = vmatprep.subr.mxu0 0.0
    %642 = vmatpush1.msra.mxu0 0.0
    %643 = vmatprep.subr.mxu0 0.0
    %644 = vmatpush1.msra.mxu0 0.0
    %645 = vmatprep.subr.mxu0 0.0
    %646 = vmatpush1.msra.mxu0 0.0
    %647 = vmatprep.subr.mxu0 0.0
    %648 = vmatpush1.msra.mxu0 0.0
    %649 = vmatprep.subr.mxu0 0.0
    %650 = vmatpush1.msra.mxu0 0.0
    %651 = vmatprep.subr.mxu0 0.0
    %652 = vmatpush1.msra.mxu0 0.0
    %653 = vmatprep.subr.mxu0 0.0
    %654 = vmatpush1.msra.mxu0 0.0
    %655 = vmatprep.subr.mxu0 0.0
    %656 = vmatpush1.msra.mxu0 0.0
    %657 = vmatprep.subr.mxu0 0.0
    %658 = vmatpush1.msra.mxu0 0.0
    %659 = vmatprep.mubr.f32.mxu0 0.0
    %660 = vmatmul.mubr.f32.gmra.mrb[0].mxu0 %v593
    %v661 = vpop.f32.mrb[0].mxu0
    %v662 = vadd.f32 %v590, %v661
    %v663 = vpop.f32.mrb[0].mxu0
    %664 = vdwg.mxu0
    %v665 = vld [vmem:[#allocation19] sm:$0x3]
    %v666 = vld [vmem:[#allocation20] sm:$0x3]
    %v667 = vld [vmem:[#allocation2] sm:$0x3]
    %v668 = vld [vmem:[#allocation5] sm:$0x3]
    %v669 = vld [vmem:[%s0] sm:$0x3]
    %v670 = vld [vmem:[%s0 + $0x2] sm:$0x3]
    %v671 = vld [vmem:[%s0 + $0x4] sm:$0x3]
    %v672 = vld [vmem:[%s0 + $0x6] sm:$0x3]
    %v673 = vld [vmem:[%s3] sm:$0xff]
    %v674 = vld [vmem:[%s3 + $0x8] sm:$0xff]
    %v675 = vld [vmem:[%s3 + $0x10] sm:$0xff]
    %v676 = vld [vmem:[%s3 + $0x18] sm:$0xff]
    %v678 = vsel %vm259, %v667, 0
    %680 = vmatprep.subr.mxu0 0.0
    %681 = vmatpush1.msra.mxu0 %v673
    %682 = vmatprep.subr.mxu0 0.0
    %683 = vmatpush1.msra.mxu0 %v674
    %684 = vmatprep.subr.mxu0 0.0
    %685 = vmatpush1.msra.mxu0 %v675
    %686 = vmatprep.subr.mxu0 0.0
    %687 = vmatpush1.msra.mxu0 %v676
    %688 = vmatprep.subr.mxu0 0.0
    %689 = vmatpush1.msra.mxu0 0.0
    %690 = vmatprep.subr.mxu0 0.0
    %691 = vmatpush1.msra.mxu0 0.0
    %692 = vmatprep.subr.mxu0 0.0
    %693 = vmatpush1.msra.mxu0 0.0
    %694 = vmatprep.subr.mxu0 0.0
    %695 = vmatpush1.msra.mxu0 0.0
    %696 = vmatprep.subr.mxu0 0.0
    %697 = vmatpush1.msra.mxu0 0.0
    %698 = vmatprep.subr.mxu0 0.0
    %699 = vmatpush1.msra.mxu0 0.0
    %700 = vmatprep.subr.mxu0 0.0
    %701 = vmatpush1.msra.mxu0 0.0
    %702 = vmatprep.subr.mxu0 0.0
    %703 = vmatpush1.msra.mxu0 0.0
    %704 = vmatprep.subr.mxu0 0.0
    %705 = vmatpush1.msra.mxu0 0.0
    %706 = vmatprep.subr.mxu0 0.0
    %707 = vmatpush1.msra.mxu0 0.0
    %708 = vmatprep.subr.mxu0 0.0
    %709 = vmatpush1.msra.mxu0 0.0
    %710 = vmatprep.subr.mxu0 0.0
    %711 = vmatpush1.msra.mxu0 0.0
    %712 = vmatprep.subr.mxu0 0.0
    %713 = vmatpush1.msra.mxu0 0.0
    %714 = vmatprep.subr.mxu0 0.0
    %715 = vmatpush1.msra.mxu0 0.0
    %716 = vmatprep.subr.mxu0 0.0
    %717 = vmatpush1.msra.mxu0 0.0
    %718 = vmatprep.subr.mxu0 0.0
    %719 = vmatpush1.msra.mxu0 0.0
    %720 = vmatprep.subr.mxu0 0.0
    %721 = vmatpush1.msra.mxu0 0.0
    %722 = vmatprep.subr.mxu0 0.0
    %723 = vmatpush1.msra.mxu0 0.0
    %724 = vmatprep.subr.mxu0 0.0
    %725 = vmatpush1.msra.mxu0 0.0
    %726 = vmatprep.subr.mxu0 0.0
    %727 = vmatpush1.msra.mxu0 0.0
    %728 = vmatprep.subr.mxu0 0.0
    %729 = vmatpush1.msra.mxu0 0.0
    %730 = vmatprep.subr.mxu0 0.0
    %731 = vmatpush1.msra.mxu0 0.0
    %732 = vmatprep.subr.mxu0 0.0
    %733 = vmatpush1.msra.mxu0 0.0
    %734 = vmatprep.subr.mxu0 0.0
    %735 = vmatpush1.msra.mxu0 0.0
    %736 = vmatprep.subr.mxu0 0.0
    %737 = vmatpush1.msra.mxu0 0.0
    %738 = vmatprep.subr.mxu0 0.0
    %739 = vmatpush1.msra.mxu0 0.0
    %740 = vmatprep.subr.mxu0 0.0
    %741 = vmatpush1.msra.mxu0 0.0
    %742 = vmatprep.subr.mxu0 0.0
    %743 = vmatpush1.msra.mxu0 0.0
    %744 = vmatprep.mubr.f32.mxu0 0.0
    %745 = vmatmul.mubr.f32.gmra.mrb[0].mxu0 %v678
    %v746 = vpop.f32.mrb[0].mxu0
    %v747 = vadd.f32 0.0, %v746
    %v748 = vpop.f32.mrb[0].mxu0
    %749 = vdwg.mxu0
    %v750 = vadd.f32 %v669, %v747
    %v751 = vxor.u32 %v750, 2147483648
    %v752 = vmul.f32 %v751, 1.442695
    %v753 = vpow.pop %v752
    %v754 = vadd.f32 %v753, 1.0
    %v755 = vrcp.pop %v754
    %v756 = vmul.f32 1.0, %v755
    %s757 = scalar_lea.vmem %s3, 32
    %v758 = vld [vmem:[%s757] sm:$0xff]
    %v759 = vld [vmem:[%s757 + $0x8] sm:$0xff]
    %v760 = vld [vmem:[%s757 + $0x10] sm:$0xff]
    %v761 = vld [vmem:[%s757 + $0x18] sm:$0xff]
    %762 = vmatprep.subr.mxu0 0.0
    %763 = vmatpush1.msra.mxu0 %v758
    %764 = vmatprep.subr.mxu0 0.0
    %765 = vmatpush1.msra.mxu0 %v759
    %766 = vmatprep.subr.mxu0 0.0
    %767 = vmatpush1.msra.mxu0 %v760
    %768 = vmatprep.subr.mxu0 0.0
    %769 = vmatpush1.msra.mxu0 %v761
    %770 = vmatprep.subr.mxu0 0.0
    %771 = vmatpush1.msra.mxu0 0.0
    %772 = vmatprep.subr.mxu0 0.0
    %773 = vmatpush1.msra.mxu0 0.0
    %774 = vmatprep.subr.mxu0 0.0
    %775 = vmatpush1.msra.mxu0 0.0
    %776 = vmatprep.subr.mxu0 0.0
    %777 = vmatpush1.msra.mxu0 0.0
    %778 = vmatprep.subr.mxu0 0.0
    %779 = vmatpush1.msra.mxu0 0.0
    %780 = vmatprep.subr.mxu0 0.0
    %781 = vmatpush1.msra.mxu0 0.0
    %782 = vmatprep.subr.mxu0 0.0
    %783 = vmatpush1.msra.mxu0 0.0
    %784 = vmatprep.subr.mxu0 0.0
    %785 = vmatpush1.msra.mxu0 0.0
    %786 = vmatprep.subr.mxu0 0.0
    %787 = vmatpush1.msra.mxu0 0.0
    %788 = vmatprep.subr.mxu0 0.0
    %789 = vmatpush1.msra.mxu0 0.0
    %790 = vmatprep.subr.mxu0 0.0
    %791 = vmatpush1.msra.mxu0 0.0
    %792 = vmatprep.subr.mxu0 0.0
    %793 = vmatpush1.msra.mxu0 0.0
    %794 = vmatprep.subr.mxu0 0.0
    %795 = vmatpush1.msra.mxu0 0.0
    %796 = vmatprep.subr.mxu0 0.0
    %797 = vmatpush1.msra.mxu0 0.0
    %798 = vmatprep.subr.mxu0 0.0
    %799 = vmatpush1.msra.mxu0 0.0
    %800 = vmatprep.subr.mxu0 0.0
    %801 = vmatpush1.msra.mxu0 0.0
    %802 = vmatprep.subr.mxu0 0.0
    %803 = vmatpush1.msra.mxu0 0.0
    %804 = vmatprep.subr.mxu0 0.0
    %805 = vmatpush1.msra.mxu0 0.0
    %806 = vmatprep.subr.mxu0 0.0
    %807 = vmatpush1.msra.mxu0 0.0
    %808 = vmatprep.subr.mxu0 0.0
    %809 = vmatpush1.msra.mxu0 0.0
    %810 = vmatprep.subr.mxu0 0.0
    %811 = vmatpush1.msra.mxu0 0.0
    %812 = vmatprep.subr.mxu0 0.0
    %813 = vmatpush1.msra.mxu0 0.0
    %814 = vmatprep.subr.mxu0 0.0
    %815 = vmatpush1.msra.mxu0 0.0
    %816 = vmatprep.subr.mxu0 0.0
    %817 = vmatpush1.msra.mxu0 0.0
    %818 = vmatprep.subr.mxu0 0.0
    %819 = vmatpush1.msra.mxu0 0.0
    %820 = vmatprep.subr.mxu0 0.0
    %821 = vmatpush1.msra.mxu0 0.0
    %822 = vmatprep.subr.mxu0 0.0
    %823 = vmatpush1.msra.mxu0 0.0
    %824 = vmatprep.subr.mxu0 0.0
    %825 = vmatpush1.msra.mxu0 0.0
    %826 = vmatprep.mubr.f32.mxu0 0.0
    %827 = vmatmul.mubr.f32.gmra.mrb[0].mxu0 %v678
    %v828 = vpop.f32.mrb[0].mxu0
    %v829 = vadd.f32 0.0, %v828
    %v830 = vpop.f32.mrb[0].mxu0
    %831 = vdwg.mxu0
    %v832 = vadd.f32 %v670, %v829
    %v833 = vxor.u32 %v832, 2147483648
    %v834 = vmul.f32 %v833, 1.442695
    %v835 = vpow.pop %v834
    %v836 = vadd.f32 %v835, 1.0
    %v837 = vrcp.pop %v836
    %v838 = vmul.f32 1.0, %v837
    %s839 = scalar_lea.vmem %s3, 64
    %v840 = vld [vmem:[%s839] sm:$0xff]
    %v841 = vld [vmem:[%s839 + $0x8] sm:$0xff]
    %v842 = vld [vmem:[%s839 + $0x10] sm:$0xff]
    %v843 = vld [vmem:[%s839 + $0x18] sm:$0xff]
    %844 = vmatprep.subr.mxu0 0.0
    %845 = vmatpush1.msra.mxu0 %v840
    %846 = vmatprep.subr.mxu0 0.0
    %847 = vmatpush1.msra.mxu0 %v841
    %848 = vmatprep.subr.mxu0 0.0
    %849 = vmatpush1.msra.mxu0 %v842
    %850 = vmatprep.subr.mxu0 0.0
    %851 = vmatpush1.msra.mxu0 %v843
    %852 = vmatprep.subr.mxu0 0.0
    %853 = vmatpush1.msra.mxu0 0.0
    %854 = vmatprep.subr.mxu0 0.0
    %855 = vmatpush1.msra.mxu0 0.0
    %856 = vmatprep.subr.mxu0 0.0
    %857 = vmatpush1.msra.mxu0 0.0
    %858 = vmatprep.subr.mxu0 0.0
    %859 = vmatpush1.msra.mxu0 0.0
    %860 = vmatprep.subr.mxu0 0.0
    %861 = vmatpush1.msra.mxu0 0.0
    %862 = vmatprep.subr.mxu0 0.0
    %863 = vmatpush1.msra.mxu0 0.0
    %864 = vmatprep.subr.mxu0 0.0
    %865 = vmatpush1.msra.mxu0 0.0
    %866 = vmatprep.subr.mxu0 0.0
    %867 = vmatpush1.msra.mxu0 0.0
    %868 = vmatprep.subr.mxu0 0.0
    %869 = vmatpush1.msra.mxu0 0.0
    %870 = vmatprep.subr.mxu0 0.0
    %871 = vmatpush1.msra.mxu0 0.0
    %872 = vmatprep.subr.mxu0 0.0
    %873 = vmatpush1.msra.mxu0 0.0
    %874 = vmatprep.subr.mxu0 0.0
    %875 = vmatpush1.msra.mxu0 0.0
    %876 = vmatprep.subr.mxu0 0.0
    %877 = vmatpush1.msra.mxu0 0.0
    %878 = vmatprep.subr.mxu0 0.0
    %879 = vmatpush1.msra.mxu0 0.0
    %880 = vmatprep.subr.mxu0 0.0
    %881 = vmatpush1.msra.mxu0 0.0
    %882 = vmatprep.subr.mxu0 0.0
    %883 = vmatpush1.msra.mxu0 0.0
    %884 = vmatprep.subr.mxu0 0.0
    %885 = vmatpush1.msra.mxu0 0.0
    %886 = vmatprep.subr.mxu0 0.0
    %887 = vmatpush1.msra.mxu0 0.0
    %888 = vmatprep.subr.mxu0 0.0
    %889 = vmatpush1.msra.mxu0 0.0
    %890 = vmatprep.subr.mxu0 0.0
    %891 = vmatpush1.msra.mxu0 0.0
    %892 = vmatprep.subr.mxu0 0.0
    %893 = vmatpush1.msra.mxu0 0.0
    %894 = vmatprep.subr.mxu0 0.0
    %895 = vmatpush1.msra.mxu0 0.0
    %896 = vmatprep.subr.mxu0 0.0
    %897 = vmatpush1.msra.mxu0 0.0
    %898 = vmatprep.subr.mxu0 0.0
    %899 = vmatpush1.msra.mxu0 0.0
    %900 = vmatprep.subr.mxu0 0.0
    %901 = vmatpush1.msra.mxu0 0.0
    %902 = vmatprep.subr.mxu0 0.0
    %903 = vmatpush1.msra.mxu0 0.0
    %904 = vmatprep.subr.mxu0 0.0
    %905 = vmatpush1.msra.mxu0 0.0
    %906 = vmatprep.subr.mxu0 0.0
    %907 = vmatpush1.msra.mxu0 0.0
    %908 = vmatprep.mubr.f32.mxu0 0.0
    %909 = vmatmul.mubr.f32.gmra.mrb[0].mxu0 %v678
    %v910 = vpop.f32.mrb[0].mxu0
    %v911 = vadd.f32 0.0, %v910
    %v912 = vpop.f32.mrb[0].mxu0
    %913 = vdwg.mxu0
    %v914 = vadd.f32 %v671, %v911
    %v915 = vtanh.pop %v914
    %s916 = scalar_lea.vmem %s3, 96
    %v917 = vld [vmem:[%s916] sm:$0xff]
    %v918 = vld [vmem:[%s916 + $0x8] sm:$0xff]
    %v919 = vld [vmem:[%s916 + $0x10] sm:$0xff]
    %v920 = vld [vmem:[%s916 + $0x18] sm:$0xff]
    %921 = vmatprep.subr.mxu0 0.0
    %922 = vmatpush1.msra.mxu0 %v917
    %923 = vmatprep.subr.mxu0 0.0
    %924 = vmatpush1.msra.mxu0 %v918
    %925 = vmatprep.subr.mxu0 0.0
    %926 = vmatpush1.msra.mxu0 %v919
    %927 = vmatprep.subr.mxu0 0.0
    %928 = vmatpush1.msra.mxu0 %v920
    %929 = vmatprep.subr.mxu0 0.0
    %930 = vmatpush1.msra.mxu0 0.0
    %931 = vmatprep.subr.mxu0 0.0
    %932 = vmatpush1.msra.mxu0 0.0
    %933 = vmatprep.subr.mxu0 0.0
    %934 = vmatpush1.msra.mxu0 0.0
    %935 = vmatprep.subr.mxu0 0.0
    %936 = vmatpush1.msra.mxu0 0.0
    %937 = vmatprep.subr.mxu0 0.0
    %938 = vmatpush1.msra.mxu0 0.0
    %939 = vmatprep.subr.mxu0 0.0
    %940 = vmatpush1.msra.mxu0 0.0
    %941 = vmatprep.subr.mxu0 0.0
    %942 = vmatpush1.msra.mxu0 0.0
    %943 = vmatprep.subr.mxu0 0.0
    %944 = vmatpush1.msra.mxu0 0.0
    %945 = vmatprep.subr.mxu0 0.0
    %946 = vmatpush1.msra.mxu0 0.0
    %947 = vmatprep.subr.mxu0 0.0
    %948 = vmatpush1.msra.mxu0 0.0
    %949 = vmatprep.subr.mxu0 0.0
    %950 = vmatpush1.msra.mxu0 0.0
    %951 = vmatprep.subr.mxu0 0.0
    %952 = vmatpush1.msra.mxu0 0.0
    %953 = vmatprep.subr.mxu0 0.0
    %954 = vmatpush1.msra.mxu0 0.0
    %955 = vmatprep.subr.mxu0 0.0
    %956 = vmatpush1.msra.mxu0 0.0
    %957 = vmatprep.subr.mxu0 0.0
    %958 = vmatpush1.msra.mxu0 0.0
    %959 = vmatprep.subr.mxu0 0.0
    %960 = vmatpush1.msra.mxu0 0.0
    %961 = vmatprep.subr.mxu0 0.0
    %962 = vmatpush1.msra.mxu0 0.0
    %963 = vmatprep.subr.mxu0 0.0
    %964 = vmatpush1.msra.mxu0 0.0
    %965 = vmatprep.subr.mxu0 0.0
    %966 = vmatpush1.msra.mxu0 0.0
    %967 = vmatprep.subr.mxu0 0.0
    %968 = vmatpush1.msra.mxu0 0.0
    %969 = vmatprep.subr.mxu0 0.0
    %970 = vmatpush1.msra.mxu0 0.0
    %971 = vmatprep.subr.mxu0 0.0
    %972 = vmatpush1.msra.mxu0 0.0
    %973 = vmatprep.subr.mxu0 0.0
    %974 = vmatpush1.msra.mxu0 0.0
    %975 = vmatprep.subr.mxu0 0.0
    %976 = vmatpush1.msra.mxu0 0.0
    %977 = vmatprep.subr.mxu0 0.0
    %978 = vmatpush1.msra.mxu0 0.0
    %979 = vmatprep.subr.mxu0 0.0
    %980 = vmatpush1.msra.mxu0 0.0
    %981 = vmatprep.subr.mxu0 0.0
    %982 = vmatpush1.msra.mxu0 0.0
    %983 = vmatprep.subr.mxu0 0.0
    %984 = vmatpush1.msra.mxu0 0.0
    %985 = vmatprep.mubr.f32.mxu0 0.0
    %986 = vmatmul.mubr.f32.gmra.mrb[0].mxu0 %v678
    %v987 = vpop.f32.mrb[0].mxu0
    %v988 = vadd.f32 0.0, %v987
    %v989 = vpop.f32.mrb[0].mxu0
    %990 = vdwg.mxu0
    %v991 = vadd.f32 %v672, %v988
    %v992 = vxor.u32 %v991, 2147483648
    %v993 = vmul.f32 %v992, 1.442695
    %v994 = vpow.pop %v993
    %v995 = vadd.f32 %v994, 1.0
    %v996 = vrcp.pop %v995
    %v997 = vmul.f32 1.0, %v996
    %v998 = vmul.f32 %v838, %v668
    %v999 = vmul.f32 %v756, %v915
    %v1000 = vadd.f32 %v998, %v999
    %v1001 = vtanh.pop %v1000
    %v1002 = vmul.f32 %v997, %v1001
    %v1003 = vld [vmem:[#allocation7] sm:$0xff]
    %v1004 = vld [vmem:[#allocation7 + $0x8] sm:$0xff]
    %v1005 = vld [vmem:[#allocation7 + $0x10] sm:$0xff]
    %v1006 = vld [vmem:[#allocation7 + $0x18] sm:$0xff]
    %v1007 = vld [vmem:[#allocation8] sm:$0x1]
    %v1009 = vlaneseq
    %v1010 = vshrl.u32 %v1009, 7
    %v1011 = vsub.s32 0, %v1010
    %v1012 = vrot.slane %v1007, %v1011
    %v1015 = vsel %vm259, %v1002, 0
    %1017 = vmatprep.subr.mxu0 0.0
    %1018 = vmatpush1.msra.mxu0 %v1003
    %1019 = vmatprep.subr.mxu0 0.0
    %1020 = vmatpush1.msra.mxu0 %v1004
    %1021 = vmatprep.subr.mxu0 0.0
    %1022 = vmatpush1.msra.mxu0 %v1005
    %1023 = vmatprep.subr.mxu0 0.0
    %1024 = vmatpush1.msra.mxu0 %v1006
    %1025 = vmatprep.subr.mxu0 0.0
    %1026 = vmatpush1.msra.mxu0 0.0
    %1027 = vmatprep.subr.mxu0 0.0
    %1028 = vmatpush1.msra.mxu0 0.0
    %1029 = vmatprep.subr.mxu0 0.0
    %1030 = vmatpush1.msra.mxu0 0.0
    %1031 = vmatprep.subr.mxu0 0.0
    %1032 = vmatpush1.msra.mxu0 0.0
    %1033 = vmatprep.subr.mxu0 0.0
    %1034 = vmatpush1.msra.mxu0 0.0
    %1035 = vmatprep.subr.mxu0 0.0
    %1036 = vmatpush1.msra.mxu0 0.0
    %1037 = vmatprep.subr.mxu0 0.0
    %1038 = vmatpush1.msra.mxu0 0.0
    %1039 = vmatprep.subr.mxu0 0.0
    %1040 = vmatpush1.msra.mxu0 0.0
    %1041 = vmatprep.subr.mxu0 0.0
    %1042 = vmatpush1.msra.mxu0 0.0
    %1043 = vmatprep.subr.mxu0 0.0
    %1044 = vmatpush1.msra.mxu0 0.0
    %1045 = vmatprep.subr.mxu0 0.0
    %1046 = vmatpush1.msra.mxu0 0.0
    %1047 = vmatprep.subr.mxu0 0.0
    %1048 = vmatpush1.msra.mxu0 0.0
    %1049 = vmatprep.subr.mxu0 0.0
    %1050 = vmatpush1.msra.mxu0 0.0
    %1051 = vmatprep.subr.mxu0 0.0
    %1052 = vmatpush1.msra.mxu0 0.0
    %1053 = vmatprep.subr.mxu0 0.0
    %1054 = vmatpush1.msra.mxu0 0.0
    %1055 = vmatprep.subr.mxu0 0.0
    %1056 = vmatpush1.msra.mxu0 0.0
    %1057 = vmatprep.subr.mxu0 0.0
    %1058 = vmatpush1.msra.mxu0 0.0
    %1059 = vmatprep.subr.mxu0 0.0
    %1060 = vmatpush1.msra.mxu0 0.0
    %1061 = vmatprep.subr.mxu0 0.0
    %1062 = vmatpush1.msra.mxu0 0.0
    %1063 = vmatprep.subr.mxu0 0.0
    %1064 = vmatpush1.msra.mxu0 0.0
    %1065 = vmatprep.subr.mxu0 0.0
    %1066 = vmatpush1.msra.mxu0 0.0
    %1067 = vmatprep.subr.mxu0 0.0
    %1068 = vmatpush1.msra.mxu0 0.0
    %1069 = vmatprep.subr.mxu0 0.0
    %1070 = vmatpush1.msra.mxu0 0.0
    %1071 = vmatprep.subr.mxu0 0.0
    %1072 = vmatpush1.msra.mxu0 0.0
    %1073 = vmatprep.subr.mxu0 0.0
    %1074 = vmatpush1.msra.mxu0 0.0
    %1075 = vmatprep.subr.mxu0 0.0
    %1076 = vmatpush1.msra.mxu0 0.0
    %1077 = vmatprep.subr.mxu0 0.0
    %1078 = vmatpush1.msra.mxu0 0.0
    %1079 = vmatprep.subr.mxu0 0.0
    %1080 = vmatpush1.msra.mxu0 0.0
    %1081 = vmatprep.mubr.f32.mxu0 0.0
    %1082 = vmatmul.mubr.f32.gmra.mrb[0].mxu0 %v1015
    %v1083 = vpop.f32.mrb[0].mxu0
    %v1084 = vadd.f32 %v1012, %v1083
    %v1085 = vpop.f32.mrb[0].mxu0
    %1086 = vdwg.mxu0
    %v1088 = vsel %vm259, %v1084, 0
    %1090 = vmatprep.subr.mxu0 0.0
    %1091 = vmatpush1.msra.mxu0 %v339
    %1092 = vmatprep.subr.mxu0 0.0
    %1093 = vmatpush1.msra.mxu0 %v344
    %1094 = vmatprep.subr.mxu0 0.0
    %1095 = vmatpush1.msra.mxu0 %v349
    %1096 = vmatprep.subr.mxu0 0.0
    %1097 = vmatpush1.msra.mxu0 %v354
    %1098 = vmatprep.subr.mxu0 0.0
    %1099 = vmatpush1.msra.mxu0 0.0
    %1100 = vmatprep.subr.mxu0 0.0
    %1101 = vmatpush1.msra.mxu0 0.0
    %1102 = vmatprep.subr.mxu0 0.0
    %1103 = vmatpush1.msra.mxu0 0.0
    %1104 = vmatprep.subr.mxu0 0.0
    %1105 = vmatpush1.msra.mxu0 0.0
    %1106 = vmatprep.subr.mxu0 0.0
    %1107 = vmatpush1.msra.mxu0 0.0
    %1108 = vmatprep.subr.mxu0 0.0
    %1109 = vmatpush1.msra.mxu0 0.0
    %1110 = vmatprep.subr.mxu0 0.0
    %1111 = vmatpush1.msra.mxu0 0.0
    %1112 = vmatprep.subr.mxu0 0.0
    %1113 = vmatpush1.msra.mxu0 0.0
    %1114 = vmatprep.subr.mxu0 0.0
    %1115 = vmatpush1.msra.mxu0 0.0
    %1116 = vmatprep.subr.mxu0 0.0
    %1117 = vmatpush1.msra.mxu0 0.0
    %1118 = vmatprep.subr.mxu0 0.0
    %1119 = vmatpush1.msra.mxu0 0.0
    %1120 = vmatprep.subr.mxu0 0.0
    %1121 = vmatpush1.msra.mxu0 0.0
    %1122 = vmatprep.subr.mxu0 0.0
    %1123 = vmatpush1.msra.mxu0 0.0
    %1124 = vmatprep.subr.mxu0 0.0
    %1125 = vmatpush1.msra.mxu0 0.0
    %1126 = vmatprep.subr.mxu0 0.0
    %1127 = vmatpush1.msra.mxu0 0.0
    %1128 = vmatprep.subr.mxu0 0.0
    %1129 = vmatpush1.msra.mxu0 0.0
    %1130 = vmatprep.subr.mxu0 0.0
    %1131 = vmatpush1.msra.mxu0 0.0
    %1132 = vmatprep.subr.mxu0 0.0
    %1133 = vmatpush1.msra.mxu0 0.0
    %1134 = vmatprep.subr.mxu0 0.0
    %1135 = vmatpush1.msra.mxu0 0.0
    %1136 = vmatprep.subr.mxu0 0.0
    %1137 = vmatpush1.msra.mxu0 0.0
    %1138 = vmatprep.subr.mxu0 0.0
    %1139 = vmatpush1.msra.mxu0 0.0
    %1140 = vmatprep.subr.mxu0 0.0
    %1141 = vmatpush1.msra.mxu0 0.0
    %1142 = vmatprep.subr.mxu0 0.0
    %1143 = vmatpush1.msra.mxu0 0.0
    %1144 = vmatprep.subr.mxu0 0.0
    %1145 = vmatpush1.msra.mxu0 0.0
    %1146 = vmatprep.subr.mxu0 0.0
    %1147 = vmatpush1.msra.mxu0 0.0
    %1148 = vmatprep.subr.mxu0 0.0
    %1149 = vmatpush1.msra.mxu0 0.0
    %1150 = vmatprep.subr.mxu0 0.0
    %1151 = vmatpush1.msra.mxu0 0.0
    %1152 = vmatprep.subr.mxu0 0.0
    %1153 = vmatpush1.msra.mxu0 0.0
    %1154 = vmatprep.mubr.f32.mxu0 0.0
    %1155 = vmatmul.mubr.f32.gmra.mrb[0].mxu0 %v1088
    %v1156 = vpop.f32.mrb[0].mxu0
    %v1157 = vadd.f32 %v665, %v1156
    %v1158 = vpop.f32.mrb[0].mxu0
    %1159 = vdwg.mxu0
    %vm1160 = vcmask 123904
    %v1161 = vsel %vm1160, %v1157, -inf
    %1162 = vmax.xlane.f32.xlu0 %v1161
    %v1163 = vpop.xlane.xlu0 %1162
    %v1164 = vsub.f32 %v1157, %v1163
    %v1165 = vmul.f32 %v1164, 1.442695
    %v1166 = vpow.pop %v1165
    %v1167 = vsel %vm1160, %v1166, 0.0
    %1168 = vadd.xlane.f32.xlu0 %v1167
    %v1169 = vpop.xlane.xlu0 %1168
    %v1170 = vrcp.pop %v1169
    %v1171 = vmul.f32 %v1166, %v1170
    %vm1172 = vcmask 130048
    %v1174 = vsel %vm1172, %v1171, 0
    %1176 = vmatprep.subr.mxu0 0.0
    %1177 = vmatpush1.msra.mxu0 %v443
    %1178 = vmatprep.subr.mxu0 0.0
    %1179 = vmatpush1.msra.mxu0 %v448
    %1180 = vmatprep.subr.mxu0 0.0
    %1181 = vmatpush1.msra.mxu0 0.0
    %1182 = vmatprep.subr.mxu0 0.0
    %1183 = vmatpush1.msra.mxu0 0.0
    %1184 = vmatprep.subr.mxu0 0.0
    %1185 = vmatpush1.msra.mxu0 0.0
    %1186 = vmatprep.subr.mxu0 0.0
    %1187 = vmatpush1.msra.mxu0 0.0
    %1188 = vmatprep.subr.mxu0 0.0
    %1189 = vmatpush1.msra.mxu0 0.0
    %1190 = vmatprep.subr.mxu0 0.0
    %1191 = vmatpush1.msra.mxu0 0.0
    %1192 = vmatprep.subr.mxu0 0.0
    %1193 = vmatpush1.msra.mxu0 0.0
    %1194 = vmatprep.subr.mxu0 0.0
    %1195 = vmatpush1.msra.mxu0 0.0
    %1196 = vmatprep.subr.mxu0 0.0
    %1197 = vmatpush1.msra.mxu0 0.0
    %1198 = vmatprep.subr.mxu0 0.0
    %1199 = vmatpush1.msra.mxu0 0.0
    %1200 = vmatprep.subr.mxu0 0.0
    %1201 = vmatpush1.msra.mxu0 0.0
    %1202 = vmatprep.subr.mxu0 0.0
    %1203 = vmatpush1.msra.mxu0 0.0
    %1204 = vmatprep.subr.mxu0 0.0
    %1205 = vmatpush1.msra.mxu0 0.0
    %1206 = vmatprep.subr.mxu0 0.0
    %1207 = vmatpush1.msra.mxu0 0.0
    %1208 = vmatprep.subr.mxu0 0.0
    %1209 = vmatpush1.msra.mxu0 0.0
    %1210 = vmatprep.subr.mxu0 0.0
    %1211 = vmatpush1.msra.mxu0 0.0
    %1212 = vmatprep.subr.mxu0 0.0
    %1213 = vmatpush1.msra.mxu0 0.0
    %1214 = vmatprep.subr.mxu0 0.0
    %1215 = vmatpush1.msra.mxu0 0.0
    %1216 = vmatprep.subr.mxu0 0.0
    %1217 = vmatpush1.msra.mxu0 0.0
    %1218 = vmatprep.subr.mxu0 0.0
    %1219 = vmatpush1.msra.mxu0 0.0
    %1220 = vmatprep.subr.mxu0 0.0
    %1221 = vmatpush1.msra.mxu0 0.0
    %1222 = vmatprep.subr.mxu0 0.0
    %1223 = vmatpush1.msra.mxu0 0.0
    %1224 = vmatprep.subr.mxu0 0.0
    %1225 = vmatpush1.msra.mxu0 0.0
    %1226 = vmatprep.subr.mxu0 0.0
    %1227 = vmatpush1.msra.mxu0 0.0
    %1228 = vmatprep.subr.mxu0 0.0
    %1229 = vmatpush1.msra.mxu0 0.0
    %1230 = vmatprep.subr.mxu0 0.0
    %1231 = vmatpush1.msra.mxu0 0.0
    %1232 = vmatprep.subr.mxu0 0.0
    %1233 = vmatpush1.msra.mxu0 0.0
    %1234 = vmatprep.subr.mxu0 0.0
    %1235 = vmatpush1.msra.mxu0 0.0
    %1236 = vmatprep.subr.mxu0 0.0
    %1237 = vmatpush1.msra.mxu0 0.0
    %1238 = vmatprep.subr.mxu0 0.0
    %1239 = vmatpush1.msra.mxu0 0.0
    %1240 = vmatprep.mubr.f32.mxu0 0.0
    %1241 = vmatmul.mubr.f32.gmra.mrb[0].mxu0 %v1174
    %v1242 = vpop.f32.mrb[0].mxu0
    %v1243 = vadd.f32 0.0, %v1242
    %v1244 = vpop.f32.mrb[0].mxu0
    %1245 = vdwg.mxu0
    %1246 = vrot.lane.b32.xlu0 %v1084, 96
    %v1247 = vpop.permute.xlu0 %1246
    %v1248 = vsel %vm259, %v1247, 0
    %1250 = vmatprep.subr.mxu0 0.0
    %1251 = vmatpush1.msra.mxu0 %v562
    %1252 = vmatprep.subr.mxu0 0.0
    %1253 = vmatpush1.msra.mxu0 %v567
    %1254 = vmatprep.subr.mxu0 0.0
    %1255 = vmatpush1.msra.mxu0 %v572
    %1256 = vmatprep.subr.mxu0 0.0
    %1257 = vmatpush1.msra.mxu0 %v577
    %1258 = vmatprep.subr.mxu0 0.0
    %1259 = vmatpush1.msra.mxu0 0.0
    %1260 = vmatprep.subr.mxu0 0.0
    %1261 = vmatpush1.msra.mxu0 0.0
    %1262 = vmatprep.subr.mxu0 0.0
    %1263 = vmatpush1.msra.mxu0 0.0
    %1264 = vmatprep.subr.mxu0 0.0
    %1265 = vmatpush1.msra.mxu0 0.0
    %1266 = vmatprep.subr.mxu0 0.0
    %1267 = vmatpush1.msra.mxu0 0.0
    %1268 = vmatprep.subr.mxu0 0.0
    %1269 = vmatpush1.msra.mxu0 0.0
    %1270 = vmatprep.subr.mxu0 0.0
    %1271 = vmatpush1.msra.mxu0 0.0
    %1272 = vmatprep.subr.mxu0 0.0
    %1273 = vmatpush1.msra.mxu0 0.0
    %1274 = vmatprep.subr.mxu0 0.0
    %1275 = vmatpush1.msra.mxu0 0.0
    %1276 = vmatprep.subr.mxu0 0.0
    %1277 = vmatpush1.msra.mxu0 0.0
    %1278 = vmatprep.subr.mxu0 0.0
    %1279 = vmatpush1.msra.mxu0 0.0
    %1280 = vmatprep.subr.mxu0 0.0
    %1281 = vmatpush1.msra.mxu0 0.0
    %1282 = vmatprep.subr.mxu0 0.0
    %1283 = vmatpush1.msra.mxu0 0.0
    %1284 = vmatprep.subr.mxu0 0.0
    %1285 = vmatpush1.msra.mxu0 0.0
    %1286 = vmatprep.subr.mxu0 0.0
    %1287 = vmatpush1.msra.mxu0 0.0
    %1288 = vmatprep.subr.mxu0 0.0
    %1289 = vmatpush1.msra.mxu0 0.0
    %1290 = vmatprep.subr.mxu0 0.0
    %1291 = vmatpush1.msra.mxu0 0.0
    %1292 = vmatprep.subr.mxu0 0.0
    %1293 = vmatpush1.msra.mxu0 0.0
    %1294 = vmatprep.subr.mxu0 0.0
    %1295 = vmatpush1.msra.mxu0 0.0
    %1296 = vmatprep.subr.mxu0 0.0
    %1297 = vmatpush1.msra.mxu0 0.0
    %1298 = vmatprep.subr.mxu0 0.0
    %1299 = vmatpush1.msra.mxu0 0.0
    %1300 = vmatprep.subr.mxu0 0.0
    %1301 = vmatpush1.msra.mxu0 0.0
    %1302 = vmatprep.subr.mxu0 0.0
    %1303 = vmatpush1.msra.mxu0 0.0
    %1304 = vmatprep.subr.mxu0 0.0
    %1305 = vmatpush1.msra.mxu0 0.0
    %1306 = vmatprep.subr.mxu0 0.0
    %1307 = vmatpush1.msra.mxu0 0.0
    %1308 = vmatprep.subr.mxu0 0.0
    %1309 = vmatpush1.msra.mxu0 0.0
    %1310 = vmatprep.subr.mxu0 0.0
    %1311 = vmatpush1.msra.mxu0 0.0
    %1312 = vmatprep.subr.mxu0 0.0
    %1313 = vmatpush1.msra.mxu0 0.0
    %1314 = vmatprep.mubr.f32.mxu0 0.0
    %1315 = vmatmul.mubr.f32.gmra.mrb[0].mxu0 %v1248
    %v1316 = vpop.f32.mrb[0].mxu0
    %v1317 = vadd.f32 %v666, %v1316
    %v1318 = vpop.f32.mrb[0].mxu0
    %1319 = vdwg.mxu0
    %vm1320 = vcmask 58368
    %v1321 = vsel %vm1320, %v1317, -inf
    %1322 = vmax.xlane.f32.xlu0 %v1321
    %v1323 = vpop.xlane.xlu0 %1322
    %v1324 = vsub.f32 %v1317, %v1323
    %v1325 = vmul.f32 %v1324, 1.442695
    %v1326 = vpow.pop %v1325
    %v1327 = vsel %vm1320, %v1326, 0.0
    %1328 = vadd.xlane.f32.xlu0 %v1327
    %v1329 = vpop.xlane.xlu0 %1328
    %v1330 = vrcp.pop %v1329
    %v1331 = vmul.f32 %v1326, %v1330
    %vm1332 = vcmask 64512
    %v1334 = vsel %vm1332, %v1331, 0
    %1336 = vmatprep.subr.mxu0 0.0
    %1337 = vmatpush1.msra.mxu0 %v662
    %1338 = vmatprep.subr.mxu0 0.0
    %1339 = vmatpush1.msra.mxu0 0.0
    %1340 = vmatprep.subr.mxu0 0.0
    %1341 = vmatpush1.msra.mxu0 0.0
    %1342 = vmatprep.subr.mxu0 0.0
    %1343 = vmatpush1.msra.mxu0 0.0
    %1344 = vmatprep.subr.mxu0 0.0
    %1345 = vmatpush1.msra.mxu0 0.0
    %1346 = vmatprep.subr.mxu0 0.0
    %1347 = vmatpush1.msra.mxu0 0.0
    %1348 = vmatprep.subr.mxu0 0.0
    %1349 = vmatpush1.msra.mxu0 0.0
    %1350 = vmatprep.subr.mxu0 0.0
    %1351 = vmatpush1.msra.mxu0 0.0
    %1352 = vmatprep.subr.mxu0 0.0
    %1353 = vmatpush1.msra.mxu0 0.0
    %1354 = vmatprep.subr.mxu0 0.0
    %1355 = vmatpush1.msra.mxu0 0.0
    %1356 = vmatprep.subr.mxu0 0.0
    %1357 = vmatpush1.msra.mxu0 0.0
    %1358 = vmatprep.subr.mxu0 0.0
    %1359 = vmatpush1.msra.mxu0 0.0
    %1360 = vmatprep.subr.mxu0 0.0
    %1361 = vmatpush1.msra.mxu0 0.0
    %1362 = vmatprep.subr.mxu0 0.0
    %1363 = vmatpush1.msra.mxu0 0.0
    %1364 = vmatprep.subr.mxu0 0.0
    %1365 = vmatpush1.msra.mxu0 0.0
    %1366 = vmatprep.subr.mxu0 0.0
    %1367 = vmatpush1.msra.mxu0 0.0
    %1368 = vmatprep.subr.mxu0 0.0
    %1369 = vmatpush1.msra.mxu0 0.0
    %1370 = vmatprep.subr.mxu0 0.0
    %1371 = vmatpush1.msra.mxu0 0.0
    %1372 = vmatprep.subr.mxu0 0.0
    %1373 = vmatpush1.msra.mxu0 0.0
    %1374 = vmatprep.subr.mxu0 0.0
    %1375 = vmatpush1.msra.mxu0 0.0
    %1376 = vmatprep.subr.mxu0 0.0
    %1377 = vmatpush1.msra.mxu0 0.0
    %1378 = vmatprep.subr.mxu0 0.0
    %1379 = vmatpush1.msra.mxu0 0.0
    %1380 = vmatprep.subr.mxu0 0.0
    %1381 = vmatpush1.msra.mxu0 0.0
    %1382 = vmatprep.subr.mxu0 0.0
    %1383 = vmatpush1.msra.mxu0 0.0
    %1384 = vmatprep.subr.mxu0 0.0
    %1385 = vmatpush1.msra.mxu0 0.0
    %1386 = vmatprep.subr.mxu0 0.0
    %1387 = vmatpush1.msra.mxu0 0.0
    %1388 = vmatprep.subr.mxu0 0.0
    %1389 = vmatpush1.msra.mxu0 0.0
    %1390 = vmatprep.subr.mxu0 0.0
    %1391 = vmatpush1.msra.mxu0 0.0
    %1392 = vmatprep.subr.mxu0 0.0
    %1393 = vmatpush1.msra.mxu0 0.0
    %1394 = vmatprep.subr.mxu0 0.0
    %1395 = vmatpush1.msra.mxu0 0.0
    %1396 = vmatprep.subr.mxu0 0.0
    %1397 = vmatpush1.msra.mxu0 0.0
    %1398 = vmatprep.subr.mxu0 0.0
    %1399 = vmatpush1.msra.mxu0 0.0
    %1400 = vmatprep.mubr.f32.mxu0 0.0
    %1401 = vmatmul.mubr.f32.gmra.mrb[0].mxu0 %v1334
    %v1402 = vpop.f32.mrb[0].mxu0
    %v1403 = vadd.f32 0.0, %v1402
    %v1404 = vpop.f32.mrb[0].mxu0
    %1405 = vdwg.mxu0
    %1407 = vrot.lane.b32.xlu0 %v1403, 32
    %v1408 = vpop.permute.xlu0 %1407
    %v1410 = vsel %vm259, %v1243, %v1408
    %v1411 = vld [vmem:[%s20] sm:$0xff]
    %v1412 = vld [vmem:[%s20 + $0x8] sm:$0xff]
    %v1413 = vld [vmem:[%s20 + $0x10] sm:$0xff]
    %v1414 = vld [vmem:[%s20 + $0x18] sm:$0xff]
    %v1415 = vld [vmem:[%s20 + $0x20] sm:$0xff]
    %v1416 = vld [vmem:[%s20 + $0x28] sm:$0xff]
    %v1417 = vld [vmem:[%s20 + $0x30] sm:$0xff]
    %v1418 = vld [vmem:[%s20 + $0x38] sm:$0xff]
    %v1419 = vld [vmem:[%s21] sm:$0x1]
    %v1421 = vlaneseq
    %v1422 = vshrl.u32 %v1421, 7
    %v1423 = vsub.s32 0, %v1422
    %v1424 = vrot.slane %v1419, %v1423
    %vm1426 = vcmask 523264
    %v1428 = vsel %vm1426, %v1410, 0
    %1430 = vmatprep.subr.mxu0 0.0
    %1431 = vmatpush1.msra.mxu0 %v1411
    %1432 = vmatprep.subr.mxu0 0.0
    %1433 = vmatpush1.msra.mxu0 %v1412
    %1434 = vmatprep.subr.mxu0 0.0
    %1435 = vmatpush1.msra.mxu0 %v1413
    %1436 = vmatprep.subr.mxu0 0.0
    %1437 = vmatpush1.msra.mxu0 %v1414
    %1438 = vmatprep.subr.mxu0 0.0
    %1439 = vmatpush1.msra.mxu0 %v1415
    %1440 = vmatprep.subr.mxu0 0.0
    %1441 = vmatpush1.msra.mxu0 %v1416
    %1442 = vmatprep.subr.mxu0 0.0
    %1443 = vmatpush1.msra.mxu0 %v1417
    %1444 = vmatprep.subr.mxu0 0.0
    %1445 = vmatpush1.msra.mxu0 %v1418
    %1446 = vmatprep.subr.mxu0 0.0
    %1447 = vmatpush1.msra.mxu0 0.0
    %1448 = vmatprep.subr.mxu0 0.0
    %1449 = vmatpush1.msra.mxu0 0.0
    %1450 = vmatprep.subr.mxu0 0.0
    %1451 = vmatpush1.msra.mxu0 0.0
    %1452 = vmatprep.subr.mxu0 0.0
    %1453 = vmatpush1.msra.mxu0 0.0
    %1454 = vmatprep.subr.mxu0 0.0
    %1455 = vmatpush1.msra.mxu0 0.0
    %1456 = vmatprep.subr.mxu0 0.0
    %1457 = vmatpush1.msra.mxu0 0.0
    %1458 = vmatprep.subr.mxu0 0.0
    %1459 = vmatpush1.msra.mxu0 0.0
    %1460 = vmatprep.subr.mxu0 0.0
    %1461 = vmatpush1.msra.mxu0 0.0
    %1462 = vmatprep.subr.mxu0 0.0
    %1463 = vmatpush1.msra.mxu0 0.0
    %1464 = vmatprep.subr.mxu0 0.0
    %1465 = vmatpush1.msra.mxu0 0.0
    %1466 = vmatprep.subr.mxu0 0.0
    %1467 = vmatpush1.msra.mxu0 0.0
    %1468 = vmatprep.subr.mxu0 0.0
    %1469 = vmatpush1.msra.mxu0 0.0
    %1470 = vmatprep.subr.mxu0 0.0
    %1471 = vmatpush1.msra.mxu0 0.0
    %1472 = vmatprep.subr.mxu0 0.0
    %1473 = vmatpush1.msra.mxu0 0.0
    %1474 = vmatprep.subr.mxu0 0.0
    %1475 = vmatpush1.msra.mxu0 0.0
    %1476 = vmatprep.subr.mxu0 0.0
    %1477 = vmatpush1.msra.mxu0 0.0
    %1478 = vmatprep.subr.mxu0 0.0
    %1479 = vmatpush1.msra.mxu0 0.0
    %1480 = vmatprep.subr.mxu0 0.0
    %1481 = vmatpush1.msra.mxu0 0.0
    %1482 = vmatprep.subr.mxu0 0.0
    %1483 = vmatpush1.msra.mxu0 0.0
    %1484 = vmatprep.subr.mxu0 0.0
    %1485 = vmatpush1.msra.mxu0 0.0
    %1486 = vmatprep.subr.mxu0 0.0
    %1487 = vmatpush1.msra.mxu0 0.0
    %1488 = vmatprep.subr.mxu0 0.0
    %1489 = vmatpush1.msra.mxu0 0.0
    %1490 = vmatprep.subr.mxu0 0.0
    %1491 = vmatpush1.msra.mxu0 0.0
    %1492 = vmatprep.subr.mxu0 0.0
    %1493 = vmatpush1.msra.mxu0 0.0
    %1494 = vmatprep.mubr.f32.mxu0 0.0
    %1495 = vmatmul.mubr.f32.gmra.mrb[0].mxu0 %v1428
    %v1496 = vpop.f32.mrb[0].mxu0
    %v1497 = vadd.f32 %v1424, %v1496
    %v1498 = vpop.f32.mrb[0].mxu0
    %1499 = vdwg.mxu0
    %v1500 = vmax.f32 %v1497, 0.0
    %v1501 = vld [vmem:[%s22] sm:$0xff]
    %v1502 = vld [vmem:[%s22 + $0x8] sm:$0xff]
    %v1503 = vld [vmem:[%s22 + $0x10] sm:$0xff]
    %v1504 = vld [vmem:[%s22 + $0x18] sm:$0xff]
    %v1505 = vld [vmem:[%s22 + $0x20] sm:$0xff]
    %v1506 = vld [vmem:[%s22 + $0x28] sm:$0xff]
    %v1507 = vld [vmem:[%s22 + $0x30] sm:$0xff]
    %v1508 = vld [vmem:[%s22 + $0x38] sm:$0xff]
    %v1509 = vld [vmem:[%s23] sm:$0x1]
    %v1511 = vlaneseq
    %v1512 = vshrl.u32 %v1511, 7
    %v1513 = vsub.s32 0, %v1512
    %v1514 = vrot.slane %v1509, %v1513
    %v1517 = vsel %vm1426, %v1500, 0
    %1519 = vmatprep.subr.mxu0 0.0
    %1520 = vmatpush1.msra.mxu0 %v1501
    %1521 = vmatprep.subr.mxu0 0.0
    %1522 = vmatpush1.msra.mxu0 %v1502
    %1523 = vmatprep.subr.mxu0 0.0
    %1524 = vmatpush1.msra.mxu0 %v1503
    %1525 = vmatprep.subr.mxu0 0.0
    %1526 = vmatpush1.msra.mxu0 %v1504
    %1527 = vmatprep.subr.mxu0 0.0
    %1528 = vmatpush1.msra.mxu0 %v1505
    %1529 = vmatprep.subr.mxu0 0.0
    %1530 = vmatpush1.msra.mxu0 %v1506
    %1531 = vmatprep.subr.mxu0 0.0
    %1532 = vmatpush1.msra.mxu0 %v1507
    %1533 = vmatprep.subr.mxu0 0.0
    %1534 = vmatpush1.msra.mxu0 %v1508
    %1535 = vmatprep.subr.mxu0 0.0
    %1536 = vmatpush1.msra.mxu0 0.0
    %1537 = vmatprep.subr.mxu0 0.0
    %1538 = vmatpush1.msra.mxu0 0.0
    %1539 = vmatprep.subr.mxu0 0.0
    %1540 = vmatpush1.msra.mxu0 0.0
    %1541 = vmatprep.subr.mxu0 0.0
    %1542 = vmatpush1.msra.mxu0 0.0
    %1543 = vmatprep.subr.mxu0 0.0
    %1544 = vmatpush1.msra.mxu0 0.0
    %1545 = vmatprep.subr.mxu0 0.0
    %1546 = vmatpush1.msra.mxu0 0.0
    %1547 = vmatprep.subr.mxu0 0.0
    %1548 = vmatpush1.msra.mxu0 0.0
    %1549 = vmatprep.subr.mxu0 0.0
    %1550 = vmatpush1.msra.mxu0 0.0
    %1551 = vmatprep.subr.mxu0 0.0
    %1552 = vmatpush1.msra.mxu0 0.0
    %1553 = vmatprep.subr.mxu0 0.0
    %1554 = vmatpush1.msra.mxu0 0.0
    %1555 = vmatprep.subr.mxu0 0.0
    %1556 = vmatpush1.msra.mxu0 0.0
    %1557 = vmatprep.subr.mxu0 0.0
    %1558 = vmatpush1.msra.mxu0 0.0
    %1559 = vmatprep.subr.mxu0 0.0
    %1560 = vmatpush1.msra.mxu0 0.0
    %1561 = vmatprep.subr.mxu0 0.0
    %1562 = vmatpush1.msra.mxu0 0.0
    %1563 = vmatprep.subr.mxu0 0.0
    %1564 = vmatpush1.msra.mxu0 0.0
    %1565 = vmatprep.subr.mxu0 0.0
    %1566 = vmatpush1.msra.mxu0 0.0
    %1567 = vmatprep.subr.mxu0 0.0
    %1568 = vmatpush1.msra.mxu0 0.0
    %1569 = vmatprep.subr.mxu0 0.0
    %1570 = vmatpush1.msra.mxu0 0.0
    %1571 = vmatprep.subr.mxu0 0.0
    %1572 = vmatpush1.msra.mxu0 0.0
    %1573 = vmatprep.subr.mxu0 0.0
    %1574 = vmatpush1.msra.mxu0 0.0
    %1575 = vmatprep.subr.mxu0 0.0
    %1576 = vmatpush1.msra.mxu0 0.0
    %1577 = vmatprep.subr.mxu0 0.0
    %1578 = vmatpush1.msra.mxu0 0.0
    %1579 = vmatprep.subr.mxu0 0.0
    %1580 = vmatpush1.msra.mxu0 0.0
    %1581 = vmatprep.subr.mxu0 0.0
    %1582 = vmatpush1.msra.mxu0 0.0
    %1583 = vmatprep.mubr.f32.mxu0 0.0
    %1584 = vmatmul.mubr.f32.gmra.mrb[0].mxu0 %v1517
    %v1585 = vpop.f32.mrb[0].mxu0
    %v1586 = vadd.f32 %v1514, %v1585
    %v1587 = vpop.f32.mrb[0].mxu0
    %1588 = vdwg.mxu0
    %1589 = vst.msk [vmem:[#allocation22] sm:$0x3] %vm1160, %v1586
    %s1590 = scalar_lea.vmem %s0, 8
    %v1591 = vld [vmem:[%s1590] sm:$0x3]
    %v1592 = vld [vmem:[%s1590 + $0x2] sm:$0x3]
    %v1593 = vld [vmem:[%s1590 + $0x4] sm:$0x3]
    %v1594 = vld [vmem:[%s1590 + $0x6] sm:$0x3]
    %v1595 = vld [vmem:[%s3] sm:$0xff]
    %v1596 = vld [vmem:[%s3 + $0x8] sm:$0xff]
    %v1597 = vld [vmem:[%s3 + $0x10] sm:$0xff]
    %v1598 = vld [vmem:[%s3 + $0x18] sm:$0xff]
    %1599 = vmatprep.subr.mxu0 0.0
    %1600 = vmatpush1.msra.mxu0 %v1595
    %1601 = vmatprep.subr.mxu0 0.0
    %1602 = vmatpush1.msra.mxu0 %v1596
    %1603 = vmatprep.subr.mxu0 0.0
    %1604 = vmatpush1.msra.mxu0 %v1597
    %1605 = vmatprep.subr.mxu0 0.0
    %1606 = vmatpush1.msra.mxu0 %v1598
    %1607 = vmatprep.subr.mxu0 0.0
    %1608 = vmatpush1.msra.mxu0 0.0
    %1609 = vmatprep.subr.mxu0 0.0
    %1610 = vmatpush1.msra.mxu0 0.0
    %1611 = vmatprep.subr.mxu0 0.0
    %1612 = vmatpush1.msra.mxu0 0.0
    %1613 = vmatprep.subr.mxu0 0.0
    %1614 = vmatpush1.msra.mxu0 0.0
    %1615 = vmatprep.subr.mxu0 0.0
    %1616 = vmatpush1.msra.mxu0 0.0
    %1617 = vmatprep.subr.mxu0 0.0
    %1618 = vmatpush1.msra.mxu0 0.0
    %1619 = vmatprep.subr.mxu0 0.0
    %1620 = vmatpush1.msra.mxu0 0.0
    %1621 = vmatprep.subr.mxu0 0.0
    %1622 = vmatpush1.msra.mxu0 0.0
    %1623 = vmatprep.subr.mxu0 0.0
    %1624 = vmatpush1.msra.mxu0 0.0
    %1625 = vmatprep.subr.mxu0 0.0
    %1626 = vmatpush1.msra.mxu0 0.0
    %1627 = vmatprep.subr.mxu0 0.0
    %1628 = vmatpush1.msra.mxu0 0.0
    %1629 = vmatprep.subr.mxu0 0.0
    %1630 = vmatpush1.msra.mxu0 0.0
    %1631 = vmatprep.subr.mxu0 0.0
    %1632 = vmatpush1.msra.mxu0 0.0
    %1633 = vmatprep.subr.mxu0 0.0
    %1634 = vmatpush1.msra.mxu0 0.0
    %1635 = vmatprep.subr.mxu0 0.0
    %1636 = vmatpush1.msra.mxu0 0.0
    %1637 = vmatprep.subr.mxu0 0.0
    %1638 = vmatpush1.msra.mxu0 0.0
    %1639 = vmatprep.subr.mxu0 0.0
    %1640 = vmatpush1.msra.mxu0 0.0
    %1641 = vmatprep.subr.mxu0 0.0
    %1642 = vmatpush1.msra.mxu0 0.0
    %1643 = vmatprep.subr.mxu0 0.0
    %1644 = vmatpush1.msra.mxu0 0.0
    %1645 = vmatprep.subr.mxu0 0.0
    %1646 = vmatpush1.msra.mxu0 0.0
    %1647 = vmatprep.subr.mxu0 0.0
    %1648 = vmatpush1.msra.mxu0 0.0
    %1649 = vmatprep.subr.mxu0 0.0
    %1650 = vmatpush1.msra.mxu0 0.0
    %1651 = vmatprep.subr.mxu0 0.0
    %1652 = vmatpush1.msra.mxu0 0.0
    %1653 = vmatprep.subr.mxu0 0.0
    %1654 = vmatpush1.msra.mxu0 0.0
    %1655 = vmatprep.subr.mxu0 0.0
    %1656 = vmatpush1.msra.mxu0 0.0
    %1657 = vmatprep.subr.mxu0 0.0
    %1658 = vmatpush1.msra.mxu0 0.0
    %1659 = vmatprep.subr.mxu0 0.0
    %1660 = vmatpush1.msra.mxu0 0.0
    %1661 = vmatprep.subr.mxu0 0.0
    %1662 = vmatpush1.msra.mxu0 0.0
    %1663 = vmatprep.mubr.f32.mxu0 0.0
    %1664 = vmatmul.mubr.f32.gmra.mrb[0].mxu0 %v1015
    %v1665 = vpop.f32.mrb[0].mxu0
    %v1666 = vadd.f32 0.0, %v1665
    %v1667 = vpop.f32.mrb[0].mxu0
    %1668 = vdwg.mxu0
    %v1669 = vadd.f32 %v1591, %v1666
    %v1670 = vxor.u32 %v1669, 2147483648
    %v1671 = vmul.f32 %v1670, 1.442695
    %v1672 = vpow.pop %v1671
    %v1673 = vadd.f32 %v1672, 1.0
    %v1674 = vrcp.pop %v1673
    %v1675 = vmul.f32 1.0, %v1674
    %v1676 = vld [vmem:[%s757] sm:$0xff]
    %v1677 = vld [vmem:[%s757 + $0x8] sm:$0xff]
    %v1678 = vld [vmem:[%s757 + $0x10] sm:$0xff]
    %v1679 = vld [vmem:[%s757 + $0x18] sm:$0xff]
    %1680 = vmatprep.subr.mxu0 0.0
    %1681 = vmatpush1.msra.mxu0 %v1676
    %1682 = vmatprep.subr.mxu0 0.0
    %1683 = vmatpush1.msra.mxu0 %v1677
    %1684 = vmatprep.subr.mxu0 0.0
    %1685 = vmatpush1.msra.mxu0 %v1678
    %1686 = vmatprep.subr.mxu0 0.0
    %1687 = vmatpush1.msra.mxu0 %v1679
    %1688 = vmatprep.subr.mxu0 0.0
    %1689 = vmatpush1.msra.mxu0 0.0
    %1690 = vmatprep.subr.mxu0 0.0
    %1691 = vmatpush1.msra.mxu0 0.0
    %1692 = vmatprep.subr.mxu0 0.0
    %1693 = vmatpush1.msra.mxu0 0.0
    %1694 = vmatprep.subr.mxu0 0.0
    %1695 = vmatpush1.msra.mxu0 0.0
    %1696 = vmatprep.subr.mxu0 0.0
    %1697 = vmatpush1.msra.mxu0 0.0
    %1698 = vmatprep.subr.mxu0 0.0
    %1699 = vmatpush1.msra.mxu0 0.0
    %1700 = vmatprep.subr.mxu0 0.0
    %1701 = vmatpush1.msra.mxu0 0.0
    %1702 = vmatprep.subr.mxu0 0.0
    %1703 = vmatpush1.msra.mxu0 0.0
    %1704 = vmatprep.subr.mxu0 0.0
    %1705 = vmatpush1.msra.mxu0 0.0
    %1706 = vmatprep.subr.mxu0 0.0
    %1707 = vmatpush1.msra.mxu0 0.0
    %1708 = vmatprep.subr.mxu0 0.0
    %1709 = vmatpush1.msra.mxu0 0.0
    %1710 = vmatprep.subr.mxu0 0.0
    %1711 = vmatpush1.msra.mxu0 0.0
    %1712 = vmatprep.subr.mxu0 0.0
    %1713 = vmatpush1.msra.mxu0 0.0
    %1714 = vmatprep.subr.mxu0 0.0
    %1715 = vmatpush1.msra.mxu0 0.0
    %1716 = vmatprep.subr.mxu0 0.0
    %1717 = vmatpush1.msra.mxu0 0.0
    %1718 = vmatprep.subr.mxu0 0.0
    %1719 = vmatpush1.msra.mxu0 0.0
    %1720 = vmatprep.subr.mxu0 0.0
    %1721 = vmatpush1.msra.mxu0 0.0
    %1722 = vmatprep.subr.mxu0 0.0
    %1723 = vmatpush1.msra.mxu0 0.0
    %1724 = vmatprep.subr.mxu0 0.0
    %1725 = vmatpush1.msra.mxu0 0.0
    %1726 = vmatprep.subr.mxu0 0.0
    %1727 = vmatpush1.msra.mxu0 0.0
    %1728 = vmatprep.subr.mxu0 0.0
    %1729 = vmatpush1.msra.mxu0 0.0
    %1730 = vmatprep.subr.mxu0 0.0
    %1731 = vmatpush1.msra.mxu0 0.0
    %1732 = vmatprep.subr.mxu0 0.0
    %1733 = vmatpush1.msra.mxu0 0.0
    %1734 = vmatprep.subr.mxu0 0.0
    %1735 = vmatpush1.msra.mxu0 0.0
    %1736 = vmatprep.subr.mxu0 0.0
    %1737 = vmatpush1.msra.mxu0 0.0
    %1738 = vmatprep.subr.mxu0 0.0
    %1739 = vmatpush1.msra.mxu0 0.0
    %1740 = vmatprep.subr.mxu0 0.0
    %1741 = vmatpush1.msra.mxu0 0.0
    %1742 = vmatprep.subr.mxu0 0.0
    %1743 = vmatpush1.msra.mxu0 0.0
    %1744 = vmatprep.mubr.f32.mxu0 0.0
    %1745 = vmatmul.mubr.f32.gmra.mrb[0].mxu0 %v1015
    %v1746 = vpop.f32.mrb[0].mxu0
    %v1747 = vadd.f32 0.0, %v1746
    %v1748 = vpop.f32.mrb[0].mxu0
    %1749 = vdwg.mxu0
    %v1750 = vadd.f32 %v1592, %v1747
    %v1751 = vxor.u32 %v1750, 2147483648
    %v1752 = vmul.f32 %v1751, 1.442695
    %v1753 = vpow.pop %v1752
    %v1754 = vadd.f32 %v1753, 1.0
    %v1755 = vrcp.pop %v1754
    %v1756 = vmul.f32 1.0, %v1755
    %v1757 = vld [vmem:[%s839] sm:$0xff]
    %v1758 = vld [vmem:[%s839 + $0x8] sm:$0xff]
    %v1759 = vld [vmem:[%s839 + $0x10] sm:$0xff]
    %v1760 = vld [vmem:[%s839 + $0x18] sm:$0xff]
    %1761 = vmatprep.subr.mxu0 0.0
    %1762 = vmatpush1.msra.mxu0 %v1757
    %1763 = vmatprep.subr.mxu0 0.0
    %1764 = vmatpush1.msra.mxu0 %v1758
    %1765 = vmatprep.subr.mxu0 0.0
    %1766 = vmatpush1.msra.mxu0 %v1759
    %1767 = vmatprep.subr.mxu0 0.0
    %1768 = vmatpush1.msra.mxu0 %v1760
    %1769 = vmatprep.subr.mxu0 0.0
    %1770 = vmatpush1.msra.mxu0 0.0
    %1771 = vmatprep.subr.mxu0 0.0
    %1772 = vmatpush1.msra.mxu0 0.0
    %1773 = vmatprep.subr.mxu0 0.0
    %1774 = vmatpush1.msra.mxu0 0.0
    %1775 = vmatprep.subr.mxu0 0.0
    %1776 = vmatpush1.msra.mxu0 0.0
    %1777 = vmatprep.subr.mxu0 0.0
    %1778 = vmatpush1.msra.mxu0 0.0
    %1779 = vmatprep.subr.mxu0 0.0
    %1780 = vmatpush1.msra.mxu0 0.0
    %1781 = vmatprep.subr.mxu0 0.0
    %1782 = vmatpush1.msra.mxu0 0.0
    %1783 = vmatprep.subr.mxu0 0.0
    %1784 = vmatpush1.msra.mxu0 0.0
    %1785 = vmatprep.subr.mxu0 0.0
    %1786 = vmatpush1.msra.mxu0 0.0
    %1787 = vmatprep.subr.mxu0 0.0
    %1788 = vmatpush1.msra.mxu0 0.0
    %1789 = vmatprep.subr.mxu0 0.0
    %1790 = vmatpush1.msra.mxu0 0.0
    %1791 = vmatprep.subr.mxu0 0.0
    %1792 = vmatpush1.msra.mxu0 0.0
    %1793 = vmatprep.subr.mxu0 0.0
    %1794 = vmatpush1.msra.mxu0 0.0
    %1795 = vmatprep.subr.mxu0 0.0
    %1796 = vmatpush1.msra.mxu0 0.0
    %1797 = vmatprep.subr.mxu0 0.0
    %1798 = vmatpush1.msra.mxu0 0.0
    %1799 = vmatprep.subr.mxu0 0.0
    %1800 = vmatpush1.msra.mxu0 0.0
    %1801 = vmatprep.subr.mxu0 0.0
    %1802 = vmatpush1.msra.mxu0 0.0
    %1803 = vmatprep.subr.mxu0 0.0
    %1804 = vmatpush1.msra.mxu0 0.0
    %1805 = vmatprep.subr.mxu0 0.0
    %1806 = vmatpush1.msra.mxu0 0.0
    %1807 = vmatprep.subr.mxu0 0.0
    %1808 = vmatpush1.msra.mxu0 0.0
    %1809 = vmatprep.subr.mxu0 0.0
    %1810 = vmatpush1.msra.mxu0 0.0
    %1811 = vmatprep.subr.mxu0 0.0
    %1812 = vmatpush1.msra.mxu0 0.0
    %1813 = vmatprep.subr.mxu0 0.0
    %1814 = vmatpush1.msra.mxu0 0.0
    %1815 = vmatprep.subr.mxu0 0.0
    %1816 = vmatpush1.msra.mxu0 0.0
    %1817 = vmatprep.subr.mxu0 0.0
    %1818 = vmatpush1.msra.mxu0 0.0
    %1819 = vmatprep.subr.mxu0 0.0
    %1820 = vmatpush1.msra.mxu0 0.0
    %1821 = vmatprep.subr.mxu0 0.0
    %1822 = vmatpush1.msra.mxu0 0.0
    %1823 = vmatprep.subr.mxu0 0.0
    %1824 = vmatpush1.msra.mxu0 0.0
    %1825 = vmatprep.mubr.f32.mxu0 0.0
    %1826 = vmatmul.mubr.f32.gmra.mrb[0].mxu0 %v1015
    %v1827 = vpop.f32.mrb[0].mxu0
    %v1828 = vadd.f32 0.0, %v1827
    %v1829 = vpop.f32.mrb[0].mxu0
    %1830 = vdwg.mxu0
    %v1831 = vadd.f32 %v1593, %v1828
    %v1832 = vtanh.pop %v1831
    %v1833 = vld [vmem:[%s916] sm:$0xff]
    %v1834 = vld [vmem:[%s916 + $0x8] sm:$0xff]
    %v1835 = vld [vmem:[%s916 + $0x10] sm:$0xff]
    %v1836 = vld [vmem:[%s916 + $0x18] sm:$0xff]
    %1837 = vmatprep.subr.mxu0 0.0
    %1838 = vmatpush1.msra.mxu0 %v1833
    %1839 = vmatprep.subr.mxu0 0.0
    %1840 = vmatpush1.msra.mxu0 %v1834
    %1841 = vmatprep.subr.mxu0 0.0
    %1842 = vmatpush1.msra.mxu0 %v1835
    %1843 = vmatprep.subr.mxu0 0.0
    %1844 = vmatpush1.msra.mxu0 %v1836
    %1845 = vmatprep.subr.mxu0 0.0
    %1846 = vmatpush1.msra.mxu0 0.0
    %1847 = vmatprep.subr.mxu0 0.0
    %1848 = vmatpush1.msra.mxu0 0.0
    %1849 = vmatprep.subr.mxu0 0.0
    %1850 = vmatpush1.msra.mxu0 0.0
    %1851 = vmatprep.subr.mxu0 0.0
    %1852 = vmatpush1.msra.mxu0 0.0
    %1853 = vmatprep.subr.mxu0 0.0
    %1854 = vmatpush1.msra.mxu0 0.0
    %1855 = vmatprep.subr.mxu0 0.0
    %1856 = vmatpush1.msra.mxu0 0.0
    %1857 = vmatprep.subr.mxu0 0.0
    %1858 = vmatpush1.msra.mxu0 0.0
    %1859 = vmatprep.subr.mxu0 0.0
    %1860 = vmatpush1.msra.mxu0 0.0
    %1861 = vmatprep.subr.mxu0 0.0
    %1862 = vmatpush1.msra.mxu0 0.0
    %1863 = vmatprep.subr.mxu0 0.0
    %1864 = vmatpush1.msra.mxu0 0.0
    %1865 = vmatprep.subr.mxu0 0.0
    %1866 = vmatpush1.msra.mxu0 0.0
    %1867 = vmatprep.subr.mxu0 0.0
    %1868 = vmatpush1.msra.mxu0 0.0
    %1869 = vmatprep.subr.mxu0 0.0
    %1870 = vmatpush1.msra.mxu0 0.0
    %1871 = vmatprep.subr.mxu0 0.0
    %1872 = vmatpush1.msra.mxu0 0.0
    %1873 = vmatprep.subr.mxu0 0.0
    %1874 = vmatpush1.msra.mxu0 0.0
    %1875 = vmatprep.subr.mxu0 0.0
    %1876 = vmatpush1.msra.mxu0 0.0
    %1877 = vmatprep.subr.mxu0 0.0
    %1878 = vmatpush1.msra.mxu0 0.0
    %1879 = vmatprep.subr.mxu0 0.0
    %1880 = vmatpush1.msra.mxu0 0.0
    %1881 = vmatprep.subr.mxu0 0.0
    %1882 = vmatpush1.msra.mxu0 0.0
    %1883 = vmatprep.subr.mxu0 0.0
    %1884 = vmatpush1.msra.mxu0 0.0
    %1885 = vmatprep.subr.mxu0 0.0
    %1886 = vmatpush1.msra.mxu0 0.0
    %1887 = vmatprep.subr.mxu0 0.0
    %1888 = vmatpush1.msra.mxu0 0.0
    %1889 = vmatprep.subr.mxu0 0.0
    %1890 = vmatpush1.msra.mxu0 0.0
    %1891 = vmatprep.subr.mxu0 0.0
    %1892 = vmatpush1.msra.mxu0 0.0
    %1893 = vmatprep.subr.mxu0 0.0
    %1894 = vmatpush1.msra.mxu0 0.0
    %1895 = vmatprep.subr.mxu0 0.0
    %1896 = vmatpush1.msra.mxu0 0.0
    %1897 = vmatprep.subr.mxu0 0.0
    %1898 = vmatpush1.msra.mxu0 0.0
    %1899 = vmatprep.subr.mxu0 0.0
    %1900 = vmatpush1.msra.mxu0 0.0
    %1901 = vmatprep.mubr.f32.mxu0 0.0
    %1902 = vmatmul.mubr.f32.gmra.mrb[0].mxu0 %v1015
    %v1903 = vpop.f32.mrb[0].mxu0
    %v1904 = vadd.f32 0.0, %v1903
    %v1905 = vpop.f32.mrb[0].mxu0
    %1906 = vdwg.mxu0
    %v1907 = vadd.f32 %v1594, %v1904
    %v1908 = vxor.u32 %v1907, 2147483648
    %v1909 = vmul.f32 %v1908, 1.442695
    %v1910 = vpow.pop %v1909
    %v1911 = vadd.f32 %v1910, 1.0
    %v1912 = vrcp.pop %v1911
    %v1913 = vmul.f32 1.0, %v1912
    %v1914 = vmul.f32 %v1756, %v1000
    %v1915 = vmul.f32 %v1675, %v1832
    %v1916 = vadd.f32 %v1914, %v1915
    %v1917 = vtanh.pop %v1916
    %v1918 = vmul.f32 %v1913, %v1917
    %v1919 = vld [vmem:[#allocation7] sm:$0xff]
    %v1920 = vld [vmem:[#allocation7 + $0x8] sm:$0xff]
    %v1921 = vld [vmem:[#allocation7 + $0x10] sm:$0xff]
    %v1922 = vld [vmem:[#allocation7 + $0x18] sm:$0xff]
    %v1923 = vld [vmem:[#allocation8] sm:$0x1]
    %v1925 = vlaneseq
    %v1926 = vshrl.u32 %v1925, 7
    %v1927 = vsub.s32 0, %v1926
    %v1928 = vrot.slane %v1923, %v1927
    %v1931 = vsel %vm259, %v1918, 0
    %1933 = vmatprep.subr.mxu0 0.0
    %1934 = vmatpush1.msra.mxu0 %v1919
    %1935 = vmatprep.subr.mxu0 0.0
    %1936 = vmatpush1.msra.mxu0 %v1920
    %1937 = vmatprep.subr.mxu0 0.0
    %1938 = vmatpush1.msra.mxu0 %v1921
    %1939 = vmatprep.subr.mxu0 0.0
    %1940 = vmatpush1.msra.mxu0 %v1922
    %1941 = vmatprep.subr.mxu0 0.0
    %1942 = vmatpush1.msra.mxu0 0.0
    %1943 = vmatprep.subr.mxu0 0.0
    %1944 = vmatpush1.msra.mxu0 0.0
    %1945 = vmatprep.subr.mxu0 0.0
    %1946 = vmatpush1.msra.mxu0 0.0
    %1947 = vmatprep.subr.mxu0 0.0
    %1948 = vmatpush1.msra.mxu0 0.0
    %1949 = vmatprep.subr.mxu0 0.0
    %1950 = vmatpush1.msra.mxu0 0.0
    %1951 = vmatprep.subr.mxu0 0.0
    %1952 = vmatpush1.msra.mxu0 0.0
    %1953 = vmatprep.subr.mxu0 0.0
    %1954 = vmatpush1.msra.mxu0 0.0
    %1955 = vmatprep.subr.mxu0 0.0
    %1956 = vmatpush1.msra.mxu0 0.0
    %1957 = vmatprep.subr.mxu0 0.0
    %1958 = vmatpush1.msra.mxu0 0.0
    %1959 = vmatprep.subr.mxu0 0.0
    %1960 = vmatpush1.msra.mxu0 0.0
    %1961 = vmatprep.subr.mxu0 0.0
    %1962 = vmatpush1.msra.mxu0 0.0
    %1963 = vmatprep.subr.mxu0 0.0
    %1964 = vmatpush1.msra.mxu0 0.0
    %1965 = vmatprep.subr.mxu0 0.0
    %1966 = vmatpush1.msra.mxu0 0.0
    %1967 = vmatprep.subr.mxu0 0.0
    %1968 = vmatpush1.msra.mxu0 0.0
    %1969 = vmatprep.subr.mxu0 0.0
    %1970 = vmatpush1.msra.mxu0 0.0
    %1971 = vmatprep.subr.mxu0 0.0
    %1972 = vmatpush1.msra.mxu0 0.0
    %1973 = vmatprep.subr.mxu0 0.0
    %1974 = vmatpush1.msra.mxu0 0.0
    %1975 = vmatprep.subr.mxu0 0.0
    %1976 = vmatpush1.msra.mxu0 0.0
    %1977 = vmatprep.subr.mxu0 0.0
    %1978 = vmatpush1.msra.mxu0 0.0
    %1979 = vmatprep.subr.mxu0 0.0
    %1980 = vmatpush1.msra.mxu0 0.0
    %1981 = vmatprep.subr.mxu0 0.0
    %1982 = vmatpush1.msra.mxu0 0.0
    %1983 = vmatprep.subr.mxu0 0.0
    %1984 = vmatpush1.msra.mxu0 0.0
    %1985 = vmatprep.subr.mxu0 0.0
    %1986 = vmatpush1.msra.mxu0 0.0
    %1987 = vmatprep.subr.mxu0 0.0
    %1988 = vmatpush1.msra.mxu0 0.0
    %1989 = vmatprep.subr.mxu0 0.0
    %1990 = vmatpush1.msra.mxu0 0.0
    %1991 = vmatprep.subr.mxu0 0.0
    %1992 = vmatpush1.msra.mxu0 0.0
    %1993 = vmatprep.subr.mxu0 0.0
    %1994 = vmatpush1.msra.mxu0 0.0
    %1995 = vmatprep.subr.mxu0 0.0
    %1996 = vmatpush1.msra.mxu0 0.0
    %1997 = vmatprep.mubr.f32.mxu0 0.0
    %1998 = vmatmul.mubr.f32.gmra.mrb[0].mxu0 %v1931
    %v1999 = vpop.f32.mrb[0].mxu0
    %v2000 = vadd.f32 %v1928, %v1999
    %v2001 = vpop.f32.mrb[0].mxu0
    %2002 = vdwg.mxu0
    %v2004 = vsel %vm259, %v2000, 0
    %2006 = vmatprep.subr.mxu0 0.0
    %2007 = vmatpush1.msra.mxu0 %v339
    %2008 = vmatprep.subr.mxu0 0.0
    %2009 = vmatpush1.msra.mxu0 %v344
    %2010 = vmatprep.subr.mxu0 0.0
    %2011 = vmatpush1.msra.mxu0 %v349
    %2012 = vmatprep.subr.mxu0 0.0
    %2013 = vmatpush1.msra.mxu0 %v354
    %2014 = vmatprep.subr.mxu0 0.0
    %2015 = vmatpush1.msra.mxu0 0.0
    %2016 = vmatprep.subr.mxu0 0.0
    %2017 = vmatpush1.msra.mxu0 0.0
    %2018 = vmatprep.subr.mxu0 0.0
    %2019 = vmatpush1.msra.mxu0 0.0
    %2020 = vmatprep.subr.mxu0 0.0
    %2021 = vmatpush1.msra.mxu0 0.0
    %2022 = vmatprep.subr.mxu0 0.0
    %2023 = vmatpush1.msra.mxu0 0.0
    %2024 = vmatprep.subr.mxu0 0.0
    %2025 = vmatpush1.msra.mxu0 0.0
    %2026 = vmatprep.subr.mxu0 0.0
    %2027 = vmatpush1.msra.mxu0 0.0
    %2028 = vmatprep.subr.mxu0 0.0
    %2029 = vmatpush1.msra.mxu0 0.0
    %2030 = vmatprep.subr.mxu0 0.0
    %2031 = vmatpush1.msra.mxu0 0.0
    %2032 = vmatprep.subr.mxu0 0.0
    %2033 = vmatpush1.msra.mxu0 0.0
    %2034 = vmatprep.subr.mxu0 0.0
    %2035 = vmatpush1.msra.mxu0 0.0
    %2036 = vmatprep.subr.mxu0 0.0
    %2037 = vmatpush1.msra.mxu0 0.0
    %2038 = vmatprep.subr.mxu0 0.0
    %2039 = vmatpush1.msra.mxu0 0.0
    %2040 = vmatprep.subr.mxu0 0.0
    %2041 = vmatpush1.msra.mxu0 0.0
    %2042 = vmatprep.subr.mxu0 0.0
    %2043 = vmatpush1.msra.mxu0 0.0
    %2044 = vmatprep.subr.mxu0 0.0
    %2045 = vmatpush1.msra.mxu0 0.0
    %2046 = vmatprep.subr.mxu0 0.0
    %2047 = vmatpush1.msra.mxu0 0.0
    %2048 = vmatprep.subr.mxu0 0.0
    %2049 = vmatpush1.msra.mxu0 0.0
    %2050 = vmatprep.subr.mxu0 0.0
    %2051 = vmatpush1.msra.mxu0 0.0
    %2052 = vmatprep.subr.mxu0 0.0
    %2053 = vmatpush1.msra.mxu0 0.0
    %2054 = vmatprep.subr.mxu0 0.0
    %2055 = vmatpush1.msra.mxu0 0.0
    %2056 = vmatprep.subr.mxu0 0.0
    %2057 = vmatpush1.msra.mxu0 0.0
    %2058 = vmatprep.subr.mxu0 0.0
    %2059 = vmatpush1.msra.mxu0 0.0
    %2060 = vmatprep.subr.mxu0 0.0
    %2061 = vmatpush1.msra.mxu0 0.0
    %2062 = vmatprep.subr.mxu0 0.0
    %2063 = vmatpush1.msra.mxu0 0.0
    %2064 = vmatprep.subr.mxu0 0.0
    %2065 = vmatpush1.msra.mxu0 0.0
    %2066 = vmatprep.subr.mxu0 0.0
    %2067 = vmatpush1.msra.mxu0 0.0
    %2068 = vmatprep.subr.mxu0 0.0
    %2069 = vmatpush1.msra.mxu0 0.0
    %2070 = vmatprep.mubr.f32.mxu0 0.0
    %2071 = vmatmul.mubr.f32.gmra.mrb[0].mxu0 %v2004
    %v2072 = vpop.f32.mrb[0].mxu0
    %v2073 = vadd.f32 %v665, %v2072
    %v2074 = vpop.f32.mrb[0].mxu0
    %2075 = vdwg.mxu0
    %v2076 = vsel %vm1160, %v2073, -inf
    %2077 = vmax.xlane.f32.xlu0 %v2076
    %v2078 = vpop.xlane.xlu0 %2077
    %v2079 = vsub.f32 %v2073, %v2078
    %v2080 = vmul.f32 %v2079, 1.442695
    %v2081 = vpow.pop %v2080
    %v2082 = vsel %vm1160, %v2081, 0.0
    %2083 = vadd.xlane.f32.xlu0 %v2082
    %v2084 = vpop.xlane.xlu0 %2083
    %v2085 = vrcp.pop %v2084
    %v2086 = vmul.f32 %v2081, %v2085
    %v2088 = vsel %vm1172, %v2086, 0
    %2090 = vmatprep.subr.mxu0 0.0
    %2091 = vmatpush1.msra.mxu0 %v443
    %2092 = vmatprep.subr.mxu0 0.0
    %2093 = vmatpush1.msra.mxu0 %v448
    %2094 = vmatprep.subr.mxu0 0.0
    %2095 = vmatpush1.msra.mxu0 0.0
    %2096 = vmatprep.subr.mxu0 0.0
    %2097 = vmatpush1.msra.mxu0 0.0
    %2098 = vmatprep.subr.mxu0 0.0
    %2099 = vmatpush1.msra.mxu0 0.0
    %2100 = vmatprep.subr.mxu0 0.0
    %2101 = vmatpush1.msra.mxu0 0.0
    %2102 = vmatprep.subr.mxu0 0.0
    %2103 = vmatpush1.msra.mxu0 0.0
    %2104 = vmatprep.subr.mxu0 0.0
    %2105 = vmatpush1.msra.mxu0 0.0
    %2106 = vmatprep.subr.mxu0 0.0
    %2107 = vmatpush1.msra.mxu0 0.0
    %2108 = vmatprep.subr.mxu0 0.0
    %2109 = vmatpush1.msra.mxu0 0.0
    %2110 = vmatprep.subr.mxu0 0.0
    %2111 = vmatpush1.msra.mxu0 0.0
    %2112 = vmatprep.subr.mxu0 0.0
    %2113 = vmatpush1.msra.mxu0 0.0
    %2114 = vmatprep.subr.mxu0 0.0
    %2115 = vmatpush1.msra.mxu0 0.0
    %2116 = vmatprep.subr.mxu0 0.0
    %2117 = vmatpush1.msra.mxu0 0.0
    %2118 = vmatprep.subr.mxu0 0.0
    %2119 = vmatpush1.msra.mxu0 0.0
    %2120 = vmatprep.subr.mxu0 0.0
    %2121 = vmatpush1.msra.mxu0 0.0
    %2122 = vmatprep.subr.mxu0 0.0
    %2123 = vmatpush1.msra.mxu0 0.0
    %2124 = vmatprep.subr.mxu0 0.0
    %2125 = vmatpush1.msra.mxu0 0.0
    %2126 = vmatprep.subr.mxu0 0.0
    %2127 = vmatpush1.msra.mxu0 0.0
    %2128 = vmatprep.subr.mxu0 0.0
    %2129 = vmatpush1.msra.mxu0 0.0
    %2130 = vmatprep.subr.mxu0 0.0
    %2131 = vmatpush1.msra.mxu0 0.0
    %2132 = vmatprep.subr.mxu0 0.0
    %2133 = vmatpush1.msra.mxu0 0.0
    %2134 = vmatprep.subr.mxu0 0.0
    %2135 = vmatpush1.msra.mxu0 0.0
    %2136 = vmatprep.subr.mxu0 0.0
    %2137 = vmatpush1.msra.mxu0 0.0
    %2138 = vmatprep.subr.mxu0 0.0
    %2139 = vmatpush1.msra.mxu0 0.0
    %2140 = vmatprep.subr.mxu0 0.0
    %2141 = vmatpush1.msra.mxu0 0.0
    %2142 = vmatprep.subr.mxu0 0.0
    %2143 = vmatpush1.msra.mxu0 0.0
    %2144 = vmatprep.subr.mxu0 0.0
    %2145 = vmatpush1.msra.mxu0 0.0
    %2146 = vmatprep.subr.mxu0 0.0
    %2147 = vmatpush1.msra.mxu0 0.0
    %2148 = vmatprep.subr.mxu0 0.0
    %2149 = vmatpush1.msra.mxu0 0.0
    %2150 = vmatprep.subr.mxu0 0.0
    %2151 = vmatpush1.msra.mxu0 0.0
    %2152 = vmatprep.subr.mxu0 0.0
    %2153 = vmatpush1.msra.mxu0 0.0
    %2154 = vmatprep.mubr.f32.mxu0 0.0
    %2155 = vmatmul.mubr.f32.gmra.mrb[0].mxu0 %v2088
    %v2156 = vpop.f32.mrb[0].mxu0
    %v2157 = vadd.f32 0.0, %v2156
    %v2158 = vpop.f32.mrb[0].mxu0
    %2159 = vdwg.mxu0
    %2160 = vrot.lane.b32.xlu0 %v2000, 96
    %v2161 = vpop.permute.xlu0 %2160
    %v2162 = vsel %vm259, %v2161, 0
    %2164 = vmatprep.subr.mxu0 0.0
    %2165 = vmatpush1.msra.mxu0 %v562
    %2166 = vmatprep.subr.mxu0 0.0
    %2167 = vmatpush1.msra.mxu0 %v567
    %2168 = vmatprep.subr.mxu0 0.0
    %2169 = vmatpush1.msra.mxu0 %v572
    %2170 = vmatprep.subr.mxu0 0.0
    %2171 = vmatpush1.msra.mxu0 %v577
    %2172 = vmatprep.subr.mxu0 0.0
    %2173 = vmatpush1.msra.mxu0 0.0
    %2174 = vmatprep.subr.mxu0 0.0
    %2175 = vmatpush1.msra.mxu0 0.0
    %2176 = vmatprep.subr.mxu0 0.0
    %2177 = vmatpush1.msra.mxu0 0.0
    %2178 = vmatprep.subr.mxu0 0.0
    %2179 = vmatpush1.msra.mxu0 0.0
    %2180 = vmatprep.subr.mxu0 0.0
    %2181 = vmatpush1.msra.mxu0 0.0
    %2182 = vmatprep.subr.mxu0 0.0
    %2183 = vmatpush1.msra.mxu0 0.0
    %2184 = vmatprep.subr.mxu0 0.0
    %2185 = vmatpush1.msra.mxu0 0.0
    %2186 = vmatprep.subr.mxu0 0.0
    %2187 = vmatpush1.msra.mxu0 0.0
    %2188 = vmatprep.subr.mxu0 0.0
    %2189 = vmatpush1.msra.mxu0 0.0
    %2190 = vmatprep.subr.mxu0 0.0
    %2191 = vmatpush1.msra.mxu0 0.0
    %2192 = vmatprep.subr.mxu0 0.0
    %2193 = vmatpush1.msra.mxu0 0.0
    %2194 = vmatprep.subr.mxu0 0.0
    %2195 = vmatpush1.msra.mxu0 0.0
    %2196 = vmatprep.subr.mxu0 0.0
    %2197 = vmatpush1.msra.mxu0 0.0
    %2198 = vmatprep.subr.mxu0 0.0
    %2199 = vmatpush1.msra.mxu0 0.0
    %2200 = vmatprep.subr.mxu0 0.0
    %2201 = vmatpush1.msra.mxu0 0.0
    %2202 = vmatprep.subr.mxu0 0.0
    %2203 = vmatpush1.msra.mxu0 0.0
    %2204 = vmatprep.subr.mxu0 0.0
    %2205 = vmatpush1.msra.mxu0 0.0
    %2206 = vmatprep.subr.mxu0 0.0
    %2207 = vmatpush1.msra.mxu0 0.0
    %2208 = vmatprep.subr.mxu0 0.0
    %2209 = vmatpush1.msra.mxu0 0.0
    %2210 = vmatprep.subr.mxu0 0.0
    %2211 = vmatpush1.msra.mxu0 0.0
    %2212 = vmatprep.subr.mxu0 0.0
    %2213 = vmatpush1.msra.mxu0 0.0
    %2214 = vmatprep.subr.mxu0 0.0
    %2215 = vmatpush1.msra.mxu0 0.0
    %2216 = vmatprep.subr.mxu0 0.0
    %2217 = vmatpush1.msra.mxu0 0.0
    %2218 = vmatprep.subr.mxu0 0.0
    %2219 = vmatpush1.msra.mxu0 0.0
    %2220 = vmatprep.subr.mxu0 0.0
    %2221 = vmatpush1.msra.mxu0 0.0
    %2222 = vmatprep.subr.mxu0 0.0
    %2223 = vmatpush1.msra.mxu0 0.0
    %2224 = vmatprep.subr.mxu0 0.0
    %2225 = vmatpush1.msra.mxu0 0.0
    %2226 = vmatprep.subr.mxu0 0.0
    %2227 = vmatpush1.msra.mxu0 0.0
    %2228 = vmatprep.mubr.f32.mxu0 0.0
    %2229 = vmatmul.mubr.f32.gmra.mrb[0].mxu0 %v2162
    %v2230 = vpop.f32.mrb[0].mxu0
    %v2231 = vadd.f32 %v666, %v2230
    %v2232 = vpop.f32.mrb[0].mxu0
    %2233 = vdwg.mxu0
    %v2234 = vsel %vm1320, %v2231, -inf
    %2235 = vmax.xlane.f32.xlu0 %v2234
    %v2236 = vpop.xlane.xlu0 %2235
    %v2237 = vsub.f32 %v2231, %v2236
    %v2238 = vmul.f32 %v2237, 1.442695
    %v2239 = vpow.pop %v2238
    %v2240 = vsel %vm1320, %v2239, 0.0
    %2241 = vadd.xlane.f32.xlu0 %v2240
    %v2242 = vpop.xlane.xlu0 %2241
    %v2243 = vrcp.pop %v2242
    %v2244 = vmul.f32 %v2239, %v2243
    %v2246 = vsel %vm1332, %v2244, 0
    %2248 = vmatprep.subr.mxu0 0.0
    %2249 = vmatpush1.msra.mxu0 %v662
    %2250 = vmatprep.subr.mxu0 0.0
    %2251 = vmatpush1.msra.mxu0 0.0
    %2252 = vmatprep.subr.mxu0 0.0
    %2253 = vmatpush1.msra.mxu0 0.0
    %2254 = vmatprep.subr.mxu0 0.0
    %2255 = vmatpush1.msra.mxu0 0.0
    %2256 = vmatprep.subr.mxu0 0.0
    %2257 = vmatpush1.msra.mxu0 0.0
    %2258 = vmatprep.subr.mxu0 0.0
    %2259 = vmatpush1.msra.mxu0 0.0
    %2260 = vmatprep.subr.mxu0 0.0
    %2261 = vmatpush1.msra.mxu0 0.0
    %2262 = vmatprep.subr.mxu0 0.0
    %2263 = vmatpush1.msra.mxu0 0.0
    %2264 = vmatprep.subr.mxu0 0.0
    %2265 = vmatpush1.msra.mxu0 0.0
    %2266 = vmatprep.subr.mxu0 0.0
    %2267 = vmatpush1.msra.mxu0 0.0
    %2268 = vmatprep.subr.mxu0 0.0
    %2269 = vmatpush1.msra.mxu0 0.0
    %2270 = vmatprep.subr.mxu0 0.0
    %2271 = vmatpush1.msra.mxu0 0.0
    %2272 = vmatprep.subr.mxu0 0.0
    %2273 = vmatpush1.msra.mxu0 0.0
    %2274 = vmatprep.subr.mxu0 0.0
    %2275 = vmatpush1.msra.mxu0 0.0
    %2276 = vmatprep.subr.mxu0 0.0
    %2277 = vmatpush1.msra.mxu0 0.0
    %2278 = vmatprep.subr.mxu0 0.0
    %2279 = vmatpush1.msra.mxu0 0.0
    %2280 = vmatprep.subr.mxu0 0.0
    %2281 = vmatpush1.msra.mxu0 0.0
    %2282 = vmatprep.subr.mxu0 0.0
    %2283 = vmatpush1.msra.mxu0 0.0
    %2284 = vmatprep.subr.mxu0 0.0
    %2285 = vmatpush1.msra.mxu0 0.0
    %2286 = vmatprep.subr.mxu0 0.0
    %2287 = vmatpush1.msra.mxu0 0.0
    %2288 = vmatprep.subr.mxu0 0.0
    %2289 = vmatpush1.msra.mxu0 0.0
    %2290 = vmatprep.subr.mxu0 0.0
    %2291 = vmatpush1.msra.mxu0 0.0
    %2292 = vmatprep.subr.mxu0 0.0
    %2293 = vmatpush1.msra.mxu0 0.0
    %2294 = vmatprep.subr.mxu0 0.0
    %2295 = vmatpush1.msra.mxu0 0.0
    %2296 = vmatprep.subr.mxu0 0.0
    %2297 = vmatpush1.msra.mxu0 0.0
    %2298 = vmatprep.subr.mxu0 0.0
    %2299 = vmatpush1.msra.mxu0 0.0
    %2300 = vmatprep.subr.mxu0 0.0
    %2301 = vmatpush1.msra.mxu0 0.0
    %2302 = vmatprep.subr.mxu0 0.0
    %2303 = vmatpush1.msra.mxu0 0.0
    %2304 = vmatprep.subr.mxu0 0.0
    %2305 = vmatpush1.msra.mxu0 0.0
    %2306 = vmatprep.subr.mxu0 0.0
    %2307 = vmatpush1.msra.mxu0 0.0
    %2308 = vmatprep.subr.mxu0 0.0
    %2309 = vmatpush1.msra.mxu0 0.0
    %2310 = vmatprep.subr.mxu0 0.0
    %2311 = vmatpush1.msra.mxu0 0.0
    %2312 = vmatprep.mubr.f32.mxu0 0.0
    %2313 = vmatmul.mubr.f32.gmra.mrb[0].mxu0 %v2246
    %v2314 = vpop.f32.mrb[0].mxu0
    %v2315 = vadd.f32 0.0, %v2314
    %v2316 = vpop.f32.mrb[0].mxu0
    %2317 = vdwg.mxu0
    %2319 = vrot.lane.b32.xlu0 %v2315, 32
    %v2320 = vpop.permute.xlu0 %2319
    %v2322 = vsel %vm259, %v2157, %v2320
    %v2323 = vld [vmem:[%s20] sm:$0xff]
    %v2324 = vld [vmem:[%s20 + $0x8] sm:$0xff]
    %v2325 = vld [vmem:[%s20 + $0x10] sm:$0xff]
    %v2326 = vld [vmem:[%s20 + $0x18] sm:$0xff]
    %v2327 = vld [vmem:[%s20 + $0x20] sm:$0xff]
    %v2328 = vld [vmem:[%s20 + $0x28] sm:$0xff]
    %v2329 = vld [vmem:[%s20 + $0x30] sm:$0xff]
    %v2330 = vld [vmem:[%s20 + $0x38] sm:$0xff]
    %v2331 = vld [vmem:[%s21] sm:$0x1]
    %v2333 = vlaneseq
    %v2334 = vshrl.u32 %v2333, 7
    %v2335 = vsub.s32 0, %v2334
    %v2336 = vrot.slane %v2331, %v2335
    %v2339 = vsel %vm1426, %v2322, 0
    %2341 = vmatprep.subr.mxu0 0.0
    %2342 = vmatpush1.msra.mxu0 %v2323
    %2343 = vmatprep.subr.mxu0 0.0
    %2344 = vmatpush1.msra.mxu0 %v2324
    %2345 = vmatprep.subr.mxu0 0.0
    %2346 = vmatpush1.msra.mxu0 %v2325
    %2347 = vmatprep.subr.mxu0 0.0
    %2348 = vmatpush1.msra.mxu0 %v2326
    %2349 = vmatprep.subr.mxu0 0.0
    %2350 = vmatpush1.msra.mxu0 %v2327
    %2351 = vmatprep.subr.mxu0 0.0
    %2352 = vmatpush1.msra.mxu0 %v2328
    %2353 = vmatprep.subr.mxu0 0.0
    %2354 = vmatpush1.msra.mxu0 %v2329
    %2355 = vmatprep.subr.mxu0 0.0
    %2356 = vmatpush1.msra.mxu0 %v2330
    %2357 = vmatprep.subr.mxu0 0.0
    %2358 = vmatpush1.msra.mxu0 0.0
    %2359 = vmatprep.subr.mxu0 0.0
    %2360 = vmatpush1.msra.mxu0 0.0
    %2361 = vmatprep.subr.mxu0 0.0
    %2362 = vmatpush1.msra.mxu0 0.0
    %2363 = vmatprep.subr.mxu0 0.0
    %2364 = vmatpush1.msra.mxu0 0.0
    %2365 = vmatprep.subr.mxu0 0.0
    %2366 = vmatpush1.msra.mxu0 0.0
    %2367 = vmatprep.subr.mxu0 0.0
    %2368 = vmatpush1.msra.mxu0 0.0
    %2369 = vmatprep.subr.mxu0 0.0
    %2370 = vmatpush1.msra.mxu0 0.0
    %2371 = vmatprep.subr.mxu0 0.0
    %2372 = vmatpush1.msra.mxu0 0.0
    %2373 = vmatprep.subr.mxu0 0.0
    %2374 = vmatpush1.msra.mxu0 0.0
    %2375 = vmatprep.subr.mxu0 0.0
    %2376 = vmatpush1.msra.mxu0 0.0
    %2377 = vmatprep.subr.mxu0 0.0
    %2378 = vmatpush1.msra.mxu0 0.0
    %2379 = vmatprep.subr.mxu0 0.0
    %2380 = vmatpush1.msra.mxu0 0.0
    %2381 = vmatprep.subr.mxu0 0.0
    %2382 = vmatpush1.msra.mxu0 0.0
    %2383 = vmatprep.subr.mxu0 0.0
    %2384 = vmatpush1.msra.mxu0 0.0
    %2385 = vmatprep.subr.mxu0 0.0
    %2386 = vmatpush1.msra.mxu0 0.0
    %2387 = vmatprep.subr.mxu0 0.0
    %2388 = vmatpush1.msra.mxu0 0.0
    %2389 = vmatprep.subr.mxu0 0.0
    %2390 = vmatpush1.msra.mxu0 0.0
    %2391 = vmatprep.subr.mxu0 0.0
    %2392 = vmatpush1.msra.mxu0 0.0
    %2393 = vmatprep.subr.mxu0 0.0
    %2394 = vmatpush1.msra.mxu0 0.0
    %2395 = vmatprep.subr.mxu0 0.0
    %2396 = vmatpush1.msra.mxu0 0.0
    %2397 = vmatprep.subr.mxu0 0.0
    %2398 = vmatpush1.msra.mxu0 0.0
    %2399 = vmatprep.subr.mxu0 0.0
    %2400 = vmatpush1.msra.mxu0 0.0
    %2401 = vmatprep.subr.mxu0 0.0
    %2402 = vmatpush1.msra.mxu0 0.0
    %2403 = vmatprep.subr.mxu0 0.0
    %2404 = vmatpush1.msra.mxu0 0.0
    %2405 = vmatprep.mubr.f32.mxu0 0.0
    %2406 = vmatmul.mubr.f32.gmra.mrb[0].mxu0 %v2339
    %v2407 = vpop.f32.mrb[0].mxu0
    %v2408 = vadd.f32 %v2336, %v2407
    %v2409 = vpop.f32.mrb[0].mxu0
    %2410 = vdwg.mxu0
    %v2411 = vmax.f32 %v2408, 0.0
    %v2412 = vld [vmem:[%s22] sm:$0xff]
    %v2413 = vld [vmem:[%s22 + $0x8] sm:$0xff]
    %v2414 = vld [vmem:[%s22 + $0x10] sm:$0xff]
    %v2415 = vld [vmem:[%s22 + $0x18] sm:$0xff]
    %v2416 = vld [vmem:[%s22 + $0x20] sm:$0xff]
    %v2417 = vld [vmem:[%s22 + $0x28] sm:$0xff]
    %v2418 = vld [vmem:[%s22 + $0x30] sm:$0xff]
    %v2419 = vld [vmem:[%s22 + $0x38] sm:$0xff]
    %v2420 = vld [vmem:[%s23] sm:$0x1]
    %v2422 = vlaneseq
    %v2423 = vshrl.u32 %v2422, 7
    %v2424 = vsub.s32 0, %v2423
    %v2425 = vrot.slane %v2420, %v2424
    %v2428 = vsel %vm1426, %v2411, 0
    %2430 = vmatprep.subr.mxu0 0.0
    %2431 = vmatpush1.msra.mxu0 %v2412
    %2432 = vmatprep.subr.mxu0 0.0
    %2433 = vmatpush1.msra.mxu0 %v2413
    %2434 = vmatprep.subr.mxu0 0.0
    %2435 = vmatpush1.msra.mxu0 %v2414
    %2436 = vmatprep.subr.mxu0 0.0
    %2437 = vmatpush1.msra.mxu0 %v2415
    %2438 = vmatprep.subr.mxu0 0.0
    %2439 = vmatpush1.msra.mxu0 %v2416
    %2440 = vmatprep.subr.mxu0 0.0
    %2441 = vmatpush1.msra.mxu0 %v2417
    %2442 = vmatprep.subr.mxu0 0.0
    %2443 = vmatpush1.msra.mxu0 %v2418
    %2444 = vmatprep.subr.mxu0 0.0
    %2445 = vmatpush1.msra.mxu0 %v2419
    %2446 = vmatprep.subr.mxu0 0.0
    %2447 = vmatpush1.msra.mxu0 0.0
    %2448 = vmatprep.subr.mxu0 0.0
    %2449 = vmatpush1.msra.mxu0 0.0
    %2450 = vmatprep.subr.mxu0 0.0
    %2451 = vmatpush1.msra.mxu0 0.0
    %2452 = vmatprep.subr.mxu0 0.0
    %2453 = vmatpush1.msra.mxu0 0.0
    %2454 = vmatprep.subr.mxu0 0.0
    %2455 = vmatpush1.msra.mxu0 0.0
    %2456 = vmatprep.subr.mxu0 0.0
    %2457 = vmatpush1.msra.mxu0 0.0
    %2458 = vmatprep.subr.mxu0 0.0
    %2459 = vmatpush1.msra.mxu0 0.0
    %2460 = vmatprep.subr.mxu0 0.0
    %2461 = vmatpush1.msra.mxu0 0.0
    %2462 = vmatprep.subr.mxu0 0.0
    %2463 = vmatpush1.msra.mxu0 0.0
    %2464 = vmatprep.subr.mxu0 0.0
    %2465 = vmatpush1.msra.mxu0 0.0
    %2466 = vmatprep.subr.mxu0 0.0
    %2467 = vmatpush1.msra.mxu0 0.0
    %2468 = vmatprep.subr.mxu0 0.0
    %2469 = vmatpush1.msra.mxu0 0.0
    %2470 = vmatprep.subr.mxu0 0.0
    %2471 = vmatpush1.msra.mxu0 0.0
    %2472 = vmatprep.subr.mxu0 0.0
    %2473 = vmatpush1.msra.mxu0 0.0
    %2474 = vmatprep.subr.mxu0 0.0
    %2475 = vmatpush1.msra.mxu0 0.0
    %2476 = vmatprep.subr.mxu0 0.0
    %2477 = vmatpush1.msra.mxu0 0.0
    %2478 = vmatprep.subr.mxu0 0.0
    %2479 = vmatpush1.msra.mxu0 0.0
    %2480 = vmatprep.subr.mxu0 0.0
    %2481 = vmatpush1.msra.mxu0 0.0
    %2482 = vmatprep.subr.mxu0 0.0
    %2483 = vmatpush1.msra.mxu0 0.0
    %2484 = vmatprep.subr.mxu0 0.0
    %2485 = vmatpush1.msra.mxu0 0.0
    %2486 = vmatprep.subr.mxu0 0.0
    %2487 = vmatpush1.msra.mxu0 0.0
    %2488 = vmatprep.subr.mxu0 0.0
    %2489 = vmatpush1.msra.mxu0 0.0
    %2490 = vmatprep.subr.mxu0 0.0
    %2491 = vmatpush1.msra.mxu0 0.0
    %2492 = vmatprep.subr.mxu0 0.0
    %2493 = vmatpush1.msra.mxu0 0.0
    %2494 = vmatprep.mubr.f32.mxu0 0.0
    %2495 = vmatmul.mubr.f32.gmra.mrb[0].mxu0 %v2428
    %v2496 = vpop.f32.mrb[0].mxu0
    %v2497 = vadd.f32 %v2425, %v2496
    %v2498 = vpop.f32.mrb[0].mxu0
    %2499 = vdwg.mxu0
    %s2500 = scalar_lea.vmem [#allocation22], 2
    %2501 = vst.msk [vmem:[%s2500] sm:$0x3] %vm1160, %v2497
    %s2502 = scalar_lea.vmem %s0, 16
    %v2503 = vld [vmem:[%s2502] sm:$0x3]
    %v2504 = vld [vmem:[%s2502 + $0x2] sm:$0x3]
    %v2505 = vld [vmem:[%s2502 + $0x4] sm:$0x3]
    %v2506 = vld [vmem:[%s2502 + $0x6] sm:$0x3]
    %v2507 = vld [vmem:[%s3] sm:$0xff]
    %v2508 = vld [vmem:[%s3 + $0x8] sm:$0xff]
    %v2509 = vld [vmem:[%s3 + $0x10] sm:$0xff]
    %v2510 = vld [vmem:[%s3 + $0x18] sm:$0xff]
    %2511 = vmatprep.subr.mxu0 0.0
    %2512 = vmatpush1.msra.mxu0 %v2507
    %2513 = vmatprep.subr.mxu0 0.0
    %2514 = vmatpush1.msra.mxu0 %v2508
    %2515 = vmatprep.subr.mxu0 0.0
    %2516 = vmatpush1.msra.mxu0 %v2509
    %2517 = vmatprep.subr.mxu0 0.0
    %2518 = vmatpush1.msra.mxu0 %v2510
    %2519 = vmatprep.subr.mxu0 0.0
    %2520 = vmatpush1.msra.mxu0 0.0
    %2521 = vmatprep.subr.mxu0 0.0
    %2522 = vmatpush1.msra.mxu0 0.0
    %2523 = vmatprep.subr.mxu0 0.0
    %2524 = vmatpush1.msra.mxu0 0.0
    %2525 = vmatprep.subr.mxu0 0.0
    %2526 = vmatpush1.msra.mxu0 0.0
    %2527 = vmatprep.subr.mxu0 0.0
    %2528 = vmatpush1.msra.mxu0 0.0
    %2529 = vmatprep.subr.mxu0 0.0
    %2530 = vmatpush1.msra.mxu0 0.0
    %2531 = vmatprep.subr.mxu0 0.0
    %2532 = vmatpush1.msra.mxu0 0.0
    %2533 = vmatprep.subr.mxu0 0.0
    %2534 = vmatpush1.msra.mxu0 0.0
    %2535 = vmatprep.subr.mxu0 0.0
    %2536 = vmatpush1.msra.mxu0 0.0
    %2537 = vmatprep.subr.mxu0 0.0
    %2538 = vmatpush1.msra.mxu0 0.0
    %2539 = vmatprep.subr.mxu0 0.0
    %2540 = vmatpush1.msra.mxu0 0.0
    %2541 = vmatprep.subr.mxu0 0.0
    %2542 = vmatpush1.msra.mxu0 0.0
    %2543 = vmatprep.subr.mxu0 0.0
    %2544 = vmatpush1.msra.mxu0 0.0
    %2545 = vmatprep.subr.mxu0 0.0
    %2546 = vmatpush1.msra.mxu0 0.0
    %2547 = vmatprep.subr.mxu0 0.0
    %2548 = vmatpush1.msra.mxu0 0.0
    %2549 = vmatprep.subr.mxu0 0.0
    %2550 = vmatpush1.msra.mxu0 0.0
    %2551 = vmatprep.subr.mxu0 0.0
    %2552 = vmatpush1.msra.mxu0 0.0
    %2553 = vmatprep.subr.mxu0 0.0
    %2554 = vmatpush1.msra.mxu0 0.0
    %2555 = vmatprep.subr.mxu0 0.0
    %2556 = vmatpush1.msra.mxu0 0.0
    %2557 = vmatprep.subr.mxu0 0.0
    %2558 = vmatpush1.msra.mxu0 0.0
    %2559 = vmatprep.subr.mxu0 0.0
    %2560 = vmatpush1.msra.mxu0 0.0
    %2561 = vmatprep.subr.mxu0 0.0
    %2562 = vmatpush1.msra.mxu0 0.0
    %2563 = vmatprep.subr.mxu0 0.0
    %2564 = vmatpush1.msra.mxu0 0.0
    %2565 = vmatprep.subr.mxu0 0.0
    %2566 = vmatpush1.msra.mxu0 0.0
    %2567 = vmatprep.subr.mxu0 0.0
    %2568 = vmatpush1.msra.mxu0 0.0
    %2569 = vmatprep.subr.mxu0 0.0
    %2570 = vmatpush1.msra.mxu0 0.0
    %2571 = vmatprep.subr.mxu0 0.0
    %2572 = vmatpush1.msra.mxu0 0.0
    %2573 = vmatprep.subr.mxu0 0.0
    %2574 = vmatpush1.msra.mxu0 0.0
    %2575 = vmatprep.mubr.f32.mxu0 0.0
    %2576 = vmatmul.mubr.f32.gmra.mrb[0].mxu0 %v1931
    %v2577 = vpop.f32.mrb[0].mxu0
    %v2578 = vadd.f32 0.0, %v2577
    %v2579 = vpop.f32.mrb[0].mxu0
    %2580 = vdwg.mxu0
    %v2581 = vadd.f32 %v2503, %v2578
    %v2582 = vxor.u32 %v2581, 2147483648
    %v2583 = vmul.f32 %v2582, 1.442695
    %v2584 = vpow.pop %v2583
    %v2585 = vadd.f32 %v2584, 1.0
    %v2586 = vrcp.pop %v2585
    %v2587 = vmul.f32 1.0, %v2586
    %v2588 = vld [vmem:[%s757] sm:$0xff]
    %v2589 = vld [vmem:[%s757 + $0x8] sm:$0xff]
    %v2590 = vld [vmem:[%s757 + $0x10] sm:$0xff]
    %v2591 = vld [vmem:[%s757 + $0x18] sm:$0xff]
    %2592 = vmatprep.subr.mxu0 0.0
    %2593 = vmatpush1.msra.mxu0 %v2588
    %2594 = vmatprep.subr.mxu0 0.0
    %2595 = vmatpush1.msra.mxu0 %v2589
    %2596 = vmatprep.subr.mxu0 0.0
    %2597 = vmatpush1.msra.mxu0 %v2590
    %2598 = vmatprep.subr.mxu0 0.0
    %2599 = vmatpush1.msra.mxu0 %v2591
    %2600 = vmatprep.subr.mxu0 0.0
    %2601 = vmatpush1.msra.mxu0 0.0
    %2602 = vmatprep.subr.mxu0 0.0
    %2603 = vmatpush1.msra.mxu0 0.0
    %2604 = vmatprep.subr.mxu0 0.0
    %2605 = vmatpush1.msra.mxu0 0.0
    %2606 = vmatprep.subr.mxu0 0.0
    %2607 = vmatpush1.msra.mxu0 0.0
    %2608 = vmatprep.subr.mxu0 0.0
    %2609 = vmatpush1.msra.mxu0 0.0
    %2610 = vmatprep.subr.mxu0 0.0
    %2611 = vmatpush1.msra.mxu0 0.0
    %2612 = vmatprep.subr.mxu0 0.0
    %2613 = vmatpush1.msra.mxu0 0.0
    %2614 = vmatprep.subr.mxu0 0.0
    %2615 = vmatpush1.msra.mxu0 0.0
    %2616 = vmatprep.subr.mxu0 0.0
    %2617 = vmatpush1.msra.mxu0 0.0
    %2618 = vmatprep.subr.mxu0 0.0
    %2619 = vmatpush1.msra.mxu0 0.0
    %2620 = vmatprep.subr.mxu0 0.0
    %2621 = vmatpush1.msra.mxu0 0.0
    %2622 = vmatprep.subr.mxu0 0.0
    %2623 = vmatpush1.msra.mxu0 0.0
    %2624 = vmatprep.subr.mxu0 0.0
    %2625 = vmatpush1.msra.mxu0 0.0
    %2626 = vmatprep.subr.mxu0 0.0
    %2627 = vmatpush1.msra.mxu0 0.0
    %2628 = vmatprep.subr.mxu0 0.0
    %2629 = vmatpush1.msra.mxu0 0.0
    %2630 = vmatprep.subr.mxu0 0.0
    %2631 = vmatpush1.msra.mxu0 0.0
    %2632 = vmatprep.subr.mxu0 0.0
    %2633 = vmatpush1.msra.mxu0 0.0
    %2634 = vmatprep.subr.mxu0 0.0
    %2635 = vmatpush1.msra.mxu0 0.0
    %2636 = vmatprep.subr.mxu0 0.0
    %2637 = vmatpush1.msra.mxu0 0.0
    %2638 = vmatprep.subr.mxu0 0.0
    %2639 = vmatpush1.msra.mxu0 0.0
    %2640 = vmatprep.subr.mxu0 0.0
    %2641 = vmatpush1.msra.mxu0 0.0
    %2642 = vmatprep.subr.mxu0 0.0
    %2643 = vmatpush1.msra.mxu0 0.0
    %2644 = vmatprep.subr.mxu0 0.0
    %2645 = vmatpush1.msra.mxu0 0.0
    %2646 = vmatprep.subr.mxu0 0.0
    %2647 = vmatpush1.msra.mxu0 0.0
    %2648 = vmatprep.subr.mxu0 0.0
    %2649 = vmatpush1.msra.mxu0 0.0
    %2650 = vmatprep.subr.mxu0 0.0
    %2651 = vmatpush1.msra.mxu0 0.0
    %2652 = vmatprep.subr.mxu0 0.0
    %2653 = vmatpush1.msra.mxu0 0.0
    %2654 = vmatprep.subr.mxu0 0.0
    %2655 = vmatpush1.msra.mxu0 0.0
    %2656 = vmatprep.mubr.f32.mxu0 0.0
    %2657 = vmatmul.mubr.f32.gmra.mrb[0].mxu0 %v1931
    %v2658 = vpop.f32.mrb[0].mxu0
    %v2659 = vadd.f32 0.0, %v2658
    %v2660 = vpop.f32.mrb[0].mxu0
    %2661 = vdwg.mxu0
    %v2662 = vadd.f32 %v2504, %v2659
    %v2663 = vxor.u32 %v2662, 2147483648
    %v2664 = vmul.f32 %v2663, 1.442695
    %v2665 = vpow.pop %v2664
    %v2666 = vadd.f32 %v2665, 1.0
    %v2667 = vrcp.pop %v2666
    %v2668 = vmul.f32 1.0, %v2667
    %v2669 = vld [vmem:[%s839] sm:$0xff]
    %v2670 = vld [vmem:[%s839 + $0x8] sm:$0xff]
    %v2671 = vld [vmem:[%s839 + $0x10] sm:$0xff]
    %v2672 = vld [vmem:[%s839 + $0x18] sm:$0xff]
    %2673 = vmatprep.subr.mxu0 0.0
    %2674 = vmatpush1.msra.mxu0 %v2669
    %2675 = vmatprep.subr.mxu0 0.0
    %2676 = vmatpush1.msra.mxu0 %v2670
    %2677 = vmatprep.subr.mxu0 0.0
    %2678 = vmatpush1.msra.mxu0 %v2671
    %2679 = vmatprep.subr.mxu0 0.0
    %2680 = vmatpush1.msra.mxu0 %v2672
    %2681 = vmatprep.subr.mxu0 0.0
    %2682 = vmatpush1.msra.mxu0 0.0
    %2683 = vmatprep.subr.mxu0 0.0
    %2684 = vmatpush1.msra.mxu0 0.0
    %2685 = vmatprep.subr.mxu0 0.0
    %2686 = vmatpush1.msra.mxu0 0.0
    %2687 = vmatprep.subr.mxu0 0.0
    %2688 = vmatpush1.msra.mxu0 0.0
    %2689 = vmatprep.subr.mxu0 0.0
    %2690 = vmatpush1.msra.mxu0 0.0
    %2691 = vmatprep.subr.mxu0 0.0
    %2692 = vmatpush1.msra.mxu0 0.0
    %2693 = vmatprep.subr.mxu0 0.0
    %2694 = vmatpush1.msra.mxu0 0.0
    %2695 = vmatprep.subr.mxu0 0.0
    %2696 = vmatpush1.msra.mxu0 0.0
    %2697 = vmatprep.subr.mxu0 0.0
    %2698 = vmatpush1.msra.mxu0 0.0
    %2699 = vmatprep.subr.mxu0 0.0
    %2700 = vmatpush1.msra.mxu0 0.0
    %2701 = vmatprep.subr.mxu0 0.0
    %2702 = vmatpush1.msra.mxu0 0.0
    %2703 = vmatprep.subr.mxu0 0.0
    %2704 = vmatpush1.msra.mxu0 0.0
    %2705 = vmatprep.subr.mxu0 0.0
    %2706 = vmatpush1.msra.mxu0 0.0
    %2707 = vmatprep.subr.mxu0 0.0
    %2708 = vmatpush1.msra.mxu0 0.0
    %2709 = vmatprep.subr.mxu0 0.0
    %2710 = vmatpush1.msra.mxu0 0.0
    %2711 = vmatprep.subr.mxu0 0.0
    %2712 = vmatpush1.msra.mxu0 0.0
    %2713 = vmatprep.subr.mxu0 0.0
    %2714 = vmatpush1.msra.mxu0 0.0
    %2715 = vmatprep.subr.mxu0 0.0
    %2716 = vmatpush1.msra.mxu0 0.0
    %2717 = vmatprep.subr.mxu0 0.0
    %2718 = vmatpush1.msra.mxu0 0.0
    %2719 = vmatprep.subr.mxu0 0.0
    %2720 = vmatpush1.msra.mxu0 0.0
    %2721 = vmatprep.subr.mxu0 0.0
    %2722 = vmatpush1.msra.mxu0 0.0
    %2723 = vmatprep.subr.mxu0 0.0
    %2724 = vmatpush1.msra.mxu0 0.0
    %2725 = vmatprep.subr.mxu0 0.0
    %2726 = vmatpush1.msra.mxu0 0.0
    %2727 = vmatprep.subr.mxu0 0.0
    %2728 = vmatpush1.msra.mxu0 0.0
    %2729 = vmatprep.subr.mxu0 0.0
    %2730 = vmatpush1.msra.mxu0 0.0
    %2731 = vmatprep.subr.mxu0 0.0
    %2732 = vmatpush1.msra.mxu0 0.0
    %2733 = vmatprep.subr.mxu0 0.0
    %2734 = vmatpush1.msra.mxu0 0.0
    %2735 = vmatprep.subr.mxu0 0.0
    %2736 = vmatpush1.msra.mxu0 0.0
    %2737 = vmatprep.mubr.f32.mxu0 0.0
    %2738 = vmatmul.mubr.f32.gmra.mrb[0].mxu0 %v1931
    %v2739 = vpop.f32.mrb[0].mxu0
    %v2740 = vadd.f32 0.0, %v2739
    %v2741 = vpop.f32.mrb[0].mxu0
    %2742 = vdwg.mxu0
    %v2743 = vadd.f32 %v2505, %v2740
    %v2744 = vtanh.pop %v2743
    %v2745 = vld [vmem:[%s916] sm:$0xff]
    %v2746 = vld [vmem:[%s916 + $0x8] sm:$0xff]
    %v2747 = vld [vmem:[%s916 + $0x10] sm:$0xff]
    %v2748 = vld [vmem:[%s916 + $0x18] sm:$0xff]
    %2749 = vmatprep.subr.mxu0 0.0
    %2750 = vmatpush1.msra.mxu0 %v2745
    %2751 = vmatprep.subr.mxu0 0.0
    %2752 = vmatpush1.msra.mxu0 %v2746
    %2753 = vmatprep.subr.mxu0 0.0
    %2754 = vmatpush1.msra.mxu0 %v2747
    %2755 = vmatprep.subr.mxu0 0.0
    %2756 = vmatpush1.msra.mxu0 %v2748
    %2757 = vmatprep.subr.mxu0 0.0
    %2758 = vmatpush1.msra.mxu0 0.0
    %2759 = vmatprep.subr.mxu0 0.0
    %2760 = vmatpush1.msra.mxu0 0.0
    %2761 = vmatprep.subr.mxu0 0.0
    %2762 = vmatpush1.msra.mxu0 0.0
    %2763 = vmatprep.subr.mxu0 0.0
    %2764 = vmatpush1.msra.mxu0 0.0
    %2765 = vmatprep.subr.mxu0 0.0
    %2766 = vmatpush1.msra.mxu0 0.0
    %2767 = vmatprep.subr.mxu0 0.0
    %2768 = vmatpush1.msra.mxu0 0.0
    %2769 = vmatprep.subr.mxu0 0.0
    %2770 = vmatpush1.msra.mxu0 0.0
    %2771 = vmatprep.subr.mxu0 0.0
    %2772 = vmatpush1.msra.mxu0 0.0
    %2773 = vmatprep.subr.mxu0 0.0
    %2774 = vmatpush1.msra.mxu0 0.0
    %2775 = vmatprep.subr.mxu0 0.0
    %2776 = vmatpush1.msra.mxu0 0.0
    %2777 = vmatprep.subr.mxu0 0.0
    %2778 = vmatpush1.msra.mxu0 0.0
    %2779 = vmatprep.subr.mxu0 0.0
    %2780 = vmatpush1.msra.mxu0 0.0
    %2781 = vmatprep.subr.mxu0 0.0
    %2782 = vmatpush1.msra.mxu0 0.0
    %2783 = vmatprep.subr.mxu0 0.0
    %2784 = vmatpush1.msra.mxu0 0.0
    %2785 = vmatprep.subr.mxu0 0.0
    %2786 = vmatpush1.msra.mxu0 0.0
    %2787 = vmatprep.subr.mxu0 0.0
    %2788 = vmatpush1.msra.mxu0 0.0
    %2789 = vmatprep.subr.mxu0 0.0
    %2790 = vmatpush1.msra.mxu0 0.0
    %2791 = vmatprep.subr.mxu0 0.0
    %2792 = vmatpush1.msra.mxu0 0.0
    %2793 = vmatprep.subr.mxu0 0.0
    %2794 = vmatpush1.msra.mxu0 0.0
    %2795 = vmatprep.subr.mxu0 0.0
    %2796 = vmatpush1.msra.mxu0 0.0
    %2797 = vmatprep.subr.mxu0 0.0
    %2798 = vmatpush1.msra.mxu0 0.0
    %2799 = vmatprep.subr.mxu0 0.0
    %2800 = vmatpush1.msra.mxu0 0.0
    %2801 = vmatprep.subr.mxu0 0.0
    %2802 = vmatpush1.msra.mxu0 0.0
    %2803 = vmatprep.subr.mxu0 0.0
    %2804 = vmatpush1.msra.mxu0 0.0
    %2805 = vmatprep.subr.mxu0 0.0
    %2806 = vmatpush1.msra.mxu0 0.0
    %2807 = vmatprep.subr.mxu0 0.0
    %2808 = vmatpush1.msra.mxu0 0.0
    %2809 = vmatprep.subr.mxu0 0.0
    %2810 = vmatpush1.msra.mxu0 0.0
    %2811 = vmatprep.subr.mxu0 0.0
    %2812 = vmatpush1.msra.mxu0 0.0
    %2813 = vmatprep.mubr.f32.mxu0 0.0
    %2814 = vmatmul.mubr.f32.gmra.mrb[0].mxu0 %v1931
    %v2815 = vpop.f32.mrb[0].mxu0
    %v2816 = vadd.f32 0.0, %v2815
    %v2817 = vpop.f32.mrb[0].mxu0
    %2818 = vdwg.mxu0
    %v2819 = vadd.f32 %v2506, %v2816
    %v2820 = vxor.u32 %v2819, 2147483648
    %v2821 = vmul.f32 %v2820, 1.442695
    %v2822 = vpow.pop %v2821
    %v2823 = vadd.f32 %v2822, 1.0
    %v2824 = vrcp.pop %v2823
    %v2825 = vmul.f32 1.0, %v2824
    %v2826 = vmul.f32 %v2668, %v1916
    %v2827 = vmul.f32 %v2587, %v2744
    %v2828 = vadd.f32 %v2826, %v2827
    %v2829 = vtanh.pop %v2828
    %v2830 = vmul.f32 %v2825, %v2829
    %v2831 = vld [vmem:[#allocation7] sm:$0xff]
    %v2832 = vld [vmem:[#allocation7 + $0x8] sm:$0xff]
    %v2833 = vld [vmem:[#allocation7 + $0x10] sm:$0xff]
    %v2834 = vld [vmem:[#allocation7 + $0x18] sm:$0xff]
    %v2835 = vld [vmem:[#allocation8] sm:$0x1]
    %v2837 = vlaneseq
    %v2838 = vshrl.u32 %v2837, 7
    %v2839 = vsub.s32 0, %v2838
    %v2840 = vrot.slane %v2835, %v2839
    %v2843 = vsel %vm259, %v2830, 0
    %2845 = vmatprep.subr.mxu0 0.0
    %2846 = vmatpush1.msra.mxu0 %v2831
    %2847 = vmatprep.subr.mxu0 0.0
    %2848 = vmatpush1.msra.mxu0 %v2832
    %2849 = vmatprep.subr.mxu0 0.0
    %2850 = vmatpush1.msra.mxu0 %v2833
    %2851 = vmatprep.subr.mxu0 0.0
    %2852 = vmatpush1.msra.mxu0 %v2834
    %2853 = vmatprep.subr.mxu0 0.0
    %2854 = vmatpush1.msra.mxu0 0.0
    %2855 = vmatprep.subr.mxu0 0.0
    %2856 = vmatpush1.msra.mxu0 0.0
    %2857 = vmatprep.subr.mxu0 0.0
    %2858 = vmatpush1.msra.mxu0 0.0
    %2859 = vmatprep.subr.mxu0 0.0
    %2860 = vmatpush1.msra.mxu0 0.0
    %2861 = vmatprep.subr.mxu0 0.0
    %2862 = vmatpush1.msra.mxu0 0.0
    %2863 = vmatprep.subr.mxu0 0.0
    %2864 = vmatpush1.msra.mxu0 0.0
    %2865 = vmatprep.subr.mxu0 0.0
    %2866 = vmatpush1.msra.mxu0 0.0
    %2867 = vmatprep.subr.mxu0 0.0
    %2868 = vmatpush1.msra.mxu0 0.0
    %2869 = vmatprep.subr.mxu0 0.0
    %2870 = vmatpush1.msra.mxu0 0.0
    %2871 = vmatprep.subr.mxu0 0.0
    %2872 = vmatpush1.msra.mxu0 0.0
    %2873 = vmatprep.subr.mxu0 0.0
    %2874 = vmatpush1.msra.mxu0 0.0
    %2875 = vmatprep.subr.mxu0 0.0
    %2876 = vmatpush1.msra.mxu0 0.0
    %2877 = vmatprep.subr.mxu0 0.0
    %2878 = vmatpush1.msra.mxu0 0.0
    %2879 = vmatprep.subr.mxu0 0.0
    %2880 = vmatpush1.msra.mxu0 0.0
    %2881 = vmatprep.subr.mxu0 0.0
    %2882 = vmatpush1.msra.mxu0 0.0
    %2883 = vmatprep.subr.mxu0 0.0
    %2884 = vmatpush1.msra.mxu0 0.0
    %2885 = vmatprep.subr.mxu0 0.0
    %2886 = vmatpush1.msra.mxu0 0.0
    %2887 = vmatprep.subr.mxu0 0.0
    %2888 = vmatpush1.msra.mxu0 0.0
    %2889 = vmatprep.subr.mxu0 0.0
    %2890 = vmatpush1.msra.mxu0 0.0
    %2891 = vmatprep.subr.mxu0 0.0
    %2892 = vmatpush1.msra.mxu0 0.0
    %2893 = vmatprep.subr.mxu0 0.0
    %2894 = vmatpush1.msra.mxu0 0.0
    %2895 = vmatprep.subr.mxu0 0.0
    %2896 = vmatpush1.msra.mxu0 0.0
    %2897 = vmatprep.subr.mxu0 0.0
    %2898 = vmatpush1.msra.mxu0 0.0
    %2899 = vmatprep.subr.mxu0 0.0
    %2900 = vmatpush1.msra.mxu0 0.0
    %2901 = vmatprep.subr.mxu0 0.0
    %2902 = vmatpush1.msra.mxu0 0.0
    %2903 = vmatprep.subr.mxu0 0.0
    %2904 = vmatpush1.msra.mxu0 0.0
    %2905 = vmatprep.subr.mxu0 0.0
    %2906 = vmatpush1.msra.mxu0 0.0
    %2907 = vmatprep.subr.mxu0 0.0
    %2908 = vmatpush1.msra.mxu0 0.0
    %2909 = vmatprep.mubr.f32.mxu0 0.0
    %2910 = vmatmul.mubr.f32.gmra.mrb[0].mxu0 %v2843
    %v2911 = vpop.f32.mrb[0].mxu0
    %v2912 = vadd.f32 %v2840, %v2911
    %v2913 = vpop.f32.mrb[0].mxu0
    %2914 = vdwg.mxu0
    %v2916 = vsel %vm259, %v2912, 0
    %2918 = vmatprep.subr.mxu0 0.0
    %2919 = vmatpush1.msra.mxu0 %v339
    %2920 = vmatprep.subr.mxu0 0.0
    %2921 = vmatpush1.msra.mxu0 %v344
    %2922 = vmatprep.subr.mxu0 0.0
    %2923 = vmatpush1.msra.mxu0 %v349
    %2924 = vmatprep.subr.mxu0 0.0
    %2925 = vmatpush1.msra.mxu0 %v354
    %2926 = vmatprep.subr.mxu0 0.0
    %2927 = vmatpush1.msra.mxu0 0.0
    %2928 = vmatprep.subr.mxu0 0.0
    %2929 = vmatpush1.msra.mxu0 0.0
    %2930 = vmatprep.subr.mxu0 0.0
    %2931 = vmatpush1.msra.mxu0 0.0
    %2932 = vmatprep.subr.mxu0 0.0
    %2933 = vmatpush1.msra.mxu0 0.0
    %2934 = vmatprep.subr.mxu0 0.0
    %2935 = vmatpush1.msra.mxu0 0.0
    %2936 = vmatprep.subr.mxu0 0.0
    %2937 = vmatpush1.msra.mxu0 0.0
    %2938 = vmatprep.subr.mxu0 0.0
    %2939 = vmatpush1.msra.mxu0 0.0
    %2940 = vmatprep.subr.mxu0 0.0
    %2941 = vmatpush1.msra.mxu0 0.0
    %2942 = vmatprep.subr.mxu0 0.0
    %2943 = vmatpush1.msra.mxu0 0.0
    %2944 = vmatprep.subr.mxu0 0.0
    %2945 = vmatpush1.msra.mxu0 0.0
    %2946 = vmatprep.subr.mxu0 0.0
    %2947 = vmatpush1.msra.mxu0 0.0
    %2948 = vmatprep.subr.mxu0 0.0
    %2949 = vmatpush1.msra.mxu0 0.0
    %2950 = vmatprep.subr.mxu0 0.0
    %2951 = vmatpush1.msra.mxu0 0.0
    %2952 = vmatprep.subr.mxu0 0.0
    %2953 = vmatpush1.msra.mxu0 0.0
    %2954 = vmatprep.subr.mxu0 0.0
    %2955 = vmatpush1.msra.mxu0 0.0
    %2956 = vmatprep.subr.mxu0 0.0
    %2957 = vmatpush1.msra.mxu0 0.0
    %2958 = vmatprep.subr.mxu0 0.0
    %2959 = vmatpush1.msra.mxu0 0.0
    %2960 = vmatprep.subr.mxu0 0.0
    %2961 = vmatpush1.msra.mxu0 0.0
    %2962 = vmatprep.subr.mxu0 0.0
    %2963 = vmatpush1.msra.mxu0 0.0
    %2964 = vmatprep.subr.mxu0 0.0
    %2965 = vmatpush1.msra.mxu0 0.0
    %2966 = vmatprep.subr.mxu0 0.0
    %2967 = vmatpush1.msra.mxu0 0.0
    %2968 = vmatprep.subr.mxu0 0.0
    %2969 = vmatpush1.msra.mxu0 0.0
    %2970 = vmatprep.subr.mxu0 0.0
    %2971 = vmatpush1.msra.mxu0 0.0
    %2972 = vmatprep.subr.mxu0 0.0
    %2973 = vmatpush1.msra.mxu0 0.0
    %2974 = vmatprep.subr.mxu0 0.0
    %2975 = vmatpush1.msra.mxu0 0.0
    %2976 = vmatprep.subr.mxu0 0.0
    %2977 = vmatpush1.msra.mxu0 0.0
    %2978 = vmatprep.subr.mxu0 0.0
    %2979 = vmatpush1.msra.mxu0 0.0
    %2980 = vmatprep.subr.mxu0 0.0
    %2981 = vmatpush1.msra.mxu0 0.0
    %2982 = vmatprep.mubr.f32.mxu0 0.0
    %2983 = vmatmul.mubr.f32.gmra.mrb[0].mxu0 %v2916
    %v2984 = vpop.f32.mrb[0].mxu0
    %v2985 = vadd.f32 %v665, %v2984
    %v2986 = vpop.f32.mrb[0].mxu0
    %2987 = vdwg.mxu0
    %v2988 = vsel %vm1160, %v2985, -inf
    %2989 = vmax.xlane.f32.xlu0 %v2988
    %v2990 = vpop.xlane.xlu0 %2989
    %v2991 = vsub.f32 %v2985, %v2990
    %v2992 = vmul.f32 %v2991, 1.442695
    %v2993 = vpow.pop %v2992
    %v2994 = vsel %vm1160, %v2993, 0.0
    %2995 = vadd.xlane.f32.xlu0 %v2994
    %v2996 = vpop.xlane.xlu0 %2995
    %v2997 = vrcp.pop %v2996
    %v2998 = vmul.f32 %v2993, %v2997
    %v3000 = vsel %vm1172, %v2998, 0
    %3002 = vmatprep.subr.mxu0 0.0
    %3003 = vmatpush1.msra.mxu0 %v443
    %3004 = vmatprep.subr.mxu0 0.0
    %3005 = vmatpush1.msra.mxu0 %v448
    %3006 = vmatprep.subr.mxu0 0.0
    %3007 = vmatpush1.msra.mxu0 0.0
    %3008 = vmatprep.subr.mxu0 0.0
    %3009 = vmatpush1.msra.mxu0 0.0
    %3010 = vmatprep.subr.mxu0 0.0
    %3011 = vmatpush1.msra.mxu0 0.0
    %3012 = vmatprep.subr.mxu0 0.0
    %3013 = vmatpush1.msra.mxu0 0.0
    %3014 = vmatprep.subr.mxu0 0.0
    %3015 = vmatpush1.msra.mxu0 0.0
    %3016 = vmatprep.subr.mxu0 0.0
    %3017 = vmatpush1.msra.mxu0 0.0
    %3018 = vmatprep.subr.mxu0 0.0
    %3019 = vmatpush1.msra.mxu0 0.0
    %3020 = vmatprep.subr.mxu0 0.0
    %3021 = vmatpush1.msra.mxu0 0.0
    %3022 = vmatprep.subr.mxu0 0.0
    %3023 = vmatpush1.msra.mxu0 0.0
    %3024 = vmatprep.subr.mxu0 0.0
    %3025 = vmatpush1.msra.mxu0 0.0
    %3026 = vmatprep.subr.mxu0 0.0
    %3027 = vmatpush1.msra.mxu0 0.0
    %3028 = vmatprep.subr.mxu0 0.0
    %3029 = vmatpush1.msra.mxu0 0.0
    %3030 = vmatprep.subr.mxu0 0.0
    %3031 = vmatpush1.msra.mxu0 0.0
    %3032 = vmatprep.subr.mxu0 0.0
    %3033 = vmatpush1.msra.mxu0 0.0
    %3034 = vmatprep.subr.mxu0 0.0
    %3035 = vmatpush1.msra.mxu0 0.0
    %3036 = vmatprep.subr.mxu0 0.0
    %3037 = vmatpush1.msra.mxu0 0.0
    %3038 = vmatprep.subr.mxu0 0.0
    %3039 = vmatpush1.msra.mxu0 0.0
    %3040 = vmatprep.subr.mxu0 0.0
    %3041 = vmatpush1.msra.mxu0 0.0
    %3042 = vmatprep.subr.mxu0 0.0
    %3043 = vmatpush1.msra.mxu0 0.0
    %3044 = vmatprep.subr.mxu0 0.0
    %3045 = vmatpush1.msra.mxu0 0.0
    %3046 = vmatprep.subr.mxu0 0.0
    %3047 = vmatpush1.msra.mxu0 0.0
    %3048 = vmatprep.subr.mxu0 0.0
    %3049 = vmatpush1.msra.mxu0 0.0
    %3050 = vmatprep.subr.mxu0 0.0
    %3051 = vmatpush1.msra.mxu0 0.0
    %3052 = vmatprep.subr.mxu0 0.0
    %3053 = vmatpush1.msra.mxu0 0.0
    %3054 = vmatprep.subr.mxu0 0.0
    %3055 = vmatpush1.msra.mxu0 0.0
    %3056 = vmatprep.subr.mxu0 0.0
    %3057 = vmatpush1.msra.mxu0 0.0
    %3058 = vmatprep.subr.mxu0 0.0
    %3059 = vmatpush1.msra.mxu0 0.0
    %3060 = vmatprep.subr.mxu0 0.0
    %3061 = vmatpush1.msra.mxu0 0.0
    %3062 = vmatprep.subr.mxu0 0.0
    %3063 = vmatpush1.msra.mxu0 0.0
    %3064 = vmatprep.subr.mxu0 0.0
    %3065 = vmatpush1.msra.mxu0 0.0
    %3066 = vmatprep.mubr.f32.mxu0 0.0
    %3067 = vmatmul.mubr.f32.gmra.mrb[0].mxu0 %v3000
    %v3068 = vpop.f32.mrb[0].mxu0
    %v3069 = vadd.f32 0.0, %v3068
    %v3070 = vpop.f32.mrb[0].mxu0
    %3071 = vdwg.mxu0
    %3072 = vrot.lane.b32.xlu0 %v2912, 96
    %v3073 = vpop.permute.xlu0 %3072
    %v3074 = vsel %vm259, %v3073, 0
    %3076 = vmatprep.subr.mxu0 0.0
    %3077 = vmatpush1.msra.mxu0 %v562
    %3078 = vmatprep.subr.mxu0 0.0
    %3079 = vmatpush1.msra.mxu0 %v567
    %3080 = vmatprep.subr.mxu0 0.0
    %3081 = vmatpush1.msra.mxu0 %v572
    %3082 = vmatprep.subr.mxu0 0.0
    %3083 = vmatpush1.msra.mxu0 %v577
    %3084 = vmatprep.subr.mxu0 0.0
    %3085 = vmatpush1.msra.mxu0 0.0
    %3086 = vmatprep.subr.mxu0 0.0
    %3087 = vmatpush1.msra.mxu0 0.0
    %3088 = vmatprep.subr.mxu0 0.0
    %3089 = vmatpush1.msra.mxu0 0.0
    %3090 = vmatprep.subr.mxu0 0.0
    %3091 = vmatpush1.msra.mxu0 0.0
    %3092 = vmatprep.subr.mxu0 0.0
    %3093 = vmatpush1.msra.mxu0 0.0
    %3094 = vmatprep.subr.mxu0 0.0
    %3095 = vmatpush1.msra.mxu0 0.0
    %3096 = vmatprep.subr.mxu0 0.0
    %3097 = vmatpush1.msra.mxu0 0.0
    %3098 = vmatprep.subr.mxu0 0.0
    %3099 = vmatpush1.msra.mxu0 0.0
    %3100 = vmatprep.subr.mxu0 0.0
    %3101 = vmatpush1.msra.mxu0 0.0
    %3102 = vmatprep.subr.mxu0 0.0
    %3103 = vmatpush1.msra.mxu0 0.0
    %3104 = vmatprep.subr.mxu0 0.0
    %3105 = vmatpush1.msra.mxu0 0.0
    %3106 = vmatprep.subr.mxu0 0.0
    %3107 = vmatpush1.msra.mxu0 0.0
    %3108 = vmatprep.subr.mxu0 0.0
    %3109 = vmatpush1.msra.mxu0 0.0
    %3110 = vmatprep.subr.mxu0 0.0
    %3111 = vmatpush1.msra.mxu0 0.0
    %3112 = vmatprep.subr.mxu0 0.0
    %3113 = vmatpush1.msra.mxu0 0.0
    %3114 = vmatprep.subr.mxu0 0.0
    %3115 = vmatpush1.msra.mxu0 0.0
    %3116 = vmatprep.subr.mxu0 0.0
    %3117 = vmatpush1.msra.mxu0 0.0
    %3118 = vmatprep.subr.mxu0 0.0
    %3119 = vmatpush1.msra.mxu0 0.0
    %3120 = vmatprep.subr.mxu0 0.0
    %3121 = vmatpush1.msra.mxu0 0.0
    %3122 = vmatprep.subr.mxu0 0.0
    %3123 = vmatpush1.msra.mxu0 0.0
    %3124 = vmatprep.subr.mxu0 0.0
    %3125 = vmatpush1.msra.mxu0 0.0
    %3126 = vmatprep.subr.mxu0 0.0
    %3127 = vmatpush1.msra.mxu0 0.0
    %3128 = vmatprep.subr.mxu0 0.0
    %3129 = vmatpush1.msra.mxu0 0.0
    %3130 = vmatprep.subr.mxu0 0.0
    %3131 = vmatpush1.msra.mxu0 0.0
    %3132 = vmatprep.subr.mxu0 0.0
    %3133 = vmatpush1.msra.mxu0 0.0
    %3134 = vmatprep.subr.mxu0 0.0
    %3135 = vmatpush1.msra.mxu0 0.0
    %3136 = vmatprep.subr.mxu0 0.0
    %3137 = vmatpush1.msra.mxu0 0.0
    %3138 = vmatprep.subr.mxu0 0.0
    %3139 = vmatpush1.msra.mxu0 0.0
    %3140 = vmatprep.mubr.f32.mxu0 0.0
    %3141 = vmatmul.mubr.f32.gmra.mrb[0].mxu0 %v3074
    %v3142 = vpop.f32.mrb[0].mxu0
    %v3143 = vadd.f32 %v666, %v3142
    %v3144 = vpop.f32.mrb[0].mxu0
    %3145 = vdwg.mxu0
    %v3146 = vsel %vm1320, %v3143, -inf
    %3147 = vmax.xlane.f32.xlu0 %v3146
    %v3148 = vpop.xlane.xlu0 %3147
    %v3149 = vsub.f32 %v3143, %v3148
    %v3150 = vmul.f32 %v3149, 1.442695
    %v3151 = vpow.pop %v3150
    %v3152 = vsel %vm1320, %v3151, 0.0
    %3153 = vadd.xlane.f32.xlu0 %v3152
    %v3154 = vpop.xlane.xlu0 %3153
    %v3155 = vrcp.pop %v3154
    %v3156 = vmul.f32 %v3151, %v3155
    %v3158 = vsel %vm1332, %v3156, 0
    %3160 = vmatprep.subr.mxu0 0.0
    %3161 = vmatpush1.msra.mxu0 %v662
    %3162 = vmatprep.subr.mxu0 0.0
    %3163 = vmatpush1.msra.mxu0 0.0
    %3164 = vmatprep.subr.mxu0 0.0
    %3165 = vmatpush1.msra.mxu0 0.0
    %3166 = vmatprep.subr.mxu0 0.0
    %3167 = vmatpush1.msra.mxu0 0.0
    %3168 = vmatprep.subr.mxu0 0.0
    %3169 = vmatpush1.msra.mxu0 0.0
    %3170 = vmatprep.subr.mxu0 0.0
    %3171 = vmatpush1.msra.mxu0 0.0
    %3172 = vmatprep.subr.mxu0 0.0
    %3173 = vmatpush1.msra.mxu0 0.0
    %3174 = vmatprep.subr.mxu0 0.0
    %3175 = vmatpush1.msra.mxu0 0.0
    %3176 = vmatprep.subr.mxu0 0.0
    %3177 = vmatpush1.msra.mxu0 0.0
    %3178 = vmatprep.subr.mxu0 0.0
    %3179 = vmatpush1.msra.mxu0 0.0
    %3180 = vmatprep.subr.mxu0 0.0
    %3181 = vmatpush1.msra.mxu0 0.0
    %3182 = vmatprep.subr.mxu0 0.0
    %3183 = vmatpush1.msra.mxu0 0.0
    %3184 = vmatprep.subr.mxu0 0.0
    %3185 = vmatpush1.msra.mxu0 0.0
    %3186 = vmatprep.subr.mxu0 0.0
    %3187 = vmatpush1.msra.mxu0 0.0
    %3188 = vmatprep.subr.mxu0 0.0
    %3189 = vmatpush1.msra.mxu0 0.0
    %3190 = vmatprep.subr.mxu0 0.0
    %3191 = vmatpush1.msra.mxu0 0.0
    %3192 = vmatprep.subr.mxu0 0.0
    %3193 = vmatpush1.msra.mxu0 0.0
    %3194 = vmatprep.subr.mxu0 0.0
    %3195 = vmatpush1.msra.mxu0 0.0
    %3196 = vmatprep.subr.mxu0 0.0
    %3197 = vmatpush1.msra.mxu0 0.0
    %3198 = vmatprep.subr.mxu0 0.0
    %3199 = vmatpush1.msra.mxu0 0.0
    %3200 = vmatprep.subr.mxu0 0.0
    %3201 = vmatpush1.msra.mxu0 0.0
    %3202 = vmatprep.subr.mxu0 0.0
    %3203 = vmatpush1.msra.mxu0 0.0
    %3204 = vmatprep.subr.mxu0 0.0
    %3205 = vmatpush1.msra.mxu0 0.0
    %3206 = vmatprep.subr.mxu0 0.0
    %3207 = vmatpush1.msra.mxu0 0.0
    %3208 = vmatprep.subr.mxu0 0.0
    %3209 = vmatpush1.msra.mxu0 0.0
    %3210 = vmatprep.subr.mxu0 0.0
    %3211 = vmatpush1.msra.mxu0 0.0
    %3212 = vmatprep.subr.mxu0 0.0
    %3213 = vmatpush1.msra.mxu0 0.0
    %3214 = vmatprep.subr.mxu0 0.0
    %3215 = vmatpush1.msra.mxu0 0.0
    %3216 = vmatprep.subr.mxu0 0.0
    %3217 = vmatpush1.msra.mxu0 0.0
    %3218 = vmatprep.subr.mxu0 0.0
    %3219 = vmatpush1.msra.mxu0 0.0
    %3220 = vmatprep.subr.mxu0 0.0
    %3221 = vmatpush1.msra.mxu0 0.0
    %3222 = vmatprep.subr.mxu0 0.0
    %3223 = vmatpush1.msra.mxu0 0.0
    %3224 = vmatprep.mubr.f32.mxu0 0.0
    %3225 = vmatmul.mubr.f32.gmra.mrb[0].mxu0 %v3158
    %v3226 = vpop.f32.mrb[0].mxu0
    %v3227 = vadd.f32 0.0, %v3226
    %v3228 = vpop.f32.mrb[0].mxu0
    %3229 = vdwg.mxu0
    %3231 = vrot.lane.b32.xlu0 %v3227, 32
    %v3232 = vpop.permute.xlu0 %3231
    %v3234 = vsel %vm259, %v3069, %v3232
    %v3235 = vld [vmem:[%s20] sm:$0xff]
    %v3236 = vld [vmem:[%s20 + $0x8] sm:$0xff]
    %v3237 = vld [vmem:[%s20 + $0x10] sm:$0xff]
    %v3238 = vld [vmem:[%s20 + $0x18] sm:$0xff]
    %v3239 = vld [vmem:[%s20 + $0x20] sm:$0xff]
    %v3240 = vld [vmem:[%s20 + $0x28] sm:$0xff]
    %v3241 = vld [vmem:[%s20 + $0x30] sm:$0xff]
    %v3242 = vld [vmem:[%s20 + $0x38] sm:$0xff]
    %v3243 = vld [vmem:[%s21] sm:$0x1]
    %v3245 = vlaneseq
    %v3246 = vshrl.u32 %v3245, 7
    %v3247 = vsub.s32 0, %v3246
    %v3248 = vrot.slane %v3243, %v3247
    %v3251 = vsel %vm1426, %v3234, 0
    %3253 = vmatprep.subr.mxu0 0.0
    %3254 = vmatpush1.msra.mxu0 %v3235
    %3255 = vmatprep.subr.mxu0 0.0
    %3256 = vmatpush1.msra.mxu0 %v3236
    %3257 = vmatprep.subr.mxu0 0.0
    %3258 = vmatpush1.msra.mxu0 %v3237
    %3259 = vmatprep.subr.mxu0 0.0
    %3260 = vmatpush1.msra.mxu0 %v3238
    %3261 = vmatprep.subr.mxu0 0.0
    %3262 = vmatpush1.msra.mxu0 %v3239
    %3263 = vmatprep.subr.mxu0 0.0
    %3264 = vmatpush1.msra.mxu0 %v3240
    %3265 = vmatprep.subr.mxu0 0.0
    %3266 = vmatpush1.msra.mxu0 %v3241
    %3267 = vmatprep.subr.mxu0 0.0
    %3268 = vmatpush1.msra.mxu0 %v3242
    %3269 = vmatprep.subr.mxu0 0.0
    %3270 = vmatpush1.msra.mxu0 0.0
    %3271 = vmatprep.subr.mxu0 0.0
    %3272 = vmatpush1.msra.mxu0 0.0
    %3273 = vmatprep.subr.mxu0 0.0
    %3274 = vmatpush1.msra.mxu0 0.0
    %3275 = vmatprep.subr.mxu0 0.0
    %3276 = vmatpush1.msra.mxu0 0.0
    %3277 = vmatprep.subr.mxu0 0.0
    %3278 = vmatpush1.msra.mxu0 0.0
    %3279 = vmatprep.subr.mxu0 0.0
    %3280 = vmatpush1.msra.mxu0 0.0
    %3281 = vmatprep.subr.mxu0 0.0
    %3282 = vmatpush1.msra.mxu0 0.0
    %3283 = vmatprep.subr.mxu0 0.0
    %3284 = vmatpush1.msra.mxu0 0.0
    %3285 = vmatprep.subr.mxu0 0.0
    %3286 = vmatpush1.msra.mxu0 0.0
    %3287 = vmatprep.subr.mxu0 0.0
    %3288 = vmatpush1.msra.mxu0 0.0
    %3289 = vmatprep.subr.mxu0 0.0
    %3290 = vmatpush1.msra.mxu0 0.0
    %3291 = vmatprep.subr.mxu0 0.0
    %3292 = vmatpush1.msra.mxu0 0.0
    %3293 = vmatprep.subr.mxu0 0.0
    %3294 = vmatpush1.msra.mxu0 0.0
    %3295 = vmatprep.subr.mxu0 0.0
    %3296 = vmatpush1.msra.mxu0 0.0
    %3297 = vmatprep.subr.mxu0 0.0
    %3298 = vmatpush1.msra.mxu0 0.0
    %3299 = vmatprep.subr.mxu0 0.0
    %3300 = vmatpush1.msra.mxu0 0.0
    %3301 = vmatprep.subr.mxu0 0.0
    %3302 = vmatpush1.msra.mxu0 0.0
    %3303 = vmatprep.subr.mxu0 0.0
    %3304 = vmatpush1.msra.mxu0 0.0
    %3305 = vmatprep.subr.mxu0 0.0
    %3306 = vmatpush1.msra.mxu0 0.0
    %3307 = vmatprep.subr.mxu0 0.0
    %3308 = vmatpush1.msra.mxu0 0.0
    %3309 = vmatprep.subr.mxu0 0.0
    %3310 = vmatpush1.msra.mxu0 0.0
    %3311 = vmatprep.subr.mxu0 0.0
    %3312 = vmatpush1.msra.mxu0 0.0
    %3313 = vmatprep.subr.mxu0 0.0
    %3314 = vmatpush1.msra.mxu0 0.0
    %3315 = vmatprep.subr.mxu0 0.0
    %3316 = vmatpush1.msra.mxu0 0.0
    %3317 = vmatprep.mubr.f32.mxu0 0.0
    %3318 = vmatmul.mubr.f32.gmra.mrb[0].mxu0 %v3251
    %v3319 = vpop.f32.mrb[0].mxu0
    %v3320 = vadd.f32 %v3248, %v3319
    %v3321 = vpop.f32.mrb[0].mxu0
    %3322 = vdwg.mxu0
    %v3323 = vmax.f32 %v3320, 0.0
    %v3324 = vld [vmem:[%s22] sm:$0xff]
    %v3325 = vld [vmem:[%s22 + $0x8] sm:$0xff]
    %v3326 = vld [vmem:[%s22 + $0x10] sm:$0xff]
    %v3327 = vld [vmem:[%s22 + $0x18] sm:$0xff]
    %v3328 = vld [vmem:[%s22 + $0x20] sm:$0xff]
    %v3329 = vld [vmem:[%s22 + $0x28] sm:$0xff]
    %v3330 = vld [vmem:[%s22 + $0x30] sm:$0xff]
    %v3331 = vld [vmem:[%s22 + $0x38] sm:$0xff]
    %v3332 = vld [vmem:[%s23] sm:$0x1]
    %v3334 = vlaneseq
    %v3335 = vshrl.u32 %v3334, 7
    %v3336 = vsub.s32 0, %v3335
    %v3337 = vrot.slane %v3332, %v3336
    %v3340 = vsel %vm1426, %v3323, 0
    %3342 = vmatprep.subr.mxu0 0.0
    %3343 = vmatpush1.msra.mxu0 %v3324
    %3344 = vmatprep.subr.mxu0 0.0
    %3345 = vmatpush1.msra.mxu0 %v3325
    %3346 = vmatprep.subr.mxu0 0.0
    %3347 = vmatpush1.msra.mxu0 %v3326
    %3348 = vmatprep.subr.mxu0 0.0
    %3349 = vmatpush1.msra.mxu0 %v3327
    %3350 = vmatprep.subr.mxu0 0.0
    %3351 = vmatpush1.msra.mxu0 %v3328
    %3352 = vmatprep.subr.mxu0 0.0
    %3353 = vmatpush1.msra.mxu0 %v3329
    %3354 = vmatprep.subr.mxu0 0.0
    %3355 = vmatpush1.msra.mxu0 %v3330
    %3356 = vmatprep.subr.mxu0 0.0
    %3357 = vmatpush1.msra.mxu0 %v3331
    %3358 = vmatprep.subr.mxu0 0.0
    %3359 = vmatpush1.msra.mxu0 0.0
    %3360 = vmatprep.subr.mxu0 0.0
    %3361 = vmatpush1.msra.mxu0 0.0
    %3362 = vmatprep.subr.mxu0 0.0
    %3363 = vmatpush1.msra.mxu0 0.0
    %3364 = vmatprep.subr.mxu0 0.0
    %3365 = vmatpush1.msra.mxu0 0.0
    %3366 = vmatprep.subr.mxu0 0.0
    %3367 = vmatpush1.msra.mxu0 0.0
    %3368 = vmatprep.subr.mxu0 0.0
    %3369 = vmatpush1.msra.mxu0 0.0
    %3370 = vmatprep.subr.mxu0 0.0
    %3371 = vmatpush1.msra.mxu0 0.0
    %3372 = vmatprep.subr.mxu0 0.0
    %3373 = vmatpush1.msra.mxu0 0.0
    %3374 = vmatprep.subr.mxu0 0.0
    %3375 = vmatpush1.msra.mxu0 0.0
    %3376 = vmatprep.subr.mxu0 0.0
    %3377 = vmatpush1.msra.mxu0 0.0
    %3378 = vmatprep.subr.mxu0 0.0
    %3379 = vmatpush1.msra.mxu0 0.0
    %3380 = vmatprep.subr.mxu0 0.0
    %3381 = vmatpush1.msra.mxu0 0.0
    %3382 = vmatprep.subr.mxu0 0.0
    %3383 = vmatpush1.msra.mxu0 0.0
    %3384 = vmatprep.subr.mxu0 0.0
    %3385 = vmatpush1.msra.mxu0 0.0
    %3386 = vmatprep.subr.mxu0 0.0
    %3387 = vmatpush1.msra.mxu0 0.0
    %3388 = vmatprep.subr.mxu0 0.0
    %3389 = vmatpush1.msra.mxu0 0.0
    %3390 = vmatprep.subr.mxu0 0.0
    %3391 = vmatpush1.msra.mxu0 0.0
    %3392 = vmatprep.subr.mxu0 0.0
    %3393 = vmatpush1.msra.mxu0 0.0
    %3394 = vmatprep.subr.mxu0 0.0
    %3395 = vmatpush1.msra.mxu0 0.0
    %3396 = vmatprep.subr.mxu0 0.0
    %3397 = vmatpush1.msra.mxu0 0.0
    %3398 = vmatprep.subr.mxu0 0.0
    %3399 = vmatpush1.msra.mxu0 0.0
    %3400 = vmatprep.subr.mxu0 0.0
    %3401 = vmatpush1.msra.mxu0 0.0
    %3402 = vmatprep.subr.mxu0 0.0
    %3403 = vmatpush1.msra.mxu0 0.0
    %3404 = vmatprep.subr.mxu0 0.0
    %3405 = vmatpush1.msra.mxu0 0.0
    %3406 = vmatprep.mubr.f32.mxu0 0.0
    %3407 = vmatmul.mubr.f32.gmra.mrb[0].mxu0 %v3340
    %v3408 = vpop.f32.mrb[0].mxu0
    %v3409 = vadd.f32 %v3337, %v3408
    %v3410 = vpop.f32.mrb[0].mxu0
    %3411 = vdwg.mxu0
    %s3412 = scalar_lea.vmem [#allocation22], 4
    %3413 = vst.msk [vmem:[%s3412] sm:$0x3] %vm1160, %v3409
    %s3414 = scalar_lea.vmem %s0, 24
    %v3415 = vld [vmem:[%s3414] sm:$0x3]
    %v3416 = vld [vmem:[%s3414 + $0x2] sm:$0x3]
    %v3417 = vld [vmem:[%s3414 + $0x4] sm:$0x3]
    %v3418 = vld [vmem:[%s3414 + $0x6] sm:$0x3]
    %v3419 = vld [vmem:[%s3] sm:$0xff]
    %v3420 = vld [vmem:[%s3 + $0x8] sm:$0xff]
    %v3421 = vld [vmem:[%s3 + $0x10] sm:$0xff]
    %v3422 = vld [vmem:[%s3 + $0x18] sm:$0xff]
    %3423 = vmatprep.subr.mxu0 0.0
    %3424 = vmatpush1.msra.mxu0 %v3419
    %3425 = vmatprep.subr.mxu0 0.0
    %3426 = vmatpush1.msra.mxu0 %v3420
    %3427 = vmatprep.subr.mxu0 0.0
    %3428 = vmatpush1.msra.mxu0 %v3421
    %3429 = vmatprep.subr.mxu0 0.0
    %3430 = vmatpush1.msra.mxu0 %v3422
    %3431 = vmatprep.subr.mxu0 0.0
    %3432 = vmatpush1.msra.mxu0 0.0
    %3433 = vmatprep.subr.mxu0 0.0
    %3434 = vmatpush1.msra.mxu0 0.0
    %3435 = vmatprep.subr.mxu0 0.0
    %3436 = vmatpush1.msra.mxu0 0.0
    %3437 = vmatprep.subr.mxu0 0.0
    %3438 = vmatpush1.msra.mxu0 0.0
    %3439 = vmatprep.subr.mxu0 0.0
    %3440 = vmatpush1.msra.mxu0 0.0
    %3441 = vmatprep.subr.mxu0 0.0
    %3442 = vmatpush1.msra.mxu0 0.0
    %3443 = vmatprep.subr.mxu0 0.0
    %3444 = vmatpush1.msra.mxu0 0.0
    %3445 = vmatprep.subr.mxu0 0.0
    %3446 = vmatpush1.msra.mxu0 0.0
    %3447 = vmatprep.subr.mxu0 0.0
    %3448 = vmatpush1.msra.mxu0 0.0
    %3449 = vmatprep.subr.mxu0 0.0
    %3450 = vmatpush1.msra.mxu0 0.0
    %3451 = vmatprep.subr.mxu0 0.0
    %3452 = vmatpush1.msra.mxu0 0.0
    %3453 = vmatprep.subr.mxu0 0.0
    %3454 = vmatpush1.msra.mxu0 0.0
    %3455 = vmatprep.subr.mxu0 0.0
    %3456 = vmatpush1.msra.mxu0 0.0
    %3457 = vmatprep.subr.mxu0 0.0
    %3458 = vmatpush1.msra.mxu0 0.0
    %3459 = vmatprep.subr.mxu0 0.0
    %3460 = vmatpush1.msra.mxu0 0.0
    %3461 = vmatprep.subr.mxu0 0.0
    %3462 = vmatpush1.msra.mxu0 0.0
    %3463 = vmatprep.subr.mxu0 0.0
    %3464 = vmatpush1.msra.mxu0 0.0
    %3465 = vmatprep.subr.mxu0 0.0
    %3466 = vmatpush1.msra.mxu0 0.0
    %3467 = vmatprep.subr.mxu0 0.0
    %3468 = vmatpush1.msra.mxu0 0.0
    %3469 = vmatprep.subr.mxu0 0.0
    %3470 = vmatpush1.msra.mxu0 0.0
    %3471 = vmatprep.subr.mxu0 0.0
    %3472 = vmatpush1.msra.mxu0 0.0
    %3473 = vmatprep.subr.mxu0 0.0
    %3474 = vmatpush1.msra.mxu0 0.0
    %3475 = vmatprep.subr.mxu0 0.0
    %3476 = vmatpush1.msra.mxu0 0.0
    %3477 = vmatprep.subr.mxu0 0.0
    %3478 = vmatpush1.msra.mxu0 0.0
    %3479 = vmatprep.subr.mxu0 0.0
    %3480 = vmatpush1.msra.mxu0 0.0
    %3481 = vmatprep.subr.mxu0 0.0
    %3482 = vmatpush1.msra.mxu0 0.0
    %3483 = vmatprep.subr.mxu0 0.0
    %3484 = vmatpush1.msra.mxu0 0.0
    %3485 = vmatprep.subr.mxu0 0.0
    %3486 = vmatpush1.msra.mxu0 0.0
    %3487 = vmatprep.mubr.f32.mxu0 0.0
    %3488 = vmatmul.mubr.f32.gmra.mrb[0].mxu0 %v2843
    %v3489 = vpop.f32.mrb[0].mxu0
    %v3490 = vadd.f32 0.0, %v3489
    %v3491 = vpop.f32.mrb[0].mxu0
    %3492 = vdwg.mxu0
    %v3493 = vadd.f32 %v3415, %v3490
    %v3494 = vxor.u32 %v3493, 2147483648
    %v3495 = vmul.f32 %v3494, 1.442695
    %v3496 = vpow.pop %v3495
    %v3497 = vadd.f32 %v3496, 1.0
    %v3498 = vrcp.pop %v3497
    %v3499 = vmul.f32 1.0, %v3498
    %v3500 = vld [vmem:[%s757] sm:$0xff]
    %v3501 = vld [vmem:[%s757 + $0x8] sm:$0xff]
    %v3502 = vld [vmem:[%s757 + $0x10] sm:$0xff]
    %v3503 = vld [vmem:[%s757 + $0x18] sm:$0xff]
    %3504 = vmatprep.subr.mxu0 0.0
    %3505 = vmatpush1.msra.mxu0 %v3500
    %3506 = vmatprep.subr.mxu0 0.0
    %3507 = vmatpush1.msra.mxu0 %v3501
    %3508 = vmatprep.subr.mxu0 0.0
    %3509 = vmatpush1.msra.mxu0 %v3502
    %3510 = vmatprep.subr.mxu0 0.0
    %3511 = vmatpush1.msra.mxu0 %v3503
    %3512 = vmatprep.subr.mxu0 0.0
    %3513 = vmatpush1.msra.mxu0 0.0
    %3514 = vmatprep.subr.mxu0 0.0
    %3515 = vmatpush1.msra.mxu0 0.0
    %3516 = vmatprep.subr.mxu0 0.0
    %3517 = vmatpush1.msra.mxu0 0.0
    %3518 = vmatprep.subr.mxu0 0.0
    %3519 = vmatpush1.msra.mxu0 0.0
    %3520 = vmatprep.subr.mxu0 0.0
    %3521 = vmatpush1.msra.mxu0 0.0
    %3522 = vmatprep.subr.mxu0 0.0
    %3523 = vmatpush1.msra.mxu0 0.0
    %3524 = vmatprep.subr.mxu0 0.0
    %3525 = vmatpush1.msra.mxu0 0.0
    %3526 = vmatprep.subr.mxu0 0.0
    %3527 = vmatpush1.msra.mxu0 0.0
    %3528 = vmatprep.subr.mxu0 0.0
    %3529 = vmatpush1.msra.mxu0 0.0
    %3530 = vmatprep.subr.mxu0 0.0
    %3531 = vmatpush1.msra.mxu0 0.0
    %3532 = vmatprep.subr.mxu0 0.0
    %3533 = vmatpush1.msra.mxu0 0.0
    %3534 = vmatprep.subr.mxu0 0.0
    %3535 = vmatpush1.msra.mxu0 0.0
    %3536 = vmatprep.subr.mxu0 0.0
    %3537 = vmatpush1.msra.mxu0 0.0
    %3538 = vmatprep.subr.mxu0 0.0
    %3539 = vmatpush1.msra.mxu0 0.0
    %3540 = vmatprep.subr.mxu0 0.0
    %3541 = vmatpush1.msra.mxu0 0.0
    %3542 = vmatprep.subr.mxu0 0.0
    %3543 = vmatpush1.msra.mxu0 0.0
    %3544 = vmatprep.subr.mxu0 0.0
    %3545 = vmatpush1.msra.mxu0 0.0
    %3546 = vmatprep.subr.mxu0 0.0
    %3547 = vmatpush1.msra.mxu0 0.0
    %3548 = vmatprep.subr.mxu0 0.0
    %3549 = vmatpush1.msra.mxu0 0.0
    %3550 = vmatprep.subr.mxu0 0.0
    %3551 = vmatpush1.msra.mxu0 0.0
    %3552 = vmatprep.subr.mxu0 0.0
    %3553 = vmatpush1.msra.mxu0 0.0
    %3554 = vmatprep.subr.mxu0 0.0
    %3555 = vmatpush1.msra.mxu0 0.0
    %3556 = vmatprep.subr.mxu0 0.0
    %3557 = vmatpush1.msra.mxu0 0.0
    %3558 = vmatprep.subr.mxu0 0.0
    %3559 = vmatpush1.msra.mxu0 0.0
    %3560 = vmatprep.subr.mxu0 0.0
    %3561 = vmatpush1.msra.mxu0 0.0
    %3562 = vmatprep.subr.mxu0 0.0
    %3563 = vmatpush1.msra.mxu0 0.0
    %3564 = vmatprep.subr.mxu0 0.0
    %3565 = vmatpush1.msra.mxu0 0.0
    %3566 = vmatprep.subr.mxu0 0.0
    %3567 = vmatpush1.msra.mxu0 0.0
    %3568 = vmatprep.mubr.f32.mxu0 0.0
    %3569 = vmatmul.mubr.f32.gmra.mrb[0].mxu0 %v2843
    %v3570 = vpop.f32.mrb[0].mxu0
    %v3571 = vadd.f32 0.0, %v3570
    %v3572 = vpop.f32.mrb[0].mxu0
    %3573 = vdwg.mxu0
    %v3574 = vadd.f32 %v3416, %v3571
    %v3575 = vxor.u32 %v3574, 2147483648
    %v3576 = vmul.f32 %v3575, 1.442695
    %v3577 = vpow.pop %v3576
    %v3578 = vadd.f32 %v3577, 1.0
    %v3579 = vrcp.pop %v3578
    %v3580 = vmul.f32 1.0, %v3579
    %v3581 = vld [vmem:[%s839] sm:$0xff]
    %v3582 = vld [vmem:[%s839 + $0x8] sm:$0xff]
    %v3583 = vld [vmem:[%s839 + $0x10] sm:$0xff]
    %v3584 = vld [vmem:[%s839 + $0x18] sm:$0xff]
    %3585 = vmatprep.subr.mxu0 0.0
    %3586 = vmatpush1.msra.mxu0 %v3581
    %3587 = vmatprep.subr.mxu0 0.0
    %3588 = vmatpush1.msra.mxu0 %v3582
    %3589 = vmatprep.subr.mxu0 0.0
    %3590 = vmatpush1.msra.mxu0 %v3583
    %3591 = vmatprep.subr.mxu0 0.0
    %3592 = vmatpush1.msra.mxu0 %v3584
    %3593 = vmatprep.subr.mxu0 0.0
    %3594 = vmatpush1.msra.mxu0 0.0
    %3595 = vmatprep.subr.mxu0 0.0
    %3596 = vmatpush1.msra.mxu0 0.0
    %3597 = vmatprep.subr.mxu0 0.0
    %3598 = vmatpush1.msra.mxu0 0.0
    %3599 = vmatprep.subr.mxu0 0.0
    %3600 = vmatpush1.msra.mxu0 0.0
    %3601 = vmatprep.subr.mxu0 0.0
    %3602 = vmatpush1.msra.mxu0 0.0
    %3603 = vmatprep.subr.mxu0 0.0
    %3604 = vmatpush1.msra.mxu0 0.0
    %3605 = vmatprep.subr.mxu0 0.0
    %3606 = vmatpush1.msra.mxu0 0.0
    %3607 = vmatprep.subr.mxu0 0.0
    %3608 = vmatpush1.msra.mxu0 0.0
    %3609 = vmatprep.subr.mxu0 0.0
    %3610 = vmatpush1.msra.mxu0 0.0
    %3611 = vmatprep.subr.mxu0 0.0
    %3612 = vmatpush1.msra.mxu0 0.0
    %3613 = vmatprep.subr.mxu0 0.0
    %3614 = vmatpush1.msra.mxu0 0.0
    %3615 = vmatprep.subr.mxu0 0.0
    %3616 = vmatpush1.msra.mxu0 0.0
    %3617 = vmatprep.subr.mxu0 0.0
    %3618 = vmatpush1.msra.mxu0 0.0
    %3619 = vmatprep.subr.mxu0 0.0
    %3620 = vmatpush1.msra.mxu0 0.0
    %3621 = vmatprep.subr.mxu0 0.0
    %3622 = vmatpush1.msra.mxu0 0.0
    %3623 = vmatprep.subr.mxu0 0.0
    %3624 = vmatpush1.msra.mxu0 0.0
    %3625 = vmatprep.subr.mxu0 0.0
    %3626 = vmatpush1.msra.mxu0 0.0
    %3627 = vmatprep.subr.mxu0 0.0
    %3628 = vmatpush1.msra.mxu0 0.0
    %3629 = vmatprep.subr.mxu0 0.0
    %3630 = vmatpush1.msra.mxu0 0.0
    %3631 = vmatprep.subr.mxu0 0.0
    %3632 = vmatpush1.msra.mxu0 0.0
    %3633 = vmatprep.subr.mxu0 0.0
    %3634 = vmatpush1.msra.mxu0 0.0
    %3635 = vmatprep.subr.mxu0 0.0
    %3636 = vmatpush1.msra.mxu0 0.0
    %3637 = vmatprep.subr.mxu0 0.0
    %3638 = vmatpush1.msra.mxu0 0.0
    %3639 = vmatprep.subr.mxu0 0.0
    %3640 = vmatpush1.msra.mxu0 0.0
    %3641 = vmatprep.subr.mxu0 0.0
    %3642 = vmatpush1.msra.mxu0 0.0
    %3643 = vmatprep.subr.mxu0 0.0
    %3644 = vmatpush1.msra.mxu0 0.0
    %3645 = vmatprep.subr.mxu0 0.0
    %3646 = vmatpush1.msra.mxu0 0.0
    %3647 = vmatprep.subr.mxu0 0.0
    %3648 = vmatpush1.msra.mxu0 0.0
    %3649 = vmatprep.mubr.f32.mxu0 0.0
    %3650 = vmatmul.mubr.f32.gmra.mrb[0].mxu0 %v2843
    %v3651 = vpop.f32.mrb[0].mxu0
    %v3652 = vadd.f32 0.0, %v3651
    %v3653 = vpop.f32.mrb[0].mxu0
    %3654 = vdwg.mxu0
    %v3655 = vadd.f32 %v3417, %v3652
    %v3656 = vtanh.pop %v3655
    %v3657 = vld [vmem:[%s916] sm:$0xff]
    %v3658 = vld [vmem:[%s916 + $0x8] sm:$0xff]
    %v3659 = vld [vmem:[%s916 + $0x10] sm:$0xff]
    %v3660 = vld [vmem:[%s916 + $0x18] sm:$0xff]
    %3661 = vmatprep.subr.mxu0 0.0
    %3662 = vmatpush1.msra.mxu0 %v3657
    %3663 = vmatprep.subr.mxu0 0.0
    %3664 = vmatpush1.msra.mxu0 %v3658
    %3665 = vmatprep.subr.mxu0 0.0
    %3666 = vmatpush1.msra.mxu0 %v3659
    %3667 = vmatprep.subr.mxu0 0.0
    %3668 = vmatpush1.msra.mxu0 %v3660
    %3669 = vmatprep.subr.mxu0 0.0
    %3670 = vmatpush1.msra.mxu0 0.0
    %3671 = vmatprep.subr.mxu0 0.0
    %3672 = vmatpush1.msra.mxu0 0.0
    %3673 = vmatprep.subr.mxu0 0.0
    %3674 = vmatpush1.msra.mxu0 0.0
    %3675 = vmatprep.subr.mxu0 0.0
    %3676 = vmatpush1.msra.mxu0 0.0
    %3677 = vmatprep.subr.mxu0 0.0
    %3678 = vmatpush1.msra.mxu0 0.0
    %3679 = vmatprep.subr.mxu0 0.0
    %3680 = vmatpush1.msra.mxu0 0.0
    %3681 = vmatprep.subr.mxu0 0.0
    %3682 = vmatpush1.msra.mxu0 0.0
    %3683 = vmatprep.subr.mxu0 0.0
    %3684 = vmatpush1.msra.mxu0 0.0
    %3685 = vmatprep.subr.mxu0 0.0
    %3686 = vmatpush1.msra.mxu0 0.0
    %3687 = vmatprep.subr.mxu0 0.0
    %3688 = vmatpush1.msra.mxu0 0.0
    %3689 = vmatprep.subr.mxu0 0.0
    %3690 = vmatpush1.msra.mxu0 0.0
    %3691 = vmatprep.subr.mxu0 0.0
    %3692 = vmatpush1.msra.mxu0 0.0
    %3693 = vmatprep.subr.mxu0 0.0
    %3694 = vmatpush1.msra.mxu0 0.0
    %3695 = vmatprep.subr.mxu0 0.0
    %3696 = vmatpush1.msra.mxu0 0.0
    %3697 = vmatprep.subr.mxu0 0.0
    %3698 = vmatpush1.msra.mxu0 0.0
    %3699 = vmatprep.subr.mxu0 0.0
    %3700 = vmatpush1.msra.mxu0 0.0
    %3701 = vmatprep.subr.mxu0 0.0
    %3702 = vmatpush1.msra.mxu0 0.0
    %3703 = vmatprep.subr.mxu0 0.0
    %3704 = vmatpush1.msra.mxu0 0.0
    %3705 = vmatprep.subr.mxu0 0.0
    %3706 = vmatpush1.msra.mxu0 0.0
    %3707 = vmatprep.subr.mxu0 0.0
    %3708 = vmatpush1.msra.mxu0 0.0
    %3709 = vmatprep.subr.mxu0 0.0
    %3710 = vmatpush1.msra.mxu0 0.0
    %3711 = vmatprep.subr.mxu0 0.0
    %3712 = vmatpush1.msra.mxu0 0.0
    %3713 = vmatprep.subr.mxu0 0.0
    %3714 = vmatpush1.msra.mxu0 0.0
    %3715 = vmatprep.subr.mxu0 0.0
    %3716 = vmatpush1.msra.mxu0 0.0
    %3717 = vmatprep.subr.mxu0 0.0
    %3718 = vmatpush1.msra.mxu0 0.0
    %3719 = vmatprep.subr.mxu0 0.0
    %3720 = vmatpush1.msra.mxu0 0.0
    %3721 = vmatprep.subr.mxu0 0.0
    %3722 = vmatpush1.msra.mxu0 0.0
    %3723 = vmatprep.subr.mxu0 0.0
    %3724 = vmatpush1.msra.mxu0 0.0
    %3725 = vmatprep.mubr.f32.mxu0 0.0
    %3726 = vmatmul.mubr.f32.gmra.mrb[0].mxu0 %v2843
    %v3727 = vpop.f32.mrb[0].mxu0
    %v3728 = vadd.f32 0.0, %v3727
    %v3729 = vpop.f32.mrb[0].mxu0
    %3730 = vdwg.mxu0
    %v3731 = vadd.f32 %v3418, %v3728
    %v3732 = vxor.u32 %v3731, 2147483648
    %v3733 = vmul.f32 %v3732, 1.442695
    %v3734 = vpow.pop %v3733
    %v3735 = vadd.f32 %v3734, 1.0
    %v3736 = vrcp.pop %v3735
    %v3737 = vmul.f32 1.0, %v3736
    %v3738 = vmul.f32 %v3580, %v2828
    %v3739 = vmul.f32 %v3499, %v3656
    %v3740 = vadd.f32 %v3738, %v3739
    %v3741 = vtanh.pop %v3740
    %v3742 = vmul.f32 %v3737, %v3741
    %v3743 = vld [vmem:[#allocation7] sm:$0xff]
    %v3744 = vld [vmem:[#allocation7 + $0x8] sm:$0xff]
    %v3745 = vld [vmem:[#allocation7 + $0x10] sm:$0xff]
    %v3746 = vld [vmem:[#allocation7 + $0x18] sm:$0xff]
    %v3747 = vld [vmem:[#allocation8] sm:$0x1]
    %v3749 = vlaneseq
    %v3750 = vshrl.u32 %v3749, 7
    %v3751 = vsub.s32 0, %v3750
    %v3752 = vrot.slane %v3747, %v3751
    %v3755 = vsel %vm259, %v3742, 0
    %3757 = vmatprep.subr.mxu0 0.0
    %3758 = vmatpush1.msra.mxu0 %v3743
    %3759 = vmatprep.subr.mxu0 0.0
    %3760 = vmatpush1.msra.mxu0 %v3744
    %3761 = vmatprep.subr.mxu0 0.0
    %3762 = vmatpush1.msra.mxu0 %v3745
    %3763 = vmatprep.subr.mxu0 0.0
    %3764 = vmatpush1.msra.mxu0 %v3746
    %3765 = vmatprep.subr.mxu0 0.0
    %3766 = vmatpush1.msra.mxu0 0.0
    %3767 = vmatprep.subr.mxu0 0.0
    %3768 = vmatpush1.msra.mxu0 0.0
    %3769 = vmatprep.subr.mxu0 0.0
    %3770 = vmatpush1.msra.mxu0 0.0
    %3771 = vmatprep.subr.mxu0 0.0
    %3772 = vmatpush1.msra.mxu0 0.0
    %3773 = vmatprep.subr.mxu0 0.0
    %3774 = vmatpush1.msra.mxu0 0.0
    %3775 = vmatprep.subr.mxu0 0.0
    %3776 = vmatpush1.msra.mxu0 0.0
    %3777 = vmatprep.subr.mxu0 0.0
    %3778 = vmatpush1.msra.mxu0 0.0
    %3779 = vmatprep.subr.mxu0 0.0
    %3780 = vmatpush1.msra.mxu0 0.0
    %3781 = vmatprep.subr.mxu0 0.0
    %3782 = vmatpush1.msra.mxu0 0.0
    %3783 = vmatprep.subr.mxu0 0.0
    %3784 = vmatpush1.msra.mxu0 0.0
    %3785 = vmatprep.subr.mxu0 0.0
    %3786 = vmatpush1.msra.mxu0 0.0
    %3787 = vmatprep.subr.mxu0 0.0
    %3788 = vmatpush1.msra.mxu0 0.0
    %3789 = vmatprep.subr.mxu0 0.0
    %3790 = vmatpush1.msra.mxu0 0.0
    %3791 = vmatprep.subr.mxu0 0.0
    %3792 = vmatpush1.msra.mxu0 0.0
    %3793 = vmatprep.subr.mxu0 0.0
    %3794 = vmatpush1.msra.mxu0 0.0
    %3795 = vmatprep.subr.mxu0 0.0
    %3796 = vmatpush1.msra.mxu0 0.0
    %3797 = vmatprep.subr.mxu0 0.0
    %3798 = vmatpush1.msra.mxu0 0.0
    %3799 = vmatprep.subr.mxu0 0.0
    %3800 = vmatpush1.msra.mxu0 0.0
    %3801 = vmatprep.subr.mxu0 0.0
    %3802 = vmatpush1.msra.mxu0 0.0
    %3803 = vmatprep.subr.mxu0 0.0
    %3804 = vmatpush1.msra.mxu0 0.0
    %3805 = vmatprep.subr.mxu0 0.0
    %3806 = vmatpush1.msra.mxu0 0.0
    %3807 = vmatprep.subr.mxu0 0.0
    %3808 = vmatpush1.msra.mxu0 0.0
    %3809 = vmatprep.subr.mxu0 0.0
    %3810 = vmatpush1.msra.mxu0 0.0
    %3811 = vmatprep.subr.mxu0 0.0
    %3812 = vmatpush1.msra.mxu0 0.0
    %3813 = vmatprep.subr.mxu0 0.0
    %3814 = vmatpush1.msra.mxu0 0.0
    %3815 = vmatprep.subr.mxu0 0.0
    %3816 = vmatpush1.msra.mxu0 0.0
    %3817 = vmatprep.subr.mxu0 0.0
    %3818 = vmatpush1.msra.mxu0 0.0
    %3819 = vmatprep.subr.mxu0 0.0
    %3820 = vmatpush1.msra.mxu0 0.0
    %3821 = vmatprep.mubr.f32.mxu0 0.0
    %3822 = vmatmul.mubr.f32.gmra.mrb[0].mxu0 %v3755
    %v3823 = vpop.f32.mrb[0].mxu0
    %v3824 = vadd.f32 %v3752, %v3823
    %v3825 = vpop.f32.mrb[0].mxu0
    %3826 = vdwg.mxu0
    %v3828 = vsel %vm259, %v3824, 0
    %3830 = vmatprep.subr.mxu0 0.0
    %3831 = vmatpush1.msra.mxu0 %v339
    %3832 = vmatprep.subr.mxu0 0.0
    %3833 = vmatpush1.msra.mxu0 %v344
    %3834 = vmatprep.subr.mxu0 0.0
    %3835 = vmatpush1.msra.mxu0 %v349
    %3836 = vmatprep.subr.mxu0 0.0
    %3837 = vmatpush1.msra.mxu0 %v354
    %3838 = vmatprep.subr.mxu0 0.0
    %3839 = vmatpush1.msra.mxu0 0.0
    %3840 = vmatprep.subr.mxu0 0.0
    %3841 = vmatpush1.msra.mxu0 0.0
    %3842 = vmatprep.subr.mxu0 0.0
    %3843 = vmatpush1.msra.mxu0 0.0
    %3844 = vmatprep.subr.mxu0 0.0
    %3845 = vmatpush1.msra.mxu0 0.0
    %3846 = vmatprep.subr.mxu0 0.0
    %3847 = vmatpush1.msra.mxu0 0.0
    %3848 = vmatprep.subr.mxu0 0.0
    %3849 = vmatpush1.msra.mxu0 0.0
    %3850 = vmatprep.subr.mxu0 0.0
    %3851 = vmatpush1.msra.mxu0 0.0
    %3852 = vmatprep.subr.mxu0 0.0
    %3853 = vmatpush1.msra.mxu0 0.0
    %3854 = vmatprep.subr.mxu0 0.0
    %3855 = vmatpush1.msra.mxu0 0.0
    %3856 = vmatprep.subr.mxu0 0.0
    %3857 = vmatpush1.msra.mxu0 0.0
    %3858 = vmatprep.subr.mxu0 0.0
    %3859 = vmatpush1.msra.mxu0 0.0
    %3860 = vmatprep.subr.mxu0 0.0
    %3861 = vmatpush1.msra.mxu0 0.0
    %3862 = vmatprep.subr.mxu0 0.0
    %3863 = vmatpush1.msra.mxu0 0.0
    %3864 = vmatprep.subr.mxu0 0.0
    %3865 = vmatpush1.msra.mxu0 0.0
    %3866 = vmatprep.subr.mxu0 0.0
    %3867 = vmatpush1.msra.mxu0 0.0
    %3868 = vmatprep.subr.mxu0 0.0
    %3869 = vmatpush1.msra.mxu0 0.0
    %3870 = vmatprep.subr.mxu0 0.0
    %3871 = vmatpush1.msra.mxu0 0.0
    %3872 = vmatprep.subr.mxu0 0.0
    %3873 = vmatpush1.msra.mxu0 0.0
    %3874 = vmatprep.subr.mxu0 0.0
    %3875 = vmatpush1.msra.mxu0 0.0
    %3876 = vmatprep.subr.mxu0 0.0
    %3877 = vmatpush1.msra.mxu0 0.0
    %3878 = vmatprep.subr.mxu0 0.0
    %3879 = vmatpush1.msra.mxu0 0.0
    %3880 = vmatprep.subr.mxu0 0.0
    %3881 = vmatpush1.msra.mxu0 0.0
    %3882 = vmatprep.subr.mxu0 0.0
    %3883 = vmatpush1.msra.mxu0 0.0
    %3884 = vmatprep.subr.mxu0 0.0
    %3885 = vmatpush1.msra.mxu0 0.0
    %3886 = vmatprep.subr.mxu0 0.0
    %3887 = vmatpush1.msra.mxu0 0.0
    %3888 = vmatprep.subr.mxu0 0.0
    %3889 = vmatpush1.msra.mxu0 0.0
    %3890 = vmatprep.subr.mxu0 0.0
    %3891 = vmatpush1.msra.mxu0 0.0
    %3892 = vmatprep.subr.mxu0 0.0
    %3893 = vmatpush1.msra.mxu0 0.0
    %3894 = vmatprep.mubr.f32.mxu0 0.0
    %3895 = vmatmul.mubr.f32.gmra.mrb[0].mxu0 %v3828
    %v3896 = vpop.f32.mrb[0].mxu0
    %v3897 = vadd.f32 %v665, %v3896
    %v3898 = vpop.f32.mrb[0].mxu0
    %3899 = vdwg.mxu0
    %v3900 = vsel %vm1160, %v3897, -inf
    %3901 = vmax.xlane.f32.xlu0 %v3900
    %v3902 = vpop.xlane.xlu0 %3901
    %v3903 = vsub.f32 %v3897, %v3902
    %v3904 = vmul.f32 %v3903, 1.442695
    %v3905 = vpow.pop %v3904
    %v3906 = vsel %vm1160, %v3905, 0.0
    %3907 = vadd.xlane.f32.xlu0 %v3906
    %v3908 = vpop.xlane.xlu0 %3907
    %v3909 = vrcp.pop %v3908
    %v3910 = vmul.f32 %v3905, %v3909
    %v3912 = vsel %vm1172, %v3910, 0
    %3914 = vmatprep.subr.mxu0 0.0
    %3915 = vmatpush1.msra.mxu0 %v443
    %3916 = vmatprep.subr.mxu0 0.0
    %3917 = vmatpush1.msra.mxu0 %v448
    %3918 = vmatprep.subr.mxu0 0.0
    %3919 = vmatpush1.msra.mxu0 0.0
    %3920 = vmatprep.subr.mxu0 0.0
    %3921 = vmatpush1.msra.mxu0 0.0
    %3922 = vmatprep.subr.mxu0 0.0
    %3923 = vmatpush1.msra.mxu0 0.0
    %3924 = vmatprep.subr.mxu0 0.0
    %3925 = vmatpush1.msra.mxu0 0.0
    %3926 = vmatprep.subr.mxu0 0.0
    %3927 = vmatpush1.msra.mxu0 0.0
    %3928 = vmatprep.subr.mxu0 0.0
    %3929 = vmatpush1.msra.mxu0 0.0
    %3930 = vmatprep.subr.mxu0 0.0
    %3931 = vmatpush1.msra.mxu0 0.0
    %3932 = vmatprep.subr.mxu0 0.0
    %3933 = vmatpush1.msra.mxu0 0.0
    %3934 = vmatprep.subr.mxu0 0.0
    %3935 = vmatpush1.msra.mxu0 0.0
    %3936 = vmatprep.subr.mxu0 0.0
    %3937 = vmatpush1.msra.mxu0 0.0
    %3938 = vmatprep.subr.mxu0 0.0
    %3939 = vmatpush1.msra.mxu0 0.0
    %3940 = vmatprep.subr.mxu0 0.0
    %3941 = vmatpush1.msra.mxu0 0.0
    %3942 = vmatprep.subr.mxu0 0.0
    %3943 = vmatpush1.msra.mxu0 0.0
    %3944 = vmatprep.subr.mxu0 0.0
    %3945 = vmatpush1.msra.mxu0 0.0
    %3946 = vmatprep.subr.mxu0 0.0
    %3947 = vmatpush1.msra.mxu0 0.0
    %3948 = vmatprep.subr.mxu0 0.0
    %3949 = vmatpush1.msra.mxu0 0.0
    %3950 = vmatprep.subr.mxu0 0.0
    %3951 = vmatpush1.msra.mxu0 0.0
    %3952 = vmatprep.subr.mxu0 0.0
    %3953 = vmatpush1.msra.mxu0 0.0
    %3954 = vmatprep.subr.mxu0 0.0
    %3955 = vmatpush1.msra.mxu0 0.0
    %3956 = vmatprep.subr.mxu0 0.0
    %3957 = vmatpush1.msra.mxu0 0.0
    %3958 = vmatprep.subr.mxu0 0.0
    %3959 = vmatpush1.msra.mxu0 0.0
    %3960 = vmatprep.subr.mxu0 0.0
    %3961 = vmatpush1.msra.mxu0 0.0
    %3962 = vmatprep.subr.mxu0 0.0
    %3963 = vmatpush1.msra.mxu0 0.0
    %3964 = vmatprep.subr.mxu0 0.0
    %3965 = vmatpush1.msra.mxu0 0.0
    %3966 = vmatprep.subr.mxu0 0.0
    %3967 = vmatpush1.msra.mxu0 0.0
    %3968 = vmatprep.subr.mxu0 0.0
    %3969 = vmatpush1.msra.mxu0 0.0
    %3970 = vmatprep.subr.mxu0 0.0
    %3971 = vmatpush1.msra.mxu0 0.0
    %3972 = vmatprep.subr.mxu0 0.0
    %3973 = vmatpush1.msra.mxu0 0.0
    %3974 = vmatprep.subr.mxu0 0.0
    %3975 = vmatpush1.msra.mxu0 0.0
    %3976 = vmatprep.subr.mxu0 0.0
    %3977 = vmatpush1.msra.mxu0 0.0
    %3978 = vmatprep.mubr.f32.mxu0 0.0
    %3979 = vmatmul.mubr.f32.gmra.mrb[0].mxu0 %v3912
    %v3980 = vpop.f32.mrb[0].mxu0
    %v3981 = vadd.f32 0.0, %v3980
    %v3982 = vpop.f32.mrb[0].mxu0
    %3983 = vdwg.mxu0
    %3984 = vrot.lane.b32.xlu0 %v3824, 96
    %v3985 = vpop.permute.xlu0 %3984
    %v3986 = vsel %vm259, %v3985, 0
    %3988 = vmatprep.subr.mxu0 0.0
    %3989 = vmatpush1.msra.mxu0 %v562
    %3990 = vmatprep.subr.mxu0 0.0
    %3991 = vmatpush1.msra.mxu0 %v567
    %3992 = vmatprep.subr.mxu0 0.0
    %3993 = vmatpush1.msra.mxu0 %v572
    %3994 = vmatprep.subr.mxu0 0.0
    %3995 = vmatpush1.msra.mxu0 %v577
    %3996 = vmatprep.subr.mxu0 0.0
    %3997 = vmatpush1.msra.mxu0 0.0
    %3998 = vmatprep.subr.mxu0 0.0
    %3999 = vmatpush1.msra.mxu0 0.0
    %4000 = vmatprep.subr.mxu0 0.0
    %4001 = vmatpush1.msra.mxu0 0.0
    %4002 = vmatprep.subr.mxu0 0.0
    %4003 = vmatpush1.msra.mxu0 0.0
    %4004 = vmatprep.subr.mxu0 0.0
    %4005 = vmatpush1.msra.mxu0 0.0
    %4006 = vmatprep.subr.mxu0 0.0
    %4007 = vmatpush1.msra.mxu0 0.0
    %4008 = vmatprep.subr.mxu0 0.0
    %4009 = vmatpush1.msra.mxu0 0.0
    %4010 = vmatprep.subr.mxu0 0.0
    %4011 = vmatpush1.msra.mxu0 0.0
    %4012 = vmatprep.subr.mxu0 0.0
    %4013 = vmatpush1.msra.mxu0 0.0
    %4014 = vmatprep.subr.mxu0 0.0
    %4015 = vmatpush1.msra.mxu0 0.0
    %4016 = vmatprep.subr.mxu0 0.0
    %4017 = vmatpush1.msra.mxu0 0.0
    %4018 = vmatprep.subr.mxu0 0.0
    %4019 = vmatpush1.msra.mxu0 0.0
    %4020 = vmatprep.subr.mxu0 0.0
    %4021 = vmatpush1.msra.mxu0 0.0
    %4022 = vmatprep.subr.mxu0 0.0
    %4023 = vmatpush1.msra.mxu0 0.0
    %4024 = vmatprep.subr.mxu0 0.0
    %4025 = vmatpush1.msra.mxu0 0.0
    %4026 = vmatprep.subr.mxu0 0.0
    %4027 = vmatpush1.msra.mxu0 0.0
    %4028 = vmatprep.subr.mxu0 0.0
    %4029 = vmatpush1.msra.mxu0 0.0
    %4030 = vmatprep.subr.mxu0 0.0
    %4031 = vmatpush1.msra.mxu0 0.0
    %4032 = vmatprep.subr.mxu0 0.0
    %4033 = vmatpush1.msra.mxu0 0.0
    %4034 = vmatprep.subr.mxu0 0.0
    %4035 = vmatpush1.msra.mxu0 0.0
    %4036 = vmatprep.subr.mxu0 0.0
    %4037 = vmatpush1.msra.mxu0 0.0
    %4038 = vmatprep.subr.mxu0 0.0
    %4039 = vmatpush1.msra.mxu0 0.0
    %4040 = vmatprep.subr.mxu0 0.0
    %4041 = vmatpush1.msra.mxu0 0.0
    %4042 = vmatprep.subr.mxu0 0.0
    %4043 = vmatpush1.msra.mxu0 0.0
    %4044 = vmatprep.subr.mxu0 0.0
    %4045 = vmatpush1.msra.mxu0 0.0
    %4046 = vmatprep.subr.mxu0 0.0
    %4047 = vmatpush1.msra.mxu0 0.0
    %4048 = vmatprep.subr.mxu0 0.0
    %4049 = vmatpush1.msra.mxu0 0.0
    %4050 = vmatprep.subr.mxu0 0.0
    %4051 = vmatpush1.msra.mxu0 0.0
    %4052 = vmatprep.mubr.f32.mxu0 0.0
    %4053 = vmatmul.mubr.f32.gmra.mrb[0].mxu0 %v3986
    %v4054 = vpop.f32.mrb[0].mxu0
    %v4055 = vadd.f32 %v666, %v4054
    %v4056 = vpop.f32.mrb[0].mxu0
    %4057 = vdwg.mxu0
    %v4058 = vsel %vm1320, %v4055, -inf
    %4059 = vmax.xlane.f32.xlu0 %v4058
    %v4060 = vpop.xlane.xlu0 %4059
    %v4061 = vsub.f32 %v4055, %v4060
    %v4062 = vmul.f32 %v4061, 1.442695
    %v4063 = vpow.pop %v4062
    %v4064 = vsel %vm1320, %v4063, 0.0
    %4065 = vadd.xlane.f32.xlu0 %v4064
    %v4066 = vpop.xlane.xlu0 %4065
    %v4067 = vrcp.pop %v4066
    %v4068 = vmul.f32 %v4063, %v4067
    %v4070 = vsel %vm1332, %v4068, 0
    %4072 = vmatprep.subr.mxu0 0.0
    %4073 = vmatpush1.msra.mxu0 %v662
    %4074 = vmatprep.subr.mxu0 0.0
    %4075 = vmatpush1.msra.mxu0 0.0
    %4076 = vmatprep.subr.mxu0 0.0
    %4077 = vmatpush1.msra.mxu0 0.0
    %4078 = vmatprep.subr.mxu0 0.0
    %4079 = vmatpush1.msra.mxu0 0.0
    %4080 = vmatprep.subr.mxu0 0.0
    %4081 = vmatpush1.msra.mxu0 0.0
    %4082 = vmatprep.subr.mxu0 0.0
    %4083 = vmatpush1.msra.mxu0 0.0
    %4084 = vmatprep.subr.mxu0 0.0
    %4085 = vmatpush1.msra.mxu0 0.0
    %4086 = vmatprep.subr.mxu0 0.0
    %4087 = vmatpush1.msra.mxu0 0.0
    %4088 = vmatprep.subr.mxu0 0.0
    %4089 = vmatpush1.msra.mxu0 0.0
    %4090 = vmatprep.subr.mxu0 0.0
    %4091 = vmatpush1.msra.mxu0 0.0
    %4092 = vmatprep.subr.mxu0 0.0
    %4093 = vmatpush1.msra.mxu0 0.0
    %4094 = vmatprep.subr.mxu0 0.0
    %4095 = vmatpush1.msra.mxu0 0.0
    %4096 = vmatprep.subr.mxu0 0.0
    %4097 = vmatpush1.msra.mxu0 0.0
    %4098 = vmatprep.subr.mxu0 0.0
    %4099 = vmatpush1.msra.mxu0 0.0
    %4100 = vmatprep.subr.mxu0 0.0
    %4101 = vmatpush1.msra.mxu0 0.0
    %4102 = vmatprep.subr.mxu0 0.0
    %4103 = vmatpush1.msra.mxu0 0.0
    %4104 = vmatprep.subr.mxu0 0.0
    %4105 = vmatpush1.msra.mxu0 0.0
    %4106 = vmatprep.subr.mxu0 0.0
    %4107 = vmatpush1.msra.mxu0 0.0
    %4108 = vmatprep.subr.mxu0 0.0
    %4109 = vmatpush1.msra.mxu0 0.0
    %4110 = vmatprep.subr.mxu0 0.0
    %4111 = vmatpush1.msra.mxu0 0.0
    %4112 = vmatprep.subr.mxu0 0.0
    %4113 = vmatpush1.msra.mxu0 0.0
    %4114 = vmatprep.subr.mxu0 0.0
    %4115 = vmatpush1.msra.mxu0 0.0
    %4116 = vmatprep.subr.mxu0 0.0
    %4117 = vmatpush1.msra.mxu0 0.0
    %4118 = vmatprep.subr.mxu0 0.0
    %4119 = vmatpush1.msra.mxu0 0.0
    %4120 = vmatprep.subr.mxu0 0.0
    %4121 = vmatpush1.msra.mxu0 0.0
    %4122 = vmatprep.subr.mxu0 0.0
    %4123 = vmatpush1.msra.mxu0 0.0
    %4124 = vmatprep.subr.mxu0 0.0
    %4125 = vmatpush1.msra.mxu0 0.0
    %4126 = vmatprep.subr.mxu0 0.0
    %4127 = vmatpush1.msra.mxu0 0.0
    %4128 = vmatprep.subr.mxu0 0.0
    %4129 = vmatpush1.msra.mxu0 0.0
    %4130 = vmatprep.subr.mxu0 0.0
    %4131 = vmatpush1.msra.mxu0 0.0
    %4132 = vmatprep.subr.mxu0 0.0
    %4133 = vmatpush1.msra.mxu0 0.0
    %4134 = vmatprep.subr.mxu0 0.0
    %4135 = vmatpush1.msra.mxu0 0.0
    %4136 = vmatprep.mubr.f32.mxu0 0.0
    %4137 = vmatmul.mubr.f32.gmra.mrb[0].mxu0 %v4070
    %v4138 = vpop.f32.mrb[0].mxu0
    %v4139 = vadd.f32 0.0, %v4138
    %v4140 = vpop.f32.mrb[0].mxu0
    %4141 = vdwg.mxu0
    %4143 = vrot.lane.b32.xlu0 %v4139, 32
    %v4144 = vpop.permute.xlu0 %4143
    %v4146 = vsel %vm259, %v3981, %v4144
    %v4147 = vld [vmem:[%s20] sm:$0xff]
    %v4148 = vld [vmem:[%s20 + $0x8] sm:$0xff]
    %v4149 = vld [vmem:[%s20 + $0x10] sm:$0xff]
    %v4150 = vld [vmem:[%s20 + $0x18] sm:$0xff]
    %v4151 = vld [vmem:[%s20 + $0x20] sm:$0xff]
    %v4152 = vld [vmem:[%s20 + $0x28] sm:$0xff]
    %v4153 = vld [vmem:[%s20 + $0x30] sm:$0xff]
    %v4154 = vld [vmem:[%s20 + $0x38] sm:$0xff]
    %v4155 = vld [vmem:[%s21] sm:$0x1]
    %v4157 = vlaneseq
    %v4158 = vshrl.u32 %v4157, 7
    %v4159 = vsub.s32 0, %v4158
    %v4160 = vrot.slane %v4155, %v4159
    %v4163 = vsel %vm1426, %v4146, 0
    %4165 = vmatprep.subr.mxu0 0.0
    %4166 = vmatpush1.msra.mxu0 %v4147
    %4167 = vmatprep.subr.mxu0 0.0
    %4168 = vmatpush1.msra.mxu0 %v4148
    %4169 = vmatprep.subr.mxu0 0.0
    %4170 = vmatpush1.msra.mxu0 %v4149
    %4171 = vmatprep.subr.mxu0 0.0
    %4172 = vmatpush1.msra.mxu0 %v4150
    %4173 = vmatprep.subr.mxu0 0.0
    %4174 = vmatpush1.msra.mxu0 %v4151
    %4175 = vmatprep.subr.mxu0 0.0
    %4176 = vmatpush1.msra.mxu0 %v4152
    %4177 = vmatprep.subr.mxu0 0.0
    %4178 = vmatpush1.msra.mxu0 %v4153
    %4179 = vmatprep.subr.mxu0 0.0
    %4180 = vmatpush1.msra.mxu0 %v4154
    %4181 = vmatprep.subr.mxu0 0.0
    %4182 = vmatpush1.msra.mxu0 0.0
    %4183 = vmatprep.subr.mxu0 0.0
    %4184 = vmatpush1.msra.mxu0 0.0
    %4185 = vmatprep.subr.mxu0 0.0
    %4186 = vmatpush1.msra.mxu0 0.0
    %4187 = vmatprep.subr.mxu0 0.0
    %4188 = vmatpush1.msra.mxu0 0.0
    %4189 = vmatprep.subr.mxu0 0.0
    %4190 = vmatpush1.msra.mxu0 0.0
    %4191 = vmatprep.subr.mxu0 0.0
    %4192 = vmatpush1.msra.mxu0 0.0
    %4193 = vmatprep.subr.mxu0 0.0
    %4194 = vmatpush1.msra.mxu0 0.0
    %4195 = vmatprep.subr.mxu0 0.0
    %4196 = vmatpush1.msra.mxu0 0.0
    %4197 = vmatprep.subr.mxu0 0.0
    %4198 = vmatpush1.msra.mxu0 0.0
    %4199 = vmatprep.subr.mxu0 0.0
    %4200 = vmatpush1.msra.mxu0 0.0
    %4201 = vmatprep.subr.mxu0 0.0
    %4202 = vmatpush1.msra.mxu0 0.0
    %4203 = vmatprep.subr.mxu0 0.0
    %4204 = vmatpush1.msra.mxu0 0.0
    %4205 = vmatprep.subr.mxu0 0.0
    %4206 = vmatpush1.msra.mxu0 0.0
    %4207 = vmatprep.subr.mxu0 0.0
    %4208 = vmatpush1.msra.mxu0 0.0
    %4209 = vmatprep.subr.mxu0 0.0
    %4210 = vmatpush1.msra.mxu0 0.0
    %4211 = vmatprep.subr.mxu0 0.0
    %4212 = vmatpush1.msra.mxu0 0.0
    %4213 = vmatprep.subr.mxu0 0.0
    %4214 = vmatpush1.msra.mxu0 0.0
    %4215 = vmatprep.subr.mxu0 0.0
    %4216 = vmatpush1.msra.mxu0 0.0
    %4217 = vmatprep.subr.mxu0 0.0
    %4218 = vmatpush1.msra.mxu0 0.0
    %4219 = vmatprep.subr.mxu0 0.0
    %4220 = vmatpush1.msra.mxu0 0.0
    %4221 = vmatprep.subr.mxu0 0.0
    %4222 = vmatpush1.msra.mxu0 0.0
    %4223 = vmatprep.subr.mxu0 0.0
    %4224 = vmatpush1.msra.mxu0 0.0
    %4225 = vmatprep.subr.mxu0 0.0
    %4226 = vmatpush1.msra.mxu0 0.0
    %4227 = vmatprep.subr.mxu0 0.0
    %4228 = vmatpush1.msra.mxu0 0.0
    %4229 = vmatprep.mubr.f32.mxu0 0.0
    %4230 = vmatmul.mubr.f32.gmra.mrb[0].mxu0 %v4163
    %v4231 = vpop.f32.mrb[0].mxu0
    %v4232 = vadd.f32 %v4160, %v4231
    %v4233 = vpop.f32.mrb[0].mxu0
    %4234 = vdwg.mxu0
    %v4235 = vmax.f32 %v4232, 0.0
    %v4236 = vld [vmem:[%s22] sm:$0xff]
    %v4237 = vld [vmem:[%s22 + $0x8] sm:$0xff]
    %v4238 = vld [vmem:[%s22 + $0x10] sm:$0xff]
    %v4239 = vld [vmem:[%s22 + $0x18] sm:$0xff]
    %v4240 = vld [vmem:[%s22 + $0x20] sm:$0xff]
    %v4241 = vld [vmem:[%s22 + $0x28] sm:$0xff]
    %v4242 = vld [vmem:[%s22 + $0x30] sm:$0xff]
    %v4243 = vld [vmem:[%s22 + $0x38] sm:$0xff]
    %v4244 = vld [vmem:[%s23] sm:$0x1]
    %v4246 = vlaneseq
    %v4247 = vshrl.u32 %v4246, 7
    %v4248 = vsub.s32 0, %v4247
    %v4249 = vrot.slane %v4244, %v4248
    %v4252 = vsel %vm1426, %v4235, 0
    %4254 = vmatprep.subr.mxu0 0.0
    %4255 = vmatpush1.msra.mxu0 %v4236
    %4256 = vmatprep.subr.mxu0 0.0
    %4257 = vmatpush1.msra.mxu0 %v4237
    %4258 = vmatprep.subr.mxu0 0.0
    %4259 = vmatpush1.msra.mxu0 %v4238
    %4260 = vmatprep.subr.mxu0 0.0
    %4261 = vmatpush1.msra.mxu0 %v4239
    %4262 = vmatprep.subr.mxu0 0.0
    %4263 = vmatpush1.msra.mxu0 %v4240
    %4264 = vmatprep.subr.mxu0 0.0
    %4265 = vmatpush1.msra.mxu0 %v4241
    %4266 = vmatprep.subr.mxu0 0.0
    %4267 = vmatpush1.msra.mxu0 %v4242
    %4268 = vmatprep.subr.mxu0 0.0
    %4269 = vmatpush1.msra.mxu0 %v4243
    %4270 = vmatprep.subr.mxu0 0.0
    %4271 = vmatpush1.msra.mxu0 0.0
    %4272 = vmatprep.subr.mxu0 0.0
    %4273 = vmatpush1.msra.mxu0 0.0
    %4274 = vmatprep.subr.mxu0 0.0
    %4275 = vmatpush1.msra.mxu0 0.0
    %4276 = vmatprep.subr.mxu0 0.0
    %4277 = vmatpush1.msra.mxu0 0.0
    %4278 = vmatprep.subr.mxu0 0.0
    %4279 = vmatpush1.msra.mxu0 0.0
    %4280 = vmatprep.subr.mxu0 0.0
    %4281 = vmatpush1.msra.mxu0 0.0
    %4282 = vmatprep.subr.mxu0 0.0
    %4283 = vmatpush1.msra.mxu0 0.0
    %4284 = vmatprep.subr.mxu0 0.0
    %4285 = vmatpush1.msra.mxu0 0.0
    %4286 = vmatprep.subr.mxu0 0.0
    %4287 = vmatpush1.msra.mxu0 0.0
    %4288 = vmatprep.subr.mxu0 0.0
    %4289 = vmatpush1.msra.mxu0 0.0
    %4290 = vmatprep.subr.mxu0 0.0
    %4291 = vmatpush1.msra.mxu0 0.0
    %4292 = vmatprep.subr.mxu0 0.0
    %4293 = vmatpush1.msra.mxu0 0.0
    %4294 = vmatprep.subr.mxu0 0.0
    %4295 = vmatpush1.msra.mxu0 0.0
    %4296 = vmatprep.subr.mxu0 0.0
    %4297 = vmatpush1.msra.mxu0 0.0
    %4298 = vmatprep.subr.mxu0 0.0
    %4299 = vmatpush1.msra.mxu0 0.0
    %4300 = vmatprep.subr.mxu0 0.0
    %4301 = vmatpush1.msra.mxu0 0.0
    %4302 = vmatprep.subr.mxu0 0.0
    %4303 = vmatpush1.msra.mxu0 0.0
    %4304 = vmatprep.subr.mxu0 0.0
    %4305 = vmatpush1.msra.mxu0 0.0
    %4306 = vmatprep.subr.mxu0 0.0
    %4307 = vmatpush1.msra.mxu0 0.0
    %4308 = vmatprep.subr.mxu0 0.0
    %4309 = vmatpush1.msra.mxu0 0.0
    %4310 = vmatprep.subr.mxu0 0.0
    %4311 = vmatpush1.msra.mxu0 0.0
    %4312 = vmatprep.subr.mxu0 0.0
    %4313 = vmatpush1.msra.mxu0 0.0
    %4314 = vmatprep.subr.mxu0 0.0
    %4315 = vmatpush1.msra.mxu0 0.0
    %4316 = vmatprep.subr.mxu0 0.0
    %4317 = vmatpush1.msra.mxu0 0.0
    %4318 = vmatprep.mubr.f32.mxu0 0.0
    %4319 = vmatmul.mubr.f32.gmra.mrb[0].mxu0 %v4252
    %v4320 = vpop.f32.mrb[0].mxu0
    %v4321 = vadd.f32 %v4249, %v4320
    %v4322 = vpop.f32.mrb[0].mxu0
    %4323 = vdwg.mxu0
    %s4324 = scalar_lea.vmem [#allocation22], 6
    %4325 = vst.msk [vmem:[%s4324] sm:$0x3] %vm1160, %v4321
    %s4326 = scalar_lea.vmem %s0, 32
    %v4327 = vld [vmem:[%s4326] sm:$0x3]
    %v4328 = vld [vmem:[%s4326 + $0x2] sm:$0x3]
    %v4329 = vld [vmem:[%s4326 + $0x4] sm:$0x3]
    %v4330 = vld [vmem:[%s4326 + $0x6] sm:$0x3]
    %v4331 = vld [vmem:[%s3] sm:$0xff]
    %v4332 = vld [vmem:[%s3 + $0x8] sm:$0xff]
    %v4333 = vld [vmem:[%s3 + $0x10] sm:$0xff]
    %v4334 = vld [vmem:[%s3 + $0x18] sm:$0xff]
    %4335 = vmatprep.subr.mxu0 0.0
    %4336 = vmatpush1.msra.mxu0 %v4331
    %4337 = vmatprep.subr.mxu0 0.0
    %4338 = vmatpush1.msra.mxu0 %v4332
    %4339 = vmatprep.subr.mxu0 0.0
    %4340 = vmatpush1.msra.mxu0 %v4333
    %4341 = vmatprep.subr.mxu0 0.0
    %4342 = vmatpush1.msra.mxu0 %v4334
    %4343 = vmatprep.subr.mxu0 0.0
    %4344 = vmatpush1.msra.mxu0 0.0
    %4345 = vmatprep.subr.mxu0 0.0
    %4346 = vmatpush1.msra.mxu0 0.0
    %4347 = vmatprep.subr.mxu0 0.0
    %4348 = vmatpush1.msra.mxu0 0.0
    %4349 = vmatprep.subr.mxu0 0.0
    %4350 = vmatpush1.msra.mxu0 0.0
    %4351 = vmatprep.subr.mxu0 0.0
    %4352 = vmatpush1.msra.mxu0 0.0
    %4353 = vmatprep.subr.mxu0 0.0
    %4354 = vmatpush1.msra.mxu0 0.0
    %4355 = vmatprep.subr.mxu0 0.0
    %4356 = vmatpush1.msra.mxu0 0.0
    %4357 = vmatprep.subr.mxu0 0.0
    %4358 = vmatpush1.msra.mxu0 0.0
    %4359 = vmatprep.subr.mxu0 0.0
    %4360 = vmatpush1.msra.mxu0 0.0
    %4361 = vmatprep.subr.mxu0 0.0
    %4362 = vmatpush1.msra.mxu0 0.0
    %4363 = vmatprep.subr.mxu0 0.0
    %4364 = vmatpush1.msra.mxu0 0.0
    %4365 = vmatprep.subr.mxu0 0.0
    %4366 = vmatpush1.msra.mxu0 0.0
    %4367 = vmatprep.subr.mxu0 0.0
    %4368 = vmatpush1.msra.mxu0 0.0
    %4369 = vmatprep.subr.mxu0 0.0
    %4370 = vmatpush1.msra.mxu0 0.0
    %4371 = vmatprep.subr.mxu0 0.0
    %4372 = vmatpush1.msra.mxu0 0.0
    %4373 = vmatprep.subr.mxu0 0.0
    %4374 = vmatpush1.msra.mxu0 0.0
    %4375 = vmatprep.subr.mxu0 0.0
    %4376 = vmatpush1.msra.mxu0 0.0
    %4377 = vmatprep.subr.mxu0 0.0
    %4378 = vmatpush1.msra.mxu0 0.0
    %4379 = vmatprep.subr.mxu0 0.0
    %4380 = vmatpush1.msra.mxu0 0.0
    %4381 = vmatprep.subr.mxu0 0.0
    %4382 = vmatpush1.msra.mxu0 0.0
    %4383 = vmatprep.subr.mxu0 0.0
    %4384 = vmatpush1.msra.mxu0 0.0
    %4385 = vmatprep.subr.mxu0 0.0
    %4386 = vmatpush1.msra.mxu0 0.0
    %4387 = vmatprep.subr.mxu0 0.0
    %4388 = vmatpush1.msra.mxu0 0.0
    %4389 = vmatprep.subr.mxu0 0.0
    %4390 = vmatpush1.msra.mxu0 0.0
    %4391 = vmatprep.subr.mxu0 0.0
    %4392 = vmatpush1.msra.mxu0 0.0
    %4393 = vmatprep.subr.mxu0 0.0
    %4394 = vmatpush1.msra.mxu0 0.0
    %4395 = vmatprep.subr.mxu0 0.0
    %4396 = vmatpush1.msra.mxu0 0.0
    %4397 = vmatprep.subr.mxu0 0.0
    %4398 = vmatpush1.msra.mxu0 0.0
    %4399 = vmatprep.mubr.f32.mxu0 0.0
    %4400 = vmatmul.mubr.f32.gmra.mrb[0].mxu0 %v3755
    %v4401 = vpop.f32.mrb[0].mxu0
    %v4402 = vadd.f32 0.0, %v4401
    %v4403 = vpop.f32.mrb[0].mxu0
    %4404 = vdwg.mxu0
    %v4405 = vadd.f32 %v4327, %v4402
    %v4406 = vxor.u32 %v4405, 2147483648
    %v4407 = vmul.f32 %v4406, 1.442695
    %v4408 = vpow.pop %v4407
    %v4409 = vadd.f32 %v4408, 1.0
    %v4410 = vrcp.pop %v4409
    %v4411 = vmul.f32 1.0, %v4410
    %v4412 = vld [vmem:[%s757] sm:$0xff]
    %v4413 = vld [vmem:[%s757 + $0x8] sm:$0xff]
    %v4414 = vld [vmem:[%s757 + $0x10] sm:$0xff]
    %v4415 = vld [vmem:[%s757 + $0x18] sm:$0xff]
    %4416 = vmatprep.subr.mxu0 0.0
    %4417 = vmatpush1.msra.mxu0 %v4412
    %4418 = vmatprep.subr.mxu0 0.0
    %4419 = vmatpush1.msra.mxu0 %v4413
    %4420 = vmatprep.subr.mxu0 0.0
    %4421 = vmatpush1.msra.mxu0 %v4414
    %4422 = vmatprep.subr.mxu0 0.0
    %4423 = vmatpush1.msra.mxu0 %v4415
    %4424 = vmatprep.subr.mxu0 0.0
    %4425 = vmatpush1.msra.mxu0 0.0
    %4426 = vmatprep.subr.mxu0 0.0
    %4427 = vmatpush1.msra.mxu0 0.0
    %4428 = vmatprep.subr.mxu0 0.0
    %4429 = vmatpush1.msra.mxu0 0.0
    %4430 = vmatprep.subr.mxu0 0.0
    %4431 = vmatpush1.msra.mxu0 0.0
    %4432 = vmatprep.subr.mxu0 0.0
    %4433 = vmatpush1.msra.mxu0 0.0
    %4434 = vmatprep.subr.mxu0 0.0
    %4435 = vmatpush1.msra.mxu0 0.0
    %4436 = vmatprep.subr.mxu0 0.0
    %4437 = vmatpush1.msra.mxu0 0.0
    %4438 = vmatprep.subr.mxu0 0.0
    %4439 = vmatpush1.msra.mxu0 0.0
    %4440 = vmatprep.subr.mxu0 0.0
    %4441 = vmatpush1.msra.mxu0 0.0
    %4442 = vmatprep.subr.mxu0 0.0
    %4443 = vmatpush1.msra.mxu0 0.0
    %4444 = vmatprep.subr.mxu0 0.0
    %4445 = vmatpush1.msra.mxu0 0.0
    %4446 = vmatprep.subr.mxu0 0.0
    %4447 = vmatpush1.msra.mxu0 0.0
    %4448 = vmatprep.subr.mxu0 0.0
    %4449 = vmatpush1.msra.mxu0 0.0
    %4450 = vmatprep.subr.mxu0 0.0
    %4451 = vmatpush1.msra.mxu0 0.0
    %4452 = vmatprep.subr.mxu0 0.0
    %4453 = vmatpush1.msra.mxu0 0.0
    %4454 = vmatprep.subr.mxu0 0.0
    %4455 = vmatpush1.msra.mxu0 0.0
    %4456 = vmatprep.subr.mxu0 0.0
    %4457 = vmatpush1.msra.mxu0 0.0
    %4458 = vmatprep.subr.mxu0 0.0
    %4459 = vmatpush1.msra.mxu0 0.0
    %4460 = vmatprep.subr.mxu0 0.0
    %4461 = vmatpush1.msra.mxu0 0.0
    %4462 = vmatprep.subr.mxu0 0.0
    %4463 = vmatpush1.msra.mxu0 0.0
    %4464 = vmatprep.subr.mxu0 0.0
    %4465 = vmatpush1.msra.mxu0 0.0
    %4466 = vmatprep.subr.mxu0 0.0
    %4467 = vmatpush1.msra.mxu0 0.0
    %4468 = vmatprep.subr.mxu0 0.0
    %4469 = vmatpush1.msra.mxu0 0.0
    %4470 = vmatprep.subr.mxu0 0.0
    %4471 = vmatpush1.msra.mxu0 0.0
    %4472 = vmatprep.subr.mxu0 0.0
    %4473 = vmatpush1.msra.mxu0 0.0
    %4474 = vmatprep.subr.mxu0 0.0
    %4475 = vmatpush1.msra.mxu0 0.0
    %4476 = vmatprep.subr.mxu0 0.0
    %4477 = vmatpush1.msra.mxu0 0.0
    %4478 = vmatprep.subr.mxu0 0.0
    %4479 = vmatpush1.msra.mxu0 0.0
    %4480 = vmatprep.mubr.f32.mxu0 0.0
    %4481 = vmatmul.mubr.f32.gmra.mrb[0].mxu0 %v3755
    %v4482 = vpop.f32.mrb[0].mxu0
    %v4483 = vadd.f32 0.0, %v4482
    %v4484 = vpop.f32.mrb[0].mxu0
    %4485 = vdwg.mxu0
    %v4486 = vadd.f32 %v4328, %v4483
    %v4487 = vxor.u32 %v4486, 2147483648
    %v4488 = vmul.f32 %v4487, 1.442695
    %v4489 = vpow.pop %v4488
    %v4490 = vadd.f32 %v4489, 1.0
    %v4491 = vrcp.pop %v4490
    %v4492 = vmul.f32 1.0, %v4491
    %v4493 = vld [vmem:[%s839] sm:$0xff]
    %v4494 = vld [vmem:[%s839 + $0x8] sm:$0xff]
    %v4495 = vld [vmem:[%s839 + $0x10] sm:$0xff]
    %v4496 = vld [vmem:[%s839 + $0x18] sm:$0xff]
    %4497 = vmatprep.subr.mxu0 0.0
    %4498 = vmatpush1.msra.mxu0 %v4493
    %4499 = vmatprep.subr.mxu0 0.0
    %4500 = vmatpush1.msra.mxu0 %v4494
    %4501 = vmatprep.subr.mxu0 0.0
    %4502 = vmatpush1.msra.mxu0 %v4495
    %4503 = vmatprep.subr.mxu0 0.0
    %4504 = vmatpush1.msra.mxu0 %v4496
    %4505 = vmatprep.subr.mxu0 0.0
    %4506 = vmatpush1.msra.mxu0 0.0
    %4507 = vmatprep.subr.mxu0 0.0
    %4508 = vmatpush1.msra.mxu0 0.0
    %4509 = vmatprep.subr.mxu0 0.0
    %4510 = vmatpush1.msra.mxu0 0.0
    %4511 = vmatprep.subr.mxu0 0.0
    %4512 = vmatpush1.msra.mxu0 0.0
    %4513 = vmatprep.subr.mxu0 0.0
    %4514 = vmatpush1.msra.mxu0 0.0
    %4515 = vmatprep.subr.mxu0 0.0
    %4516 = vmatpush1.msra.mxu0 0.0
    %4517 = vmatprep.subr.mxu0 0.0
    %4518 = vmatpush1.msra.mxu0 0.0
    %4519 = vmatprep.subr.mxu0 0.0
    %4520 = vmatpush1.msra.mxu0 0.0
    %4521 = vmatprep.subr.mxu0 0.0
    %4522 = vmatpush1.msra.mxu0 0.0
    %4523 = vmatprep.subr.mxu0 0.0
    %4524 = vmatpush1.msra.mxu0 0.0
    %4525 = vmatprep.subr.mxu0 0.0
    %4526 = vmatpush1.msra.mxu0 0.0
    %4527 = vmatprep.subr.mxu0 0.0
    %4528 = vmatpush1.msra.mxu0 0.0
    %4529 = vmatprep.subr.mxu0 0.0
    %4530 = vmatpush1.msra.mxu0 0.0
    %4531 = vmatprep.subr.mxu0 0.0
    %4532 = vmatpush1.msra.mxu0 0.0
    %4533 = vmatprep.subr.mxu0 0.0
    %4534 = vmatpush1.msra.mxu0 0.0
    %4535 = vmatprep.subr.mxu0 0.0
    %4536 = vmatpush1.msra.mxu0 0.0
    %4537 = vmatprep.subr.mxu0 0.0
    %4538 = vmatpush1.msra.mxu0 0.0
    %4539 = vmatprep.subr.mxu0 0.0
    %4540 = vmatpush1.msra.mxu0 0.0
    %4541 = vmatprep.subr.mxu0 0.0
    %4542 = vmatpush1.msra.mxu0 0.0
    %4543 = vmatprep.subr.mxu0 0.0
    %4544 = vmatpush1.msra.mxu0 0.0
    %4545 = vmatprep.subr.mxu0 0.0
    %4546 = vmatpush1.msra.mxu0 0.0
    %4547 = vmatprep.subr.mxu0 0.0
    %4548 = vmatpush1.msra.mxu0 0.0
    %4549 = vmatprep.subr.mxu0 0.0
    %4550 = vmatpush1.msra.mxu0 0.0
    %4551 = vmatprep.subr.mxu0 0.0
    %4552 = vmatpush1.msra.mxu0 0.0
    %4553 = vmatprep.subr.mxu0 0.0
    %4554 = vmatpush1.msra.mxu0 0.0
    %4555 = vmatprep.subr.mxu0 0.0
    %4556 = vmatpush1.msra.mxu0 0.0
    %4557 = vmatprep.subr.mxu0 0.0
    %4558 = vmatpush1.msra.mxu0 0.0
    %4559 = vmatprep.subr.mxu0 0.0
    %4560 = vmatpush1.msra.mxu0 0.0
    %4561 = vmatprep.mubr.f32.mxu0 0.0
    %4562 = vmatmul.mubr.f32.gmra.mrb[0].mxu0 %v3755
    %v4563 = vpop.f32.mrb[0].mxu0
    %v4564 = vadd.f32 0.0, %v4563
    %v4565 = vpop.f32.mrb[0].mxu0
    %4566 = vdwg.mxu0
    %v4567 = vadd.f32 %v4329, %v4564
    %v4568 = vtanh.pop %v4567
    %v4569 = vld [vmem:[%s916] sm:$0xff]
    %v4570 = vld [vmem:[%s916 + $0x8] sm:$0xff]
    %v4571 = vld [vmem:[%s916 + $0x10] sm:$0xff]
    %v4572 = vld [vmem:[%s916 + $0x18] sm:$0xff]
    %4573 = vmatprep.subr.mxu0 0.0
    %4574 = vmatpush1.msra.mxu0 %v4569
    %4575 = vmatprep.subr.mxu0 0.0
    %4576 = vmatpush1.msra.mxu0 %v4570
    %4577 = vmatprep.subr.mxu0 0.0
    %4578 = vmatpush1.msra.mxu0 %v4571
    %4579 = vmatprep.subr.mxu0 0.0
    %4580 = vmatpush1.msra.mxu0 %v4572
    %4581 = vmatprep.subr.mxu0 0.0
    %4582 = vmatpush1.msra.mxu0 0.0
    %4583 = vmatprep.subr.mxu0 0.0
    %4584 = vmatpush1.msra.mxu0 0.0
    %4585 = vmatprep.subr.mxu0 0.0
    %4586 = vmatpush1.msra.mxu0 0.0
    %4587 = vmatprep.subr.mxu0 0.0
    %4588 = vmatpush1.msra.mxu0 0.0
    %4589 = vmatprep.subr.mxu0 0.0
    %4590 = vmatpush1.msra.mxu0 0.0
    %4591 = vmatprep.subr.mxu0 0.0
    %4592 = vmatpush1.msra.mxu0 0.0
    %4593 = vmatprep.subr.mxu0 0.0
    %4594 = vmatpush1.msra.mxu0 0.0
    %4595 = vmatprep.subr.mxu0 0.0
    %4596 = vmatpush1.msra.mxu0 0.0
    %4597 = vmatprep.subr.mxu0 0.0
    %4598 = vmatpush1.msra.mxu0 0.0
    %4599 = vmatprep.subr.mxu0 0.0
    %4600 = vmatpush1.msra.mxu0 0.0
    %4601 = vmatprep.subr.mxu0 0.0
    %4602 = vmatpush1.msra.mxu0 0.0
    %4603 = vmatprep.subr.mxu0 0.0
    %4604 = vmatpush1.msra.mxu0 0.0
    %4605 = vmatprep.subr.mxu0 0.0
    %4606 = vmatpush1.msra.mxu0 0.0
    %4607 = vmatprep.subr.mxu0 0.0
    %4608 = vmatpush1.msra.mxu0 0.0
    %4609 = vmatprep.subr.mxu0 0.0
    %4610 = vmatpush1.msra.mxu0 0.0
    %4611 = vmatprep.subr.mxu0 0.0
    %4612 = vmatpush1.msra.mxu0 0.0
    %4613 = vmatprep.subr.mxu0 0.0
    %4614 = vmatpush1.msra.mxu0 0.0
    %4615 = vmatprep.subr.mxu0 0.0
    %4616 = vmatpush1.msra.mxu0 0.0
    %4617 = vmatprep.subr.mxu0 0.0
    %4618 = vmatpush1.msra.mxu0 0.0
    %4619 = vmatprep.subr.mxu0 0.0
    %4620 = vmatpush1.msra.mxu0 0.0
    %4621 = vmatprep.subr.mxu0 0.0
    %4622 = vmatpush1.msra.mxu0 0.0
    %4623 = vmatprep.subr.mxu0 0.0
    %4624 = vmatpush1.msra.mxu0 0.0
    %4625 = vmatprep.subr.mxu0 0.0
    %4626 = vmatpush1.msra.mxu0 0.0
    %4627 = vmatprep.subr.mxu0 0.0
    %4628 = vmatpush1.msra.mxu0 0.0
    %4629 = vmatprep.subr.mxu0 0.0
    %4630 = vmatpush1.msra.mxu0 0.0
    %4631 = vmatprep.subr.mxu0 0.0
    %4632 = vmatpush1.msra.mxu0 0.0
    %4633 = vmatprep.subr.mxu0 0.0
    %4634 = vmatpush1.msra.mxu0 0.0
    %4635 = vmatprep.subr.mxu0 0.0
    %4636 = vmatpush1.msra.mxu0 0.0
    %4637 = vmatprep.mubr.f32.mxu0 0.0
    %4638 = vmatmul.mubr.f32.gmra.mrb[0].mxu0 %v3755
    %v4639 = vpop.f32.mrb[0].mxu0
    %v4640 = vadd.f32 0.0, %v4639
    %v4641 = vpop.f32.mrb[0].mxu0
    %4642 = vdwg.mxu0
    %v4643 = vadd.f32 %v4330, %v4640
    %v4644 = vxor.u32 %v4643, 2147483648
    %v4645 = vmul.f32 %v4644, 1.442695
    %v4646 = vpow.pop %v4645
    %v4647 = vadd.f32 %v4646, 1.0
    %v4648 = vrcp.pop %v4647
    %v4649 = vmul.f32 1.0, %v4648
    %v4650 = vmul.f32 %v4492, %v3740
    %v4651 = vmul.f32 %v4411, %v4568
    %v4652 = vadd.f32 %v4650, %v4651
    %v4653 = vtanh.pop %v4652
    %v4654 = vmul.f32 %v4649, %v4653
    %v4655 = vld [vmem:[#allocation7] sm:$0xff]
    %v4656 = vld [vmem:[#allocation7 + $0x8] sm:$0xff]
    %v4657 = vld [vmem:[#allocation7 + $0x10] sm:$0xff]
    %v4658 = vld [vmem:[#allocation7 + $0x18] sm:$0xff]
    %v4659 = vld [vmem:[#allocation8] sm:$0x1]
    %v4661 = vlaneseq
    %v4662 = vshrl.u32 %v4661, 7
    %v4663 = vsub.s32 0, %v4662
    %v4664 = vrot.slane %v4659, %v4663
    %v4667 = vsel %vm259, %v4654, 0
    %4669 = vmatprep.subr.mxu0 0.0
    %4670 = vmatpush1.msra.mxu0 %v4655
    %4671 = vmatprep.subr.mxu0 0.0
    %4672 = vmatpush1.msra.mxu0 %v4656
    %4673 = vmatprep.subr.mxu0 0.0
    %4674 = vmatpush1.msra.mxu0 %v4657
    %4675 = vmatprep.subr.mxu0 0.0
    %4676 = vmatpush1.msra.mxu0 %v4658
    %4677 = vmatprep.subr.mxu0 0.0
    %4678 = vmatpush1.msra.mxu0 0.0
    %4679 = vmatprep.subr.mxu0 0.0
    %4680 = vmatpush1.msra.mxu0 0.0
    %4681 = vmatprep.subr.mxu0 0.0
    %4682 = vmatpush1.msra.mxu0 0.0
    %4683 = vmatprep.subr.mxu0 0.0
    %4684 = vmatpush1.msra.mxu0 0.0
    %4685 = vmatprep.subr.mxu0 0.0
    %4686 = vmatpush1.msra.mxu0 0.0
    %4687 = vmatprep.subr.mxu0 0.0
    %4688 = vmatpush1.msra.mxu0 0.0
    %4689 = vmatprep.subr.mxu0 0.0
    %4690 = vmatpush1.msra.mxu0 0.0
    %4691 = vmatprep.subr.mxu0 0.0
    %4692 = vmatpush1.msra.mxu0 0.0
    %4693 = vmatprep.subr.mxu0 0.0
    %4694 = vmatpush1.msra.mxu0 0.0
    %4695 = vmatprep.subr.mxu0 0.0
    %4696 = vmatpush1.msra.mxu0 0.0
    %4697 = vmatprep.subr.mxu0 0.0
    %4698 = vmatpush1.msra.mxu0 0.0
    %4699 = vmatprep.subr.mxu0 0.0
    %4700 = vmatpush1.msra.mxu0 0.0
    %4701 = vmatprep.subr.mxu0 0.0
    %4702 = vmatpush1.msra.mxu0 0.0
    %4703 = vmatprep.subr.mxu0 0.0
    %4704 = vmatpush1.msra.mxu0 0.0
    %4705 = vmatprep.subr.mxu0 0.0
    %4706 = vmatpush1.msra.mxu0 0.0
    %4707 = vmatprep.subr.mxu0 0.0
    %4708 = vmatpush1.msra.mxu0 0.0
    %4709 = vmatprep.subr.mxu0 0.0
    %4710 = vmatpush1.msra.mxu0 0.0
    %4711 = vmatprep.subr.mxu0 0.0
    %4712 = vmatpush1.msra.mxu0 0.0
    %4713 = vmatprep.subr.mxu0 0.0
    %4714 = vmatpush1.msra.mxu0 0.0
    %4715 = vmatprep.subr.mxu0 0.0
    %4716 = vmatpush1.msra.mxu0 0.0
    %4717 = vmatprep.subr.mxu0 0.0
    %4718 = vmatpush1.msra.mxu0 0.0
    %4719 = vmatprep.subr.mxu0 0.0
    %4720 = vmatpush1.msra.mxu0 0.0
    %4721 = vmatprep.subr.mxu0 0.0
    %4722 = vmatpush1.msra.mxu0 0.0
    %4723 = vmatprep.subr.mxu0 0.0
    %4724 = vmatpush1.msra.mxu0 0.0
    %4725 = vmatprep.subr.mxu0 0.0
    %4726 = vmatpush1.msra.mxu0 0.0
    %4727 = vmatprep.subr.mxu0 0.0
    %4728 = vmatpush1.msra.mxu0 0.0
    %4729 = vmatprep.subr.mxu0 0.0
    %4730 = vmatpush1.msra.mxu0 0.0
    %4731 = vmatprep.subr.mxu0 0.0
    %4732 = vmatpush1.msra.mxu0 0.0
    %4733 = vmatprep.mubr.f32.mxu0 0.0
    %4734 = vmatmul.mubr.f32.gmra.mrb[0].mxu0 %v4667
    %v4735 = vpop.f32.mrb[0].mxu0
    %v4736 = vadd.f32 %v4664, %v4735
    %v4737 = vpop.f32.mrb[0].mxu0
    %4738 = vdwg.mxu0
    %v4740 = vsel %vm259, %v4736, 0
    %4742 = vmatprep.subr.mxu0 0.0
    %4743 = vmatpush1.msra.mxu0 %v339
    %4744 = vmatprep.subr.mxu0 0.0
    %4745 = vmatpush1.msra.mxu0 %v344
    %4746 = vmatprep.subr.mxu0 0.0
    %4747 = vmatpush1.msra.mxu0 %v349
    %4748 = vmatprep.subr.mxu0 0.0
    %4749 = vmatpush1.msra.mxu0 %v354
    %4750 = vmatprep.subr.mxu0 0.0
    %4751 = vmatpush1.msra.mxu0 0.0
    %4752 = vmatprep.subr.mxu0 0.0
    %4753 = vmatpush1.msra.mxu0 0.0
    %4754 = vmatprep.subr.mxu0 0.0
    %4755 = vmatpush1.msra.mxu0 0.0
    %4756 = vmatprep.subr.mxu0 0.0
    %4757 = vmatpush1.msra.mxu0 0.0
    %4758 = vmatprep.subr.mxu0 0.0
    %4759 = vmatpush1.msra.mxu0 0.0
    %4760 = vmatprep.subr.mxu0 0.0
    %4761 = vmatpush1.msra.mxu0 0.0
    %4762 = vmatprep.subr.mxu0 0.0
    %4763 = vmatpush1.msra.mxu0 0.0
    %4764 = vmatprep.subr.mxu0 0.0
    %4765 = vmatpush1.msra.mxu0 0.0
    %4766 = vmatprep.subr.mxu0 0.0
    %4767 = vmatpush1.msra.mxu0 0.0
    %4768 = vmatprep.subr.mxu0 0.0
    %4769 = vmatpush1.msra.mxu0 0.0
    %4770 = vmatprep.subr.mxu0 0.0
    %4771 = vmatpush1.msra.mxu0 0.0
    %4772 = vmatprep.subr.mxu0 0.0
    %4773 = vmatpush1.msra.mxu0 0.0
    %4774 = vmatprep.subr.mxu0 0.0
    %4775 = vmatpush1.msra.mxu0 0.0
    %4776 = vmatprep.subr.mxu0 0.0
    %4777 = vmatpush1.msra.mxu0 0.0
    %4778 = vmatprep.subr.mxu0 0.0
    %4779 = vmatpush1.msra.mxu0 0.0
    %4780 = vmatprep.subr.mxu0 0.0
    %4781 = vmatpush1.msra.mxu0 0.0
    %4782 = vmatprep.subr.mxu0 0.0
    %4783 = vmatpush1.msra.mxu0 0.0
    %4784 = vmatprep.subr.mxu0 0.0
    %4785 = vmatpush1.msra.mxu0 0.0
    %4786 = vmatprep.subr.mxu0 0.0
    %4787 = vmatpush1.msra.mxu0 0.0
    %4788 = vmatprep.subr.mxu0 0.0
    %4789 = vmatpush1.msra.mxu0 0.0
    %4790 = vmatprep.subr.mxu0 0.0
    %4791 = vmatpush1.msra.mxu0 0.0
    %4792 = vmatprep.subr.mxu0 0.0
    %4793 = vmatpush1.msra.mxu0 0.0
    %4794 = vmatprep.subr.mxu0 0.0
    %4795 = vmatpush1.msra.mxu0 0.0
    %4796 = vmatprep.subr.mxu0 0.0
    %4797 = vmatpush1.msra.mxu0 0.0
    %4798 = vmatprep.subr.mxu0 0.0
    %4799 = vmatpush1.msra.mxu0 0.0
    %4800 = vmatprep.subr.mxu0 0.0
    %4801 = vmatpush1.msra.mxu0 0.0
    %4802 = vmatprep.subr.mxu0 0.0
    %4803 = vmatpush1.msra.mxu0 0.0
    %4804 = vmatprep.subr.mxu0 0.0
    %4805 = vmatpush1.msra.mxu0 0.0
    %4806 = vmatprep.mubr.f32.mxu0 0.0
    %4807 = vmatmul.mubr.f32.gmra.mrb[0].mxu0 %v4740
    %v4808 = vpop.f32.mrb[0].mxu0
    %v4809 = vadd.f32 %v665, %v4808
    %v4810 = vpop.f32.mrb[0].mxu0
    %4811 = vdwg.mxu0
    %v4812 = vsel %vm1160, %v4809, -inf
    %4813 = vmax.xlane.f32.xlu0 %v4812
    %v4814 = vpop.xlane.xlu0 %4813
    %v4815 = vsub.f32 %v4809, %v4814
    %v4816 = vmul.f32 %v4815, 1.442695
    %v4817 = vpow.pop %v4816
    %v4818 = vsel %vm1160, %v4817, 0.0
    %4819 = vadd.xlane.f32.xlu0 %v4818
    %v4820 = vpop.xlane.xlu0 %4819
    %v4821 = vrcp.pop %v4820
    %v4822 = vmul.f32 %v4817, %v4821
    %v4824 = vsel %vm1172, %v4822, 0
    %4826 = vmatprep.subr.mxu0 0.0
    %4827 = vmatpush1.msra.mxu0 %v443
    %4828 = vmatprep.subr.mxu0 0.0
    %4829 = vmatpush1.msra.mxu0 %v448
    %4830 = vmatprep.subr.mxu0 0.0
    %4831 = vmatpush1.msra.mxu0 0.0
    %4832 = vmatprep.subr.mxu0 0.0
    %4833 = vmatpush1.msra.mxu0 0.0
    %4834 = vmatprep.subr.mxu0 0.0
    %4835 = vmatpush1.msra.mxu0 0.0
    %4836 = vmatprep.subr.mxu0 0.0
    %4837 = vmatpush1.msra.mxu0 0.0
    %4838 = vmatprep.subr.mxu0 0.0
    %4839 = vmatpush1.msra.mxu0 0.0
    %4840 = vmatprep.subr.mxu0 0.0
    %4841 = vmatpush1.msra.mxu0 0.0
    %4842 = vmatprep.subr.mxu0 0.0
    %4843 = vmatpush1.msra.mxu0 0.0
    %4844 = vmatprep.subr.mxu0 0.0
    %4845 = vmatpush1.msra.mxu0 0.0
    %4846 = vmatprep.subr.mxu0 0.0
    %4847 = vmatpush1.msra.mxu0 0.0
    %4848 = vmatprep.subr.mxu0 0.0
    %4849 = vmatpush1.msra.mxu0 0.0
    %4850 = vmatprep.subr.mxu0 0.0
    %4851 = vmatpush1.msra.mxu0 0.0
    %4852 = vmatprep.subr.mxu0 0.0
    %4853 = vmatpush1.msra.mxu0 0.0
    %4854 = vmatprep.subr.mxu0 0.0
    %4855 = vmatpush1.msra.mxu0 0.0
    %4856 = vmatprep.subr.mxu0 0.0
    %4857 = vmatpush1.msra.mxu0 0.0
    %4858 = vmatprep.subr.mxu0 0.0
    %4859 = vmatpush1.msra.mxu0 0.0
    %4860 = vmatprep.subr.mxu0 0.0
    %4861 = vmatpush1.msra.mxu0 0.0
    %4862 = vmatprep.subr.mxu0 0.0
    %4863 = vmatpush1.msra.mxu0 0.0
    %4864 = vmatprep.subr.mxu0 0.0
    %4865 = vmatpush1.msra.mxu0 0.0
    %4866 = vmatprep.subr.mxu0 0.0
    %4867 = vmatpush1.msra.mxu0 0.0
    %4868 = vmatprep.subr.mxu0 0.0
    %4869 = vmatpush1.msra.mxu0 0.0
    %4870 = vmatprep.subr.mxu0 0.0
    %4871 = vmatpush1.msra.mxu0 0.0
    %4872 = vmatprep.subr.mxu0 0.0
    %4873 = vmatpush1.msra.mxu0 0.0
    %4874 = vmatprep.subr.mxu0 0.0
    %4875 = vmatpush1.msra.mxu0 0.0
    %4876 = vmatprep.subr.mxu0 0.0
    %4877 = vmatpush1.msra.mxu0 0.0
    %4878 = vmatprep.subr.mxu0 0.0
    %4879 = vmatpush1.msra.mxu0 0.0
    %4880 = vmatprep.subr.mxu0 0.0
    %4881 = vmatpush1.msra.mxu0 0.0
    %4882 = vmatprep.subr.mxu0 0.0
    %4883 = vmatpush1.msra.mxu0 0.0
    %4884 = vmatprep.subr.mxu0 0.0
    %4885 = vmatpush1.msra.mxu0 0.0
    %4886 = vmatprep.subr.mxu0 0.0
    %4887 = vmatpush1.msra.mxu0 0.0
    %4888 = vmatprep.subr.mxu0 0.0
    %4889 = vmatpush1.msra.mxu0 0.0
    %4890 = vmatprep.mubr.f32.mxu0 0.0
    %4891 = vmatmul.mubr.f32.gmra.mrb[0].mxu0 %v4824
    %v4892 = vpop.f32.mrb[0].mxu0
    %v4893 = vadd.f32 0.0, %v4892
    %v4894 = vpop.f32.mrb[0].mxu0
    %4895 = vdwg.mxu0
    %4896 = vrot.lane.b32.xlu0 %v4736, 96
    %v4897 = vpop.permute.xlu0 %4896
    %v4898 = vsel %vm259, %v4897, 0
    %4900 = vmatprep.subr.mxu0 0.0
    %4901 = vmatpush1.msra.mxu0 %v562
    %4902 = vmatprep.subr.mxu0 0.0
    %4903 = vmatpush1.msra.mxu0 %v567
    %4904 = vmatprep.subr.mxu0 0.0
    %4905 = vmatpush1.msra.mxu0 %v572
    %4906 = vmatprep.subr.mxu0 0.0
    %4907 = vmatpush1.msra.mxu0 %v577
    %4908 = vmatprep.subr.mxu0 0.0
    %4909 = vmatpush1.msra.mxu0 0.0
    %4910 = vmatprep.subr.mxu0 0.0
    %4911 = vmatpush1.msra.mxu0 0.0
    %4912 = vmatprep.subr.mxu0 0.0
    %4913 = vmatpush1.msra.mxu0 0.0
    %4914 = vmatprep.subr.mxu0 0.0
    %4915 = vmatpush1.msra.mxu0 0.0
    %4916 = vmatprep.subr.mxu0 0.0
    %4917 = vmatpush1.msra.mxu0 0.0
    %4918 = vmatprep.subr.mxu0 0.0
    %4919 = vmatpush1.msra.mxu0 0.0
    %4920 = vmatprep.subr.mxu0 0.0
    %4921 = vmatpush1.msra.mxu0 0.0
    %4922 = vmatprep.subr.mxu0 0.0
    %4923 = vmatpush1.msra.mxu0 0.0
    %4924 = vmatprep.subr.mxu0 0.0
    %4925 = vmatpush1.msra.mxu0 0.0
    %4926 = vmatprep.subr.mxu0 0.0
    %4927 = vmatpush1.msra.mxu0 0.0
    %4928 = vmatprep.subr.mxu0 0.0
    %4929 = vmatpush1.msra.mxu0 0.0
    %4930 = vmatprep.subr.mxu0 0.0
    %4931 = vmatpush1.msra.mxu0 0.0
    %4932 = vmatprep.subr.mxu0 0.0
    %4933 = vmatpush1.msra.mxu0 0.0
    %4934 = vmatprep.subr.mxu0 0.0
    %4935 = vmatpush1.msra.mxu0 0.0
    %4936 = vmatprep.subr.mxu0 0.0
    %4937 = vmatpush1.msra.mxu0 0.0
    %4938 = vmatprep.subr.mxu0 0.0
    %4939 = vmatpush1.msra.mxu0 0.0
    %4940 = vmatprep.subr.mxu0 0.0
    %4941 = vmatpush1.msra.mxu0 0.0
    %4942 = vmatprep.subr.mxu0 0.0
    %4943 = vmatpush1.msra.mxu0 0.0
    %4944 = vmatprep.subr.mxu0 0.0
    %4945 = vmatpush1.msra.mxu0 0.0
    %4946 = vmatprep.subr.mxu0 0.0
    %4947 = vmatpush1.msra.mxu0 0.0
    %4948 = vmatprep.subr.mxu0 0.0
    %4949 = vmatpush1.msra.mxu0 0.0
    %4950 = vmatprep.subr.mxu0 0.0
    %4951 = vmatpush1.msra.mxu0 0.0
    %4952 = vmatprep.subr.mxu0 0.0
    %4953 = vmatpush1.msra.mxu0 0.0
    %4954 = vmatprep.subr.mxu0 0.0
    %4955 = vmatpush1.msra.mxu0 0.0
    %4956 = vmatprep.subr.mxu0 0.0
    %4957 = vmatpush1.msra.mxu0 0.0
    %4958 = vmatprep.subr.mxu0 0.0
    %4959 = vmatpush1.msra.mxu0 0.0
    %4960 = vmatprep.subr.mxu0 0.0
    %4961 = vmatpush1.msra.mxu0 0.0
    %4962 = vmatprep.subr.mxu0 0.0
    %4963 = vmatpush1.msra.mxu0 0.0
    %4964 = vmatprep.mubr.f32.mxu0 0.0
    %4965 = vmatmul.mubr.f32.gmra.mrb[0].mxu0 %v4898
    %v4966 = vpop.f32.mrb[0].mxu0
    %v4967 = vadd.f32 %v666, %v4966
    %v4968 = vpop.f32.mrb[0].mxu0
    %4969 = vdwg.mxu0
    %v4970 = vsel %vm1320, %v4967, -inf
    %4971 = vmax.xlane.f32.xlu0 %v4970
    %v4972 = vpop.xlane.xlu0 %4971
    %v4973 = vsub.f32 %v4967, %v4972
    %v4974 = vmul.f32 %v4973, 1.442695
    %v4975 = vpow.pop %v4974
    %v4976 = vsel %vm1320, %v4975, 0.0
    %4977 = vadd.xlane.f32.xlu0 %v4976
    %v4978 = vpop.xlane.xlu0 %4977
    %v4979 = vrcp.pop %v4978
    %v4980 = vmul.f32 %v4975, %v4979
    %v4982 = vsel %vm1332, %v4980, 0
    %4984 = vmatprep.subr.mxu0 0.0
    %4985 = vmatpush1.msra.mxu0 %v662
    %4986 = vmatprep.subr.mxu0 0.0
    %4987 = vmatpush1.msra.mxu0 0.0
    %4988 = vmatprep.subr.mxu0 0.0
    %4989 = vmatpush1.msra.mxu0 0.0
    %4990 = vmatprep.subr.mxu0 0.0
    %4991 = vmatpush1.msra.mxu0 0.0
    %4992 = vmatprep.subr.mxu0 0.0
    %4993 = vmatpush1.msra.mxu0 0.0
    %4994 = vmatprep.subr.mxu0 0.0
    %4995 = vmatpush1.msra.mxu0 0.0
    %4996 = vmatprep.subr.mxu0 0.0
    %4997 = vmatpush1.msra.mxu0 0.0
    %4998 = vmatprep.subr.mxu0 0.0
    %4999 = vmatpush1.msra.mxu0 0.0
    %5000 = vmatprep.subr.mxu0 0.0
    %5001 = vmatpush1.msra.mxu0 0.0
    %5002 = vmatprep.subr.mxu0 0.0
    %5003 = vmatpush1.msra.mxu0 0.0
    %5004 = vmatprep.subr.mxu0 0.0
    %5005 = vmatpush1.msra.mxu0 0.0
    %5006 = vmatprep.subr.mxu0 0.0
    %5007 = vmatpush1.msra.mxu0 0.0
    %5008 = vmatprep.subr.mxu0 0.0
    %5009 = vmatpush1.msra.mxu0 0.0
    %5010 = vmatprep.subr.mxu0 0.0
    %5011 = vmatpush1.msra.mxu0 0.0
    %5012 = vmatprep.subr.mxu0 0.0
    %5013 = vmatpush1.msra.mxu0 0.0
    %5014 = vmatprep.subr.mxu0 0.0
    %5015 = vmatpush1.msra.mxu0 0.0
    %5016 = vmatprep.subr.mxu0 0.0
    %5017 = vmatpush1.msra.mxu0 0.0
    %5018 = vmatprep.subr.mxu0 0.0
    %5019 = vmatpush1.msra.mxu0 0.0
    %5020 = vmatprep.subr.mxu0 0.0
    %5021 = vmatpush1.msra.mxu0 0.0
    %5022 = vmatprep.subr.mxu0 0.0
    %5023 = vmatpush1.msra.mxu0 0.0
    %5024 = vmatprep.subr.mxu0 0.0
    %5025 = vmatpush1.msra.mxu0 0.0
    %5026 = vmatprep.subr.mxu0 0.0
    %5027 = vmatpush1.msra.mxu0 0.0
    %5028 = vmatprep.subr.mxu0 0.0
    %5029 = vmatpush1.msra.mxu0 0.0
    %5030 = vmatprep.subr.mxu0 0.0
    %5031 = vmatpush1.msra.mxu0 0.0
    %5032 = vmatprep.subr.mxu0 0.0
    %5033 = vmatpush1.msra.mxu0 0.0
    %5034 = vmatprep.subr.mxu0 0.0
    %5035 = vmatpush1.msra.mxu0 0.0
    %5036 = vmatprep.subr.mxu0 0.0
    %5037 = vmatpush1.msra.mxu0 0.0
    %5038 = vmatprep.subr.mxu0 0.0
    %5039 = vmatpush1.msra.mxu0 0.0
    %5040 = vmatprep.subr.mxu0 0.0
    %5041 = vmatpush1.msra.mxu0 0.0
    %5042 = vmatprep.subr.mxu0 0.0
    %5043 = vmatpush1.msra.mxu0 0.0
    %5044 = vmatprep.subr.mxu0 0.0
    %5045 = vmatpush1.msra.mxu0 0.0
    %5046 = vmatprep.subr.mxu0 0.0
    %5047 = vmatpush1.msra.mxu0 0.0
    %5048 = vmatprep.mubr.f32.mxu0 0.0
    %5049 = vmatmul.mubr.f32.gmra.mrb[0].mxu0 %v4982
    %v5050 = vpop.f32.mrb[0].mxu0
    %v5051 = vadd.f32 0.0, %v5050
    %v5052 = vpop.f32.mrb[0].mxu0
    %5053 = vdwg.mxu0
    %5055 = vrot.lane.b32.xlu0 %v5051, 32
    %v5056 = vpop.permute.xlu0 %5055
    %v5058 = vsel %vm259, %v4893, %v5056
    %v5059 = vld [vmem:[%s20] sm:$0xff]
    %v5060 = vld [vmem:[%s20 + $0x8] sm:$0xff]
    %v5061 = vld [vmem:[%s20 + $0x10] sm:$0xff]
    %v5062 = vld [vmem:[%s20 + $0x18] sm:$0xff]
    %v5063 = vld [vmem:[%s20 + $0x20] sm:$0xff]
    %v5064 = vld [vmem:[%s20 + $0x28] sm:$0xff]
    %v5065 = vld [vmem:[%s20 + $0x30] sm:$0xff]
    %v5066 = vld [vmem:[%s20 + $0x38] sm:$0xff]
    %v5067 = vld [vmem:[%s21] sm:$0x1]
    %v5069 = vlaneseq
    %v5070 = vshrl.u32 %v5069, 7
    %v5071 = vsub.s32 0, %v5070
    %v5072 = vrot.slane %v5067, %v5071
    %v5075 = vsel %vm1426, %v5058, 0
    %5077 = vmatprep.subr.mxu0 0.0
    %5078 = vmatpush1.msra.mxu0 %v5059
    %5079 = vmatprep.subr.mxu0 0.0
    %5080 = vmatpush1.msra.mxu0 %v5060
    %5081 = vmatprep.subr.mxu0 0.0
    %5082 = vmatpush1.msra.mxu0 %v5061
    %5083 = vmatprep.subr.mxu0 0.0
    %5084 = vmatpush1.msra.mxu0 %v5062
    %5085 = vmatprep.subr.mxu0 0.0
    %5086 = vmatpush1.msra.mxu0 %v5063
    %5087 = vmatprep.subr.mxu0 0.0
    %5088 = vmatpush1.msra.mxu0 %v5064
    %5089 = vmatprep.subr.mxu0 0.0
    %5090 = vmatpush1.msra.mxu0 %v5065
    %5091 = vmatprep.subr.mxu0 0.0
    %5092 = vmatpush1.msra.mxu0 %v5066
    %5093 = vmatprep.subr.mxu0 0.0
    %5094 = vmatpush1.msra.mxu0 0.0
    %5095 = vmatprep.subr.mxu0 0.0
    %5096 = vmatpush1.msra.mxu0 0.0
    %5097 = vmatprep.subr.mxu0 0.0
    %5098 = vmatpush1.msra.mxu0 0.0
    %5099 = vmatprep.subr.mxu0 0.0
    %5100 = vmatpush1.msra.mxu0 0.0
    %5101 = vmatprep.subr.mxu0 0.0
    %5102 = vmatpush1.msra.mxu0 0.0
    %5103 = vmatprep.subr.mxu0 0.0
    %5104 = vmatpush1.msra.mxu0 0.0
    %5105 = vmatprep.subr.mxu0 0.0
    %5106 = vmatpush1.msra.mxu0 0.0
    %5107 = vmatprep.subr.mxu0 0.0
    %5108 = vmatpush1.msra.mxu0 0.0
    %5109 = vmatprep.subr.mxu0 0.0
    %5110 = vmatpush1.msra.mxu0 0.0
    %5111 = vmatprep.subr.mxu0 0.0
    %5112 = vmatpush1.msra.mxu0 0.0
    %5113 = vmatprep.subr.mxu0 0.0
    %5114 = vmatpush1.msra.mxu0 0.0
    %5115 = vmatprep.subr.mxu0 0.0
    %5116 = vmatpush1.msra.mxu0 0.0
    %5117 = vmatprep.subr.mxu0 0.0
    %5118 = vmatpush1.msra.mxu0 0.0
    %5119 = vmatprep.subr.mxu0 0.0
    %5120 = vmatpush1.msra.mxu0 0.0
    %5121 = vmatprep.subr.mxu0 0.0
    %5122 = vmatpush1.msra.mxu0 0.0
    %5123 = vmatprep.subr.mxu0 0.0
    %5124 = vmatpush1.msra.mxu0 0.0
    %5125 = vmatprep.subr.mxu0 0.0
    %5126 = vmatpush1.msra.mxu0 0.0
    %5127 = vmatprep.subr.mxu0 0.0
    %5128 = vmatpush1.msra.mxu0 0.0
    %5129 = vmatprep.subr.mxu0 0.0
    %5130 = vmatpush1.msra.mxu0 0.0
    %5131 = vmatprep.subr.mxu0 0.0
    %5132 = vmatpush1.msra.mxu0 0.0
    %5133 = vmatprep.subr.mxu0 0.0
    %5134 = vmatpush1.msra.mxu0 0.0
    %5135 = vmatprep.subr.mxu0 0.0
    %5136 = vmatpush1.msra.mxu0 0.0
    %5137 = vmatprep.subr.mxu0 0.0
    %5138 = vmatpush1.msra.mxu0 0.0
    %5139 = vmatprep.subr.mxu0 0.0
    %5140 = vmatpush1.msra.mxu0 0.0
    %5141 = vmatprep.mubr.f32.mxu0 0.0
    %5142 = vmatmul.mubr.f32.gmra.mrb[0].mxu0 %v5075
    %v5143 = vpop.f32.mrb[0].mxu0
    %v5144 = vadd.f32 %v5072, %v5143
    %v5145 = vpop.f32.mrb[0].mxu0
    %5146 = vdwg.mxu0
    %v5147 = vmax.f32 %v5144, 0.0
    %v5148 = vld [vmem:[%s22] sm:$0xff]
    %v5149 = vld [vmem:[%s22 + $0x8] sm:$0xff]
    %v5150 = vld [vmem:[%s22 + $0x10] sm:$0xff]
    %v5151 = vld [vmem:[%s22 + $0x18] sm:$0xff]
    %v5152 = vld [vmem:[%s22 + $0x20] sm:$0xff]
    %v5153 = vld [vmem:[%s22 + $0x28] sm:$0xff]
    %v5154 = vld [vmem:[%s22 + $0x30] sm:$0xff]
    %v5155 = vld [vmem:[%s22 + $0x38] sm:$0xff]
    %v5156 = vld [vmem:[%s23] sm:$0x1]
    %v5158 = vlaneseq
    %v5159 = vshrl.u32 %v5158, 7
    %v5160 = vsub.s32 0, %v5159
    %v5161 = vrot.slane %v5156, %v5160
    %v5164 = vsel %vm1426, %v5147, 0
    %5166 = vmatprep.subr.mxu0 0.0
    %5167 = vmatpush1.msra.mxu0 %v5148
    %5168 = vmatprep.subr.mxu0 0.0
    %5169 = vmatpush1.msra.mxu0 %v5149
    %5170 = vmatprep.subr.mxu0 0.0
    %5171 = vmatpush1.msra.mxu0 %v5150
    %5172 = vmatprep.subr.mxu0 0.0
    %5173 = vmatpush1.msra.mxu0 %v5151
    %5174 = vmatprep.subr.mxu0 0.0
    %5175 = vmatpush1.msra.mxu0 %v5152
    %5176 = vmatprep.subr.mxu0 0.0
    %5177 = vmatpush1.msra.mxu0 %v5153
    %5178 = vmatprep.subr.mxu0 0.0
    %5179 = vmatpush1.msra.mxu0 %v5154
    %5180 = vmatprep.subr.mxu0 0.0
    %5181 = vmatpush1.msra.mxu0 %v5155
    %5182 = vmatprep.subr.mxu0 0.0
    %5183 = vmatpush1.msra.mxu0 0.0
    %5184 = vmatprep.subr.mxu0 0.0
    %5185 = vmatpush1.msra.mxu0 0.0
    %5186 = vmatprep.subr.mxu0 0.0
    %5187 = vmatpush1.msra.mxu0 0.0
    %5188 = vmatprep.subr.mxu0 0.0
    %5189 = vmatpush1.msra.mxu0 0.0
    %5190 = vmatprep.subr.mxu0 0.0
    %5191 = vmatpush1.msra.mxu0 0.0
    %5192 = vmatprep.subr.mxu0 0.0
    %5193 = vmatpush1.msra.mxu0 0.0
    %5194 = vmatprep.subr.mxu0 0.0
    %5195 = vmatpush1.msra.mxu0 0.0
    %5196 = vmatprep.subr.mxu0 0.0
    %5197 = vmatpush1.msra.mxu0 0.0
    %5198 = vmatprep.subr.mxu0 0.0
    %5199 = vmatpush1.msra.mxu0 0.0
    %5200 = vmatprep.subr.mxu0 0.0
    %5201 = vmatpush1.msra.mxu0 0.0
    %5202 = vmatprep.subr.mxu0 0.0
    %5203 = vmatpush1.msra.mxu0 0.0
    %5204 = vmatprep.subr.mxu0 0.0
    %5205 = vmatpush1.msra.mxu0 0.0
    %5206 = vmatprep.subr.mxu0 0.0
    %5207 = vmatpush1.msra.mxu0 0.0
    %5208 = vmatprep.subr.mxu0 0.0
    %5209 = vmatpush1.msra.mxu0 0.0
    %5210 = vmatprep.subr.mxu0 0.0
    %5211 = vmatpush1.msra.mxu0 0.0
    %5212 = vmatprep.subr.mxu0 0.0
    %5213 = vmatpush1.msra.mxu0 0.0
    %5214 = vmatprep.subr.mxu0 0.0
    %5215 = vmatpush1.msra.mxu0 0.0
    %5216 = vmatprep.subr.mxu0 0.0
    %5217 = vmatpush1.msra.mxu0 0.0
    %5218 = vmatprep.subr.mxu0 0.0
    %5219 = vmatpush1.msra.mxu0 0.0
    %5220 = vmatprep.subr.mxu0 0.0
    %5221 = vmatpush1.msra.mxu0 0.0
    %5222 = vmatprep.subr.mxu0 0.0
    %5223 = vmatpush1.msra.mxu0 0.0
    %5224 = vmatprep.subr.mxu0 0.0
    %5225 = vmatpush1.msra.mxu0 0.0
    %5226 = vmatprep.subr.mxu0 0.0
    %5227 = vmatpush1.msra.mxu0 0.0
    %5228 = vmatprep.subr.mxu0 0.0
    %5229 = vmatpush1.msra.mxu0 0.0
    %5230 = vmatprep.mubr.f32.mxu0 0.0
    %5231 = vmatmul.mubr.f32.gmra.mrb[0].mxu0 %v5164
    %v5232 = vpop.f32.mrb[0].mxu0
    %v5233 = vadd.f32 %v5161, %v5232
    %v5234 = vpop.f32.mrb[0].mxu0
    %5235 = vdwg.mxu0
    %s5236 = scalar_lea.vmem [#allocation22], 8
    %5237 = vst.msk [vmem:[%s5236] sm:$0x3] %vm1160, %v5233
    %s5238 = scalar_lea.vmem %s0, 40
    %v5239 = vld [vmem:[%s5238] sm:$0x3]
    %v5240 = vld [vmem:[%s5238 + $0x2] sm:$0x3]
    %v5241 = vld [vmem:[%s5238 + $0x4] sm:$0x3]
    %v5242 = vld [vmem:[%s5238 + $0x6] sm:$0x3]
    %v5243 = vld [vmem:[%s3] sm:$0xff]
    %v5244 = vld [vmem:[%s3 + $0x8] sm:$0xff]
    %v5245 = vld [vmem:[%s3 + $0x10] sm:$0xff]
    %v5246 = vld [vmem:[%s3 + $0x18] sm:$0xff]
    %5247 = vmatprep.subr.mxu0 0.0
    %5248 = vmatpush1.msra.mxu0 %v5243
    %5249 = vmatprep.subr.mxu0 0.0
    %5250 = vmatpush1.msra.mxu0 %v5244
    %5251 = vmatprep.subr.mxu0 0.0
    %5252 = vmatpush1.msra.mxu0 %v5245
    %5253 = vmatprep.subr.mxu0 0.0
    %5254 = vmatpush1.msra.mxu0 %v5246
    %5255 = vmatprep.subr.mxu0 0.0
    %5256 = vmatpush1.msra.mxu0 0.0
    %5257 = vmatprep.subr.mxu0 0.0
    %5258 = vmatpush1.msra.mxu0 0.0
    %5259 = vmatprep.subr.mxu0 0.0
    %5260 = vmatpush1.msra.mxu0 0.0
    %5261 = vmatprep.subr.mxu0 0.0
    %5262 = vmatpush1.msra.mxu0 0.0
    %5263 = vmatprep.subr.mxu0 0.0
    %5264 = vmatpush1.msra.mxu0 0.0
    %5265 = vmatprep.subr.mxu0 0.0
    %5266 = vmatpush1.msra.mxu0 0.0
    %5267 = vmatprep.subr.mxu0 0.0
    %5268 = vmatpush1.msra.mxu0 0.0
    %5269 = vmatprep.subr.mxu0 0.0
    %5270 = vmatpush1.msra.mxu0 0.0
    %5271 = vmatprep.subr.mxu0 0.0
    %5272 = vmatpush1.msra.mxu0 0.0
    %5273 = vmatprep.subr.mxu0 0.0
    %5274 = vmatpush1.msra.mxu0 0.0
    %5275 = vmatprep.subr.mxu0 0.0
    %5276 = vmatpush1.msra.mxu0 0.0
    %5277 = vmatprep.subr.mxu0 0.0
    %5278 = vmatpush1.msra.mxu0 0.0
    %5279 = vmatprep.subr.mxu0 0.0
    %5280 = vmatpush1.msra.mxu0 0.0
    %5281 = vmatprep.subr.mxu0 0.0
    %5282 = vmatpush1.msra.mxu0 0.0
    %5283 = vmatprep.subr.mxu0 0.0
    %5284 = vmatpush1.msra.mxu0 0.0
    %5285 = vmatprep.subr.mxu0 0.0
    %5286 = vmatpush1.msra.mxu0 0.0
    %5287 = vmatprep.subr.mxu0 0.0
    %5288 = vmatpush1.msra.mxu0 0.0
    %5289 = vmatprep.subr.mxu0 0.0
    %5290 = vmatpush1.msra.mxu0 0.0
    %5291 = vmatprep.subr.mxu0 0.0
    %5292 = vmatpush1.msra.mxu0 0.0
    %5293 = vmatprep.subr.mxu0 0.0
    %5294 = vmatpush1.msra.mxu0 0.0
    %5295 = vmatprep.subr.mxu0 0.0
    %5296 = vmatpush1.msra.mxu0 0.0
    %5297 = vmatprep.subr.mxu0 0.0
    %5298 = vmatpush1.msra.mxu0 0.0
    %5299 = vmatprep.subr.mxu0 0.0
    %5300 = vmatpush1.msra.mxu0 0.0
    %5301 = vmatprep.subr.mxu0 0.0
    %5302 = vmatpush1.msra.mxu0 0.0
    %5303 = vmatprep.subr.mxu0 0.0
    %5304 = vmatpush1.msra.mxu0 0.0
    %5305 = vmatprep.subr.mxu0 0.0
    %5306 = vmatpush1.msra.mxu0 0.0
    %5307 = vmatprep.subr.mxu0 0.0
    %5308 = vmatpush1.msra.mxu0 0.0
    %5309 = vmatprep.subr.mxu0 0.0
    %5310 = vmatpush1.msra.mxu0 0.0
    %5311 = vmatprep.mubr.f32.mxu0 0.0
    %5312 = vmatmul.mubr.f32.gmra.mrb[0].mxu0 %v4667
    %v5313 = vpop.f32.mrb[0].mxu0
    %v5314 = vadd.f32 0.0, %v5313
    %v5315 = vpop.f32.mrb[0].mxu0
    %5316 = vdwg.mxu0
    %v5317 = vadd.f32 %v5239, %v5314
    %v5318 = vxor.u32 %v5317, 2147483648
    %v5319 = vmul.f32 %v5318, 1.442695
    %v5320 = vpow.pop %v5319
    %v5321 = vadd.f32 %v5320, 1.0
    %v5322 = vrcp.pop %v5321
    %v5323 = vmul.f32 1.0, %v5322
    %v5324 = vld [vmem:[%s757] sm:$0xff]
    %v5325 = vld [vmem:[%s757 + $0x8] sm:$0xff]
    %v5326 = vld [vmem:[%s757 + $0x10] sm:$0xff]
    %v5327 = vld [vmem:[%s757 + $0x18] sm:$0xff]
    %5328 = vmatprep.subr.mxu0 0.0
    %5329 = vmatpush1.msra.mxu0 %v5324
    %5330 = vmatprep.subr.mxu0 0.0
    %5331 = vmatpush1.msra.mxu0 %v5325
    %5332 = vmatprep.subr.mxu0 0.0
    %5333 = vmatpush1.msra.mxu0 %v5326
    %5334 = vmatprep.subr.mxu0 0.0
    %5335 = vmatpush1.msra.mxu0 %v5327
    %5336 = vmatprep.subr.mxu0 0.0
    %5337 = vmatpush1.msra.mxu0 0.0
    %5338 = vmatprep.subr.mxu0 0.0
    %5339 = vmatpush1.msra.mxu0 0.0
    %5340 = vmatprep.subr.mxu0 0.0
    %5341 = vmatpush1.msra.mxu0 0.0
    %5342 = vmatprep.subr.mxu0 0.0
    %5343 = vmatpush1.msra.mxu0 0.0
    %5344 = vmatprep.subr.mxu0 0.0
    %5345 = vmatpush1.msra.mxu0 0.0
    %5346 = vmatprep.subr.mxu0 0.0
    %5347 = vmatpush1.msra.mxu0 0.0
    %5348 = vmatprep.subr.mxu0 0.0
    %5349 = vmatpush1.msra.mxu0 0.0
    %5350 = vmatprep.subr.mxu0 0.0
    %5351 = vmatpush1.msra.mxu0 0.0
    %5352 = vmatprep.subr.mxu0 0.0
    %5353 = vmatpush1.msra.mxu0 0.0
    %5354 = vmatprep.subr.mxu0 0.0
    %5355 = vmatpush1.msra.mxu0 0.0
    %5356 = vmatprep.subr.mxu0 0.0
    %5357 = vmatpush1.msra.mxu0 0.0
    %5358 = vmatprep.subr.mxu0 0.0
    %5359 = vmatpush1.msra.mxu0 0.0
    %5360 = vmatprep.subr.mxu0 0.0
    %5361 = vmatpush1.msra.mxu0 0.0
    %5362 = vmatprep.subr.mxu0 0.0
    %5363 = vmatpush1.msra.mxu0 0.0
    %5364 = vmatprep.subr.mxu0 0.0
    %5365 = vmatpush1.msra.mxu0 0.0
    %5366 = vmatprep.subr.mxu0 0.0
    %5367 = vmatpush1.msra.mxu0 0.0
    %5368 = vmatprep.subr.mxu0 0.0
    %5369 = vmatpush1.msra.mxu0 0.0
    %5370 = vmatprep.subr.mxu0 0.0
    %5371 = vmatpush1.msra.mxu0 0.0
    %5372 = vmatprep.subr.mxu0 0.0
    %5373 = vmatpush1.msra.mxu0 0.0
    %5374 = vmatprep.subr.mxu0 0.0
    %5375 = vmatpush1.msra.mxu0 0.0
    %5376 = vmatprep.subr.mxu0 0.0
    %5377 = vmatpush1.msra.mxu0 0.0
    %5378 = vmatprep.subr.mxu0 0.0
    %5379 = vmatpush1.msra.mxu0 0.0
    %5380 = vmatprep.subr.mxu0 0.0
    %5381 = vmatpush1.msra.mxu0 0.0
    %5382 = vmatprep.subr.mxu0 0.0
    %5383 = vmatpush1.msra.mxu0 0.0
    %5384 = vmatprep.subr.mxu0 0.0
    %5385 = vmatpush1.msra.mxu0 0.0
    %5386 = vmatprep.subr.mxu0 0.0
    %5387 = vmatpush1.msra.mxu0 0.0
    %5388 = vmatprep.subr.mxu0 0.0
    %5389 = vmatpush1.msra.mxu0 0.0
    %5390 = vmatprep.subr.mxu0 0.0
    %5391 = vmatpush1.msra.mxu0 0.0
    %5392 = vmatprep.mubr.f32.mxu0 0.0
    %5393 = vmatmul.mubr.f32.gmra.mrb[0].mxu0 %v4667
    %v5394 = vpop.f32.mrb[0].mxu0
    %v5395 = vadd.f32 0.0, %v5394
    %v5396 = vpop.f32.mrb[0].mxu0
    %5397 = vdwg.mxu0
    %v5398 = vadd.f32 %v5240, %v5395
    %v5399 = vxor.u32 %v5398, 2147483648
    %v5400 = vmul.f32 %v5399, 1.442695
    %v5401 = vpow.pop %v5400
    %v5402 = vadd.f32 %v5401, 1.0
    %v5403 = vrcp.pop %v5402
    %v5404 = vmul.f32 1.0, %v5403
    %v5405 = vld [vmem:[%s839] sm:$0xff]
    %v5406 = vld [vmem:[%s839 + $0x8] sm:$0xff]
    %v5407 = vld [vmem:[%s839 + $0x10] sm:$0xff]
    %v5408 = vld [vmem:[%s839 + $0x18] sm:$0xff]
    %5409 = vmatprep.subr.mxu0 0.0
    %5410 = vmatpush1.msra.mxu0 %v5405
    %5411 = vmatprep.subr.mxu0 0.0
    %5412 = vmatpush1.msra.mxu0 %v5406
    %5413 = vmatprep.subr.mxu0 0.0
    %5414 = vmatpush1.msra.mxu0 %v5407
    %5415 = vmatprep.subr.mxu0 0.0
    %5416 = vmatpush1.msra.mxu0 %v5408
    %5417 = vmatprep.subr.mxu0 0.0
    %5418 = vmatpush1.msra.mxu0 0.0
    %5419 = vmatprep.subr.mxu0 0.0
    %5420 = vmatpush1.msra.mxu0 0.0
    %5421 = vmatprep.subr.mxu0 0.0
    %5422 = vmatpush1.msra.mxu0 0.0
    %5423 = vmatprep.subr.mxu0 0.0
    %5424 = vmatpush1.msra.mxu0 0.0
    %5425 = vmatprep.subr.mxu0 0.0
    %5426 = vmatpush1.msra.mxu0 0.0
    %5427 = vmatprep.subr.mxu0 0.0
    %5428 = vmatpush1.msra.mxu0 0.0
    %5429 = vmatprep.subr.mxu0 0.0
    %5430 = vmatpush1.msra.mxu0 0.0
    %5431 = vmatprep.subr.mxu0 0.0
    %5432 = vmatpush1.msra.mxu0 0.0
    %5433 = vmatprep.subr.mxu0 0.0
    %5434 = vmatpush1.msra.mxu0 0.0
    %5435 = vmatprep.subr.mxu0 0.0
    %5436 = vmatpush1.msra.mxu0 0.0
    %5437 = vmatprep.subr.mxu0 0.0
    %5438 = vmatpush1.msra.mxu0 0.0
    %5439 = vmatprep.subr.mxu0 0.0
    %5440 = vmatpush1.msra.mxu0 0.0
    %5441 = vmatprep.subr.mxu0 0.0
    %5442 = vmatpush1.msra.mxu0 0.0
    %5443 = vmatprep.subr.mxu0 0.0
    %5444 = vmatpush1.msra.mxu0 0.0
    %5445 = vmatprep.subr.mxu0 0.0
    %5446 = vmatpush1.msra.mxu0 0.0
    %5447 = vmatprep.subr.mxu0 0.0
    %5448 = vmatpush1.msra.mxu0 0.0
    %5449 = vmatprep.subr.mxu0 0.0
    %5450 = vmatpush1.msra.mxu0 0.0
    %5451 = vmatprep.subr.mxu0 0.0
    %5452 = vmatpush1.msra.mxu0 0.0
    %5453 = vmatprep.subr.mxu0 0.0
    %5454 = vmatpush1.msra.mxu0 0.0
    %5455 = vmatprep.subr.mxu0 0.0
    %5456 = vmatpush1.msra.mxu0 0.0
    %5457 = vmatprep.subr.mxu0 0.0
    %5458 = vmatpush1.msra.mxu0 0.0
    %5459 = vmatprep.subr.mxu0 0.0
    %5460 = vmatpush1.msra.mxu0 0.0
    %5461 = vmatprep.subr.mxu0 0.0
    %5462 = vmatpush1.msra.mxu0 0.0
    %5463 = vmatprep.subr.mxu0 0.0
    %5464 = vmatpush1.msra.mxu0 0.0
    %5465 = vmatprep.subr.mxu0 0.0
    %5466 = vmatpush1.msra.mxu0 0.0
    %5467 = vmatprep.subr.mxu0 0.0
    %5468 = vmatpush1.msra.mxu0 0.0
    %5469 = vmatprep.subr.mxu0 0.0
    %5470 = vmatpush1.msra.mxu0 0.0
    %5471 = vmatprep.subr.mxu0 0.0
    %5472 = vmatpush1.msra.mxu0 0.0
    %5473 = vmatprep.mubr.f32.mxu0 0.0
    %5474 = vmatmul.mubr.f32.gmra.mrb[0].mxu0 %v4667
    %v5475 = vpop.f32.mrb[0].mxu0
    %v5476 = vadd.f32 0.0, %v5475
    %v5477 = vpop.f32.mrb[0].mxu0
    %5478 = vdwg.mxu0
    %v5479 = vadd.f32 %v5241, %v5476
    %v5480 = vtanh.pop %v5479
    %v5481 = vld [vmem:[%s916] sm:$0xff]
    %v5482 = vld [vmem:[%s916 + $0x8] sm:$0xff]
    %v5483 = vld [vmem:[%s916 + $0x10] sm:$0xff]
    %v5484 = vld [vmem:[%s916 + $0x18] sm:$0xff]
    %5485 = vmatprep.subr.mxu0 0.0
    %5486 = vmatpush1.msra.mxu0 %v5481
    %5487 = vmatprep.subr.mxu0 0.0
    %5488 = vmatpush1.msra.mxu0 %v5482
    %5489 = vmatprep.subr.mxu0 0.0
    %5490 = vmatpush1.msra.mxu0 %v5483
    %5491 = vmatprep.subr.mxu0 0.0
    %5492 = vmatpush1.msra.mxu0 %v5484
    %5493 = vmatprep.subr.mxu0 0.0
    %5494 = vmatpush1.msra.mxu0 0.0
    %5495 = vmatprep.subr.mxu0 0.0
    %5496 = vmatpush1.msra.mxu0 0.0
    %5497 = vmatprep.subr.mxu0 0.0
    %5498 = vmatpush1.msra.mxu0 0.0
    %5499 = vmatprep.subr.mxu0 0.0
    %5500 = vmatpush1.msra.mxu0 0.0
    %5501 = vmatprep.subr.mxu0 0.0
    %5502 = vmatpush1.msra.mxu0 0.0
    %5503 = vmatprep.subr.mxu0 0.0
    %5504 = vmatpush1.msra.mxu0 0.0
    %5505 = vmatprep.subr.mxu0 0.0
    %5506 = vmatpush1.msra.mxu0 0.0
    %5507 = vmatprep.subr.mxu0 0.0
    %5508 = vmatpush1.msra.mxu0 0.0
    %5509 = vmatprep.subr.mxu0 0.0
    %5510 = vmatpush1.msra.mxu0 0.0
    %5511 = vmatprep.subr.mxu0 0.0
    %5512 = vmatpush1.msra.mxu0 0.0
    %5513 = vmatprep.subr.mxu0 0.0
    %5514 = vmatpush1.msra.mxu0 0.0
    %5515 = vmatprep.subr.mxu0 0.0
    %5516 = vmatpush1.msra.mxu0 0.0
    %5517 = vmatprep.subr.mxu0 0.0
    %5518 = vmatpush1.msra.mxu0 0.0
    %5519 = vmatprep.subr.mxu0 0.0
    %5520 = vmatpush1.msra.mxu0 0.0
    %5521 = vmatprep.subr.mxu0 0.0
    %5522 = vmatpush1.msra.mxu0 0.0
    %5523 = vmatprep.subr.mxu0 0.0
    %5524 = vmatpush1.msra.mxu0 0.0
    %5525 = vmatprep.subr.mxu0 0.0
    %5526 = vmatpush1.msra.mxu0 0.0
    %5527 = vmatprep.subr.mxu0 0.0
    %5528 = vmatpush1.msra.mxu0 0.0
    %5529 = vmatprep.subr.mxu0 0.0
    %5530 = vmatpush1.msra.mxu0 0.0
    %5531 = vmatprep.subr.mxu0 0.0
    %5532 = vmatpush1.msra.mxu0 0.0
    %5533 = vmatprep.subr.mxu0 0.0
    %5534 = vmatpush1.msra.mxu0 0.0
    %5535 = vmatprep.subr.mxu0 0.0
    %5536 = vmatpush1.msra.mxu0 0.0
    %5537 = vmatprep.subr.mxu0 0.0
    %5538 = vmatpush1.msra.mxu0 0.0
    %5539 = vmatprep.subr.mxu0 0.0
    %5540 = vmatpush1.msra.mxu0 0.0
    %5541 = vmatprep.subr.mxu0 0.0
    %5542 = vmatpush1.msra.mxu0 0.0
    %5543 = vmatprep.subr.mxu0 0.0
    %5544 = vmatpush1.msra.mxu0 0.0
    %5545 = vmatprep.subr.mxu0 0.0
    %5546 = vmatpush1.msra.mxu0 0.0
    %5547 = vmatprep.subr.mxu0 0.0
    %5548 = vmatpush1.msra.mxu0 0.0
    %5549 = vmatprep.mubr.f32.mxu0 0.0
    %5550 = vmatmul.mubr.f32.gmra.mrb[0].mxu0 %v4667
    %v5551 = vpop.f32.mrb[0].mxu0
    %v5552 = vadd.f32 0.0, %v5551
    %v5553 = vpop.f32.mrb[0].mxu0
    %5554 = vdwg.mxu0
    %v5555 = vadd.f32 %v5242, %v5552
    %v5556 = vxor.u32 %v5555, 2147483648
    %v5557 = vmul.f32 %v5556, 1.442695
    %v5558 = vpow.pop %v5557
    %v5559 = vadd.f32 %v5558, 1.0
    %v5560 = vrcp.pop %v5559
    %v5561 = vmul.f32 1.0, %v5560
    %v5562 = vmul.f32 %v5404, %v4652
    %v5563 = vmul.f32 %v5323, %v5480
    %v5564 = vadd.f32 %v5562, %v5563
    %v5565 = vtanh.pop %v5564
    %v5566 = vmul.f32 %v5561, %v5565
    %v5567 = vld [vmem:[#allocation7] sm:$0xff]
    %v5568 = vld [vmem:[#allocation7 + $0x8] sm:$0xff]
    %v5569 = vld [vmem:[#allocation7 + $0x10] sm:$0xff]
    %v5570 = vld [vmem:[#allocation7 + $0x18] sm:$0xff]
    %v5571 = vld [vmem:[#allocation8] sm:$0x1]
    %v5573 = vlaneseq
    %v5574 = vshrl.u32 %v5573, 7
    %v5575 = vsub.s32 0, %v5574
    %v5576 = vrot.slane %v5571, %v5575
    %v5579 = vsel %vm259, %v5566, 0
    %5581 = vmatprep.subr.mxu0 0.0
    %5582 = vmatpush1.msra.mxu0 %v5567
    %5583 = vmatprep.subr.mxu0 0.0
    %5584 = vmatpush1.msra.mxu0 %v5568
    %5585 = vmatprep.subr.mxu0 0.0
    %5586 = vmatpush1.msra.mxu0 %v5569
    %5587 = vmatprep.subr.mxu0 0.0
    %5588 = vmatpush1.msra.mxu0 %v5570
    %5589 = vmatprep.subr.mxu0 0.0
    %5590 = vmatpush1.msra.mxu0 0.0
    %5591 = vmatprep.subr.mxu0 0.0
    %5592 = vmatpush1.msra.mxu0 0.0
    %5593 = vmatprep.subr.mxu0 0.0
    %5594 = vmatpush1.msra.mxu0 0.0
    %5595 = vmatprep.subr.mxu0 0.0
    %5596 = vmatpush1.msra.mxu0 0.0
    %5597 = vmatprep.subr.mxu0 0.0
    %5598 = vmatpush1.msra.mxu0 0.0
    %5599 = vmatprep.subr.mxu0 0.0
    %5600 = vmatpush1.msra.mxu0 0.0
    %5601 = vmatprep.subr.mxu0 0.0
    %5602 = vmatpush1.msra.mxu0 0.0
    %5603 = vmatprep.subr.mxu0 0.0
    %5604 = vmatpush1.msra.mxu0 0.0
    %5605 = vmatprep.subr.mxu0 0.0
    %5606 = vmatpush1.msra.mxu0 0.0
    %5607 = vmatprep.subr.mxu0 0.0
    %5608 = vmatpush1.msra.mxu0 0.0
    %5609 = vmatprep.subr.mxu0 0.0
    %5610 = vmatpush1.msra.mxu0 0.0
    %5611 = vmatprep.subr.mxu0 0.0
    %5612 = vmatpush1.msra.mxu0 0.0
    %5613 = vmatprep.subr.mxu0 0.0
    %5614 = vmatpush1.msra.mxu0 0.0
    %5615 = vmatprep.subr.mxu0 0.0
    %5616 = vmatpush1.msra.mxu0 0.0
    %5617 = vmatprep.subr.mxu0 0.0
    %5618 = vmatpush1.msra.mxu0 0.0
    %5619 = vmatprep.subr.mxu0 0.0
    %5620 = vmatpush1.msra.mxu0 0.0
    %5621 = vmatprep.subr.mxu0 0.0
    %5622 = vmatpush1.msra.mxu0 0.0
    %5623 = vmatprep.subr.mxu0 0.0
    %5624 = vmatpush1.msra.mxu0 0.0
    %5625 = vmatprep.subr.mxu0 0.0
    %5626 = vmatpush1.msra.mxu0 0.0
    %5627 = vmatprep.subr.mxu0 0.0
    %5628 = vmatpush1.msra.mxu0 0.0
    %5629 = vmatprep.subr.mxu0 0.0
    %5630 = vmatpush1.msra.mxu0 0.0
    %5631 = vmatprep.subr.mxu0 0.0
    %5632 = vmatpush1.msra.mxu0 0.0
    %5633 = vmatprep.subr.mxu0 0.0
    %5634 = vmatpush1.msra.mxu0 0.0
    %5635 = vmatprep.subr.mxu0 0.0
    %5636 = vmatpush1.msra.mxu0 0.0
    %5637 = vmatprep.subr.mxu0 0.0
    %5638 = vmatpush1.msra.mxu0 0.0
    %5639 = vmatprep.subr.mxu0 0.0
    %5640 = vmatpush1.msra.mxu0 0.0
    %5641 = vmatprep.subr.mxu0 0.0
    %5642 = vmatpush1.msra.mxu0 0.0
    %5643 = vmatprep.subr.mxu0 0.0
    %5644 = vmatpush1.msra.mxu0 0.0
    %5645 = vmatprep.mubr.f32.mxu0 0.0
    %5646 = vmatmul.mubr.f32.gmra.mrb[0].mxu0 %v5579
    %v5647 = vpop.f32.mrb[0].mxu0
    %v5648 = vadd.f32 %v5576, %v5647
    %v5649 = vpop.f32.mrb[0].mxu0
    %5650 = vdwg.mxu0
    %v5652 = vsel %vm259, %v5648, 0
    %5654 = vmatprep.subr.mxu0 0.0
    %5655 = vmatpush1.msra.mxu0 %v339
    %5656 = vmatprep.subr.mxu0 0.0
    %5657 = vmatpush1.msra.mxu0 %v344
    %5658 = vmatprep.subr.mxu0 0.0
    %5659 = vmatpush1.msra.mxu0 %v349
    %5660 = vmatprep.subr.mxu0 0.0
    %5661 = vmatpush1.msra.mxu0 %v354
    %5662 = vmatprep.subr.mxu0 0.0
    %5663 = vmatpush1.msra.mxu0 0.0
    %5664 = vmatprep.subr.mxu0 0.0
    %5665 = vmatpush1.msra.mxu0 0.0
    %5666 = vmatprep.subr.mxu0 0.0
    %5667 = vmatpush1.msra.mxu0 0.0
    %5668 = vmatprep.subr.mxu0 0.0
    %5669 = vmatpush1.msra.mxu0 0.0
    %5670 = vmatprep.subr.mxu0 0.0
    %5671 = vmatpush1.msra.mxu0 0.0
    %5672 = vmatprep.subr.mxu0 0.0
    %5673 = vmatpush1.msra.mxu0 0.0
    %5674 = vmatprep.subr.mxu0 0.0
    %5675 = vmatpush1.msra.mxu0 0.0
    %5676 = vmatprep.subr.mxu0 0.0
    %5677 = vmatpush1.msra.mxu0 0.0
    %5678 = vmatprep.subr.mxu0 0.0
    %5679 = vmatpush1.msra.mxu0 0.0
    %5680 = vmatprep.subr.mxu0 0.0
    %5681 = vmatpush1.msra.mxu0 0.0
    %5682 = vmatprep.subr.mxu0 0.0
    %5683 = vmatpush1.msra.mxu0 0.0
    %5684 = vmatprep.subr.mxu0 0.0
    %5685 = vmatpush1.msra.mxu0 0.0
    %5686 = vmatprep.subr.mxu0 0.0
    %5687 = vmatpush1.msra.mxu0 0.0
    %5688 = vmatprep.subr.mxu0 0.0
    %5689 = vmatpush1.msra.mxu0 0.0
    %5690 = vmatprep.subr.mxu0 0.0
    %5691 = vmatpush1.msra.mxu0 0.0
    %5692 = vmatprep.subr.mxu0 0.0
    %5693 = vmatpush1.msra.mxu0 0.0
    %5694 = vmatprep.subr.mxu0 0.0
    %5695 = vmatpush1.msra.mxu0 0.0
    %5696 = vmatprep.subr.mxu0 0.0
    %5697 = vmatpush1.msra.mxu0 0.0
    %5698 = vmatprep.subr.mxu0 0.0
    %5699 = vmatpush1.msra.mxu0 0.0
    %5700 = vmatprep.subr.mxu0 0.0
    %5701 = vmatpush1.msra.mxu0 0.0
    %5702 = vmatprep.subr.mxu0 0.0
    %5703 = vmatpush1.msra.mxu0 0.0
    %5704 = vmatprep.subr.mxu0 0.0
    %5705 = vmatpush1.msra.mxu0 0.0
    %5706 = vmatprep.subr.mxu0 0.0
    %5707 = vmatpush1.msra.mxu0 0.0
    %5708 = vmatprep.subr.mxu0 0.0
    %5709 = vmatpush1.msra.mxu0 0.0
    %5710 = vmatprep.subr.mxu0 0.0
    %5711 = vmatpush1.msra.mxu0 0.0
    %5712 = vmatprep.subr.mxu0 0.0
    %5713 = vmatpush1.msra.mxu0 0.0
    %5714 = vmatprep.subr.mxu0 0.0
    %5715 = vmatpush1.msra.mxu0 0.0
    %5716 = vmatprep.subr.mxu0 0.0
    %5717 = vmatpush1.msra.mxu0 0.0
    %5718 = vmatprep.mubr.f32.mxu0 0.0
    %5719 = vmatmul.mubr.f32.gmra.mrb[0].mxu0 %v5652
    %v5720 = vpop.f32.mrb[0].mxu0
    %v5721 = vadd.f32 %v665, %v5720
    %v5722 = vpop.f32.mrb[0].mxu0
    %5723 = vdwg.mxu0
    %v5724 = vsel %vm1160, %v5721, -inf
    %5725 = vmax.xlane.f32.xlu0 %v5724
    %v5726 = vpop.xlane.xlu0 %5725
    %v5727 = vsub.f32 %v5721, %v5726
    %v5728 = vmul.f32 %v5727, 1.442695
    %v5729 = vpow.pop %v5728
    %v5730 = vsel %vm1160, %v5729, 0.0
    %5731 = vadd.xlane.f32.xlu0 %v5730
    %v5732 = vpop.xlane.xlu0 %5731
    %v5733 = vrcp.pop %v5732
    %v5734 = vmul.f32 %v5729, %v5733
    %v5736 = vsel %vm1172, %v5734, 0
    %5738 = vmatprep.subr.mxu0 0.0
    %5739 = vmatpush1.msra.mxu0 %v443
    %5740 = vmatprep.subr.mxu0 0.0
    %5741 = vmatpush1.msra.mxu0 %v448
    %5742 = vmatprep.subr.mxu0 0.0
    %5743 = vmatpush1.msra.mxu0 0.0
    %5744 = vmatprep.subr.mxu0 0.0
    %5745 = vmatpush1.msra.mxu0 0.0
    %5746 = vmatprep.subr.mxu0 0.0
    %5747 = vmatpush1.msra.mxu0 0.0
    %5748 = vmatprep.subr.mxu0 0.0
    %5749 = vmatpush1.msra.mxu0 0.0
    %5750 = vmatprep.subr.mxu0 0.0
    %5751 = vmatpush1.msra.mxu0 0.0
    %5752 = vmatprep.subr.mxu0 0.0
    %5753 = vmatpush1.msra.mxu0 0.0
    %5754 = vmatprep.subr.mxu0 0.0
    %5755 = vmatpush1.msra.mxu0 0.0
    %5756 = vmatprep.subr.mxu0 0.0
    %5757 = vmatpush1.msra.mxu0 0.0
    %5758 = vmatprep.subr.mxu0 0.0
    %5759 = vmatpush1.msra.mxu0 0.0
    %5760 = vmatprep.subr.mxu0 0.0
    %5761 = vmatpush1.msra.mxu0 0.0
    %5762 = vmatprep.subr.mxu0 0.0
    %5763 = vmatpush1.msra.mxu0 0.0
    %5764 = vmatprep.subr.mxu0 0.0
    %5765 = vmatpush1.msra.mxu0 0.0
    %5766 = vmatprep.subr.mxu0 0.0
    %5767 = vmatpush1.msra.mxu0 0.0
    %5768 = vmatprep.subr.mxu0 0.0
    %5769 = vmatpush1.msra.mxu0 0.0
    %5770 = vmatprep.subr.mxu0 0.0
    %5771 = vmatpush1.msra.mxu0 0.0
    %5772 = vmatprep.subr.mxu0 0.0
    %5773 = vmatpush1.msra.mxu0 0.0
    %5774 = vmatprep.subr.mxu0 0.0
    %5775 = vmatpush1.msra.mxu0 0.0
    %5776 = vmatprep.subr.mxu0 0.0
    %5777 = vmatpush1.msra.mxu0 0.0
    %5778 = vmatprep.subr.mxu0 0.0
    %5779 = vmatpush1.msra.mxu0 0.0
    %5780 = vmatprep.subr.mxu0 0.0
    %5781 = vmatpush1.msra.mxu0 0.0
    %5782 = vmatprep.subr.mxu0 0.0
    %5783 = vmatpush1.msra.mxu0 0.0
    %5784 = vmatprep.subr.mxu0 0.0
    %5785 = vmatpush1.msra.mxu0 0.0
    %5786 = vmatprep.subr.mxu0 0.0
    %5787 = vmatpush1.msra.mxu0 0.0
    %5788 = vmatprep.subr.mxu0 0.0
    %5789 = vmatpush1.msra.mxu0 0.0
    %5790 = vmatprep.subr.mxu0 0.0
    %5791 = vmatpush1.msra.mxu0 0.0
    %5792 = vmatprep.subr.mxu0 0.0
    %5793 = vmatpush1.msra.mxu0 0.0
    %5794 = vmatprep.subr.mxu0 0.0
    %5795 = vmatpush1.msra.mxu0 0.0
    %5796 = vmatprep.subr.mxu0 0.0
    %5797 = vmatpush1.msra.mxu0 0.0
    %5798 = vmatprep.subr.mxu0 0.0
    %5799 = vmatpush1.msra.mxu0 0.0
    %5800 = vmatprep.subr.mxu0 0.0
    %5801 = vmatpush1.msra.mxu0 0.0
    %5802 = vmatprep.mubr.f32.mxu0 0.0
    %5803 = vmatmul.mubr.f32.gmra.mrb[0].mxu0 %v5736
    %v5804 = vpop.f32.mrb[0].mxu0
    %v5805 = vadd.f32 0.0, %v5804
    %v5806 = vpop.f32.mrb[0].mxu0
    %5807 = vdwg.mxu0
    %5808 = vrot.lane.b32.xlu0 %v5648, 96
    %v5809 = vpop.permute.xlu0 %5808
    %v5810 = vsel %vm259, %v5809, 0
    %5812 = vmatprep.subr.mxu0 0.0
    %5813 = vmatpush1.msra.mxu0 %v562
    %5814 = vmatprep.subr.mxu0 0.0
    %5815 = vmatpush1.msra.mxu0 %v567
    %5816 = vmatprep.subr.mxu0 0.0
    %5817 = vmatpush1.msra.mxu0 %v572
    %5818 = vmatprep.subr.mxu0 0.0
    %5819 = vmatpush1.msra.mxu0 %v577
    %5820 = vmatprep.subr.mxu0 0.0
    %5821 = vmatpush1.msra.mxu0 0.0
    %5822 = vmatprep.subr.mxu0 0.0
    %5823 = vmatpush1.msra.mxu0 0.0
    %5824 = vmatprep.subr.mxu0 0.0
    %5825 = vmatpush1.msra.mxu0 0.0
    %5826 = vmatprep.subr.mxu0 0.0
    %5827 = vmatpush1.msra.mxu0 0.0
    %5828 = vmatprep.subr.mxu0 0.0
    %5829 = vmatpush1.msra.mxu0 0.0
    %5830 = vmatprep.subr.mxu0 0.0
    %5831 = vmatpush1.msra.mxu0 0.0
    %5832 = vmatprep.subr.mxu0 0.0
    %5833 = vmatpush1.msra.mxu0 0.0
    %5834 = vmatprep.subr.mxu0 0.0
    %5835 = vmatpush1.msra.mxu0 0.0
    %5836 = vmatprep.subr.mxu0 0.0
    %5837 = vmatpush1.msra.mxu0 0.0
    %5838 = vmatprep.subr.mxu0 0.0
    %5839 = vmatpush1.msra.mxu0 0.0
    %5840 = vmatprep.subr.mxu0 0.0
    %5841 = vmatpush1.msra.mxu0 0.0
    %5842 = vmatprep.subr.mxu0 0.0
    %5843 = vmatpush1.msra.mxu0 0.0
    %5844 = vmatprep.subr.mxu0 0.0
    %5845 = vmatpush1.msra.mxu0 0.0
    %5846 = vmatprep.subr.mxu0 0.0
    %5847 = vmatpush1.msra.mxu0 0.0
    %5848 = vmatprep.subr.mxu0 0.0
    %5849 = vmatpush1.msra.mxu0 0.0
    %5850 = vmatprep.subr.mxu0 0.0
    %5851 = vmatpush1.msra.mxu0 0.0
    %5852 = vmatprep.subr.mxu0 0.0
    %5853 = vmatpush1.msra.mxu0 0.0
    %5854 = vmatprep.subr.mxu0 0.0
    %5855 = vmatpush1.msra.mxu0 0.0
    %5856 = vmatprep.subr.mxu0 0.0
    %5857 = vmatpush1.msra.mxu0 0.0
    %5858 = vmatprep.subr.mxu0 0.0
    %5859 = vmatpush1.msra.mxu0 0.0
    %5860 = vmatprep.subr.mxu0 0.0
    %5861 = vmatpush1.msra.mxu0 0.0
    %5862 = vmatprep.subr.mxu0 0.0
    %5863 = vmatpush1.msra.mxu0 0.0
    %5864 = vmatprep.subr.mxu0 0.0
    %5865 = vmatpush1.msra.mxu0 0.0
    %5866 = vmatprep.subr.mxu0 0.0
    %5867 = vmatpush1.msra.mxu0 0.0
    %5868 = vmatprep.subr.mxu0 0.0
    %5869 = vmatpush1.msra.mxu0 0.0
    %5870 = vmatprep.subr.mxu0 0.0
    %5871 = vmatpush1.msra.mxu0 0.0
    %5872 = vmatprep.subr.mxu0 0.0
    %5873 = vmatpush1.msra.mxu0 0.0
    %5874 = vmatprep.subr.mxu0 0.0
    %5875 = vmatpush1.msra.mxu0 0.0
    %5876 = vmatprep.mubr.f32.mxu0 0.0
    %5877 = vmatmul.mubr.f32.gmra.mrb[0].mxu0 %v5810
    %v5878 = vpop.f32.mrb[0].mxu0
    %v5879 = vadd.f32 %v666, %v5878
    %v5880 = vpop.f32.mrb[0].mxu0
    %5881 = vdwg.mxu0
    %v5882 = vsel %vm1320, %v5879, -inf
    %5883 = vmax.xlane.f32.xlu0 %v5882
    %v5884 = vpop.xlane.xlu0 %5883
    %v5885 = vsub.f32 %v5879, %v5884
    %v5886 = vmul.f32 %v5885, 1.442695
    %v5887 = vpow.pop %v5886
    %v5888 = vsel %vm1320, %v5887, 0.0
    %5889 = vadd.xlane.f32.xlu0 %v5888
    %v5890 = vpop.xlane.xlu0 %5889
    %v5891 = vrcp.pop %v5890
    %v5892 = vmul.f32 %v5887, %v5891
    %v5894 = vsel %vm1332, %v5892, 0
    %5896 = vmatprep.subr.mxu0 0.0
    %5897 = vmatpush1.msra.mxu0 %v662
    %5898 = vmatprep.subr.mxu0 0.0
    %5899 = vmatpush1.msra.mxu0 0.0
    %5900 = vmatprep.subr.mxu0 0.0
    %5901 = vmatpush1.msra.mxu0 0.0
    %5902 = vmatprep.subr.mxu0 0.0
    %5903 = vmatpush1.msra.mxu0 0.0
    %5904 = vmatprep.subr.mxu0 0.0
    %5905 = vmatpush1.msra.mxu0 0.0
    %5906 = vmatprep.subr.mxu0 0.0
    %5907 = vmatpush1.msra.mxu0 0.0
    %5908 = vmatprep.subr.mxu0 0.0
    %5909 = vmatpush1.msra.mxu0 0.0
    %5910 = vmatprep.subr.mxu0 0.0
    %5911 = vmatpush1.msra.mxu0 0.0
    %5912 = vmatprep.subr.mxu0 0.0
    %5913 = vmatpush1.msra.mxu0 0.0
    %5914 = vmatprep.subr.mxu0 0.0
    %5915 = vmatpush1.msra.mxu0 0.0
    %5916 = vmatprep.subr.mxu0 0.0
    %5917 = vmatpush1.msra.mxu0 0.0
    %5918 = vmatprep.subr.mxu0 0.0
    %5919 = vmatpush1.msra.mxu0 0.0
    %5920 = vmatprep.subr.mxu0 0.0
    %5921 = vmatpush1.msra.mxu0 0.0
    %5922 = vmatprep.subr.mxu0 0.0
    %5923 = vmatpush1.msra.mxu0 0.0
    %5924 = vmatprep.subr.mxu0 0.0
    %5925 = vmatpush1.msra.mxu0 0.0
    %5926 = vmatprep.subr.mxu0 0.0
    %5927 = vmatpush1.msra.mxu0 0.0
    %5928 = vmatprep.subr.mxu0 0.0
    %5929 = vmatpush1.msra.mxu0 0.0
    %5930 = vmatprep.subr.mxu0 0.0
    %5931 = vmatpush1.msra.mxu0 0.0
    %5932 = vmatprep.subr.mxu0 0.0
    %5933 = vmatpush1.msra.mxu0 0.0
    %5934 = vmatprep.subr.mxu0 0.0
    %5935 = vmatpush1.msra.mxu0 0.0
    %5936 = vmatprep.subr.mxu0 0.0
    %5937 = vmatpush1.msra.mxu0 0.0
    %5938 = vmatprep.subr.mxu0 0.0
    %5939 = vmatpush1.msra.mxu0 0.0
    %5940 = vmatprep.subr.mxu0 0.0
    %5941 = vmatpush1.msra.mxu0 0.0
    %5942 = vmatprep.subr.mxu0 0.0
    %5943 = vmatpush1.msra.mxu0 0.0
    %5944 = vmatprep.subr.mxu0 0.0
    %5945 = vmatpush1.msra.mxu0 0.0
    %5946 = vmatprep.subr.mxu0 0.0
    %5947 = vmatpush1.msra.mxu0 0.0
    %5948 = vmatprep.subr.mxu0 0.0
    %5949 = vmatpush1.msra.mxu0 0.0
    %5950 = vmatprep.subr.mxu0 0.0
    %5951 = vmatpush1.msra.mxu0 0.0
    %5952 = vmatprep.subr.mxu0 0.0
    %5953 = vmatpush1.msra.mxu0 0.0
    %5954 = vmatprep.subr.mxu0 0.0
    %5955 = vmatpush1.msra.mxu0 0.0
    %5956 = vmatprep.subr.mxu0 0.0
    %5957 = vmatpush1.msra.mxu0 0.0
    %5958 = vmatprep.subr.mxu0 0.0
    %5959 = vmatpush1.msra.mxu0 0.0
    %5960 = vmatprep.mubr.f32.mxu0 0.0
    %5961 = vmatmul.mubr.f32.gmra.mrb[0].mxu0 %v5894
    %v5962 = vpop.f32.mrb[0].mxu0
    %v5963 = vadd.f32 0.0, %v5962
    %v5964 = vpop.f32.mrb[0].mxu0
    %5965 = vdwg.mxu0
    %5967 = vrot.lane.b32.xlu0 %v5963, 32
    %v5968 = vpop.permute.xlu0 %5967
    %v5970 = vsel %vm259, %v5805, %v5968
    %v5971 = vld [vmem:[%s20] sm:$0xff]
    %v5972 = vld [vmem:[%s20 + $0x8] sm:$0xff]
    %v5973 = vld [vmem:[%s20 + $0x10] sm:$0xff]
    %v5974 = vld [vmem:[%s20 + $0x18] sm:$0xff]
    %v5975 = vld [vmem:[%s20 + $0x20] sm:$0xff]
    %v5976 = vld [vmem:[%s20 + $0x28] sm:$0xff]
    %v5977 = vld [vmem:[%s20 + $0x30] sm:$0xff]
    %v5978 = vld [vmem:[%s20 + $0x38] sm:$0xff]
    %v5979 = vld [vmem:[%s21] sm:$0x1]
    %v5981 = vlaneseq
    %v5982 = vshrl.u32 %v5981, 7
    %v5983 = vsub.s32 0, %v5982
    %v5984 = vrot.slane %v5979, %v5983
    %v5987 = vsel %vm1426, %v5970, 0
    %5989 = vmatprep.subr.mxu0 0.0
    %5990 = vmatpush1.msra.mxu0 %v5971
    %5991 = vmatprep.subr.mxu0 0.0
    %5992 = vmatpush1.msra.mxu0 %v5972
    %5993 = vmatprep.subr.mxu0 0.0
    %5994 = vmatpush1.msra.mxu0 %v5973
    %5995 = vmatprep.subr.mxu0 0.0
    %5996 = vmatpush1.msra.mxu0 %v5974
    %5997 = vmatprep.subr.mxu0 0.0
    %5998 = vmatpush1.msra.mxu0 %v5975
    %5999 = vmatprep.subr.mxu0 0.0
    %6000 = vmatpush1.msra.mxu0 %v5976
    %6001 = vmatprep.subr.mxu0 0.0
    %6002 = vmatpush1.msra.mxu0 %v5977
    %6003 = vmatprep.subr.mxu0 0.0
    %6004 = vmatpush1.msra.mxu0 %v5978
    %6005 = vmatprep.subr.mxu0 0.0
    %6006 = vmatpush1.msra.mxu0 0.0
    %6007 = vmatprep.subr.mxu0 0.0
    %6008 = vmatpush1.msra.mxu0 0.0
    %6009 = vmatprep.subr.mxu0 0.0
    %6010 = vmatpush1.msra.mxu0 0.0
    %6011 = vmatprep.subr.mxu0 0.0
    %6012 = vmatpush1.msra.mxu0 0.0
    %6013 = vmatprep.subr.mxu0 0.0
    %6014 = vmatpush1.msra.mxu0 0.0
    %6015 = vmatprep.subr.mxu0 0.0
    %6016 = vmatpush1.msra.mxu0 0.0
    %6017 = vmatprep.subr.mxu0 0.0
    %6018 = vmatpush1.msra.mxu0 0.0
    %6019 = vmatprep.subr.mxu0 0.0
    %6020 = vmatpush1.msra.mxu0 0.0
    %6021 = vmatprep.subr.mxu0 0.0
    %6022 = vmatpush1.msra.mxu0 0.0
    %6023 = vmatprep.subr.mxu0 0.0
    %6024 = vmatpush1.msra.mxu0 0.0
    %6025 = vmatprep.subr.mxu0 0.0
    %6026 = vmatpush1.msra.mxu0 0.0
    %6027 = vmatprep.subr.mxu0 0.0
    %6028 = vmatpush1.msra.mxu0 0.0
    %6029 = vmatprep.subr.mxu0 0.0
    %6030 = vmatpush1.msra.mxu0 0.0
    %6031 = vmatprep.subr.mxu0 0.0
    %6032 = vmatpush1.msra.mxu0 0.0
    %6033 = vmatprep.subr.mxu0 0.0
    %6034 = vmatpush1.msra.mxu0 0.0
    %6035 = vmatprep.subr.mxu0 0.0
    %6036 = vmatpush1.msra.mxu0 0.0
    %6037 = vmatprep.subr.mxu0 0.0
    %6038 = vmatpush1.msra.mxu0 0.0
    %6039 = vmatprep.subr.mxu0 0.0
    %6040 = vmatpush1.msra.mxu0 0.0
    %6041 = vmatprep.subr.mxu0 0.0
    %6042 = vmatpush1.msra.mxu0 0.0
    %6043 = vmatprep.subr.mxu0 0.0
    %6044 = vmatpush1.msra.mxu0 0.0
    %6045 = vmatprep.subr.mxu0 0.0
    %6046 = vmatpush1.msra.mxu0 0.0
    %6047 = vmatprep.subr.mxu0 0.0
    %6048 = vmatpush1.msra.mxu0 0.0
    %6049 = vmatprep.subr.mxu0 0.0
    %6050 = vmatpush1.msra.mxu0 0.0
    %6051 = vmatprep.subr.mxu0 0.0
    %6052 = vmatpush1.msra.mxu0 0.0
    %6053 = vmatprep.mubr.f32.mxu0 0.0
    %6054 = vmatmul.mubr.f32.gmra.mrb[0].mxu0 %v5987
    %v6055 = vpop.f32.mrb[0].mxu0
    %v6056 = vadd.f32 %v5984, %v6055
    %v6057 = vpop.f32.mrb[0].mxu0
    %6058 = vdwg.mxu0
    %v6059 = vmax.f32 %v6056, 0.0
    %v6060 = vld [vmem:[%s22] sm:$0xff]
    %v6061 = vld [vmem:[%s22 + $0x8] sm:$0xff]
    %v6062 = vld [vmem:[%s22 + $0x10] sm:$0xff]
    %v6063 = vld [vmem:[%s22 + $0x18] sm:$0xff]
    %v6064 = vld [vmem:[%s22 + $0x20] sm:$0xff]
    %v6065 = vld [vmem:[%s22 + $0x28] sm:$0xff]
    %v6066 = vld [vmem:[%s22 + $0x30] sm:$0xff]
    %v6067 = vld [vmem:[%s22 + $0x38] sm:$0xff]
    %v6068 = vld [vmem:[%s23] sm:$0x1]
    %v6070 = vlaneseq
    %v6071 = vshrl.u32 %v6070, 7
    %v6072 = vsub.s32 0, %v6071
    %v6073 = vrot.slane %v6068, %v6072
    %v6076 = vsel %vm1426, %v6059, 0
    %6078 = vmatprep.subr.mxu0 0.0
    %6079 = vmatpush1.msra.mxu0 %v6060
    %6080 = vmatprep.subr.mxu0 0.0
    %6081 = vmatpush1.msra.mxu0 %v6061
    %6082 = vmatprep.subr.mxu0 0.0
    %6083 = vmatpush1.msra.mxu0 %v6062
    %6084 = vmatprep.subr.mxu0 0.0
    %6085 = vmatpush1.msra.mxu0 %v6063
    %6086 = vmatprep.subr.mxu0 0.0
    %6087 = vmatpush1.msra.mxu0 %v6064
    %6088 = vmatprep.subr.mxu0 0.0
    %6089 = vmatpush1.msra.mxu0 %v6065
    %6090 = vmatprep.subr.mxu0 0.0
    %6091 = vmatpush1.msra.mxu0 %v6066
    %6092 = vmatprep.subr.mxu0 0.0
    %6093 = vmatpush1.msra.mxu0 %v6067
    %6094 = vmatprep.subr.mxu0 0.0
    %6095 = vmatpush1.msra.mxu0 0.0
    %6096 = vmatprep.subr.mxu0 0.0
    %6097 = vmatpush1.msra.mxu0 0.0
    %6098 = vmatprep.subr.mxu0 0.0
    %6099 = vmatpush1.msra.mxu0 0.0
    %6100 = vmatprep.subr.mxu0 0.0
    %6101 = vmatpush1.msra.mxu0 0.0
    %6102 = vmatprep.subr.mxu0 0.0
    %6103 = vmatpush1.msra.mxu0 0.0
    %6104 = vmatprep.subr.mxu0 0.0
    %6105 = vmatpush1.msra.mxu0 0.0
    %6106 = vmatprep.subr.mxu0 0.0
    %6107 = vmatpush1.msra.mxu0 0.0
    %6108 = vmatprep.subr.mxu0 0.0
    %6109 = vmatpush1.msra.mxu0 0.0
    %6110 = vmatprep.subr.mxu0 0.0
    %6111 = vmatpush1.msra.mxu0 0.0
    %6112 = vmatprep.subr.mxu0 0.0
    %6113 = vmatpush1.msra.mxu0 0.0
    %6114 = vmatprep.subr.mxu0 0.0
    %6115 = vmatpush1.msra.mxu0 0.0
    %6116 = vmatprep.subr.mxu0 0.0
    %6117 = vmatpush1.msra.mxu0 0.0
    %6118 = vmatprep.subr.mxu0 0.0
    %6119 = vmatpush1.msra.mxu0 0.0
    %6120 = vmatprep.subr.mxu0 0.0
    %6121 = vmatpush1.msra.mxu0 0.0
    %6122 = vmatprep.subr.mxu0 0.0
    %6123 = vmatpush1.msra.mxu0 0.0
    %6124 = vmatprep.subr.mxu0 0.0
    %6125 = vmatpush1.msra.mxu0 0.0
    %6126 = vmatprep.subr.mxu0 0.0
    %6127 = vmatpush1.msra.mxu0 0.0
    %6128 = vmatprep.subr.mxu0 0.0
    %6129 = vmatpush1.msra.mxu0 0.0
    %6130 = vmatprep.subr.mxu0 0.0
    %6131 = vmatpush1.msra.mxu0 0.0
    %6132 = vmatprep.subr.mxu0 0.0
    %6133 = vmatpush1.msra.mxu0 0.0
    %6134 = vmatprep.subr.mxu0 0.0
    %6135 = vmatpush1.msra.mxu0 0.0
    %6136 = vmatprep.subr.mxu0 0.0
    %6137 = vmatpush1.msra.mxu0 0.0
    %6138 = vmatprep.subr.mxu0 0.0
    %6139 = vmatpush1.msra.mxu0 0.0
    %6140 = vmatprep.subr.mxu0 0.0
    %6141 = vmatpush1.msra.mxu0 0.0
    %6142 = vmatprep.mubr.f32.mxu0 0.0
    %6143 = vmatmul.mubr.f32.gmra.mrb[0].mxu0 %v6076
    %v6144 = vpop.f32.mrb[0].mxu0
    %v6145 = vadd.f32 %v6073, %v6144
    %v6146 = vpop.f32.mrb[0].mxu0
    %6147 = vdwg.mxu0
    %s6148 = scalar_lea.vmem [#allocation22], 10
    %6149 = vst.msk [vmem:[%s6148] sm:$0x3] %vm1160, %v6145
    %s6150 = scalar_lea.vmem %s0, 48
    %v6151 = vld [vmem:[%s6150] sm:$0x3]
    %v6152 = vld [vmem:[%s6150 + $0x2] sm:$0x3]
    %v6153 = vld [vmem:[%s6150 + $0x4] sm:$0x3]
    %v6154 = vld [vmem:[%s6150 + $0x6] sm:$0x3]
    %v6155 = vld [vmem:[%s3] sm:$0xff]
    %v6156 = vld [vmem:[%s3 + $0x8] sm:$0xff]
    %v6157 = vld [vmem:[%s3 + $0x10] sm:$0xff]
    %v6158 = vld [vmem:[%s3 + $0x18] sm:$0xff]
    %6159 = vmatprep.subr.mxu0 0.0
    %6160 = vmatpush1.msra.mxu0 %v6155
    %6161 = vmatprep.subr.mxu0 0.0
    %6162 = vmatpush1.msra.mxu0 %v6156
    %6163 = vmatprep.subr.mxu0 0.0
    %6164 = vmatpush1.msra.mxu0 %v6157
    %6165 = vmatprep.subr.mxu0 0.0
    %6166 = vmatpush1.msra.mxu0 %v6158
    %6167 = vmatprep.subr.mxu0 0.0
    %6168 = vmatpush1.msra.mxu0 0.0
    %6169 = vmatprep.subr.mxu0 0.0
    %6170 = vmatpush1.msra.mxu0 0.0
    %6171 = vmatprep.subr.mxu0 0.0
    %6172 = vmatpush1.msra.mxu0 0.0
    %6173 = vmatprep.subr.mxu0 0.0
    %6174 = vmatpush1.msra.mxu0 0.0
    %6175 = vmatprep.subr.mxu0 0.0
    %6176 = vmatpush1.msra.mxu0 0.0
    %6177 = vmatprep.subr.mxu0 0.0
    %6178 = vmatpush1.msra.mxu0 0.0
    %6179 = vmatprep.subr.mxu0 0.0
    %6180 = vmatpush1.msra.mxu0 0.0
    %6181 = vmatprep.subr.mxu0 0.0
    %6182 = vmatpush1.msra.mxu0 0.0
    %6183 = vmatprep.subr.mxu0 0.0
    %6184 = vmatpush1.msra.mxu0 0.0
    %6185 = vmatprep.subr.mxu0 0.0
    %6186 = vmatpush1.msra.mxu0 0.0
    %6187 = vmatprep.subr.mxu0 0.0
    %6188 = vmatpush1.msra.mxu0 0.0
    %6189 = vmatprep.subr.mxu0 0.0
    %6190 = vmatpush1.msra.mxu0 0.0
    %6191 = vmatprep.subr.mxu0 0.0
    %6192 = vmatpush1.msra.mxu0 0.0
    %6193 = vmatprep.subr.mxu0 0.0
    %6194 = vmatpush1.msra.mxu0 0.0
    %6195 = vmatprep.subr.mxu0 0.0
    %6196 = vmatpush1.msra.mxu0 0.0
    %6197 = vmatprep.subr.mxu0 0.0
    %6198 = vmatpush1.msra.mxu0 0.0
    %6199 = vmatprep.subr.mxu0 0.0
    %6200 = vmatpush1.msra.mxu0 0.0
    %6201 = vmatprep.subr.mxu0 0.0
    %6202 = vmatpush1.msra.mxu0 0.0
    %6203 = vmatprep.subr.mxu0 0.0
    %6204 = vmatpush1.msra.mxu0 0.0
    %6205 = vmatprep.subr.mxu0 0.0
    %6206 = vmatpush1.msra.mxu0 0.0
    %6207 = vmatprep.subr.mxu0 0.0
    %6208 = vmatpush1.msra.mxu0 0.0
    %6209 = vmatprep.subr.mxu0 0.0
    %6210 = vmatpush1.msra.mxu0 0.0
    %6211 = vmatprep.subr.mxu0 0.0
    %6212 = vmatpush1.msra.mxu0 0.0
    %6213 = vmatprep.subr.mxu0 0.0
    %6214 = vmatpush1.msra.mxu0 0.0
    %6215 = vmatprep.subr.mxu0 0.0
    %6216 = vmatpush1.msra.mxu0 0.0
    %6217 = vmatprep.subr.mxu0 0.0
    %6218 = vmatpush1.msra.mxu0 0.0
    %6219 = vmatprep.subr.mxu0 0.0
    %6220 = vmatpush1.msra.mxu0 0.0
    %6221 = vmatprep.subr.mxu0 0.0
    %6222 = vmatpush1.msra.mxu0 0.0
    %6223 = vmatprep.mubr.f32.mxu0 0.0
    %6224 = vmatmul.mubr.f32.gmra.mrb[0].mxu0 %v5579
    %v6225 = vpop.f32.mrb[0].mxu0
    %v6226 = vadd.f32 0.0, %v6225
    %v6227 = vpop.f32.mrb[0].mxu0
    %6228 = vdwg.mxu0
    %v6229 = vadd.f32 %v6151, %v6226
    %v6230 = vxor.u32 %v6229, 2147483648
    %v6231 = vmul.f32 %v6230, 1.442695
    %v6232 = vpow.pop %v6231
    %v6233 = vadd.f32 %v6232, 1.0
    %v6234 = vrcp.pop %v6233
    %v6235 = vmul.f32 1.0, %v6234
    %v6236 = vld [vmem:[%s757] sm:$0xff]
    %v6237 = vld [vmem:[%s757 + $0x8] sm:$0xff]
    %v6238 = vld [vmem:[%s757 + $0x10] sm:$0xff]
    %v6239 = vld [vmem:[%s757 + $0x18] sm:$0xff]
    %6240 = vmatprep.subr.mxu0 0.0
    %6241 = vmatpush1.msra.mxu0 %v6236
    %6242 = vmatprep.subr.mxu0 0.0
    %6243 = vmatpush1.msra.mxu0 %v6237
    %6244 = vmatprep.subr.mxu0 0.0
    %6245 = vmatpush1.msra.mxu0 %v6238
    %6246 = vmatprep.subr.mxu0 0.0
    %6247 = vmatpush1.msra.mxu0 %v6239
    %6248 = vmatprep.subr.mxu0 0.0
    %6249 = vmatpush1.msra.mxu0 0.0
    %6250 = vmatprep.subr.mxu0 0.0
    %6251 = vmatpush1.msra.mxu0 0.0
    %6252 = vmatprep.subr.mxu0 0.0
    %6253 = vmatpush1.msra.mxu0 0.0
    %6254 = vmatprep.subr.mxu0 0.0
    %6255 = vmatpush1.msra.mxu0 0.0
    %6256 = vmatprep.subr.mxu0 0.0
    %6257 = vmatpush1.msra.mxu0 0.0
    %6258 = vmatprep.subr.mxu0 0.0
    %6259 = vmatpush1.msra.mxu0 0.0
    %6260 = vmatprep.subr.mxu0 0.0
    %6261 = vmatpush1.msra.mxu0 0.0
    %6262 = vmatprep.subr.mxu0 0.0
    %6263 = vmatpush1.msra.mxu0 0.0
    %6264 = vmatprep.subr.mxu0 0.0
    %6265 = vmatpush1.msra.mxu0 0.0
    %6266 = vmatprep.subr.mxu0 0.0
    %6267 = vmatpush1.msra.mxu0 0.0
    %6268 = vmatprep.subr.mxu0 0.0
    %6269 = vmatpush1.msra.mxu0 0.0
    %6270 = vmatprep.subr.mxu0 0.0
    %6271 = vmatpush1.msra.mxu0 0.0
    %6272 = vmatprep.subr.mxu0 0.0
    %6273 = vmatpush1.msra.mxu0 0.0
    %6274 = vmatprep.subr.mxu0 0.0
    %6275 = vmatpush1.msra.mxu0 0.0
    %6276 = vmatprep.subr.mxu0 0.0
    %6277 = vmatpush1.msra.mxu0 0.0
    %6278 = vmatprep.subr.mxu0 0.0
    %6279 = vmatpush1.msra.mxu0 0.0
    %6280 = vmatprep.subr.mxu0 0.0
    %6281 = vmatpush1.msra.mxu0 0.0
    %6282 = vmatprep.subr.mxu0 0.0
    %6283 = vmatpush1.msra.mxu0 0.0
    %6284 = vmatprep.subr.mxu0 0.0
    %6285 = vmatpush1.msra.mxu0 0.0
    %6286 = vmatprep.subr.mxu0 0.0
    %6287 = vmatpush1.msra.mxu0 0.0
    %6288 = vmatprep.subr.mxu0 0.0
    %6289 = vmatpush1.msra.mxu0 0.0
    %6290 = vmatprep.subr.mxu0 0.0
    %6291 = vmatpush1.msra.mxu0 0.0
    %6292 = vmatprep.subr.mxu0 0.0
    %6293 = vmatpush1.msra.mxu0 0.0
    %6294 = vmatprep.subr.mxu0 0.0
    %6295 = vmatpush1.msra.mxu0 0.0
    %6296 = vmatprep.subr.mxu0 0.0
    %6297 = vmatpush1.msra.mxu0 0.0
    %6298 = vmatprep.subr.mxu0 0.0
    %6299 = vmatpush1.msra.mxu0 0.0
    %6300 = vmatprep.subr.mxu0 0.0
    %6301 = vmatpush1.msra.mxu0 0.0
    %6302 = vmatprep.subr.mxu0 0.0
    %6303 = vmatpush1.msra.mxu0 0.0
    %6304 = vmatprep.mubr.f32.mxu0 0.0
    %6305 = vmatmul.mubr.f32.gmra.mrb[0].mxu0 %v5579
    %v6306 = vpop.f32.mrb[0].mxu0
    %v6307 = vadd.f32 0.0, %v6306
    %v6308 = vpop.f32.mrb[0].mxu0
    %6309 = vdwg.mxu0
    %v6310 = vadd.f32 %v6152, %v6307
    %v6311 = vxor.u32 %v6310, 2147483648
    %v6312 = vmul.f32 %v6311, 1.442695
    %v6313 = vpow.pop %v6312
    %v6314 = vadd.f32 %v6313, 1.0
    %v6315 = vrcp.pop %v6314
    %v6316 = vmul.f32 1.0, %v6315
    %v6317 = vld [vmem:[%s839] sm:$0xff]
    %v6318 = vld [vmem:[%s839 + $0x8] sm:$0xff]
    %v6319 = vld [vmem:[%s839 + $0x10] sm:$0xff]
    %v6320 = vld [vmem:[%s839 + $0x18] sm:$0xff]
    %6321 = vmatprep.subr.mxu0 0.0
    %6322 = vmatpush1.msra.mxu0 %v6317
    %6323 = vmatprep.subr.mxu0 0.0
    %6324 = vmatpush1.msra.mxu0 %v6318
    %6325 = vmatprep.subr.mxu0 0.0
    %6326 = vmatpush1.msra.mxu0 %v6319
    %6327 = vmatprep.subr.mxu0 0.0
    %6328 = vmatpush1.msra.mxu0 %v6320
    %6329 = vmatprep.subr.mxu0 0.0
    %6330 = vmatpush1.msra.mxu0 0.0
    %6331 = vmatprep.subr.mxu0 0.0
    %6332 = vmatpush1.msra.mxu0 0.0
    %6333 = vmatprep.subr.mxu0 0.0
    %6334 = vmatpush1.msra.mxu0 0.0
    %6335 = vmatprep.subr.mxu0 0.0
    %6336 = vmatpush1.msra.mxu0 0.0
    %6337 = vmatprep.subr.mxu0 0.0
    %6338 = vmatpush1.msra.mxu0 0.0
    %6339 = vmatprep.subr.mxu0 0.0
    %6340 = vmatpush1.msra.mxu0 0.0
    %6341 = vmatprep.subr.mxu0 0.0
    %6342 = vmatpush1.msra.mxu0 0.0
    %6343 = vmatprep.subr.mxu0 0.0
    %6344 = vmatpush1.msra.mxu0 0.0
    %6345 = vmatprep.subr.mxu0 0.0
    %6346 = vmatpush1.msra.mxu0 0.0
    %6347 = vmatprep.subr.mxu0 0.0
    %6348 = vmatpush1.msra.mxu0 0.0
    %6349 = vmatprep.subr.mxu0 0.0
    %6350 = vmatpush1.msra.mxu0 0.0
    %6351 = vmatprep.subr.mxu0 0.0
    %6352 = vmatpush1.msra.mxu0 0.0
    %6353 = vmatprep.subr.mxu0 0.0
    %6354 = vmatpush1.msra.mxu0 0.0
    %6355 = vmatprep.subr.mxu0 0.0
    %6356 = vmatpush1.msra.mxu0 0.0
    %6357 = vmatprep.subr.mxu0 0.0
    %6358 = vmatpush1.msra.mxu0 0.0
    %6359 = vmatprep.subr.mxu0 0.0
    %6360 = vmatpush1.msra.mxu0 0.0
    %6361 = vmatprep.subr.mxu0 0.0
    %6362 = vmatpush1.msra.mxu0 0.0
    %6363 = vmatprep.subr.mxu0 0.0
    %6364 = vmatpush1.msra.mxu0 0.0
    %6365 = vmatprep.subr.mxu0 0.0
    %6366 = vmatpush1.msra.mxu0 0.0
    %6367 = vmatprep.subr.mxu0 0.0
    %6368 = vmatpush1.msra.mxu0 0.0
    %6369 = vmatprep.subr.mxu0 0.0
    %6370 = vmatpush1.msra.mxu0 0.0
    %6371 = vmatprep.subr.mxu0 0.0
    %6372 = vmatpush1.msra.mxu0 0.0
    %6373 = vmatprep.subr.mxu0 0.0
    %6374 = vmatpush1.msra.mxu0 0.0
    %6375 = vmatprep.subr.mxu0 0.0
    %6376 = vmatpush1.msra.mxu0 0.0
    %6377 = vmatprep.subr.mxu0 0.0
    %6378 = vmatpush1.msra.mxu0 0.0
    %6379 = vmatprep.subr.mxu0 0.0
    %6380 = vmatpush1.msra.mxu0 0.0
    %6381 = vmatprep.subr.mxu0 0.0
    %6382 = vmatpush1.msra.mxu0 0.0
    %6383 = vmatprep.subr.mxu0 0.0
    %6384 = vmatpush1.msra.mxu0 0.0
    %6385 = vmatprep.mubr.f32.mxu0 0.0
    %6386 = vmatmul.mubr.f32.gmra.mrb[0].mxu0 %v5579
    %v6387 = vpop.f32.mrb[0].mxu0
    %v6388 = vadd.f32 0.0, %v6387
    %v6389 = vpop.f32.mrb[0].mxu0
    %6390 = vdwg.mxu0
    %v6391 = vadd.f32 %v6153, %v6388
    %v6392 = vtanh.pop %v6391
    %v6393 = vld [vmem:[%s916] sm:$0xff]
    %v6394 = vld [vmem:[%s916 + $0x8] sm:$0xff]
    %v6395 = vld [vmem:[%s916 + $0x10] sm:$0xff]
    %v6396 = vld [vmem:[%s916 + $0x18] sm:$0xff]
    %6397 = vmatprep.subr.mxu0 0.0
    %6398 = vmatpush1.msra.mxu0 %v6393
    %6399 = vmatprep.subr.mxu0 0.0
    %6400 = vmatpush1.msra.mxu0 %v6394
    %6401 = vmatprep.subr.mxu0 0.0
    %6402 = vmatpush1.msra.mxu0 %v6395
    %6403 = vmatprep.subr.mxu0 0.0
    %6404 = vmatpush1.msra.mxu0 %v6396
    %6405 = vmatprep.subr.mxu0 0.0
    %6406 = vmatpush1.msra.mxu0 0.0
    %6407 = vmatprep.subr.mxu0 0.0
    %6408 = vmatpush1.msra.mxu0 0.0
    %6409 = vmatprep.subr.mxu0 0.0
    %6410 = vmatpush1.msra.mxu0 0.0
    %6411 = vmatprep.subr.mxu0 0.0
    %6412 = vmatpush1.msra.mxu0 0.0
    %6413 = vmatprep.subr.mxu0 0.0
    %6414 = vmatpush1.msra.mxu0 0.0
    %6415 = vmatprep.subr.mxu0 0.0
    %6416 = vmatpush1.msra.mxu0 0.0
    %6417 = vmatprep.subr.mxu0 0.0
    %6418 = vmatpush1.msra.mxu0 0.0
    %6419 = vmatprep.subr.mxu0 0.0
    %6420 = vmatpush1.msra.mxu0 0.0
    %6421 = vmatprep.subr.mxu0 0.0
    %6422 = vmatpush1.msra.mxu0 0.0
    %6423 = vmatprep.subr.mxu0 0.0
    %6424 = vmatpush1.msra.mxu0 0.0
    %6425 = vmatprep.subr.mxu0 0.0
    %6426 = vmatpush1.msra.mxu0 0.0
    %6427 = vmatprep.subr.mxu0 0.0
    %6428 = vmatpush1.msra.mxu0 0.0
    %6429 = vmatprep.subr.mxu0 0.0
    %6430 = vmatpush1.msra.mxu0 0.0
    %6431 = vmatprep.subr.mxu0 0.0
    %6432 = vmatpush1.msra.mxu0 0.0
    %6433 = vmatprep.subr.mxu0 0.0
    %6434 = vmatpush1.msra.mxu0 0.0
    %6435 = vmatprep.subr.mxu0 0.0
    %6436 = vmatpush1.msra.mxu0 0.0
    %6437 = vmatprep.subr.mxu0 0.0
    %6438 = vmatpush1.msra.mxu0 0.0
    %6439 = vmatprep.subr.mxu0 0.0
    %6440 = vmatpush1.msra.mxu0 0.0
    %6441 = vmatprep.subr.mxu0 0.0
    %6442 = vmatpush1.msra.mxu0 0.0
    %6443 = vmatprep.subr.mxu0 0.0
    %6444 = vmatpush1.msra.mxu0 0.0
    %6445 = vmatprep.subr.mxu0 0.0
    %6446 = vmatpush1.msra.mxu0 0.0
    %6447 = vmatprep.subr.mxu0 0.0
    %6448 = vmatpush1.msra.mxu0 0.0
    %6449 = vmatprep.subr.mxu0 0.0
    %6450 = vmatpush1.msra.mxu0 0.0
    %6451 = vmatprep.subr.mxu0 0.0
    %6452 = vmatpush1.msra.mxu0 0.0
    %6453 = vmatprep.subr.mxu0 0.0
    %6454 = vmatpush1.msra.mxu0 0.0
    %6455 = vmatprep.subr.mxu0 0.0
    %6456 = vmatpush1.msra.mxu0 0.0
    %6457 = vmatprep.subr.mxu0 0.0
    %6458 = vmatpush1.msra.mxu0 0.0
    %6459 = vmatprep.subr.mxu0 0.0
    %6460 = vmatpush1.msra.mxu0 0.0
    %6461 = vmatprep.mubr.f32.mxu0 0.0
    %6462 = vmatmul.mubr.f32.gmra.mrb[0].mxu0 %v5579
    %v6463 = vpop.f32.mrb[0].mxu0
    %v6464 = vadd.f32 0.0, %v6463
    %v6465 = vpop.f32.mrb[0].mxu0
    %6466 = vdwg.mxu0
    %v6467 = vadd.f32 %v6154, %v6464
    %v6468 = vxor.u32 %v6467, 2147483648
    %v6469 = vmul.f32 %v6468, 1.442695
    %v6470 = vpow.pop %v6469
    %v6471 = vadd.f32 %v6470, 1.0
    %v6472 = vrcp.pop %v6471
    %v6473 = vmul.f32 1.0, %v6472
    %v6474 = vmul.f32 %v6316, %v5564
    %v6475 = vmul.f32 %v6235, %v6392
    %v6476 = vadd.f32 %v6474, %v6475
    %v6477 = vtanh.pop %v6476
    %v6478 = vmul.f32 %v6473, %v6477
    %v6479 = vld [vmem:[#allocation7] sm:$0xff]
    %v6480 = vld [vmem:[#allocation7 + $0x8] sm:$0xff]
    %v6481 = vld [vmem:[#allocation7 + $0x10] sm:$0xff]
    %v6482 = vld [vmem:[#allocation7 + $0x18] sm:$0xff]
    %v6483 = vld [vmem:[#allocation8] sm:$0x1]
    %v6485 = vlaneseq
    %v6486 = vshrl.u32 %v6485, 7
    %v6487 = vsub.s32 0, %v6486
    %v6488 = vrot.slane %v6483, %v6487
    %v6491 = vsel %vm259, %v6478, 0
    %6493 = vmatprep.subr.mxu0 0.0
    %6494 = vmatpush1.msra.mxu0 %v6479
    %6495 = vmatprep.subr.mxu0 0.0
    %6496 = vmatpush1.msra.mxu0 %v6480
    %6497 = vmatprep.subr.mxu0 0.0
    %6498 = vmatpush1.msra.mxu0 %v6481
    %6499 = vmatprep.subr.mxu0 0.0
    %6500 = vmatpush1.msra.mxu0 %v6482
    %6501 = vmatprep.subr.mxu0 0.0
    %6502 = vmatpush1.msra.mxu0 0.0
    %6503 = vmatprep.subr.mxu0 0.0
    %6504 = vmatpush1.msra.mxu0 0.0
    %6505 = vmatprep.subr.mxu0 0.0
    %6506 = vmatpush1.msra.mxu0 0.0
    %6507 = vmatprep.subr.mxu0 0.0
    %6508 = vmatpush1.msra.mxu0 0.0
    %6509 = vmatprep.subr.mxu0 0.0
    %6510 = vmatpush1.msra.mxu0 0.0
    %6511 = vmatprep.subr.mxu0 0.0
    %6512 = vmatpush1.msra.mxu0 0.0
    %6513 = vmatprep.subr.mxu0 0.0
    %6514 = vmatpush1.msra.mxu0 0.0
    %6515 = vmatprep.subr.mxu0 0.0
    %6516 = vmatpush1.msra.mxu0 0.0
    %6517 = vmatprep.subr.mxu0 0.0
    %6518 = vmatpush1.msra.mxu0 0.0
    %6519 = vmatprep.subr.mxu0 0.0
    %6520 = vmatpush1.msra.mxu0 0.0
    %6521 = vmatprep.subr.mxu0 0.0
    %6522 = vmatpush1.msra.mxu0 0.0
    %6523 = vmatprep.subr.mxu0 0.0
    %6524 = vmatpush1.msra.mxu0 0.0
    %6525 = vmatprep.subr.mxu0 0.0
    %6526 = vmatpush1.msra.mxu0 0.0
    %6527 = vmatprep.subr.mxu0 0.0
    %6528 = vmatpush1.msra.mxu0 0.0
    %6529 = vmatprep.subr.mxu0 0.0
    %6530 = vmatpush1.msra.mxu0 0.0
    %6531 = vmatprep.subr.mxu0 0.0
    %6532 = vmatpush1.msra.mxu0 0.0
    %6533 = vmatprep.subr.mxu0 0.0
    %6534 = vmatpush1.msra.mxu0 0.0
    %6535 = vmatprep.subr.mxu0 0.0
    %6536 = vmatpush1.msra.mxu0 0.0
    %6537 = vmatprep.subr.mxu0 0.0
    %6538 = vmatpush1.msra.mxu0 0.0
    %6539 = vmatprep.subr.mxu0 0.0
    %6540 = vmatpush1.msra.mxu0 0.0
    %6541 = vmatprep.subr.mxu0 0.0
    %6542 = vmatpush1.msra.mxu0 0.0
    %6543 = vmatprep.subr.mxu0 0.0
    %6544 = vmatpush1.msra.mxu0 0.0
    %6545 = vmatprep.subr.mxu0 0.0
    %6546 = vmatpush1.msra.mxu0 0.0
    %6547 = vmatprep.subr.mxu0 0.0
    %6548 = vmatpush1.msra.mxu0 0.0
    %6549 = vmatprep.subr.mxu0 0.0
    %6550 = vmatpush1.msra.mxu0 0.0
    %6551 = vmatprep.subr.mxu0 0.0
    %6552 = vmatpush1.msra.mxu0 0.0
    %6553 = vmatprep.subr.mxu0 0.0
    %6554 = vmatpush1.msra.mxu0 0.0
    %6555 = vmatprep.subr.mxu0 0.0
    %6556 = vmatpush1.msra.mxu0 0.0
    %6557 = vmatprep.mubr.f32.mxu0 0.0
    %6558 = vmatmul.mubr.f32.gmra.mrb[0].mxu0 %v6491
    %v6559 = vpop.f32.mrb[0].mxu0
    %v6560 = vadd.f32 %v6488, %v6559
    %v6561 = vpop.f32.mrb[0].mxu0
    %6562 = vdwg.mxu0
    %v6564 = vsel %vm259, %v6560, 0
    %6566 = vmatprep.subr.mxu0 0.0
    %6567 = vmatpush1.msra.mxu0 %v339
    %6568 = vmatprep.subr.mxu0 0.0
    %6569 = vmatpush1.msra.mxu0 %v344
    %6570 = vmatprep.subr.mxu0 0.0
    %6571 = vmatpush1.msra.mxu0 %v349
    %6572 = vmatprep.subr.mxu0 0.0
    %6573 = vmatpush1.msra.mxu0 %v354
    %6574 = vmatprep.subr.mxu0 0.0
    %6575 = vmatpush1.msra.mxu0 0.0
    %6576 = vmatprep.subr.mxu0 0.0
    %6577 = vmatpush1.msra.mxu0 0.0
    %6578 = vmatprep.subr.mxu0 0.0
    %6579 = vmatpush1.msra.mxu0 0.0
    %6580 = vmatprep.subr.mxu0 0.0
    %6581 = vmatpush1.msra.mxu0 0.0
    %6582 = vmatprep.subr.mxu0 0.0
    %6583 = vmatpush1.msra.mxu0 0.0
    %6584 = vmatprep.subr.mxu0 0.0
    %6585 = vmatpush1.msra.mxu0 0.0
    %6586 = vmatprep.subr.mxu0 0.0
    %6587 = vmatpush1.msra.mxu0 0.0
    %6588 = vmatprep.subr.mxu0 0.0
    %6589 = vmatpush1.msra.mxu0 0.0
    %6590 = vmatprep.subr.mxu0 0.0
    %6591 = vmatpush1.msra.mxu0 0.0
    %6592 = vmatprep.subr.mxu0 0.0
    %6593 = vmatpush1.msra.mxu0 0.0
    %6594 = vmatprep.subr.mxu0 0.0
    %6595 = vmatpush1.msra.mxu0 0.0
    %6596 = vmatprep.subr.mxu0 0.0
    %6597 = vmatpush1.msra.mxu0 0.0
    %6598 = vmatprep.subr.mxu0 0.0
    %6599 = vmatpush1.msra.mxu0 0.0
    %6600 = vmatprep.subr.mxu0 0.0
    %6601 = vmatpush1.msra.mxu0 0.0
    %6602 = vmatprep.subr.mxu0 0.0
    %6603 = vmatpush1.msra.mxu0 0.0
    %6604 = vmatprep.subr.mxu0 0.0
    %6605 = vmatpush1.msra.mxu0 0.0
    %6606 = vmatprep.subr.mxu0 0.0
    %6607 = vmatpush1.msra.mxu0 0.0
    %6608 = vmatprep.subr.mxu0 0.0
    %6609 = vmatpush1.msra.mxu0 0.0
    %6610 = vmatprep.subr.mxu0 0.0
    %6611 = vmatpush1.msra.mxu0 0.0
    %6612 = vmatprep.subr.mxu0 0.0
    %6613 = vmatpush1.msra.mxu0 0.0
    %6614 = vmatprep.subr.mxu0 0.0
    %6615 = vmatpush1.msra.mxu0 0.0
    %6616 = vmatprep.subr.mxu0 0.0
    %6617 = vmatpush1.msra.mxu0 0.0
    %6618 = vmatprep.subr.mxu0 0.0
    %6619 = vmatpush1.msra.mxu0 0.0
    %6620 = vmatprep.subr.mxu0 0.0
    %6621 = vmatpush1.msra.mxu0 0.0
    %6622 = vmatprep.subr.mxu0 0.0
    %6623 = vmatpush1.msra.mxu0 0.0
    %6624 = vmatprep.subr.mxu0 0.0
    %6625 = vmatpush1.msra.mxu0 0.0
    %6626 = vmatprep.subr.mxu0 0.0
    %6627 = vmatpush1.msra.mxu0 0.0
    %6628 = vmatprep.subr.mxu0 0.0
    %6629 = vmatpush1.msra.mxu0 0.0
    %6630 = vmatprep.mubr.f32.mxu0 0.0
    %6631 = vmatmul.mubr.f32.gmra.mrb[0].mxu0 %v6564
    %v6632 = vpop.f32.mrb[0].mxu0
    %v6633 = vadd.f32 %v665, %v6632
    %v6634 = vpop.f32.mrb[0].mxu0
    %6635 = vdwg.mxu0
    %v6636 = vsel %vm1160, %v6633, -inf
    %6637 = vmax.xlane.f32.xlu0 %v6636
    %v6638 = vpop.xlane.xlu0 %6637
    %v6639 = vsub.f32 %v6633, %v6638
    %v6640 = vmul.f32 %v6639, 1.442695
    %v6641 = vpow.pop %v6640
    %v6642 = vsel %vm1160, %v6641, 0.0
    %6643 = vadd.xlane.f32.xlu0 %v6642
    %v6644 = vpop.xlane.xlu0 %6643
    %v6645 = vrcp.pop %v6644
    %v6646 = vmul.f32 %v6641, %v6645
    %v6648 = vsel %vm1172, %v6646, 0
    %6650 = vmatprep.subr.mxu0 0.0
    %6651 = vmatpush1.msra.mxu0 %v443
    %6652 = vmatprep.subr.mxu0 0.0
    %6653 = vmatpush1.msra.mxu0 %v448
    %6654 = vmatprep.subr.mxu0 0.0
    %6655 = vmatpush1.msra.mxu0 0.0
    %6656 = vmatprep.subr.mxu0 0.0
    %6657 = vmatpush1.msra.mxu0 0.0
    %6658 = vmatprep.subr.mxu0 0.0
    %6659 = vmatpush1.msra.mxu0 0.0
    %6660 = vmatprep.subr.mxu0 0.0
    %6661 = vmatpush1.msra.mxu0 0.0
    %6662 = vmatprep.subr.mxu0 0.0
    %6663 = vmatpush1.msra.mxu0 0.0
    %6664 = vmatprep.subr.mxu0 0.0
    %6665 = vmatpush1.msra.mxu0 0.0
    %6666 = vmatprep.subr.mxu0 0.0
    %6667 = vmatpush1.msra.mxu0 0.0
    %6668 = vmatprep.subr.mxu0 0.0
    %6669 = vmatpush1.msra.mxu0 0.0
    %6670 = vmatprep.subr.mxu0 0.0
    %6671 = vmatpush1.msra.mxu0 0.0
    %6672 = vmatprep.subr.mxu0 0.0
    %6673 = vmatpush1.msra.mxu0 0.0
    %6674 = vmatprep.subr.mxu0 0.0
    %6675 = vmatpush1.msra.mxu0 0.0
    %6676 = vmatprep.subr.mxu0 0.0
    %6677 = vmatpush1.msra.mxu0 0.0
    %6678 = vmatprep.subr.mxu0 0.0
    %6679 = vmatpush1.msra.mxu0 0.0
    %6680 = vmatprep.subr.mxu0 0.0
    %6681 = vmatpush1.msra.mxu0 0.0
    %6682 = vmatprep.subr.mxu0 0.0
    %6683 = vmatpush1.msra.mxu0 0.0
    %6684 = vmatprep.subr.mxu0 0.0
    %6685 = vmatpush1.msra.mxu0 0.0
    %6686 = vmatprep.subr.mxu0 0.0
    %6687 = vmatpush1.msra.mxu0 0.0
    %6688 = vmatprep.subr.mxu0 0.0
    %6689 = vmatpush1.msra.mxu0 0.0
    %6690 = vmatprep.subr.mxu0 0.0
    %6691 = vmatpush1.msra.mxu0 0.0
    %6692 = vmatprep.subr.mxu0 0.0
    %6693 = vmatpush1.msra.mxu0 0.0
    %6694 = vmatprep.subr.mxu0 0.0
    %6695 = vmatpush1.msra.mxu0 0.0
    %6696 = vmatprep.subr.mxu0 0.0
    %6697 = vmatpush1.msra.mxu0 0.0
    %6698 = vmatprep.subr.mxu0 0.0
    %6699 = vmatpush1.msra.mxu0 0.0
    %6700 = vmatprep.subr.mxu0 0.0
    %6701 = vmatpush1.msra.mxu0 0.0
    %6702 = vmatprep.subr.mxu0 0.0
    %6703 = vmatpush1.msra.mxu0 0.0
    %6704 = vmatprep.subr.mxu0 0.0
    %6705 = vmatpush1.msra.mxu0 0.0
    %6706 = vmatprep.subr.mxu0 0.0
    %6707 = vmatpush1.msra.mxu0 0.0
    %6708 = vmatprep.subr.mxu0 0.0
    %6709 = vmatpush1.msra.mxu0 0.0
    %6710 = vmatprep.subr.mxu0 0.0
    %6711 = vmatpush1.msra.mxu0 0.0
    %6712 = vmatprep.subr.mxu0 0.0
    %6713 = vmatpush1.msra.mxu0 0.0
    %6714 = vmatprep.mubr.f32.mxu0 0.0
    %6715 = vmatmul.mubr.f32.gmra.mrb[0].mxu0 %v6648
    %v6716 = vpop.f32.mrb[0].mxu0
    %v6717 = vadd.f32 0.0, %v6716
    %v6718 = vpop.f32.mrb[0].mxu0
    %6719 = vdwg.mxu0
    %6720 = vrot.lane.b32.xlu0 %v6560, 96
    %v6721 = vpop.permute.xlu0 %6720
    %v6722 = vsel %vm259, %v6721, 0
    %6724 = vmatprep.subr.mxu0 0.0
    %6725 = vmatpush1.msra.mxu0 %v562
    %6726 = vmatprep.subr.mxu0 0.0
    %6727 = vmatpush1.msra.mxu0 %v567
    %6728 = vmatprep.subr.mxu0 0.0
    %6729 = vmatpush1.msra.mxu0 %v572
    %6730 = vmatprep.subr.mxu0 0.0
    %6731 = vmatpush1.msra.mxu0 %v577
    %6732 = vmatprep.subr.mxu0 0.0
    %6733 = vmatpush1.msra.mxu0 0.0
    %6734 = vmatprep.subr.mxu0 0.0
    %6735 = vmatpush1.msra.mxu0 0.0
    %6736 = vmatprep.subr.mxu0 0.0
    %6737 = vmatpush1.msra.mxu0 0.0
    %6738 = vmatprep.subr.mxu0 0.0
    %6739 = vmatpush1.msra.mxu0 0.0
    %6740 = vmatprep.subr.mxu0 0.0
    %6741 = vmatpush1.msra.mxu0 0.0
    %6742 = vmatprep.subr.mxu0 0.0
    %6743 = vmatpush1.msra.mxu0 0.0
    %6744 = vmatprep.subr.mxu0 0.0
    %6745 = vmatpush1.msra.mxu0 0.0
    %6746 = vmatprep.subr.mxu0 0.0
    %6747 = vmatpush1.msra.mxu0 0.0
    %6748 = vmatprep.subr.mxu0 0.0
    %6749 = vmatpush1.msra.mxu0 0.0
    %6750 = vmatprep.subr.mxu0 0.0
    %6751 = vmatpush1.msra.mxu0 0.0
    %6752 = vmatprep.subr.mxu0 0.0
    %6753 = vmatpush1.msra.mxu0 0.0
    %6754 = vmatprep.subr.mxu0 0.0
    %6755 = vmatpush1.msra.mxu0 0.0
    %6756 = vmatprep.subr.mxu0 0.0
    %6757 = vmatpush1.msra.mxu0 0.0
    %6758 = vmatprep.subr.mxu0 0.0
    %6759 = vmatpush1.msra.mxu0 0.0
    %6760 = vmatprep.subr.mxu0 0.0
    %6761 = vmatpush1.msra.mxu0 0.0
    %6762 = vmatprep.subr.mxu0 0.0
    %6763 = vmatpush1.msra.mxu0 0.0
    %6764 = vmatprep.subr.mxu0 0.0
    %6765 = vmatpush1.msra.mxu0 0.0
    %6766 = vmatprep.subr.mxu0 0.0
    %6767 = vmatpush1.msra.mxu0 0.0
    %6768 = vmatprep.subr.mxu0 0.0
    %6769 = vmatpush1.msra.mxu0 0.0
    %6770 = vmatprep.subr.mxu0 0.0
    %6771 = vmatpush1.msra.mxu0 0.0
    %6772 = vmatprep.subr.mxu0 0.0
    %6773 = vmatpush1.msra.mxu0 0.0
    %6774 = vmatprep.subr.mxu0 0.0
    %6775 = vmatpush1.msra.mxu0 0.0
    %6776 = vmatprep.subr.mxu0 0.0
    %6777 = vmatpush1.msra.mxu0 0.0
    %6778 = vmatprep.subr.mxu0 0.0
    %6779 = vmatpush1.msra.mxu0 0.0
    %6780 = vmatprep.subr.mxu0 0.0
    %6781 = vmatpush1.msra.mxu0 0.0
    %6782 = vmatprep.subr.mxu0 0.0
    %6783 = vmatpush1.msra.mxu0 0.0
    %6784 = vmatprep.subr.mxu0 0.0
    %6785 = vmatpush1.msra.mxu0 0.0
    %6786 = vmatprep.subr.mxu0 0.0
    %6787 = vmatpush1.msra.mxu0 0.0
    %6788 = vmatprep.mubr.f32.mxu0 0.0
    %6789 = vmatmul.mubr.f32.gmra.mrb[0].mxu0 %v6722
    %v6790 = vpop.f32.mrb[0].mxu0
    %v6791 = vadd.f32 %v666, %v6790
    %v6792 = vpop.f32.mrb[0].mxu0
    %6793 = vdwg.mxu0
    %v6794 = vsel %vm1320, %v6791, -inf
    %6795 = vmax.xlane.f32.xlu0 %v6794
    %v6796 = vpop.xlane.xlu0 %6795
    %v6797 = vsub.f32 %v6791, %v6796
    %v6798 = vmul.f32 %v6797, 1.442695
    %v6799 = vpow.pop %v6798
    %v6800 = vsel %vm1320, %v6799, 0.0
    %6801 = vadd.xlane.f32.xlu0 %v6800
    %v6802 = vpop.xlane.xlu0 %6801
    %v6803 = vrcp.pop %v6802
    %v6804 = vmul.f32 %v6799, %v6803
    %v6806 = vsel %vm1332, %v6804, 0
    %6808 = vmatprep.subr.mxu0 0.0
    %6809 = vmatpush1.msra.mxu0 %v662
    %6810 = vmatprep.subr.mxu0 0.0
    %6811 = vmatpush1.msra.mxu0 0.0
    %6812 = vmatprep.subr.mxu0 0.0
    %6813 = vmatpush1.msra.mxu0 0.0
    %6814 = vmatprep.subr.mxu0 0.0
    %6815 = vmatpush1.msra.mxu0 0.0
    %6816 = vmatprep.subr.mxu0 0.0
    %6817 = vmatpush1.msra.mxu0 0.0
    %6818 = vmatprep.subr.mxu0 0.0
    %6819 = vmatpush1.msra.mxu0 0.0
    %6820 = vmatprep.subr.mxu0 0.0
    %6821 = vmatpush1.msra.mxu0 0.0
    %6822 = vmatprep.subr.mxu0 0.0
    %6823 = vmatpush1.msra.mxu0 0.0
    %6824 = vmatprep.subr.mxu0 0.0
    %6825 = vmatpush1.msra.mxu0 0.0
    %6826 = vmatprep.subr.mxu0 0.0
    %6827 = vmatpush1.msra.mxu0 0.0
    %6828 = vmatprep.subr.mxu0 0.0
    %6829 = vmatpush1.msra.mxu0 0.0
    %6830 = vmatprep.subr.mxu0 0.0
    %6831 = vmatpush1.msra.mxu0 0.0
    %6832 = vmatprep.subr.mxu0 0.0
    %6833 = vmatpush1.msra.mxu0 0.0
    %6834 = vmatprep.subr.mxu0 0.0
    %6835 = vmatpush1.msra.mxu0 0.0
    %6836 = vmatprep.subr.mxu0 0.0
    %6837 = vmatpush1.msra.mxu0 0.0
    %6838 = vmatprep.subr.mxu0 0.0
    %6839 = vmatpush1.msra.mxu0 0.0
    %6840 = vmatprep.subr.mxu0 0.0
    %6841 = vmatpush1.msra.mxu0 0.0
    %6842 = vmatprep.subr.mxu0 0.0
    %6843 = vmatpush1.msra.mxu0 0.0
    %6844 = vmatprep.subr.mxu0 0.0
    %6845 = vmatpush1.msra.mxu0 0.0
    %6846 = vmatprep.subr.mxu0 0.0
    %6847 = vmatpush1.msra.mxu0 0.0
    %6848 = vmatprep.subr.mxu0 0.0
    %6849 = vmatpush1.msra.mxu0 0.0
    %6850 = vmatprep.subr.mxu0 0.0
    %6851 = vmatpush1.msra.mxu0 0.0
    %6852 = vmatprep.subr.mxu0 0.0
    %6853 = vmatpush1.msra.mxu0 0.0
    %6854 = vmatprep.subr.mxu0 0.0
    %6855 = vmatpush1.msra.mxu0 0.0
    %6856 = vmatprep.subr.mxu0 0.0
    %6857 = vmatpush1.msra.mxu0 0.0
    %6858 = vmatprep.subr.mxu0 0.0
    %6859 = vmatpush1.msra.mxu0 0.0
    %6860 = vmatprep.subr.mxu0 0.0
    %6861 = vmatpush1.msra.mxu0 0.0
    %6862 = vmatprep.subr.mxu0 0.0
    %6863 = vmatpush1.msra.mxu0 0.0
    %6864 = vmatprep.subr.mxu0 0.0
    %6865 = vmatpush1.msra.mxu0 0.0
    %6866 = vmatprep.subr.mxu0 0.0
    %6867 = vmatpush1.msra.mxu0 0.0
    %6868 = vmatprep.subr.mxu0 0.0
    %6869 = vmatpush1.msra.mxu0 0.0
    %6870 = vmatprep.subr.mxu0 0.0
    %6871 = vmatpush1.msra.mxu0 0.0
    %6872 = vmatprep.mubr.f32.mxu0 0.0
    %6873 = vmatmul.mubr.f32.gmra.mrb[0].mxu0 %v6806
    %v6874 = vpop.f32.mrb[0].mxu0
    %v6875 = vadd.f32 0.0, %v6874
    %v6876 = vpop.f32.mrb[0].mxu0
    %6877 = vdwg.mxu0
    %6879 = vrot.lane.b32.xlu0 %v6875, 32
    %v6880 = vpop.permute.xlu0 %6879
    %v6882 = vsel %vm259, %v6717, %v6880
    %v6883 = vld [vmem:[%s20] sm:$0xff]
    %v6884 = vld [vmem:[%s20 + $0x8] sm:$0xff]
    %v6885 = vld [vmem:[%s20 + $0x10] sm:$0xff]
    %v6886 = vld [vmem:[%s20 + $0x18] sm:$0xff]
    %v6887 = vld [vmem:[%s20 + $0x20] sm:$0xff]
    %v6888 = vld [vmem:[%s20 + $0x28] sm:$0xff]
    %v6889 = vld [vmem:[%s20 + $0x30] sm:$0xff]
    %v6890 = vld [vmem:[%s20 + $0x38] sm:$0xff]
    %v6891 = vld [vmem:[%s21] sm:$0x1]
    %v6893 = vlaneseq
    %v6894 = vshrl.u32 %v6893, 7
    %v6895 = vsub.s32 0, %v6894
    %v6896 = vrot.slane %v6891, %v6895
    %v6899 = vsel %vm1426, %v6882, 0
    %6901 = vmatprep.subr.mxu0 0.0
    %6902 = vmatpush1.msra.mxu0 %v6883
    %6903 = vmatprep.subr.mxu0 0.0
    %6904 = vmatpush1.msra.mxu0 %v6884
    %6905 = vmatprep.subr.mxu0 0.0
    %6906 = vmatpush1.msra.mxu0 %v6885
    %6907 = vmatprep.subr.mxu0 0.0
    %6908 = vmatpush1.msra.mxu0 %v6886
    %6909 = vmatprep.subr.mxu0 0.0
    %6910 = vmatpush1.msra.mxu0 %v6887
    %6911 = vmatprep.subr.mxu0 0.0
    %6912 = vmatpush1.msra.mxu0 %v6888
    %6913 = vmatprep.subr.mxu0 0.0
    %6914 = vmatpush1.msra.mxu0 %v6889
    %6915 = vmatprep.subr.mxu0 0.0
    %6916 = vmatpush1.msra.mxu0 %v6890
    %6917 = vmatprep.subr.mxu0 0.0
    %6918 = vmatpush1.msra.mxu0 0.0
    %6919 = vmatprep.subr.mxu0 0.0
    %6920 = vmatpush1.msra.mxu0 0.0
    %6921 = vmatprep.subr.mxu0 0.0
    %6922 = vmatpush1.msra.mxu0 0.0
    %6923 = vmatprep.subr.mxu0 0.0
    %6924 = vmatpush1.msra.mxu0 0.0
    %6925 = vmatprep.subr.mxu0 0.0
    %6926 = vmatpush1.msra.mxu0 0.0
    %6927 = vmatprep.subr.mxu0 0.0
    %6928 = vmatpush1.msra.mxu0 0.0
    %6929 = vmatprep.subr.mxu0 0.0
    %6930 = vmatpush1.msra.mxu0 0.0
    %6931 = vmatprep.subr.mxu0 0.0
    %6932 = vmatpush1.msra.mxu0 0.0
    %6933 = vmatprep.subr.mxu0 0.0
    %6934 = vmatpush1.msra.mxu0 0.0
    %6935 = vmatprep.subr.mxu0 0.0
    %6936 = vmatpush1.msra.mxu0 0.0
    %6937 = vmatprep.subr.mxu0 0.0
    %6938 = vmatpush1.msra.mxu0 0.0
    %6939 = vmatprep.subr.mxu0 0.0
    %6940 = vmatpush1.msra.mxu0 0.0
    %6941 = vmatprep.subr.mxu0 0.0
    %6942 = vmatpush1.msra.mxu0 0.0
    %6943 = vmatprep.subr.mxu0 0.0
    %6944 = vmatpush1.msra.mxu0 0.0
    %6945 = vmatprep.subr.mxu0 0.0
    %6946 = vmatpush1.msra.mxu0 0.0
    %6947 = vmatprep.subr.mxu0 0.0
    %6948 = vmatpush1.msra.mxu0 0.0
    %6949 = vmatprep.subr.mxu0 0.0
    %6950 = vmatpush1.msra.mxu0 0.0
    %6951 = vmatprep.subr.mxu0 0.0
    %6952 = vmatpush1.msra.mxu0 0.0
    %6953 = vmatprep.subr.mxu0 0.0
    %6954 = vmatpush1.msra.mxu0 0.0
    %6955 = vmatprep.subr.mxu0 0.0
    %6956 = vmatpush1.msra.mxu0 0.0
    %6957 = vmatprep.subr.mxu0 0.0
    %6958 = vmatpush1.msra.mxu0 0.0
    %6959 = vmatprep.subr.mxu0 0.0
    %6960 = vmatpush1.msra.mxu0 0.0
    %6961 = vmatprep.subr.mxu0 0.0
    %6962 = vmatpush1.msra.mxu0 0.0
    %6963 = vmatprep.subr.mxu0 0.0
    %6964 = vmatpush1.msra.mxu0 0.0
    %6965 = vmatprep.mubr.f32.mxu0 0.0
    %6966 = vmatmul.mubr.f32.gmra.mrb[0].mxu0 %v6899
    %v6967 = vpop.f32.mrb[0].mxu0
    %v6968 = vadd.f32 %v6896, %v6967
    %v6969 = vpop.f32.mrb[0].mxu0
    %6970 = vdwg.mxu0
    %v6971 = vmax.f32 %v6968, 0.0
    %v6972 = vld [vmem:[%s22] sm:$0xff]
    %v6973 = vld [vmem:[%s22 + $0x8] sm:$0xff]
    %v6974 = vld [vmem:[%s22 + $0x10] sm:$0xff]
    %v6975 = vld [vmem:[%s22 + $0x18] sm:$0xff]
    %v6976 = vld [vmem:[%s22 + $0x20] sm:$0xff]
    %v6977 = vld [vmem:[%s22 + $0x28] sm:$0xff]
    %v6978 = vld [vmem:[%s22 + $0x30] sm:$0xff]
    %v6979 = vld [vmem:[%s22 + $0x38] sm:$0xff]
    %v6980 = vld [vmem:[%s23] sm:$0x1]
    %v6982 = vlaneseq
    %v6983 = vshrl.u32 %v6982, 7
    %v6984 = vsub.s32 0, %v6983
    %v6985 = vrot.slane %v6980, %v6984
    %v6988 = vsel %vm1426, %v6971, 0
    %6990 = vmatprep.subr.mxu0 0.0
    %6991 = vmatpush1.msra.mxu0 %v6972
    %6992 = vmatprep.subr.mxu0 0.0
    %6993 = vmatpush1.msra.mxu0 %v6973
    %6994 = vmatprep.subr.mxu0 0.0
    %6995 = vmatpush1.msra.mxu0 %v6974
    %6996 = vmatprep.subr.mxu0 0.0
    %6997 = vmatpush1.msra.mxu0 %v6975
    %6998 = vmatprep.subr.mxu0 0.0
    %6999 = vmatpush1.msra.mxu0 %v6976
    %7000 = vmatprep.subr.mxu0 0.0
    %7001 = vmatpush1.msra.mxu0 %v6977
    %7002 = vmatprep.subr.mxu0 0.0
    %7003 = vmatpush1.msra.mxu0 %v6978
    %7004 = vmatprep.subr.mxu0 0.0
    %7005 = vmatpush1.msra.mxu0 %v6979
    %7006 = vmatprep.subr.mxu0 0.0
    %7007 = vmatpush1.msra.mxu0 0.0
    %7008 = vmatprep.subr.mxu0 0.0
    %7009 = vmatpush1.msra.mxu0 0.0
    %7010 = vmatprep.subr.mxu0 0.0
    %7011 = vmatpush1.msra.mxu0 0.0
    %7012 = vmatprep.subr.mxu0 0.0
    %7013 = vmatpush1.msra.mxu0 0.0
    %7014 = vmatprep.subr.mxu0 0.0
    %7015 = vmatpush1.msra.mxu0 0.0
    %7016 = vmatprep.subr.mxu0 0.0
    %7017 = vmatpush1.msra.mxu0 0.0
    %7018 = vmatprep.subr.mxu0 0.0
    %7019 = vmatpush1.msra.mxu0 0.0
    %7020 = vmatprep.subr.mxu0 0.0
    %7021 = vmatpush1.msra.mxu0 0.0
    %7022 = vmatprep.subr.mxu0 0.0
    %7023 = vmatpush1.msra.mxu0 0.0
    %7024 = vmatprep.subr.mxu0 0.0
    %7025 = vmatpush1.msra.mxu0 0.0
    %7026 = vmatprep.subr.mxu0 0.0
    %7027 = vmatpush1.msra.mxu0 0.0
    %7028 = vmatprep.subr.mxu0 0.0
    %7029 = vmatpush1.msra.mxu0 0.0
    %7030 = vmatprep.subr.mxu0 0.0
    %7031 = vmatpush1.msra.mxu0 0.0
    %7032 = vmatprep.subr.mxu0 0.0
    %7033 = vmatpush1.msra.mxu0 0.0
    %7034 = vmatprep.subr.mxu0 0.0
    %7035 = vmatpush1.msra.mxu0 0.0
    %7036 = vmatprep.subr.mxu0 0.0
    %7037 = vmatpush1.msra.mxu0 0.0
    %7038 = vmatprep.subr.mxu0 0.0
    %7039 = vmatpush1.msra.mxu0 0.0
    %7040 = vmatprep.subr.mxu0 0.0
    %7041 = vmatpush1.msra.mxu0 0.0
    %7042 = vmatprep.subr.mxu0 0.0
    %7043 = vmatpush1.msra.mxu0 0.0
    %7044 = vmatprep.subr.mxu0 0.0
    %7045 = vmatpush1.msra.mxu0 0.0
    %7046 = vmatprep.subr.mxu0 0.0
    %7047 = vmatpush1.msra.mxu0 0.0
    %7048 = vmatprep.subr.mxu0 0.0
    %7049 = vmatpush1.msra.mxu0 0.0
    %7050 = vmatprep.subr.mxu0 0.0
    %7051 = vmatpush1.msra.mxu0 0.0
    %7052 = vmatprep.subr.mxu0 0.0
    %7053 = vmatpush1.msra.mxu0 0.0
    %7054 = vmatprep.mubr.f32.mxu0 0.0
    %7055 = vmatmul.mubr.f32.gmra.mrb[0].mxu0 %v6988
    %v7056 = vpop.f32.mrb[0].mxu0
    %v7057 = vadd.f32 %v6985, %v7056
    %v7058 = vpop.f32.mrb[0].mxu0
    %7059 = vdwg.mxu0
    %s7060 = scalar_lea.vmem [#allocation22], 12
    %7061 = vst.msk [vmem:[%s7060] sm:$0x3] %vm1160, %v7057
    %s7062 = scalar_lea.vmem %s0, 56
    %v7063 = vld [vmem:[%s7062] sm:$0x3]
    %v7064 = vld [vmem:[%s7062 + $0x2] sm:$0x3]
    %v7065 = vld [vmem:[%s7062 + $0x4] sm:$0x3]
    %v7066 = vld [vmem:[%s7062 + $0x6] sm:$0x3]
    %v7067 = vld [vmem:[%s3] sm:$0xff]
    %v7068 = vld [vmem:[%s3 + $0x8] sm:$0xff]
    %v7069 = vld [vmem:[%s3 + $0x10] sm:$0xff]
    %v7070 = vld [vmem:[%s3 + $0x18] sm:$0xff]
    %7071 = vmatprep.subr.mxu0 0.0
    %7072 = vmatpush1.msra.mxu0 %v7067
    %7073 = vmatprep.subr.mxu0 0.0
    %7074 = vmatpush1.msra.mxu0 %v7068
    %7075 = vmatprep.subr.mxu0 0.0
    %7076 = vmatpush1.msra.mxu0 %v7069
    %7077 = vmatprep.subr.mxu0 0.0
    %7078 = vmatpush1.msra.mxu0 %v7070
    %7079 = vmatprep.subr.mxu0 0.0
    %7080 = vmatpush1.msra.mxu0 0.0
    %7081 = vmatprep.subr.mxu0 0.0
    %7082 = vmatpush1.msra.mxu0 0.0
    %7083 = vmatprep.subr.mxu0 0.0
    %7084 = vmatpush1.msra.mxu0 0.0
    %7085 = vmatprep.subr.mxu0 0.0
    %7086 = vmatpush1.msra.mxu0 0.0
    %7087 = vmatprep.subr.mxu0 0.0
    %7088 = vmatpush1.msra.mxu0 0.0
    %7089 = vmatprep.subr.mxu0 0.0
    %7090 = vmatpush1.msra.mxu0 0.0
    %7091 = vmatprep.subr.mxu0 0.0
    %7092 = vmatpush1.msra.mxu0 0.0
    %7093 = vmatprep.subr.mxu0 0.0
    %7094 = vmatpush1.msra.mxu0 0.0
    %7095 = vmatprep.subr.mxu0 0.0
    %7096 = vmatpush1.msra.mxu0 0.0
    %7097 = vmatprep.subr.mxu0 0.0
    %7098 = vmatpush1.msra.mxu0 0.0
    %7099 = vmatprep.subr.mxu0 0.0
    %7100 = vmatpush1.msra.mxu0 0.0
    %7101 = vmatprep.subr.mxu0 0.0
    %7102 = vmatpush1.msra.mxu0 0.0
    %7103 = vmatprep.subr.mxu0 0.0
    %7104 = vmatpush1.msra.mxu0 0.0
    %7105 = vmatprep.subr.mxu0 0.0
    %7106 = vmatpush1.msra.mxu0 0.0
    %7107 = vmatprep.subr.mxu0 0.0
    %7108 = vmatpush1.msra.mxu0 0.0
    %7109 = vmatprep.subr.mxu0 0.0
    %7110 = vmatpush1.msra.mxu0 0.0
    %7111 = vmatprep.subr.mxu0 0.0
    %7112 = vmatpush1.msra.mxu0 0.0
    %7113 = vmatprep.subr.mxu0 0.0
    %7114 = vmatpush1.msra.mxu0 0.0
    %7115 = vmatprep.subr.mxu0 0.0
    %7116 = vmatpush1.msra.mxu0 0.0
    %7117 = vmatprep.subr.mxu0 0.0
    %7118 = vmatpush1.msra.mxu0 0.0
    %7119 = vmatprep.subr.mxu0 0.0
    %7120 = vmatpush1.msra.mxu0 0.0
    %7121 = vmatprep.subr.mxu0 0.0
    %7122 = vmatpush1.msra.mxu0 0.0
    %7123 = vmatprep.subr.mxu0 0.0
    %7124 = vmatpush1.msra.mxu0 0.0
    %7125 = vmatprep.subr.mxu0 0.0
    %7126 = vmatpush1.msra.mxu0 0.0
    %7127 = vmatprep.subr.mxu0 0.0
    %7128 = vmatpush1.msra.mxu0 0.0
    %7129 = vmatprep.subr.mxu0 0.0
    %7130 = vmatpush1.msra.mxu0 0.0
    %7131 = vmatprep.subr.mxu0 0.0
    %7132 = vmatpush1.msra.mxu0 0.0
    %7133 = vmatprep.subr.mxu0 0.0
    %7134 = vmatpush1.msra.mxu0 0.0
    %7135 = vmatprep.mubr.f32.mxu0 0.0
    %7136 = vmatmul.mubr.f32.gmra.mrb[0].mxu0 %v6491
    %v7137 = vpop.f32.mrb[0].mxu0
    %v7138 = vadd.f32 0.0, %v7137
    %v7139 = vpop.f32.mrb[0].mxu0
    %7140 = vdwg.mxu0
    %v7141 = vadd.f32 %v7063, %v7138
    %v7142 = vxor.u32 %v7141, 2147483648
    %v7143 = vmul.f32 %v7142, 1.442695
    %v7144 = vpow.pop %v7143
    %v7145 = vadd.f32 %v7144, 1.0
    %v7146 = vrcp.pop %v7145
    %v7147 = vmul.f32 1.0, %v7146
    %v7148 = vld [vmem:[%s757] sm:$0xff]
    %v7149 = vld [vmem:[%s757 + $0x8] sm:$0xff]
    %v7150 = vld [vmem:[%s757 + $0x10] sm:$0xff]
    %v7151 = vld [vmem:[%s757 + $0x18] sm:$0xff]
    %7152 = vmatprep.subr.mxu0 0.0
    %7153 = vmatpush1.msra.mxu0 %v7148
    %7154 = vmatprep.subr.mxu0 0.0
    %7155 = vmatpush1.msra.mxu0 %v7149
    %7156 = vmatprep.subr.mxu0 0.0
    %7157 = vmatpush1.msra.mxu0 %v7150
    %7158 = vmatprep.subr.mxu0 0.0
    %7159 = vmatpush1.msra.mxu0 %v7151
    %7160 = vmatprep.subr.mxu0 0.0
    %7161 = vmatpush1.msra.mxu0 0.0
    %7162 = vmatprep.subr.mxu0 0.0
    %7163 = vmatpush1.msra.mxu0 0.0
    %7164 = vmatprep.subr.mxu0 0.0
    %7165 = vmatpush1.msra.mxu0 0.0
    %7166 = vmatprep.subr.mxu0 0.0
    %7167 = vmatpush1.msra.mxu0 0.0
    %7168 = vmatprep.subr.mxu0 0.0
    %7169 = vmatpush1.msra.mxu0 0.0
    %7170 = vmatprep.subr.mxu0 0.0
    %7171 = vmatpush1.msra.mxu0 0.0
    %7172 = vmatprep.subr.mxu0 0.0
    %7173 = vmatpush1.msra.mxu0 0.0
    %7174 = vmatprep.subr.mxu0 0.0
    %7175 = vmatpush1.msra.mxu0 0.0
    %7176 = vmatprep.subr.mxu0 0.0
    %7177 = vmatpush1.msra.mxu0 0.0
    %7178 = vmatprep.subr.mxu0 0.0
    %7179 = vmatpush1.msra.mxu0 0.0
    %7180 = vmatprep.subr.mxu0 0.0
    %7181 = vmatpush1.msra.mxu0 0.0
    %7182 = vmatprep.subr.mxu0 0.0
    %7183 = vmatpush1.msra.mxu0 0.0
    %7184 = vmatprep.subr.mxu0 0.0
    %7185 = vmatpush1.msra.mxu0 0.0
    %7186 = vmatprep.subr.mxu0 0.0
    %7187 = vmatpush1.msra.mxu0 0.0
    %7188 = vmatprep.subr.mxu0 0.0
    %7189 = vmatpush1.msra.mxu0 0.0
    %7190 = vmatprep.subr.mxu0 0.0
    %7191 = vmatpush1.msra.mxu0 0.0
    %7192 = vmatprep.subr.mxu0 0.0
    %7193 = vmatpush1.msra.mxu0 0.0
    %7194 = vmatprep.subr.mxu0 0.0
    %7195 = vmatpush1.msra.mxu0 0.0
    %7196 = vmatprep.subr.mxu0 0.0
    %7197 = vmatpush1.msra.mxu0 0.0
    %7198 = vmatprep.subr.mxu0 0.0
    %7199 = vmatpush1.msra.mxu0 0.0
    %7200 = vmatprep.subr.mxu0 0.0
    %7201 = vmatpush1.msra.mxu0 0.0
    %7202 = vmatprep.subr.mxu0 0.0
    %7203 = vmatpush1.msra.mxu0 0.0
    %7204 = vmatprep.subr.mxu0 0.0
    %7205 = vmatpush1.msra.mxu0 0.0
    %7206 = vmatprep.subr.mxu0 0.0
    %7207 = vmatpush1.msra.mxu0 0.0
    %7208 = vmatprep.subr.mxu0 0.0
    %7209 = vmatpush1.msra.mxu0 0.0
    %7210 = vmatprep.subr.mxu0 0.0
    %7211 = vmatpush1.msra.mxu0 0.0
    %7212 = vmatprep.subr.mxu0 0.0
    %7213 = vmatpush1.msra.mxu0 0.0
    %7214 = vmatprep.subr.mxu0 0.0
    %7215 = vmatpush1.msra.mxu0 0.0
    %7216 = vmatprep.mubr.f32.mxu0 0.0
    %7217 = vmatmul.mubr.f32.gmra.mrb[0].mxu0 %v6491
    %v7218 = vpop.f32.mrb[0].mxu0
    %v7219 = vadd.f32 0.0, %v7218
    %v7220 = vpop.f32.mrb[0].mxu0
    %7221 = vdwg.mxu0
    %v7222 = vadd.f32 %v7064, %v7219
    %v7223 = vxor.u32 %v7222, 2147483648
    %v7224 = vmul.f32 %v7223, 1.442695
    %v7225 = vpow.pop %v7224
    %v7226 = vadd.f32 %v7225, 1.0
    %v7227 = vrcp.pop %v7226
    %v7228 = vmul.f32 1.0, %v7227
    %v7229 = vld [vmem:[%s839] sm:$0xff]
    %v7230 = vld [vmem:[%s839 + $0x8] sm:$0xff]
    %v7231 = vld [vmem:[%s839 + $0x10] sm:$0xff]
    %v7232 = vld [vmem:[%s839 + $0x18] sm:$0xff]
    %7233 = vmatprep.subr.mxu0 0.0
    %7234 = vmatpush1.msra.mxu0 %v7229
    %7235 = vmatprep.subr.mxu0 0.0
    %7236 = vmatpush1.msra.mxu0 %v7230
    %7237 = vmatprep.subr.mxu0 0.0
    %7238 = vmatpush1.msra.mxu0 %v7231
    %7239 = vmatprep.subr.mxu0 0.0
    %7240 = vmatpush1.msra.mxu0 %v7232
    %7241 = vmatprep.subr.mxu0 0.0
    %7242 = vmatpush1.msra.mxu0 0.0
    %7243 = vmatprep.subr.mxu0 0.0
    %7244 = vmatpush1.msra.mxu0 0.0
    %7245 = vmatprep.subr.mxu0 0.0
    %7246 = vmatpush1.msra.mxu0 0.0
    %7247 = vmatprep.subr.mxu0 0.0
    %7248 = vmatpush1.msra.mxu0 0.0
    %7249 = vmatprep.subr.mxu0 0.0
    %7250 = vmatpush1.msra.mxu0 0.0
    %7251 = vmatprep.subr.mxu0 0.0
    %7252 = vmatpush1.msra.mxu0 0.0
    %7253 = vmatprep.subr.mxu0 0.0
    %7254 = vmatpush1.msra.mxu0 0.0
    %7255 = vmatprep.subr.mxu0 0.0
    %7256 = vmatpush1.msra.mxu0 0.0
    %7257 = vmatprep.subr.mxu0 0.0
    %7258 = vmatpush1.msra.mxu0 0.0
    %7259 = vmatprep.subr.mxu0 0.0
    %7260 = vmatpush1.msra.mxu0 0.0
    %7261 = vmatprep.subr.mxu0 0.0
    %7262 = vmatpush1.msra.mxu0 0.0
    %7263 = vmatprep.subr.mxu0 0.0
    %7264 = vmatpush1.msra.mxu0 0.0
    %7265 = vmatprep.subr.mxu0 0.0
    %7266 = vmatpush1.msra.mxu0 0.0
    %7267 = vmatprep.subr.mxu0 0.0
    %7268 = vmatpush1.msra.mxu0 0.0
    %7269 = vmatprep.subr.mxu0 0.0
    %7270 = vmatpush1.msra.mxu0 0.0
    %7271 = vmatprep.subr.mxu0 0.0
    %7272 = vmatpush1.msra.mxu0 0.0
    %7273 = vmatprep.subr.mxu0 0.0
    %7274 = vmatpush1.msra.mxu0 0.0
    %7275 = vmatprep.subr.mxu0 0.0
    %7276 = vmatpush1.msra.mxu0 0.0
    %7277 = vmatprep.subr.mxu0 0.0
    %7278 = vmatpush1.msra.mxu0 0.0
    %7279 = vmatprep.subr.mxu0 0.0
    %7280 = vmatpush1.msra.mxu0 0.0
    %7281 = vmatprep.subr.mxu0 0.0
    %7282 = vmatpush1.msra.mxu0 0.0
    %7283 = vmatprep.subr.mxu0 0.0
    %7284 = vmatpush1.msra.mxu0 0.0
    %7285 = vmatprep.subr.mxu0 0.0
    %7286 = vmatpush1.msra.mxu0 0.0
    %7287 = vmatprep.subr.mxu0 0.0
    %7288 = vmatpush1.msra.mxu0 0.0
    %7289 = vmatprep.subr.mxu0 0.0
    %7290 = vmatpush1.msra.mxu0 0.0
    %7291 = vmatprep.subr.mxu0 0.0
    %7292 = vmatpush1.msra.mxu0 0.0
    %7293 = vmatprep.subr.mxu0 0.0
    %7294 = vmatpush1.msra.mxu0 0.0
    %7295 = vmatprep.subr.mxu0 0.0
    %7296 = vmatpush1.msra.mxu0 0.0
    %7297 = vmatprep.mubr.f32.mxu0 0.0
    %7298 = vmatmul.mubr.f32.gmra.mrb[0].mxu0 %v6491
    %v7299 = vpop.f32.mrb[0].mxu0
    %v7300 = vadd.f32 0.0, %v7299
    %v7301 = vpop.f32.mrb[0].mxu0
    %7302 = vdwg.mxu0
    %v7303 = vadd.f32 %v7065, %v7300
    %v7304 = vtanh.pop %v7303
    %v7305 = vld [vmem:[%s916] sm:$0xff]
    %v7306 = vld [vmem:[%s916 + $0x8] sm:$0xff]
    %v7307 = vld [vmem:[%s916 + $0x10] sm:$0xff]
    %v7308 = vld [vmem:[%s916 + $0x18] sm:$0xff]
    %7309 = vmatprep.subr.mxu0 0.0
    %7310 = vmatpush1.msra.mxu0 %v7305
    %7311 = vmatprep.subr.mxu0 0.0
    %7312 = vmatpush1.msra.mxu0 %v7306
    %7313 = vmatprep.subr.mxu0 0.0
    %7314 = vmatpush1.msra.mxu0 %v7307
    %7315 = vmatprep.subr.mxu0 0.0
    %7316 = vmatpush1.msra.mxu0 %v7308
    %7317 = vmatprep.subr.mxu0 0.0
    %7318 = vmatpush1.msra.mxu0 0.0
    %7319 = vmatprep.subr.mxu0 0.0
    %7320 = vmatpush1.msra.mxu0 0.0
    %7321 = vmatprep.subr.mxu0 0.0
    %7322 = vmatpush1.msra.mxu0 0.0
    %7323 = vmatprep.subr.mxu0 0.0
    %7324 = vmatpush1.msra.mxu0 0.0
    %7325 = vmatprep.subr.mxu0 0.0
    %7326 = vmatpush1.msra.mxu0 0.0
    %7327 = vmatprep.subr.mxu0 0.0
    %7328 = vmatpush1.msra.mxu0 0.0
    %7329 = vmatprep.subr.mxu0 0.0
    %7330 = vmatpush1.msra.mxu0 0.0
    %7331 = vmatprep.subr.mxu0 0.0
    %7332 = vmatpush1.msra.mxu0 0.0
    %7333 = vmatprep.subr.mxu0 0.0
    %7334 = vmatpush1.msra.mxu0 0.0
    %7335 = vmatprep.subr.mxu0 0.0
    %7336 = vmatpush1.msra.mxu0 0.0
    %7337 = vmatprep.subr.mxu0 0.0
    %7338 = vmatpush1.msra.mxu0 0.0
    %7339 = vmatprep.subr.mxu0 0.0
    %7340 = vmatpush1.msra.mxu0 0.0
    %7341 = vmatprep.subr.mxu0 0.0
    %7342 = vmatpush1.msra.mxu0 0.0
    %7343 = vmatprep.subr.mxu0 0.0
    %7344 = vmatpush1.msra.mxu0 0.0
    %7345 = vmatprep.subr.mxu0 0.0
    %7346 = vmatpush1.msra.mxu0 0.0
    %7347 = vmatprep.subr.mxu0 0.0
    %7348 = vmatpush1.msra.mxu0 0.0
    %7349 = vmatprep.subr.mxu0 0.0
    %7350 = vmatpush1.msra.mxu0 0.0
    %7351 = vmatprep.subr.mxu0 0.0
    %7352 = vmatpush1.msra.mxu0 0.0
    %7353 = vmatprep.subr.mxu0 0.0
    %7354 = vmatpush1.msra.mxu0 0.0
    %7355 = vmatprep.subr.mxu0 0.0
    %7356 = vmatpush1.msra.mxu0 0.0
    %7357 = vmatprep.subr.mxu0 0.0
    %7358 = vmatpush1.msra.mxu0 0.0
    %7359 = vmatprep.subr.mxu0 0.0
    %7360 = vmatpush1.msra.mxu0 0.0
    %7361 = vmatprep.subr.mxu0 0.0
    %7362 = vmatpush1.msra.mxu0 0.0
    %7363 = vmatprep.subr.mxu0 0.0
    %7364 = vmatpush1.msra.mxu0 0.0
    %7365 = vmatprep.subr.mxu0 0.0
    %7366 = vmatpush1.msra.mxu0 0.0
    %7367 = vmatprep.subr.mxu0 0.0
    %7368 = vmatpush1.msra.mxu0 0.0
    %7369 = vmatprep.subr.mxu0 0.0
    %7370 = vmatpush1.msra.mxu0 0.0
    %7371 = vmatprep.subr.mxu0 0.0
    %7372 = vmatpush1.msra.mxu0 0.0
    %7373 = vmatprep.mubr.f32.mxu0 0.0
    %7374 = vmatmul.mubr.f32.gmra.mrb[0].mxu0 %v6491
    %v7375 = vpop.f32.mrb[0].mxu0
    %v7376 = vadd.f32 0.0, %v7375
    %v7377 = vpop.f32.mrb[0].mxu0
    %7378 = vdwg.mxu0
    %v7379 = vadd.f32 %v7066, %v7376
    %v7380 = vxor.u32 %v7379, 2147483648
    %v7381 = vmul.f32 %v7380, 1.442695
    %v7382 = vpow.pop %v7381
    %v7383 = vadd.f32 %v7382, 1.0
    %v7384 = vrcp.pop %v7383
    %v7385 = vmul.f32 1.0, %v7384
    %v7386 = vmul.f32 %v7228, %v6476
    %v7387 = vmul.f32 %v7147, %v7304
    %v7388 = vadd.f32 %v7386, %v7387
    %v7389 = vtanh.pop %v7388
    %v7390 = vmul.f32 %v7385, %v7389
    %v7391 = vld [vmem:[#allocation7] sm:$0xff]
    %v7392 = vld [vmem:[#allocation7 + $0x8] sm:$0xff]
    %v7393 = vld [vmem:[#allocation7 + $0x10] sm:$0xff]
    %v7394 = vld [vmem:[#allocation7 + $0x18] sm:$0xff]
    %v7395 = vld [vmem:[#allocation8] sm:$0x1]
    %v7397 = vlaneseq
    %v7398 = vshrl.u32 %v7397, 7
    %v7399 = vsub.s32 0, %v7398
    %v7400 = vrot.slane %v7395, %v7399
    %v7403 = vsel %vm259, %v7390, 0
    %7405 = vmatprep.subr.mxu0 0.0
    %7406 = vmatpush1.msra.mxu0 %v7391
    %7407 = vmatprep.subr.mxu0 0.0
    %7408 = vmatpush1.msra.mxu0 %v7392
    %7409 = vmatprep.subr.mxu0 0.0
    %7410 = vmatpush1.msra.mxu0 %v7393
    %7411 = vmatprep.subr.mxu0 0.0
    %7412 = vmatpush1.msra.mxu0 %v7394
    %7413 = vmatprep.subr.mxu0 0.0
    %7414 = vmatpush1.msra.mxu0 0.0
    %7415 = vmatprep.subr.mxu0 0.0
    %7416 = vmatpush1.msra.mxu0 0.0
    %7417 = vmatprep.subr.mxu0 0.0
    %7418 = vmatpush1.msra.mxu0 0.0
    %7419 = vmatprep.subr.mxu0 0.0
    %7420 = vmatpush1.msra.mxu0 0.0
    %7421 = vmatprep.subr.mxu0 0.0
    %7422 = vmatpush1.msra.mxu0 0.0
    %7423 = vmatprep.subr.mxu0 0.0
    %7424 = vmatpush1.msra.mxu0 0.0
    %7425 = vmatprep.subr.mxu0 0.0
    %7426 = vmatpush1.msra.mxu0 0.0
    %7427 = vmatprep.subr.mxu0 0.0
    %7428 = vmatpush1.msra.mxu0 0.0
    %7429 = vmatprep.subr.mxu0 0.0
    %7430 = vmatpush1.msra.mxu0 0.0
    %7431 = vmatprep.subr.mxu0 0.0
    %7432 = vmatpush1.msra.mxu0 0.0
    %7433 = vmatprep.subr.mxu0 0.0
    %7434 = vmatpush1.msra.mxu0 0.0
    %7435 = vmatprep.subr.mxu0 0.0
    %7436 = vmatpush1.msra.mxu0 0.0
    %7437 = vmatprep.subr.mxu0 0.0
    %7438 = vmatpush1.msra.mxu0 0.0
    %7439 = vmatprep.subr.mxu0 0.0
    %7440 = vmatpush1.msra.mxu0 0.0
    %7441 = vmatprep.subr.mxu0 0.0
    %7442 = vmatpush1.msra.mxu0 0.0
    %7443 = vmatprep.subr.mxu0 0.0
    %7444 = vmatpush1.msra.mxu0 0.0
    %7445 = vmatprep.subr.mxu0 0.0
    %7446 = vmatpush1.msra.mxu0 0.0
    %7447 = vmatprep.subr.mxu0 0.0
    %7448 = vmatpush1.msra.mxu0 0.0
    %7449 = vmatprep.subr.mxu0 0.0
    %7450 = vmatpush1.msra.mxu0 0.0
    %7451 = vmatprep.subr.mxu0 0.0
    %7452 = vmatpush1.msra.mxu0 0.0
    %7453 = vmatprep.subr.mxu0 0.0
    %7454 = vmatpush1.msra.mxu0 0.0
    %7455 = vmatprep.subr.mxu0 0.0
    %7456 = vmatpush1.msra.mxu0 0.0
    %7457 = vmatprep.subr.mxu0 0.0
    %7458 = vmatpush1.msra.mxu0 0.0
    %7459 = vmatprep.subr.mxu0 0.0
    %7460 = vmatpush1.msra.mxu0 0.0
    %7461 = vmatprep.subr.mxu0 0.0
    %7462 = vmatpush1.msra.mxu0 0.0
    %7463 = vmatprep.subr.mxu0 0.0
    %7464 = vmatpush1.msra.mxu0 0.0
    %7465 = vmatprep.subr.mxu0 0.0
    %7466 = vmatpush1.msra.mxu0 0.0
    %7467 = vmatprep.subr.mxu0 0.0
    %7468 = vmatpush1.msra.mxu0 0.0
    %7469 = vmatprep.mubr.f32.mxu0 0.0
    %7470 = vmatmul.mubr.f32.gmra.mrb[0].mxu0 %v7403
    %v7471 = vpop.f32.mrb[0].mxu0
    %v7472 = vadd.f32 %v7400, %v7471
    %v7473 = vpop.f32.mrb[0].mxu0
    %7474 = vdwg.mxu0
    %v7476 = vsel %vm259, %v7472, 0
    %7478 = vmatprep.subr.mxu0 0.0
    %7479 = vmatpush1.msra.mxu0 %v339
    %7480 = vmatprep.subr.mxu0 0.0
    %7481 = vmatpush1.msra.mxu0 %v344
    %7482 = vmatprep.subr.mxu0 0.0
    %7483 = vmatpush1.msra.mxu0 %v349
    %7484 = vmatprep.subr.mxu0 0.0
    %7485 = vmatpush1.msra.mxu0 %v354
    %7486 = vmatprep.subr.mxu0 0.0
    %7487 = vmatpush1.msra.mxu0 0.0
    %7488 = vmatprep.subr.mxu0 0.0
    %7489 = vmatpush1.msra.mxu0 0.0
    %7490 = vmatprep.subr.mxu0 0.0
    %7491 = vmatpush1.msra.mxu0 0.0
    %7492 = vmatprep.subr.mxu0 0.0
    %7493 = vmatpush1.msra.mxu0 0.0
    %7494 = vmatprep.subr.mxu0 0.0
    %7495 = vmatpush1.msra.mxu0 0.0
    %7496 = vmatprep.subr.mxu0 0.0
    %7497 = vmatpush1.msra.mxu0 0.0
    %7498 = vmatprep.subr.mxu0 0.0
    %7499 = vmatpush1.msra.mxu0 0.0
    %7500 = vmatprep.subr.mxu0 0.0
    %7501 = vmatpush1.msra.mxu0 0.0
    %7502 = vmatprep.subr.mxu0 0.0
    %7503 = vmatpush1.msra.mxu0 0.0
    %7504 = vmatprep.subr.mxu0 0.0
    %7505 = vmatpush1.msra.mxu0 0.0
    %7506 = vmatprep.subr.mxu0 0.0
    %7507 = vmatpush1.msra.mxu0 0.0
    %7508 = vmatprep.subr.mxu0 0.0
    %7509 = vmatpush1.msra.mxu0 0.0
    %7510 = vmatprep.subr.mxu0 0.0
    %7511 = vmatpush1.msra.mxu0 0.0
    %7512 = vmatprep.subr.mxu0 0.0
    %7513 = vmatpush1.msra.mxu0 0.0
    %7514 = vmatprep.subr.mxu0 0.0
    %7515 = vmatpush1.msra.mxu0 0.0
    %7516 = vmatprep.subr.mxu0 0.0
    %7517 = vmatpush1.msra.mxu0 0.0
    %7518 = vmatprep.subr.mxu0 0.0
    %7519 = vmatpush1.msra.mxu0 0.0
    %7520 = vmatprep.subr.mxu0 0.0
    %7521 = vmatpush1.msra.mxu0 0.0
    %7522 = vmatprep.subr.mxu0 0.0
    %7523 = vmatpush1.msra.mxu0 0.0
    %7524 = vmatprep.subr.mxu0 0.0
    %7525 = vmatpush1.msra.mxu0 0.0
    %7526 = vmatprep.subr.mxu0 0.0
    %7527 = vmatpush1.msra.mxu0 0.0
    %7528 = vmatprep.subr.mxu0 0.0
    %7529 = vmatpush1.msra.mxu0 0.0
    %7530 = vmatprep.subr.mxu0 0.0
    %7531 = vmatpush1.msra.mxu0 0.0
    %7532 = vmatprep.subr.mxu0 0.0
    %7533 = vmatpush1.msra.mxu0 0.0
    %7534 = vmatprep.subr.mxu0 0.0
    %7535 = vmatpush1.msra.mxu0 0.0
    %7536 = vmatprep.subr.mxu0 0.0
    %7537 = vmatpush1.msra.mxu0 0.0
    %7538 = vmatprep.subr.mxu0 0.0
    %7539 = vmatpush1.msra.mxu0 0.0
    %7540 = vmatprep.subr.mxu0 0.0
    %7541 = vmatpush1.msra.mxu0 0.0
    %7542 = vmatprep.mubr.f32.mxu0 0.0
    %7543 = vmatmul.mubr.f32.gmra.mrb[0].mxu0 %v7476
    %v7544 = vpop.f32.mrb[0].mxu0
    %v7545 = vadd.f32 %v665, %v7544
    %v7546 = vpop.f32.mrb[0].mxu0
    %7547 = vdwg.mxu0
    %v7548 = vsel %vm1160, %v7545, -inf
    %7549 = vmax.xlane.f32.xlu0 %v7548
    %v7550 = vpop.xlane.xlu0 %7549
    %v7551 = vsub.f32 %v7545, %v7550
    %v7552 = vmul.f32 %v7551, 1.442695
    %v7553 = vpow.pop %v7552
    %v7554 = vsel %vm1160, %v7553, 0.0
    %7555 = vadd.xlane.f32.xlu0 %v7554
    %v7556 = vpop.xlane.xlu0 %7555
    %v7557 = vrcp.pop %v7556
    %v7558 = vmul.f32 %v7553, %v7557
    %v7560 = vsel %vm1172, %v7558, 0
    %7562 = vmatprep.subr.mxu0 0.0
    %7563 = vmatpush1.msra.mxu0 %v443
    %7564 = vmatprep.subr.mxu0 0.0
    %7565 = vmatpush1.msra.mxu0 %v448
    %7566 = vmatprep.subr.mxu0 0.0
    %7567 = vmatpush1.msra.mxu0 0.0
    %7568 = vmatprep.subr.mxu0 0.0
    %7569 = vmatpush1.msra.mxu0 0.0
    %7570 = vmatprep.subr.mxu0 0.0
    %7571 = vmatpush1.msra.mxu0 0.0
    %7572 = vmatprep.subr.mxu0 0.0
    %7573 = vmatpush1.msra.mxu0 0.0
    %7574 = vmatprep.subr.mxu0 0.0
    %7575 = vmatpush1.msra.mxu0 0.0
    %7576 = vmatprep.subr.mxu0 0.0
    %7577 = vmatpush1.msra.mxu0 0.0
    %7578 = vmatprep.subr.mxu0 0.0
    %7579 = vmatpush1.msra.mxu0 0.0
    %7580 = vmatprep.subr.mxu0 0.0
    %7581 = vmatpush1.msra.mxu0 0.0
    %7582 = vmatprep.subr.mxu0 0.0
    %7583 = vmatpush1.msra.mxu0 0.0
    %7584 = vmatprep.subr.mxu0 0.0
    %7585 = vmatpush1.msra.mxu0 0.0
    %7586 = vmatprep.subr.mxu0 0.0
    %7587 = vmatpush1.msra.mxu0 0.0
    %7588 = vmatprep.subr.mxu0 0.0
    %7589 = vmatpush1.msra.mxu0 0.0
    %7590 = vmatprep.subr.mxu0 0.0
    %7591 = vmatpush1.msra.mxu0 0.0
    %7592 = vmatprep.subr.mxu0 0.0
    %7593 = vmatpush1.msra.mxu0 0.0
    %7594 = vmatprep.subr.mxu0 0.0
    %7595 = vmatpush1.msra.mxu0 0.0
    %7596 = vmatprep.subr.mxu0 0.0
    %7597 = vmatpush1.msra.mxu0 0.0
    %7598 = vmatprep.subr.mxu0 0.0
    %7599 = vmatpush1.msra.mxu0 0.0
    %7600 = vmatprep.subr.mxu0 0.0
    %7601 = vmatpush1.msra.mxu0 0.0
    %7602 = vmatprep.subr.mxu0 0.0
    %7603 = vmatpush1.msra.mxu0 0.0
    %7604 = vmatprep.subr.mxu0 0.0
    %7605 = vmatpush1.msra.mxu0 0.0
    %7606 = vmatprep.subr.mxu0 0.0
    %7607 = vmatpush1.msra.mxu0 0.0
    %7608 = vmatprep.subr.mxu0 0.0
    %7609 = vmatpush1.msra.mxu0 0.0
    %7610 = vmatprep.subr.mxu0 0.0
    %7611 = vmatpush1.msra.mxu0 0.0
    %7612 = vmatprep.subr.mxu0 0.0
    %7613 = vmatpush1.msra.mxu0 0.0
    %7614 = vmatprep.subr.mxu0 0.0
    %7615 = vmatpush1.msra.mxu0 0.0
    %7616 = vmatprep.subr.mxu0 0.0
    %7617 = vmatpush1.msra.mxu0 0.0
    %7618 = vmatprep.subr.mxu0 0.0
    %7619 = vmatpush1.msra.mxu0 0.0
    %7620 = vmatprep.subr.mxu0 0.0
    %7621 = vmatpush1.msra.mxu0 0.0
    %7622 = vmatprep.subr.mxu0 0.0
    %7623 = vmatpush1.msra.mxu0 0.0
    %7624 = vmatprep.subr.mxu0 0.0
    %7625 = vmatpush1.msra.mxu0 0.0
    %7626 = vmatprep.mubr.f32.mxu0 0.0
    %7627 = vmatmul.mubr.f32.gmra.mrb[0].mxu0 %v7560
    %v7628 = vpop.f32.mrb[0].mxu0
    %v7629 = vadd.f32 0.0, %v7628
    %v7630 = vpop.f32.mrb[0].mxu0
    %7631 = vdwg.mxu0
    %7632 = vrot.lane.b32.xlu0 %v7472, 96
    %v7633 = vpop.permute.xlu0 %7632
    %v7634 = vsel %vm259, %v7633, 0
    %7636 = vmatprep.subr.mxu0 0.0
    %7637 = vmatpush1.msra.mxu0 %v562
    %7638 = vmatprep.subr.mxu0 0.0
    %7639 = vmatpush1.msra.mxu0 %v567
    %7640 = vmatprep.subr.mxu0 0.0
    %7641 = vmatpush1.msra.mxu0 %v572
    %7642 = vmatprep.subr.mxu0 0.0
    %7643 = vmatpush1.msra.mxu0 %v577
    %7644 = vmatprep.subr.mxu0 0.0
    %7645 = vmatpush1.msra.mxu0 0.0
    %7646 = vmatprep.subr.mxu0 0.0
    %7647 = vmatpush1.msra.mxu0 0.0
    %7648 = vmatprep.subr.mxu0 0.0
    %7649 = vmatpush1.msra.mxu0 0.0
    %7650 = vmatprep.subr.mxu0 0.0
    %7651 = vmatpush1.msra.mxu0 0.0
    %7652 = vmatprep.subr.mxu0 0.0
    %7653 = vmatpush1.msra.mxu0 0.0
    %7654 = vmatprep.subr.mxu0 0.0
    %7655 = vmatpush1.msra.mxu0 0.0
    %7656 = vmatprep.subr.mxu0 0.0
    %7657 = vmatpush1.msra.mxu0 0.0
    %7658 = vmatprep.subr.mxu0 0.0
    %7659 = vmatpush1.msra.mxu0 0.0
    %7660 = vmatprep.subr.mxu0 0.0
    %7661 = vmatpush1.msra.mxu0 0.0
    %7662 = vmatprep.subr.mxu0 0.0
    %7663 = vmatpush1.msra.mxu0 0.0
    %7664 = vmatprep.subr.mxu0 0.0
    %7665 = vmatpush1.msra.mxu0 0.0
    %7666 = vmatprep.subr.mxu0 0.0
    %7667 = vmatpush1.msra.mxu0 0.0
    %7668 = vmatprep.subr.mxu0 0.0
    %7669 = vmatpush1.msra.mxu0 0.0
    %7670 = vmatprep.subr.mxu0 0.0
    %7671 = vmatpush1.msra.mxu0 0.0
    %7672 = vmatprep.subr.mxu0 0.0
    %7673 = vmatpush1.msra.mxu0 0.0
    %7674 = vmatprep.subr.mxu0 0.0
    %7675 = vmatpush1.msra.mxu0 0.0
    %7676 = vmatprep.subr.mxu0 0.0
    %7677 = vmatpush1.msra.mxu0 0.0
    %7678 = vmatprep.subr.mxu0 0.0
    %7679 = vmatpush1.msra.mxu0 0.0
    %7680 = vmatprep.subr.mxu0 0.0
    %7681 = vmatpush1.msra.mxu0 0.0
    %7682 = vmatprep.subr.mxu0 0.0
    %7683 = vmatpush1.msra.mxu0 0.0
    %7684 = vmatprep.subr.mxu0 0.0
    %7685 = vmatpush1.msra.mxu0 0.0
    %7686 = vmatprep.subr.mxu0 0.0
    %7687 = vmatpush1.msra.mxu0 0.0
    %7688 = vmatprep.subr.mxu0 0.0
    %7689 = vmatpush1.msra.mxu0 0.0
    %7690 = vmatprep.subr.mxu0 0.0
    %7691 = vmatpush1.msra.mxu0 0.0
    %7692 = vmatprep.subr.mxu0 0.0
    %7693 = vmatpush1.msra.mxu0 0.0
    %7694 = vmatprep.subr.mxu0 0.0
    %7695 = vmatpush1.msra.mxu0 0.0
    %7696 = vmatprep.subr.mxu0 0.0
    %7697 = vmatpush1.msra.mxu0 0.0
    %7698 = vmatprep.subr.mxu0 0.0
    %7699 = vmatpush1.msra.mxu0 0.0
    %7700 = vmatprep.mubr.f32.mxu0 0.0
    %7701 = vmatmul.mubr.f32.gmra.mrb[0].mxu0 %v7634
    %v7702 = vpop.f32.mrb[0].mxu0
    %v7703 = vadd.f32 %v666, %v7702
    %v7704 = vpop.f32.mrb[0].mxu0
    %7705 = vdwg.mxu0
    %v7706 = vsel %vm1320, %v7703, -inf
    %7707 = vmax.xlane.f32.xlu0 %v7706
    %v7708 = vpop.xlane.xlu0 %7707
    %v7709 = vsub.f32 %v7703, %v7708
    %v7710 = vmul.f32 %v7709, 1.442695
    %v7711 = vpow.pop %v7710
    %v7712 = vsel %vm1320, %v7711, 0.0
    %7713 = vadd.xlane.f32.xlu0 %v7712
    %v7714 = vpop.xlane.xlu0 %7713
    %v7715 = vrcp.pop %v7714
    %v7716 = vmul.f32 %v7711, %v7715
    %v7718 = vsel %vm1332, %v7716, 0
    %7720 = vmatprep.subr.mxu0 0.0
    %7721 = vmatpush1.msra.mxu0 %v662
    %7722 = vmatprep.subr.mxu0 0.0
    %7723 = vmatpush1.msra.mxu0 0.0
    %7724 = vmatprep.subr.mxu0 0.0
    %7725 = vmatpush1.msra.mxu0 0.0
    %7726 = vmatprep.subr.mxu0 0.0
    %7727 = vmatpush1.msra.mxu0 0.0
    %7728 = vmatprep.subr.mxu0 0.0
    %7729 = vmatpush1.msra.mxu0 0.0
    %7730 = vmatprep.subr.mxu0 0.0
    %7731 = vmatpush1.msra.mxu0 0.0
    %7732 = vmatprep.subr.mxu0 0.0
    %7733 = vmatpush1.msra.mxu0 0.0
    %7734 = vmatprep.subr.mxu0 0.0
    %7735 = vmatpush1.msra.mxu0 0.0
    %7736 = vmatprep.subr.mxu0 0.0
    %7737 = vmatpush1.msra.mxu0 0.0
    %7738 = vmatprep.subr.mxu0 0.0
    %7739 = vmatpush1.msra.mxu0 0.0
    %7740 = vmatprep.subr.mxu0 0.0
    %7741 = vmatpush1.msra.mxu0 0.0
    %7742 = vmatprep.subr.mxu0 0.0
    %7743 = vmatpush1.msra.mxu0 0.0
    %7744 = vmatprep.subr.mxu0 0.0
    %7745 = vmatpush1.msra.mxu0 0.0
    %7746 = vmatprep.subr.mxu0 0.0
    %7747 = vmatpush1.msra.mxu0 0.0
    %7748 = vmatprep.subr.mxu0 0.0
    %7749 = vmatpush1.msra.mxu0 0.0
    %7750 = vmatprep.subr.mxu0 0.0
    %7751 = vmatpush1.msra.mxu0 0.0
    %7752 = vmatprep.subr.mxu0 0.0
    %7753 = vmatpush1.msra.mxu0 0.0
    %7754 = vmatprep.subr.mxu0 0.0
    %7755 = vmatpush1.msra.mxu0 0.0
    %7756 = vmatprep.subr.mxu0 0.0
    %7757 = vmatpush1.msra.mxu0 0.0
    %7758 = vmatprep.subr.mxu0 0.0
    %7759 = vmatpush1.msra.mxu0 0.0
    %7760 = vmatprep.subr.mxu0 0.0
    %7761 = vmatpush1.msra.mxu0 0.0
    %7762 = vmatprep.subr.mxu0 0.0
    %7763 = vmatpush1.msra.mxu0 0.0
    %7764 = vmatprep.subr.mxu0 0.0
    %7765 = vmatpush1.msra.mxu0 0.0
    %7766 = vmatprep.subr.mxu0 0.0
    %7767 = vmatpush1.msra.mxu0 0.0
    %7768 = vmatprep.subr.mxu0 0.0
    %7769 = vmatpush1.msra.mxu0 0.0
    %7770 = vmatprep.subr.mxu0 0.0
    %7771 = vmatpush1.msra.mxu0 0.0
    %7772 = vmatprep.subr.mxu0 0.0
    %7773 = vmatpush1.msra.mxu0 0.0
    %7774 = vmatprep.subr.mxu0 0.0
    %7775 = vmatpush1.msra.mxu0 0.0
    %7776 = vmatprep.subr.mxu0 0.0
    %7777 = vmatpush1.msra.mxu0 0.0
    %7778 = vmatprep.subr.mxu0 0.0
    %7779 = vmatpush1.msra.mxu0 0.0
    %7780 = vmatprep.subr.mxu0 0.0
    %7781 = vmatpush1.msra.mxu0 0.0
    %7782 = vmatprep.subr.mxu0 0.0
    %7783 = vmatpush1.msra.mxu0 0.0
    %7784 = vmatprep.mubr.f32.mxu0 0.0
    %7785 = vmatmul.mubr.f32.gmra.mrb[0].mxu0 %v7718
    %v7786 = vpop.f32.mrb[0].mxu0
    %v7787 = vadd.f32 0.0, %v7786
    %v7788 = vpop.f32.mrb[0].mxu0
    %7789 = vdwg.mxu0
    %7791 = vrot.lane.b32.xlu0 %v7787, 32
    %v7792 = vpop.permute.xlu0 %7791
    %v7794 = vsel %vm259, %v7629, %v7792
    %v7795 = vld [vmem:[%s20] sm:$0xff]
    %v7796 = vld [vmem:[%s20 + $0x8] sm:$0xff]
    %v7797 = vld [vmem:[%s20 + $0x10] sm:$0xff]
    %v7798 = vld [vmem:[%s20 + $0x18] sm:$0xff]
    %v7799 = vld [vmem:[%s20 + $0x20] sm:$0xff]
    %v7800 = vld [vmem:[%s20 + $0x28] sm:$0xff]
    %v7801 = vld [vmem:[%s20 + $0x30] sm:$0xff]
    %v7802 = vld [vmem:[%s20 + $0x38] sm:$0xff]
    %v7803 = vld [vmem:[%s21] sm:$0x1]
    %v7805 = vlaneseq
    %v7806 = vshrl.u32 %v7805, 7
    %v7807 = vsub.s32 0, %v7806
    %v7808 = vrot.slane %v7803, %v7807
    %v7811 = vsel %vm1426, %v7794, 0
    %7813 = vmatprep.subr.mxu0 0.0
    %7814 = vmatpush1.msra.mxu0 %v7795
    %7815 = vmatprep.subr.mxu0 0.0
    %7816 = vmatpush1.msra.mxu0 %v7796
    %7817 = vmatprep.subr.mxu0 0.0
    %7818 = vmatpush1.msra.mxu0 %v7797
    %7819 = vmatprep.subr.mxu0 0.0
    %7820 = vmatpush1.msra.mxu0 %v7798
    %7821 = vmatprep.subr.mxu0 0.0
    %7822 = vmatpush1.msra.mxu0 %v7799
    %7823 = vmatprep.subr.mxu0 0.0
    %7824 = vmatpush1.msra.mxu0 %v7800
    %7825 = vmatprep.subr.mxu0 0.0
    %7826 = vmatpush1.msra.mxu0 %v7801
    %7827 = vmatprep.subr.mxu0 0.0
    %7828 = vmatpush1.msra.mxu0 %v7802
    %7829 = vmatprep.subr.mxu0 0.0
    %7830 = vmatpush1.msra.mxu0 0.0
    %7831 = vmatprep.subr.mxu0 0.0
    %7832 = vmatpush1.msra.mxu0 0.0
    %7833 = vmatprep.subr.mxu0 0.0
    %7834 = vmatpush1.msra.mxu0 0.0
    %7835 = vmatprep.subr.mxu0 0.0
    %7836 = vmatpush1.msra.mxu0 0.0
    %7837 = vmatprep.subr.mxu0 0.0
    %7838 = vmatpush1.msra.mxu0 0.0
    %7839 = vmatprep.subr.mxu0 0.0
    %7840 = vmatpush1.msra.mxu0 0.0
    %7841 = vmatprep.subr.mxu0 0.0
    %7842 = vmatpush1.msra.mxu0 0.0
    %7843 = vmatprep.subr.mxu0 0.0
    %7844 = vmatpush1.msra.mxu0 0.0
    %7845 = vmatprep.subr.mxu0 0.0
    %7846 = vmatpush1.msra.mxu0 0.0
    %7847 = vmatprep.subr.mxu0 0.0
    %7848 = vmatpush1.msra.mxu0 0.0
    %7849 = vmatprep.subr.mxu0 0.0
    %7850 = vmatpush1.msra.mxu0 0.0
    %7851 = vmatprep.subr.mxu0 0.0
    %7852 = vmatpush1.msra.mxu0 0.0
    %7853 = vmatprep.subr.mxu0 0.0
    %7854 = vmatpush1.msra.mxu0 0.0
    %7855 = vmatprep.subr.mxu0 0.0
    %7856 = vmatpush1.msra.mxu0 0.0
    %7857 = vmatprep.subr.mxu0 0.0
    %7858 = vmatpush1.msra.mxu0 0.0
    %7859 = vmatprep.subr.mxu0 0.0
    %7860 = vmatpush1.msra.mxu0 0.0
    %7861 = vmatprep.subr.mxu0 0.0
    %7862 = vmatpush1.msra.mxu0 0.0
    %7863 = vmatprep.subr.mxu0 0.0
    %7864 = vmatpush1.msra.mxu0 0.0
    %7865 = vmatprep.subr.mxu0 0.0
    %7866 = vmatpush1.msra.mxu0 0.0
    %7867 = vmatprep.subr.mxu0 0.0
    %7868 = vmatpush1.msra.mxu0 0.0
    %7869 = vmatprep.subr.mxu0 0.0
    %7870 = vmatpush1.msra.mxu0 0.0
    %7871 = vmatprep.subr.mxu0 0.0
    %7872 = vmatpush1.msra.mxu0 0.0
    %7873 = vmatprep.subr.mxu0 0.0
    %7874 = vmatpush1.msra.mxu0 0.0
    %7875 = vmatprep.subr.mxu0 0.0
    %7876 = vmatpush1.msra.mxu0 0.0
    %7877 = vmatprep.mubr.f32.mxu0 0.0
    %7878 = vmatmul.mubr.f32.gmra.mrb[0].mxu0 %v7811
    %v7879 = vpop.f32.mrb[0].mxu0
    %v7880 = vadd.f32 %v7808, %v7879
    %v7881 = vpop.f32.mrb[0].mxu0
    %7882 = vdwg.mxu0
    %v7883 = vmax.f32 %v7880, 0.0
    %v7884 = vld [vmem:[%s22] sm:$0xff]
    %v7885 = vld [vmem:[%s22 + $0x8] sm:$0xff]
    %v7886 = vld [vmem:[%s22 + $0x10] sm:$0xff]
    %v7887 = vld [vmem:[%s22 + $0x18] sm:$0xff]
    %v7888 = vld [vmem:[%s22 + $0x20] sm:$0xff]
    %v7889 = vld [vmem:[%s22 + $0x28] sm:$0xff]
    %v7890 = vld [vmem:[%s22 + $0x30] sm:$0xff]
    %v7891 = vld [vmem:[%s22 + $0x38] sm:$0xff]
    %v7892 = vld [vmem:[%s23] sm:$0x1]
    %v7894 = vlaneseq
    %v7895 = vshrl.u32 %v7894, 7
    %v7896 = vsub.s32 0, %v7895
    %v7897 = vrot.slane %v7892, %v7896
    %v7900 = vsel %vm1426, %v7883, 0
    %7902 = vmatprep.subr.mxu0 0.0
    %7903 = vmatpush1.msra.mxu0 %v7884
    %7904 = vmatprep.subr.mxu0 0.0
    %7905 = vmatpush1.msra.mxu0 %v7885
    %7906 = vmatprep.subr.mxu0 0.0
    %7907 = vmatpush1.msra.mxu0 %v7886
    %7908 = vmatprep.subr.mxu0 0.0
    %7909 = vmatpush1.msra.mxu0 %v7887
    %7910 = vmatprep.subr.mxu0 0.0
    %7911 = vmatpush1.msra.mxu0 %v7888
    %7912 = vmatprep.subr.mxu0 0.0
    %7913 = vmatpush1.msra.mxu0 %v7889
    %7914 = vmatprep.subr.mxu0 0.0
    %7915 = vmatpush1.msra.mxu0 %v7890
    %7916 = vmatprep.subr.mxu0 0.0
    %7917 = vmatpush1.msra.mxu0 %v7891
    %7918 = vmatprep.subr.mxu0 0.0
    %7919 = vmatpush1.msra.mxu0 0.0
    %7920 = vmatprep.subr.mxu0 0.0
    %7921 = vmatpush1.msra.mxu0 0.0
    %7922 = vmatprep.subr.mxu0 0.0
    %7923 = vmatpush1.msra.mxu0 0.0
    %7924 = vmatprep.subr.mxu0 0.0
    %7925 = vmatpush1.msra.mxu0 0.0
    %7926 = vmatprep.subr.mxu0 0.0
    %7927 = vmatpush1.msra.mxu0 0.0
    %7928 = vmatprep.subr.mxu0 0.0
    %7929 = vmatpush1.msra.mxu0 0.0
    %7930 = vmatprep.subr.mxu0 0.0
    %7931 = vmatpush1.msra.mxu0 0.0
    %7932 = vmatprep.subr.mxu0 0.0
    %7933 = vmatpush1.msra.mxu0 0.0
    %7934 = vmatprep.subr.mxu0 0.0
    %7935 = vmatpush1.msra.mxu0 0.0
    %7936 = vmatprep.subr.mxu0 0.0
    %7937 = vmatpush1.msra.mxu0 0.0
    %7938 = vmatprep.subr.mxu0 0.0
    %7939 = vmatpush1.msra.mxu0 0.0
    %7940 = vmatprep.subr.mxu0 0.0
    %7941 = vmatpush1.msra.mxu0 0.0
    %7942 = vmatprep.subr.mxu0 0.0
    %7943 = vmatpush1.msra.mxu0 0.0
    %7944 = vmatprep.subr.mxu0 0.0
    %7945 = vmatpush1.msra.mxu0 0.0
    %7946 = vmatprep.subr.mxu0 0.0
    %7947 = vmatpush1.msra.mxu0 0.0
    %7948 = vmatprep.subr.mxu0 0.0
    %7949 = vmatpush1.msra.mxu0 0.0
    %7950 = vmatprep.subr.mxu0 0.0
    %7951 = vmatpush1.msra.mxu0 0.0
    %7952 = vmatprep.subr.mxu0 0.0
    %7953 = vmatpush1.msra.mxu0 0.0
    %7954 = vmatprep.subr.mxu0 0.0
    %7955 = vmatpush1.msra.mxu0 0.0
    %7956 = vmatprep.subr.mxu0 0.0
    %7957 = vmatpush1.msra.mxu0 0.0
    %7958 = vmatprep.subr.mxu0 0.0
    %7959 = vmatpush1.msra.mxu0 0.0
    %7960 = vmatprep.subr.mxu0 0.0
    %7961 = vmatpush1.msra.mxu0 0.0
    %7962 = vmatprep.subr.mxu0 0.0
    %7963 = vmatpush1.msra.mxu0 0.0
    %7964 = vmatprep.subr.mxu0 0.0
    %7965 = vmatpush1.msra.mxu0 0.0
    %7966 = vmatprep.mubr.f32.mxu0 0.0
    %7967 = vmatmul.mubr.f32.gmra.mrb[0].mxu0 %v7900
    %v7968 = vpop.f32.mrb[0].mxu0
    %v7969 = vadd.f32 %v7897, %v7968
    %v7970 = vpop.f32.mrb[0].mxu0
    %7971 = vdwg.mxu0
    %s7972 = scalar_lea.vmem [#allocation22], 14
    %7973 = vst.msk [vmem:[%s7972] sm:$0x3] %vm1160, %v7969
    // Predicated region
    $region146: #{tpu_custom_call.1} parent=1 // pred_check
      _
    $region147: #{tpu_custom_call.1} parent=1 // pred_check_branch
      %7975 = sbr.rel (0) target = $region149
    $region148: #{tpu_custom_call.1} parent=1 // pred_region
      %s7977 = ssub.s32 256, 256
      %7978 = vsyncadd [#allocation4], %s7977
      %s7979 = sshll.u32 [#allocation22], 4
      %s7980 = int_to_ptr.vmem [resolvable:$true] %s7979
      %7985 = dma.vmem_to_hbm [thread:$0]  %s7980, 256, %s24, [#allocation4], 32, 32, 2
    $region149: #{tpu_custom_call.1} parent=1 // pred_fallthru
      _
    // Predicated region
    $region150: #{tpu_custom_call.1} parent=1 // pred_check
      _
    $region151: #{tpu_custom_call.1} parent=1 // pred_check_branch
      %7987 = sbr.rel (0) target = $region153
    $region152: #{tpu_custom_call.1} parent=1 // pred_region
      %7988 = dma.done [#allocation4], 256
    $region153: #{tpu_custom_call.1} parent=1 // pred_fallthru
      _
    %7989 = vsyncpa [#allocation3], 1
    %7990 = vsyncpa [#allocation6], 1
    %7991 = vsyncpa [#allocation9], 1
    %7992 = vsyncpa [#allocation12], 1
    %7993 = vsyncpa [#allocation15], 1
    %7994 = vsyncpa [#allocation18], 1
    %7995 = vsyncpa [#allocation21], 1
    %7996 = vsyncpa [#allocation4], 1

</llo_original>
